<compile_context>
chip_gen: v7x
topology: tpu7x:2x2x1
jax: 0.10.0
libtpu: 0.0.40
codegen_flags: <defaults>
</compile_context>

<pallas_src>
import functools

import jax
import jax.numpy as jnp
from jax import lax
from jax.experimental import pallas as pl
from jax.experimental.pallas import tpu as pltpu

EPS = 1e-5
LANE = 128


def _round_up(x, m):
    return ((x + m - 1) // m) * m


def _vmem_capacity_bytes():
    try:
        return int(pltpu.get_tpu_info().vmem_capacity_bytes)
    except Exception:
        return 64 * 1024 * 1024  # conservative default (v7x per-core VMEM)


def _compiler_params(dimension_semantics):
    cap = _vmem_capacity_bytes()
    return pltpu.CompilerParams(
        dimension_semantics=dimension_semantics,
        vmem_limit_bytes=int(cap * 85 // 100),
    )


def _pick_tile_h(n, h, w, cin_p, cout_p):
    """Pick a row-tile height: largest divisor of H that fits the VMEM budget,
    preferring one that leaves at least 4 grid steps (>=2 per v7x TensorCore)."""
    cap = _vmem_capacity_bytes()
    budget = int(cap * 7 // 10)            # same number used for the compiler limit

    w_b = 2 * 9 * cin_p * cout_p * 2       # resident bf16 weights (2x headroom)
    vec_b = 6 * cout_p * 4

    def footprint(th):
        xbuf = 2 * (th + 2) * w * cin_p * 2          # double-buffered input tiles (bf16)
        xw = (th + 2) * (w + 2) * cin_p * 2          # widened-column scratch (bf16)
        tmp = 4 * (th + 2) * (w + 2) * cin_p * 4     # in-kernel value temporaries (f32, generous)
        acc = th * w * cout_p * 4
        yout = 2 * th * w * cout_p * 2               # double-buffered bf16 output block
        return w_b + vec_b + xbuf + xw + tmp + acc + yout

    # TODO(synk): support a ragged last row tile so non-divisor tile heights work.
    divisors = [d for d in range(1, h + 1) if h % d == 0]
    fitting = [d for d in divisors if footprint(d) <= budget] or [1]
    preferred = [d for d in fitting if n * (h // d) >= 4]
    return max(preferred) if preferred else max(fitting)


# ---------------------------------------------------------------------------
# Kernels
# ---------------------------------------------------------------------------

def _conv_pass_kernel(x_hbm, w_ref, b_ref, scale_ref, shift_ref,
                      y_ref, stats_ref,
                      xbuf, xw_ref, sem, acc_ref,
                      *, tile_h, fuse_input_act):
    """One (batch, row-tile) block of a 3x3 "same" conv.

    x_hbm:     (N, H, W, Cin_p) bf16 activation, left in HBM (manual DMA)
    w_ref:     (3, 3, Cin_p, Cout_p) bf16 HWIO weights (constant block, resident)
    b_ref:     (1, Cout_p) f32 conv bias
    scale_ref: (1, Cin_p) f32 previous-stage BN scale (used iff fuse_input_act)
    shift_ref: (1, Cin_p) f32 previous-stage BN shift (used iff fuse_input_act)
    y_ref:     (1, tile_h, W, Cout_p) bf16 conv+bias output tile
    stats_ref: (1, 1, 2, Cout_p) f32 per-tile per-channel [sum, sumsq]
    xbuf:      (2, tile_h+2, W, Cin_p) bf16 double-buffered haloed input rows
    xw_ref:    (tile_h+2, W+2, Cin_p) bf16 column-widened scratch
    sem:       (2, 3) DMA semaphores (slot x {middle, top halo, bottom halo})
    acc_ref:   (tile_h*W, Cout_p) f32 MXU accumulator
    """
    ni = pl.program_id(0)
    ti = pl.program_id(1)
    n_t = pl.num_programs(1)
    th = tile_h
    _, thp2, w_sp, cin_p = xbuf.shape
    cout_p = acc_ref.shape[-1]
    h_total = th * n_t

    # -- manual double-buffered input DMA (no haloed HBM copy) ---------------
    def fetch(nb, tb, slot):
        r0 = tb * th
        pltpu.make_async_copy(x_hbm.at[nb, pl.ds(r0, th)],
                              xbuf.at[slot, pl.ds(1, th)],
                              sem.at[slot, 0]).start()

        @pl.when(tb > 0)
        def _():
            pltpu.make_async_copy(x_hbm.at[nb, pl.ds(r0 - 1, 1)],
                                  xbuf.at[slot, pl.ds(0, 1)],
                                  sem.at[slot, 1]).start()

        @pl.when(tb < n_t - 1)
        def _():
            pltpu.make_async_copy(x_hbm.at[nb, pl.ds(r0 + th, 1)],
                                  xbuf.at[slot, pl.ds(th + 1, 1)],
                                  sem.at[slot, 2]).start()

    def wait(tb, slot):
        pltpu.make_async_copy(x_hbm.at[0, pl.ds(0, th)],
                              xbuf.at[slot, pl.ds(1, th)],
                              sem.at[slot, 0]).wait()

        @pl.when(tb > 0)
        def _():
            pltpu.make_async_copy(x_hbm.at[0, pl.ds(0, 1)],
                                  xbuf.at[slot, pl.ds(0, 1)],
                                  sem.at[slot, 1]).wait()

        @pl.when(tb < n_t - 1)
        def _():
            pltpu.make_async_copy(x_hbm.at[0, pl.ds(0, 1)],
                                  xbuf.at[slot, pl.ds(th + 1, 1)],
                                  sem.at[slot, 2]).wait()

    slot = ti % 2

    @pl.when(ti == 0)                      # prime once per image (safe under megacore:
    def _():                               # only the batch axis is "parallel")
        fetch(ni, ti, slot)

    wait(ti, slot)

    @pl.when(ti + 1 < n_t)                 # prefetch next row tile of the same image
    def _():
        fetch(ni, ti + 1, 1 - slot)

    # Halo rows at the image boundary are never DMA'd -> zero them.
    @pl.when(ti == 0)
    def _():
        xbuf[slot, 0] = jnp.zeros((w_sp, cin_p), xbuf.dtype)

    @pl.when(ti == n_t - 1)
    def _():
        xbuf[slot, th + 1] = jnp.zeros((w_sp, cin_p), xbuf.dtype)

    x = xbuf[slot]                                           # (th+2, W, Cin_p) bf16

    # -- fused previous-stage BatchNorm + ReLU (conv2 only) ------------------
    if fuse_input_act:
        act = jnp.maximum(x.astype(jnp.float32) * scale_ref[0] + shift_ref[0], 0.0)
        # Only the image-boundary halo rows must be forced back to zero
        # (columns are handled by the zero halo columns of xw_ref below).
        row = ti * th - 1 + lax.broadcasted_iota(jnp.int32, (thp2, 1, 1), 0)
        row_ok = (row >= 0) & (row < h_total)
        x = jnp.where(row_ok, act, 0.0).astype(jnp.bfloat16)

    # -- build the three dx-shifted patches once per tile --------------------
    xw_ref[:, pl.ds(1, w_sp), :] = x
    xw_ref[:, 0, :] = jnp.zeros((thp2, cin_p), xw_ref.dtype)
    xw_ref[:, w_sp + 1, :] = jnp.zeros((thp2, cin_p), xw_ref.dtype)

    flat_c = x.reshape(thp2 * w_sp, cin_p)                              # dx = 1
    flat_l = xw_ref[:, pl.ds(0, w_sp), :].reshape(thp2 * w_sp, cin_p)   # dx = 0
    flat_r = xw_ref[:, pl.ds(2, w_sp), :].reshape(thp2 * w_sp, cin_p)   # dx = 2
    flats = (flat_l, flat_c, flat_r)

    # -- 9 tap matmuls: bf16 operands, f32 accumulation ----------------------
    for dy in range(3):
        lo = dy * w_sp
        hi = lo + th * w_sp
        for dx in range(3):
            patch = flats[dx][lo:hi]                         # cheap leading-dim slice
            contrib = jnp.dot(patch, w_ref[dy, dx],
                              preferred_element_type=jnp.float32)
            if dy == 0 and dx == 0:
                acc_ref[...] = contrib                       # no explicit zero-init
            else:
                acc_ref[...] += contrib

    # -- epilogue: one accumulator read -> bias, output, BN partial stats ----
    y = acc_ref[...] + b_ref[0]                              # (th*W, Cout_p) f32
    y_ref[0] = y.reshape(th, w_sp, cout_p).astype(y_ref.dtype)
    s = jnp.sum(y, axis=0, keepdims=True)
    ss = jnp.sum(y * y, axis=0, keepdims=True)
    stats_ref[0, 0] = jnp.concatenate([s, ss], axis=0)


def _bn_relu_kernel(y_ref, scale_ref, shift_ref, o_ref):
    o_ref[...] = jnp.maximum(
        y_ref[...].astype(jnp.float32) * scale_ref[0] + shift_ref[0], 0.0)


# ---------------------------------------------------------------------------
# Wrappers
# ---------------------------------------------------------------------------

def _conv_pass(x, w_hwio, b, scale_in, shift_in, tile_h, fuse_input_act):
    n, h, w_sp, cin_p = x.shape
    cout_p = w_hwio.shape[-1]
    t = h // tile_h

    if scale_in is None:
        scale_in = jnp.ones((1, cin_p), jnp.float32)
        shift_in = jnp.zeros((1, cin_p), jnp.float32)

    kernel = functools.partial(_conv_pass_kernel, tile_h=tile_h,
                               fuse_input_act=fuse_input_act)

    grid_spec = pltpu.PrefetchScalarGridSpec(
        num_scalar_prefetch=0,
        grid=(n, t),
        in_specs=[
            pl.BlockSpec(memory_space=pl.ANY),                 # activation stays in HBM
            pl.BlockSpec((3, 3, cin_p, cout_p), lambda ni, ti: (0, 0, 0, 0)),
            pl.BlockSpec((1, cout_p), lambda ni, ti: (0, 0)),
            pl.BlockSpec((1, cin_p), lambda ni, ti: (0, 0)),
            pl.BlockSpec((1, cin_p), lambda ni, ti: (0, 0)),
        ],
        out_specs=(
            pl.BlockSpec((1, tile_h, w_sp, cout_p), lambda ni, ti: (ni, ti, 0, 0)),
            pl.BlockSpec((1, 1, 2, cout_p), lambda ni, ti: (ni, ti, 0, 0)),
        ),
        scratch_shapes=[
            pltpu.VMEM((2, tile_h + 2, w_sp, cin_p), jnp.bfloat16),
            pltpu.VMEM((tile_h + 2, w_sp + 2, cin_p), jnp.bfloat16),
            pltpu.SemaphoreType.DMA((2, 3)),
            pltpu.VMEM((tile_h * w_sp, cout_p), jnp.float32),
        ],
    )

    y, stats = pl.pallas_call(
        kernel,
        out_shape=(jax.ShapeDtypeStruct((n, h, w_sp, cout_p), jnp.bfloat16),
                   jax.ShapeDtypeStruct((n, t, 2, cout_p), jnp.float32)),
        grid_spec=grid_spec,
        # batch axis "parallel" (megacore); row-tile axis "arbitrary" so the
        # per-image prefetch chain stays on one core.
        compiler_params=_compiler_params(("parallel", "arbitrary")),
    )(x, w_hwio, b, scale_in, shift_in)
    return y, stats


def _bn_relu_apply(y, scale, shift, tile_h):
    n, h, w_sp, cp = y.shape
    t = h // tile_h
    grid_spec = pltpu.PrefetchScalarGridSpec(
        num_scalar_prefetch=0,
        grid=(n, t),
        in_specs=[
            pl.BlockSpec((1, tile_h, w_sp, cp), lambda ni, ti: (ni, ti, 0, 0)),
            pl.BlockSpec((1, cp), lambda ni, ti: (0, 0)),
            pl.BlockSpec((1, cp), lambda ni, ti: (0, 0)),
        ],
        out_specs=pl.BlockSpec((1, tile_h, w_sp, cp), lambda ni, ti: (ni, ti, 0, 0)),
    )
    return pl.pallas_call(
        _bn_relu_kernel,
        out_shape=jax.ShapeDtypeStruct((n, h, w_sp, cp), jnp.float32),
        grid_spec=grid_spec,
        compiler_params=_compiler_params(("parallel", "parallel")),
    )(y, scale, shift)


def _bn_scale_shift(stats, gamma_p, beta_p, count):
    """Fold global BatchNorm(train) batch stats into per-channel scale/shift."""
    s = jnp.sum(stats[:, :, 0, :], axis=(0, 1))
    ss = jnp.sum(stats[:, :, 1, :], axis=(0, 1))
    mean = s / count
    # E[x^2]-E[x]^2 in f32; fine for typical activation magnitudes.
    var = jnp.maximum(ss / count - mean * mean, 0.0)   # biased var (PyTorch BN train)
    scale = gamma_p[0] * lax.rsqrt(var + EPS)
    shift = beta_p[0] - mean * scale
    return scale.reshape(1, -1), shift.reshape(1, -1)


def _pack_weight(w_pt, cin_p, cout_p):
    # PyTorch (Cout, Cin, 3, 3) -> HWIO (3, 3, Cin, Cout), zero-padded channels, bf16.
    w = jnp.transpose(w_pt, (2, 3, 1, 0)).astype(jnp.float32)
    w = jnp.pad(w, ((0, 0), (0, 0),
                    (0, cin_p - w.shape[2]), (0, cout_p - w.shape[3])))
    return w.astype(jnp.bfloat16)


def _pack_vec(v, cp):
    v = v.astype(jnp.float32).reshape(1, -1)
    return jnp.pad(v, ((0, 0), (0, cp - v.shape[1])))


@functools.partial(jax.jit, static_argnames=("tile_h",))
def double_conv_forward(x_nchw, params, tile_h=None):
    """Full DoubleConv forward. Input/output follow PyTorch NCHW convention."""
    x = jnp.transpose(x_nchw, (0, 2, 3, 1)).astype(jnp.float32)   # NCHW -> NHWC
    n, h, w_sp, cin = x.shape
    cout = params["w1"].shape[0]
    cin_p = _round_up(cin, LANE)
    cout_p = _round_up(cout, LANE)

    if tile_h is None:
        tile_h = _pick_tile_h(n, h, w_sp, max(cin_p, cout_p), cout_p)
    assert h % tile_h == 0, "tile_h must divide H"

    # Lane-dense channel padding; activations stored bf16 (MXU dtype).
    x_p = jnp.pad(x, ((0, 0), (0, 0), (0, 0),
                      (0, cin_p - cin))).astype(jnp.bfloat16)

    w1 = _pack_weight(params["w1"], cin_p, cout_p)
    w2 = _pack_weight(params["w2"], cout_p, cout_p)
    b1, b2 = _pack_vec(params["b1"], cout_p), _pack_vec(params["b2"], cout_p)
    g1, g2 = _pack_vec(params["g1"], cout_p), _pack_vec(params["g2"], cout_p)
    be1, be2 = _pack_vec(params["beta1"], cout_p), _pack_vec(params["beta2"], cout_p)

    count = float(n * h * w_sp)

    # Stage 1: conv1 + bias, with BN1 batch-stat partials.
    y1, stats1 = _conv_pass(x_p, w1, b1, None, None, tile_h, fuse_input_act=False)
    scale1, shift1 = _bn_scale_shift(stats1, g1, be1, count)

    # Stage 2: conv2 over relu(BN1(y1)); BN1+ReLU fused into conv2's input load.
    y2, stats2 = _conv_pass(y1, w2, b2, scale1, shift1, tile_h, fuse_input_act=True)
    scale2, shift2 = _bn_scale_shift(stats2, g2, be2, count)

    # Stage 3: BN2 + ReLU finalize (f32 output).
    out_p = _bn_relu_apply(y2, scale2, shift2, tile_h)

    # TODO(synk): fold the channel un-pad + NHWC->NCHW transpose into the
    # finalize kernel when the consumer layout allows lane-dense stores.
    out = out_p[..., :cout]
    return jnp.transpose(out, (0, 3, 1, 2))                  # NHWC -> NCHW


# ---------------------------------------------------------------------------
# Params / reference / test
# ---------------------------------------------------------------------------

def init_params(key, in_channels, out_channels):
    k1, k2, k3, k4 = jax.random.split(key, 4)
    bound1 = 1.0 / jnp.sqrt(in_channels * 9)
    bound2 = 1.0 / jnp.sqrt(out_channels * 9)
    return {
        "w1": jax.random.uniform(k1, (out_channels, in_channels, 3, 3),
                                 jnp.float32, -bound1, bound1),
        "b1": jax.random.uniform(k2, (out_channels,), jnp.float32,
                                 -bound1, bound1),
        "g1": jnp.ones((out_channels,), jnp.float32),
        "beta1": jnp.zeros((out_channels,), jnp.float32),
        "w2": jax.random.uniform(k3, (out_channels, out_channels, 3, 3),
                                 jnp.float32, -bound2, bound2),
        "b2": jax.random.uniform(k4, (out_channels,), jnp.float32,
                                 -bound2, bound2),
        "g2": jnp.ones((out_channels,), jnp.float32),
        "beta2": jnp.zeros((out_channels,), jnp.float32),
    }


def _reference_forward(x_nchw, params):
    """Pure-JAX f32 reference (lax.conv) for correctness checking."""
    def block(x_nhwc, w_pt, b, g, beta):
        w_hwio = jnp.transpose(w_pt, (2, 3, 1, 0))
        y = lax.conv_general_dilated(
            x_nhwc, w_hwio, window_strides=(1, 1), padding="SAME",
            dimension_numbers=("NHWC", "HWIO", "NHWC")) + b
        mean = jnp.mean(y, axis=(0, 1, 2), keepdims=True)
        var = jnp.mean((y - mean) ** 2, axis=(0, 1, 2), keepdims=True)
        yn = (y - mean) * lax.rsqrt(var + EPS) * g + beta
        return jnp.maximum(yn, 0.0)

    x = jnp.transpose(x_nchw, (0, 2, 3, 1))
    h = block(x, params["w1"], params["b1"], params["g1"], params["beta1"])
    y = block(h, params["w2"], params["b2"], params["g2"], params["beta2"])
    return jnp.transpose(y, (0, 3, 1, 2))


if __name__ == "__main__":
    key = jax.random.PRNGKey(0)
    kx, kp = jax.random.split(key)

    N, Cin, Cout, H, W = 2, 4, 8, 16, 16
    x = jax.random.normal(kx, (N, Cin, H, W), jnp.float32)   # PyTorch NCHW
    params = init_params(kp, Cin, Cout)

    ref = _reference_forward(x, params)

    # Default (VMEM-budget / >=4-step derived) row tile.
    out = jax.block_until_ready(double_conv_forward(x, params))
    assert out.shape == (N, Cout, H, W)
    assert jnp.allclose(out, ref, rtol=5e-2, atol=5e-2), "mismatch (default tile)"

    # Force smaller row tiles to exercise the halo DMA / fused-BN masking path.
    out_tiled = jax.block_until_ready(double_conv_forward(x, params, tile_h=4))
    assert jnp.allclose(out_tiled, ref, rtol=5e-2, atol=5e-2), "mismatch (tile_h=4)"

    print("KERNEL_OK")
</pallas_src>

<mosaic_0001>
module attributes {stable_mosaic.version = 11 : i64} {
  func.func @_conv_pass_kernel(%arg0: i32, %arg1: i32, %arg2: memref<2x16x16x128xbf16, #tpu.memory_space<any>>, %arg3: memref<3x3x128x128xbf16, #tpu.memory_space<vmem>>, %arg4: memref<1x128xf32, #tpu.memory_space<vmem>>, %arg5: memref<1x128xf32, #tpu.memory_space<vmem>>, %arg6: memref<1x128xf32, #tpu.memory_space<vmem>>, %arg7: memref<1x8x16x128xbf16, #tpu.memory_space<vmem>>, %arg8: memref<1x1x2x128xf32, #tpu.memory_space<vmem>>, %arg9: memref<2x10x16x128xbf16, #tpu.memory_space<vmem>>, %arg10: memref<10x18x128xbf16, #tpu.memory_space<vmem>>, %arg11: memref<2x3x!tpu.dma_semaphore, #tpu.memory_space<semaphore_mem>>, %arg12: memref<128x128xf32, #tpu.memory_space<vmem>>) attributes {dimension_semantics = [#tpu.dimension_semantics<parallel>, #tpu.dimension_semantics<arbitrary>], iteration_bounds = array<i64: 2, 2>, scalar_prefetch = 0 : i64, scratch_operands = 4 : i64, tpu.core_type = #tpu.core_type<tc>, window_params = [{}, {pipeline_mode = #tpu.pipeline_mode<synchronous>, transform_indices = @transform_1, window_bounds = array<i64: 3, 3, 128, 128>}, {pipeline_mode = #tpu.pipeline_mode<synchronous>, transform_indices = @transform_2, window_bounds = array<i64: 1, 128>}, {pipeline_mode = #tpu.pipeline_mode<synchronous>, transform_indices = @transform_3, window_bounds = array<i64: 1, 128>}, {pipeline_mode = #tpu.pipeline_mode<synchronous>, transform_indices = @transform_4, window_bounds = array<i64: 1, 128>}, {transform_indices = @transform_5, window_bounds = array<i64: 1, 8, 16, 128>}, {transform_indices = @transform_6, window_bounds = array<i64: 1, 1, 2, 128>}]} {
    %c2_i32 = arith.constant 2 : i32
    %c0_i32 = arith.constant 0 : i32
    %0 = arith.cmpi eq, %c2_i32, %c0_i32 : i32
    %c1_i32 = arith.constant 1 : i32
    %1 = arith.select %0, %c1_i32, %c2_i32 : i32
    %2 = arith.remsi %arg1, %1 : i32
    %c0_i32_0 = arith.constant 0 : i32
    %3 = arith.cmpi ne, %2, %c0_i32_0 : i32
    %c0_i32_1 = arith.constant 0 : i32
    %4 = arith.cmpi slt, %2, %c0_i32_1 : i32
    %c0_i32_2 = arith.constant 0 : i32
    %5 = arith.cmpi slt, %1, %c0_i32_2 : i32
    %6 = arith.xori %4, %5 : i1
    %7 = arith.andi %6, %3 : i1
    %8 = arith.addi %2, %1 : i32
    %9 = arith.select %7, %8, %2 : i32
    %c0_i32_3 = arith.constant 0 : i32
    %10 = arith.cmpi eq, %arg1, %c0_i32_3 : i32
    %11 = arith.extui %10 : i1 to i32
    %c0_i32_4 = arith.constant 0 : i32
    %12 = arith.cmpi ne, %11, %c0_i32_4 : i32
    scf.if %12 {
      %c8_i32 = arith.constant 8 : i32
      %133 = arith.muli %arg1, %c8_i32 : i32
      %c0_i32_132 = arith.constant 0 : i32
      %c0_i32_133 = arith.constant 0 : i32
      %c0_i32_134 = arith.constant 0 : i32
      %134 = tpu.memref_slice %arg2[%arg0, %133, %c0_i32_133, %c0_i32_134] : memref<2x16x16x128xbf16, #tpu.memory_space<any>> -> memref<1x8x16x128xbf16, #tpu.memory_space<any>>
      %135 = tpu.memref_squeeze %134 : memref<1x8x16x128xbf16, #tpu.memory_space<any>> -> memref<8x16x128xbf16, #tpu.memory_space<any>>
      %c1_i32_135 = arith.constant 1 : i32
      %c0_i32_136 = arith.constant 0 : i32
      %c0_i32_137 = arith.constant 0 : i32
      %136 = tpu.memref_slice %arg9[%9, %c1_i32_135, %c0_i32_136, %c0_i32_137] : memref<2x10x16x128xbf16, #tpu.memory_space<vmem>> -> memref<1x8x16x128xbf16, #tpu.memory_space<vmem>>
      %137 = tpu.memref_squeeze %136 : memref<1x8x16x128xbf16, #tpu.memory_space<vmem>> -> memref<8x16x128xbf16, #tpu.memory_space<vmem>>
      %138 = tpu.memref_slice %arg11[%9, %c0_i32_132] : memref<2x3x!tpu.dma_semaphore, #tpu.memory_space<semaphore_mem>> -> memref<1x1x!tpu.dma_semaphore, #tpu.memory_space<semaphore_mem>>
      %139 = tpu.memref_squeeze %138 : memref<1x1x!tpu.dma_semaphore, #tpu.memory_space<semaphore_mem>> -> memref<!tpu.dma_semaphore, #tpu.memory_space<semaphore_mem>>
      tpu.enqueue_dma source(%135 : memref<8x16x128xbf16, #tpu.memory_space<any>>) target(%137 : memref<8x16x128xbf16, #tpu.memory_space<vmem>>) target_semaphore(%139 : memref<!tpu.dma_semaphore, #tpu.memory_space<semaphore_mem>>)
      %c0_i32_138 = arith.constant 0 : i32
      %140 = arith.cmpi sgt, %arg1, %c0_i32_138 : i32
      %141 = arith.extui %140 : i1 to i32
      %c0_i32_139 = arith.constant 0 : i32
      %142 = arith.cmpi ne, %141, %c0_i32_139 : i32
      scf.if %142 {
        %c1_i32_142 = arith.constant 1 : i32
        %146 = arith.subi %133, %c1_i32_142 : i32
        %c1_i32_143 = arith.constant 1 : i32
        %c0_i32_144 = arith.constant 0 : i32
        %c0_i32_145 = arith.constant 0 : i32
        %147 = tpu.memref_slice %arg2[%arg0, %146, %c0_i32_144, %c0_i32_145] : memref<2x16x16x128xbf16, #tpu.memory_space<any>> -> memref<1x1x16x128xbf16, #tpu.memory_space<any>>
        %148 = tpu.memref_squeeze %147 : memref<1x1x16x128xbf16, #tpu.memory_space<any>> -> memref<1x16x128xbf16, #tpu.memory_space<any>>
        %c0_i32_146 = arith.constant 0 : i32
        %c0_i32_147 = arith.constant 0 : i32
        %c0_i32_148 = arith.constant 0 : i32
        %149 = tpu.memref_slice %arg9[%9, %c0_i32_146, %c0_i32_147, %c0_i32_148] : memref<2x10x16x128xbf16, #tpu.memory_space<vmem>> -> memref<1x1x16x128xbf16, #tpu.memory_space<vmem>>
        %150 = tpu.memref_squeeze %149 : memref<1x1x16x128xbf16, #tpu.memory_space<vmem>> -> memref<1x16x128xbf16, #tpu.memory_space<vmem>>
        %151 = tpu.memref_slice %arg11[%9, %c1_i32_143] : memref<2x3x!tpu.dma_semaphore, #tpu.memory_space<semaphore_mem>> -> memref<1x1x!tpu.dma_semaphore, #tpu.memory_space<semaphore_mem>>
        %152 = tpu.memref_squeeze %151 : memref<1x1x!tpu.dma_semaphore, #tpu.memory_space<semaphore_mem>> -> memref<!tpu.dma_semaphore, #tpu.memory_space<semaphore_mem>>
        tpu.enqueue_dma source(%148 : memref<1x16x128xbf16, #tpu.memory_space<any>>) target(%150 : memref<1x16x128xbf16, #tpu.memory_space<vmem>>) target_semaphore(%152 : memref<!tpu.dma_semaphore, #tpu.memory_space<semaphore_mem>>)
      } else {
      }
      %c1_i32_140 = arith.constant 1 : i32
      %143 = arith.cmpi slt, %arg1, %c1_i32_140 : i32
      %144 = arith.extui %143 : i1 to i32
      %c0_i32_141 = arith.constant 0 : i32
      %145 = arith.cmpi ne, %144, %c0_i32_141 : i32
      scf.if %145 {
        %c8_i32_142 = arith.constant 8 : i32
        %146 = arith.addi %133, %c8_i32_142 : i32
        %c2_i32_143 = arith.constant 2 : i32
        %c0_i32_144 = arith.constant 0 : i32
        %c0_i32_145 = arith.constant 0 : i32
        %147 = tpu.memref_slice %arg2[%arg0, %146, %c0_i32_144, %c0_i32_145] : memref<2x16x16x128xbf16, #tpu.memory_space<any>> -> memref<1x1x16x128xbf16, #tpu.memory_space<any>>
        %148 = tpu.memref_squeeze %147 : memref<1x1x16x128xbf16, #tpu.memory_space<any>> -> memref<1x16x128xbf16, #tpu.memory_space<any>>
        %c9_i32 = arith.constant 9 : i32
        %c0_i32_146 = arith.constant 0 : i32
        %c0_i32_147 = arith.constant 0 : i32
        %149 = tpu.memref_slice %arg9[%9, %c9_i32, %c0_i32_146, %c0_i32_147] : memref<2x10x16x128xbf16, #tpu.memory_space<vmem>> -> memref<1x1x16x128xbf16, #tpu.memory_space<vmem>>
        %150 = tpu.memref_squeeze %149 : memref<1x1x16x128xbf16, #tpu.memory_space<vmem>> -> memref<1x16x128xbf16, #tpu.memory_space<vmem>>
        %151 = tpu.memref_slice %arg11[%9, %c2_i32_143] : memref<2x3x!tpu.dma_semaphore, #tpu.memory_space<semaphore_mem>> -> memref<1x1x!tpu.dma_semaphore, #tpu.memory_space<semaphore_mem>>
        %152 = tpu.memref_squeeze %151 : memref<1x1x!tpu.dma_semaphore, #tpu.memory_space<semaphore_mem>> -> memref<!tpu.dma_semaphore, #tpu.memory_space<semaphore_mem>>
        tpu.enqueue_dma source(%148 : memref<1x16x128xbf16, #tpu.memory_space<any>>) target(%150 : memref<1x16x128xbf16, #tpu.memory_space<vmem>>) target_semaphore(%152 : memref<!tpu.dma_semaphore, #tpu.memory_space<semaphore_mem>>)
      } else {
      }
    } else {
    }
    %c0_i32_5 = arith.constant 0 : i32
    %c0_i32_6 = arith.constant 0 : i32
    %c0_i32_7 = arith.constant 0 : i32
    %c0_i32_8 = arith.constant 0 : i32
    %c0_i32_9 = arith.constant 0 : i32
    %13 = tpu.memref_slice %arg2[%c0_i32_5, %c0_i32_7, %c0_i32_8, %c0_i32_9] : memref<2x16x16x128xbf16, #tpu.memory_space<any>> -> memref<1x8x16x128xbf16, #tpu.memory_space<any>>
    %14 = tpu.memref_squeeze %13 : memref<1x8x16x128xbf16, #tpu.memory_space<any>> -> memref<8x16x128xbf16, #tpu.memory_space<any>>
    %c1_i32_10 = arith.constant 1 : i32
    %c0_i32_11 = arith.constant 0 : i32
    %c0_i32_12 = arith.constant 0 : i32
    %15 = tpu.memref_slice %arg9[%9, %c1_i32_10, %c0_i32_11, %c0_i32_12] : memref<2x10x16x128xbf16, #tpu.memory_space<vmem>> -> memref<1x8x16x128xbf16, #tpu.memory_space<vmem>>
    %16 = tpu.memref_squeeze %15 : memref<1x8x16x128xbf16, #tpu.memory_space<vmem>> -> memref<8x16x128xbf16, #tpu.memory_space<vmem>>
    %17 = tpu.memref_slice %arg11[%9, %c0_i32_6] : memref<2x3x!tpu.dma_semaphore, #tpu.memory_space<semaphore_mem>> -> memref<1x1x!tpu.dma_semaphore, #tpu.memory_space<semaphore_mem>>
    %18 = tpu.memref_squeeze %17 : memref<1x1x!tpu.dma_semaphore, #tpu.memory_space<semaphore_mem>> -> memref<!tpu.dma_semaphore, #tpu.memory_space<semaphore_mem>>
    tpu.wait_dma2 semaphore(%18 : memref<!tpu.dma_semaphore, #tpu.memory_space<semaphore_mem>>) src(%14 : memref<8x16x128xbf16, #tpu.memory_space<any>>) dst(%16 : memref<8x16x128xbf16, #tpu.memory_space<vmem>>)
    %c0_i32_13 = arith.constant 0 : i32
    %19 = arith.cmpi sgt, %arg1, %c0_i32_13 : i32
    %20 = arith.extui %19 : i1 to i32
    %c0_i32_14 = arith.constant 0 : i32
    %21 = arith.cmpi ne, %20, %c0_i32_14 : i32
    scf.if %21 {
      %c0_i32_132 = arith.constant 0 : i32
      %c1_i32_133 = arith.constant 1 : i32
      %c0_i32_134 = arith.constant 0 : i32
      %c0_i32_135 = arith.constant 0 : i32
      %c0_i32_136 = arith.constant 0 : i32
      %133 = tpu.memref_slice %arg2[%c0_i32_132, %c0_i32_134, %c0_i32_135, %c0_i32_136] : memref<2x16x16x128xbf16, #tpu.memory_space<any>> -> memref<1x1x16x128xbf16, #tpu.memory_space<any>>
      %134 = tpu.memref_squeeze %133 : memref<1x1x16x128xbf16, #tpu.memory_space<any>> -> memref<1x16x128xbf16, #tpu.memory_space<any>>
      %c0_i32_137 = arith.constant 0 : i32
      %c0_i32_138 = arith.constant 0 : i32
      %c0_i32_139 = arith.constant 0 : i32
      %135 = tpu.memref_slice %arg9[%9, %c0_i32_137, %c0_i32_138, %c0_i32_139] : memref<2x10x16x128xbf16, #tpu.memory_space<vmem>> -> memref<1x1x16x128xbf16, #tpu.memory_space<vmem>>
      %136 = tpu.memref_squeeze %135 : memref<1x1x16x128xbf16, #tpu.memory_space<vmem>> -> memref<1x16x128xbf16, #tpu.memory_space<vmem>>
      %137 = tpu.memref_slice %arg11[%9, %c1_i32_133] : memref<2x3x!tpu.dma_semaphore, #tpu.memory_space<semaphore_mem>> -> memref<1x1x!tpu.dma_semaphore, #tpu.memory_space<semaphore_mem>>
      %138 = tpu.memref_squeeze %137 : memref<1x1x!tpu.dma_semaphore, #tpu.memory_space<semaphore_mem>> -> memref<!tpu.dma_semaphore, #tpu.memory_space<semaphore_mem>>
      tpu.wait_dma2 semaphore(%138 : memref<!tpu.dma_semaphore, #tpu.memory_space<semaphore_mem>>) src(%134 : memref<1x16x128xbf16, #tpu.memory_space<any>>) dst(%136 : memref<1x16x128xbf16, #tpu.memory_space<vmem>>)
    } else {
    }
    %c1_i32_15 = arith.constant 1 : i32
    %22 = arith.cmpi slt, %arg1, %c1_i32_15 : i32
    %23 = arith.extui %22 : i1 to i32
    %c0_i32_16 = arith.constant 0 : i32
    %24 = arith.cmpi ne, %23, %c0_i32_16 : i32
    scf.if %24 {
      %c0_i32_132 = arith.constant 0 : i32
      %c2_i32_133 = arith.constant 2 : i32
      %c0_i32_134 = arith.constant 0 : i32
      %c0_i32_135 = arith.constant 0 : i32
      %c0_i32_136 = arith.constant 0 : i32
      %133 = tpu.memref_slice %arg2[%c0_i32_132, %c0_i32_134, %c0_i32_135, %c0_i32_136] : memref<2x16x16x128xbf16, #tpu.memory_space<any>> -> memref<1x1x16x128xbf16, #tpu.memory_space<any>>
      %134 = tpu.memref_squeeze %133 : memref<1x1x16x128xbf16, #tpu.memory_space<any>> -> memref<1x16x128xbf16, #tpu.memory_space<any>>
      %c9_i32 = arith.constant 9 : i32
      %c0_i32_137 = arith.constant 0 : i32
      %c0_i32_138 = arith.constant 0 : i32
      %135 = tpu.memref_slice %arg9[%9, %c9_i32, %c0_i32_137, %c0_i32_138] : memref<2x10x16x128xbf16, #tpu.memory_space<vmem>> -> memref<1x1x16x128xbf16, #tpu.memory_space<vmem>>
      %136 = tpu.memref_squeeze %135 : memref<1x1x16x128xbf16, #tpu.memory_space<vmem>> -> memref<1x16x128xbf16, #tpu.memory_space<vmem>>
      %137 = tpu.memref_slice %arg11[%9, %c2_i32_133] : memref<2x3x!tpu.dma_semaphore, #tpu.memory_space<semaphore_mem>> -> memref<1x1x!tpu.dma_semaphore, #tpu.memory_space<semaphore_mem>>
      %138 = tpu.memref_squeeze %137 : memref<1x1x!tpu.dma_semaphore, #tpu.memory_space<semaphore_mem>> -> memref<!tpu.dma_semaphore, #tpu.memory_space<semaphore_mem>>
      tpu.wait_dma2 semaphore(%138 : memref<!tpu.dma_semaphore, #tpu.memory_space<semaphore_mem>>) src(%134 : memref<1x16x128xbf16, #tpu.memory_space<any>>) dst(%136 : memref<1x16x128xbf16, #tpu.memory_space<vmem>>)
    } else {
    }
    %c1_i32_17 = arith.constant 1 : i32
    %25 = arith.addi %arg1, %c1_i32_17 : i32
    %c2_i32_18 = arith.constant 2 : i32
    %26 = arith.cmpi slt, %25, %c2_i32_18 : i32
    %27 = arith.extui %26 : i1 to i32
    %c0_i32_19 = arith.constant 0 : i32
    %28 = arith.cmpi ne, %27, %c0_i32_19 : i32
    scf.if %28 {
      %c1_i32_132 = arith.constant 1 : i32
      %133 = arith.addi %arg1, %c1_i32_132 : i32
      %c1_i32_133 = arith.constant 1 : i32
      %134 = arith.subi %c1_i32_133, %9 : i32
      %c8_i32 = arith.constant 8 : i32
      %135 = arith.muli %133, %c8_i32 : i32
      %c0_i32_134 = arith.constant 0 : i32
      %c0_i32_135 = arith.constant 0 : i32
      %c0_i32_136 = arith.constant 0 : i32
      %136 = tpu.memref_slice %arg2[%arg0, %135, %c0_i32_135, %c0_i32_136] : memref<2x16x16x128xbf16, #tpu.memory_space<any>> -> memref<1x8x16x128xbf16, #tpu.memory_space<any>>
      %137 = tpu.memref_squeeze %136 : memref<1x8x16x128xbf16, #tpu.memory_space<any>> -> memref<8x16x128xbf16, #tpu.memory_space<any>>
      %c1_i32_137 = arith.constant 1 : i32
      %c0_i32_138 = arith.constant 0 : i32
      %c0_i32_139 = arith.constant 0 : i32
      %138 = tpu.memref_slice %arg9[%134, %c1_i32_137, %c0_i32_138, %c0_i32_139] : memref<2x10x16x128xbf16, #tpu.memory_space<vmem>> -> memref<1x8x16x128xbf16, #tpu.memory_space<vmem>>
      %139 = tpu.memref_squeeze %138 : memref<1x8x16x128xbf16, #tpu.memory_space<vmem>> -> memref<8x16x128xbf16, #tpu.memory_space<vmem>>
      %140 = tpu.memref_slice %arg11[%134, %c0_i32_134] : memref<2x3x!tpu.dma_semaphore, #tpu.memory_space<semaphore_mem>> -> memref<1x1x!tpu.dma_semaphore, #tpu.memory_space<semaphore_mem>>
      %141 = tpu.memref_squeeze %140 : memref<1x1x!tpu.dma_semaphore, #tpu.memory_space<semaphore_mem>> -> memref<!tpu.dma_semaphore, #tpu.memory_space<semaphore_mem>>
      tpu.enqueue_dma source(%137 : memref<8x16x128xbf16, #tpu.memory_space<any>>) target(%139 : memref<8x16x128xbf16, #tpu.memory_space<vmem>>) target_semaphore(%141 : memref<!tpu.dma_semaphore, #tpu.memory_space<semaphore_mem>>)
      %c0_i32_140 = arith.constant 0 : i32
      %142 = arith.cmpi sgt, %133, %c0_i32_140 : i32
      %143 = arith.extui %142 : i1 to i32
      %c0_i32_141 = arith.constant 0 : i32
      %144 = arith.cmpi ne, %143, %c0_i32_141 : i32
      scf.if %144 {
        %c1_i32_144 = arith.constant 1 : i32
        %148 = arith.subi %135, %c1_i32_144 : i32
        %c1_i32_145 = arith.constant 1 : i32
        %c0_i32_146 = arith.constant 0 : i32
        %c0_i32_147 = arith.constant 0 : i32
        %149 = tpu.memref_slice %arg2[%arg0, %148, %c0_i32_146, %c0_i32_147] : memref<2x16x16x128xbf16, #tpu.memory_space<any>> -> memref<1x1x16x128xbf16, #tpu.memory_space<any>>
        %150 = tpu.memref_squeeze %149 : memref<1x1x16x128xbf16, #tpu.memory_space<any>> -> memref<1x16x128xbf16, #tpu.memory_space<any>>
        %c0_i32_148 = arith.constant 0 : i32
        %c0_i32_149 = arith.constant 0 : i32
        %c0_i32_150 = arith.constant 0 : i32
        %151 = tpu.memref_slice %arg9[%134, %c0_i32_148, %c0_i32_149, %c0_i32_150] : memref<2x10x16x128xbf16, #tpu.memory_space<vmem>> -> memref<1x1x16x128xbf16, #tpu.memory_space<vmem>>
        %152 = tpu.memref_squeeze %151 : memref<1x1x16x128xbf16, #tpu.memory_space<vmem>> -> memref<1x16x128xbf16, #tpu.memory_space<vmem>>
        %153 = tpu.memref_slice %arg11[%134, %c1_i32_145] : memref<2x3x!tpu.dma_semaphore, #tpu.memory_space<semaphore_mem>> -> memref<1x1x!tpu.dma_semaphore, #tpu.memory_space<semaphore_mem>>
        %154 = tpu.memref_squeeze %153 : memref<1x1x!tpu.dma_semaphore, #tpu.memory_space<semaphore_mem>> -> memref<!tpu.dma_semaphore, #tpu.memory_space<semaphore_mem>>
        tpu.enqueue_dma source(%150 : memref<1x16x128xbf16, #tpu.memory_space<any>>) target(%152 : memref<1x16x128xbf16, #tpu.memory_space<vmem>>) target_semaphore(%154 : memref<!tpu.dma_semaphore, #tpu.memory_space<semaphore_mem>>)
      } else {
      }
      %c1_i32_142 = arith.constant 1 : i32
      %145 = arith.cmpi slt, %133, %c1_i32_142 : i32
      %146 = arith.extui %145 : i1 to i32
      %c0_i32_143 = arith.constant 0 : i32
      %147 = arith.cmpi ne, %146, %c0_i32_143 : i32
      scf.if %147 {
        %c8_i32_144 = arith.constant 8 : i32
        %148 = arith.addi %135, %c8_i32_144 : i32
        %c2_i32_145 = arith.constant 2 : i32
        %c0_i32_146 = arith.constant 0 : i32
        %c0_i32_147 = arith.constant 0 : i32
        %149 = tpu.memref_slice %arg2[%arg0, %148, %c0_i32_146, %c0_i32_147] : memref<2x16x16x128xbf16, #tpu.memory_space<any>> -> memref<1x1x16x128xbf16, #tpu.memory_space<any>>
        %150 = tpu.memref_squeeze %149 : memref<1x1x16x128xbf16, #tpu.memory_space<any>> -> memref<1x16x128xbf16, #tpu.memory_space<any>>
        %c9_i32 = arith.constant 9 : i32
        %c0_i32_148 = arith.constant 0 : i32
        %c0_i32_149 = arith.constant 0 : i32
        %151 = tpu.memref_slice %arg9[%134, %c9_i32, %c0_i32_148, %c0_i32_149] : memref<2x10x16x128xbf16, #tpu.memory_space<vmem>> -> memref<1x1x16x128xbf16, #tpu.memory_space<vmem>>
        %152 = tpu.memref_squeeze %151 : memref<1x1x16x128xbf16, #tpu.memory_space<vmem>> -> memref<1x16x128xbf16, #tpu.memory_space<vmem>>
        %153 = tpu.memref_slice %arg11[%134, %c2_i32_145] : memref<2x3x!tpu.dma_semaphore, #tpu.memory_space<semaphore_mem>> -> memref<1x1x!tpu.dma_semaphore, #tpu.memory_space<semaphore_mem>>
        %154 = tpu.memref_squeeze %153 : memref<1x1x!tpu.dma_semaphore, #tpu.memory_space<semaphore_mem>> -> memref<!tpu.dma_semaphore, #tpu.memory_space<semaphore_mem>>
        tpu.enqueue_dma source(%150 : memref<1x16x128xbf16, #tpu.memory_space<any>>) target(%152 : memref<1x16x128xbf16, #tpu.memory_space<vmem>>) target_semaphore(%154 : memref<!tpu.dma_semaphore, #tpu.memory_space<semaphore_mem>>)
      } else {
      }
    } else {
    }
    %c0_i32_20 = arith.constant 0 : i32
    %29 = arith.cmpi eq, %arg1, %c0_i32_20 : i32
    %30 = arith.extui %29 : i1 to i32
    %c0_i32_21 = arith.constant 0 : i32
    %31 = arith.cmpi ne, %30, %c0_i32_21 : i32
    scf.if %31 {
      %cst_132 = arith.constant 0.000000e+00 : bf16
      %133 = vector.broadcast %cst_132 : bf16 to vector<16x128xbf16>
      %134 = arith.index_cast %9 : i32 to index
      %c0_133 = arith.constant 0 : index
      %c0_134 = arith.constant 0 : index
      %c0_135 = arith.constant 0 : index
      %135 = vector.load %arg9[%134, %c0_133, %c0_134, %c0_135] : memref<2x10x16x128xbf16, #tpu.memory_space<vmem>>, vector<1x1x16x128xbf16>
      %136 = vector.shape_cast %135 : vector<1x1x16x128xbf16> to vector<16x128xbf16>
      %137 = vector.shape_cast %133 : vector<16x128xbf16> to vector<1x1x16x128xbf16>
      tpu.vector_store %arg9[%134, %c0_133, %c0_134, %c0_135], %137 {strides = array<i32>} : memref<2x10x16x128xbf16, #tpu.memory_space<vmem>>, vector<1x1x16x128xbf16>,
    } else {
    }
    %c1_i32_22 = arith.constant 1 : i32
    %32 = arith.cmpi eq, %arg1, %c1_i32_22 : i32
    %33 = arith.extui %32 : i1 to i32
    %c0_i32_23 = arith.constant 0 : i32
    %34 = arith.cmpi ne, %33, %c0_i32_23 : i32
    scf.if %34 {
      %cst_132 = arith.constant 0.000000e+00 : bf16
      %133 = vector.broadcast %cst_132 : bf16 to vector<16x128xbf16>
      %134 = arith.index_cast %9 : i32 to index
      %c9 = arith.constant 9 : index
      %c0_133 = arith.constant 0 : index
      %c0_134 = arith.constant 0 : index
      %135 = vector.load %arg9[%134, %c9, %c0_133, %c0_134] : memref<2x10x16x128xbf16, #tpu.memory_space<vmem>>, vector<1x1x16x128xbf16>
      %136 = vector.shape_cast %135 : vector<1x1x16x128xbf16> to vector<16x128xbf16>
      %137 = vector.shape_cast %133 : vector<16x128xbf16> to vector<1x1x16x128xbf16>
      tpu.vector_store %arg9[%134, %c9, %c0_133, %c0_134], %137 {strides = array<i32>} : memref<2x10x16x128xbf16, #tpu.memory_space<vmem>>, vector<1x1x16x128xbf16>,
    } else {
    }
    %35 = arith.index_cast %9 : i32 to index
    %c0 = arith.constant 0 : index
    %c0_24 = arith.constant 0 : index
    %c0_25 = arith.constant 0 : index
    %36 = vector.load %arg9[%35, %c0, %c0_24, %c0_25] : memref<2x10x16x128xbf16, #tpu.memory_space<vmem>>, vector<1x10x16x128xbf16>
    %37 = vector.shape_cast %36 : vector<1x10x16x128xbf16> to vector<10x16x128xbf16>
    %c0_26 = arith.constant 0 : index
    %c1 = arith.constant 1 : index
    %c0_27 = arith.constant 0 : index
    %38 = vector.load %arg10[%c0_26, %c1, %c0_27] : memref<10x18x128xbf16, #tpu.memory_space<vmem>>, vector<10x16x128xbf16>
    tpu.vector_store %arg10[%c0_26, %c1, %c0_27], %37 {strides = array<i32>} : memref<10x18x128xbf16, #tpu.memory_space<vmem>>, vector<10x16x128xbf16>,
    %cst = arith.constant 0.000000e+00 : bf16
    %39 = vector.broadcast %cst : bf16 to vector<10x128xbf16>
    %c0_28 = arith.constant 0 : index
    %c0_29 = arith.constant 0 : index
    %c0_30 = arith.constant 0 : index
    %40 = vector.load %arg10[%c0_28, %c0_29, %c0_30] : memref<10x18x128xbf16, #tpu.memory_space<vmem>>, vector<10x1x128xbf16>
    %41 = vector.shape_cast %40 : vector<10x1x128xbf16> to vector<10x128xbf16>
    %42 = vector.shape_cast %39 : vector<10x128xbf16> to vector<10x1x128xbf16>
    tpu.vector_store %arg10[%c0_28, %c0_29, %c0_30], %42 {strides = array<i32>} : memref<10x18x128xbf16, #tpu.memory_space<vmem>>, vector<10x1x128xbf16>,
    %cst_31 = arith.constant 0.000000e+00 : bf16
    %43 = vector.broadcast %cst_31 : bf16 to vector<10x128xbf16>
    %c0_32 = arith.constant 0 : index
    %c17 = arith.constant 17 : index
    %c0_33 = arith.constant 0 : index
    %44 = vector.load %arg10[%c0_32, %c17, %c0_33] : memref<10x18x128xbf16, #tpu.memory_space<vmem>>, vector<10x1x128xbf16>
    %45 = vector.shape_cast %44 : vector<10x1x128xbf16> to vector<10x128xbf16>
    %46 = vector.shape_cast %43 : vector<10x128xbf16> to vector<10x1x128xbf16>
    tpu.vector_store %arg10[%c0_32, %c17, %c0_33], %46 {strides = array<i32>} : memref<10x18x128xbf16, #tpu.memory_space<vmem>>, vector<10x1x128xbf16>,
    %47 = vector.shape_cast %37 : vector<10x16x128xbf16> to vector<160x128xbf16>
    %c0_34 = arith.constant 0 : index
    %c0_35 = arith.constant 0 : index
    %c0_36 = arith.constant 0 : index
    %48 = vector.load %arg10[%c0_34, %c0_35, %c0_36] : memref<10x18x128xbf16, #tpu.memory_space<vmem>>, vector<10x16x128xbf16>
    %49 = vector.shape_cast %48 : vector<10x16x128xbf16> to vector<160x128xbf16>
    %c0_37 = arith.constant 0 : index
    %c2 = arith.constant 2 : index
    %c0_38 = arith.constant 0 : index
    %50 = vector.load %arg10[%c0_37, %c2, %c0_38] : memref<10x18x128xbf16, #tpu.memory_space<vmem>>, vector<10x16x128xbf16>
    %51 = vector.shape_cast %50 : vector<10x16x128xbf16> to vector<160x128xbf16>
    %52 = vector.extract_strided_slice %49 {offsets = [0, 0], sizes = [128, 128], strides = [1, 1]} : vector<160x128xbf16> to vector<128x128xbf16>
    %c0_39 = arith.constant 0 : index
    %c0_40 = arith.constant 0 : index
    %c0_41 = arith.constant 0 : index
    %c0_42 = arith.constant 0 : index
    %53 = vector.load %arg3[%c0_39, %c0_40, %c0_41, %c0_42] : memref<3x3x128x128xbf16, #tpu.memory_space<vmem>>, vector<1x1x128x128xbf16>
    %54 = vector.shape_cast %53 : vector<1x1x128x128xbf16> to vector<128x128xbf16>
    %cst_43 = arith.constant dense<0.000000e+00> : vector<128x128xf32>
    %55 = tpu.matmul %52, %54, %cst_43 {dimension_numbers = #tpu.dot_dimension_numbers<[1], [0], [0], [1], [0, 0, 1, 1], [], []>} : vector<128x128xbf16>, vector<128x128xbf16>, vector<128x128xf32> -> vector<128x128xf32>
    %c0_44 = arith.constant 0 : index
    %c0_45 = arith.constant 0 : index
    %56 = vector.load %arg12[%c0_44, %c0_45] : memref<128x128xf32, #tpu.memory_space<vmem>>, vector<128x128xf32>
    tpu.vector_store %arg12[%c0_44, %c0_45], %55 {strides = array<i32>} : memref<128x128xf32, #tpu.memory_space<vmem>>, vector<128x128xf32>,
    %57 = vector.extract_strided_slice %47 {offsets = [0, 0], sizes = [128, 128], strides = [1, 1]} : vector<160x128xbf16> to vector<128x128xbf16>
    %c0_46 = arith.constant 0 : index
    %c1_47 = arith.constant 1 : index
    %c0_48 = arith.constant 0 : index
    %c0_49 = arith.constant 0 : index
    %58 = vector.load %arg3[%c0_46, %c1_47, %c0_48, %c0_49] : memref<3x3x128x128xbf16, #tpu.memory_space<vmem>>, vector<1x1x128x128xbf16>
    %59 = vector.shape_cast %58 : vector<1x1x128x128xbf16> to vector<128x128xbf16>
    %cst_50 = arith.constant dense<0.000000e+00> : vector<128x128xf32>
    %60 = tpu.matmul %57, %59, %cst_50 {dimension_numbers = #tpu.dot_dimension_numbers<[1], [0], [0], [1], [0, 0, 1, 1], [], []>} : vector<128x128xbf16>, vector<128x128xbf16>, vector<128x128xf32> -> vector<128x128xf32>
    %c0_51 = arith.constant 0 : index
    %c0_52 = arith.constant 0 : index
    %61 = vector.load %arg12[%c0_51, %c0_52] : memref<128x128xf32, #tpu.memory_space<vmem>>, vector<128x128xf32>
    %62 = arith.addf %61, %60 : vector<128x128xf32>
    %c0_53 = arith.constant 0 : index
    %c0_54 = arith.constant 0 : index
    %63 = vector.load %arg12[%c0_53, %c0_54] : memref<128x128xf32, #tpu.memory_space<vmem>>, vector<128x128xf32>
    tpu.vector_store %arg12[%c0_53, %c0_54], %62 {strides = array<i32>} : memref<128x128xf32, #tpu.memory_space<vmem>>, vector<128x128xf32>,
    %64 = vector.extract_strided_slice %51 {offsets = [0, 0], sizes = [128, 128], strides = [1, 1]} : vector<160x128xbf16> to vector<128x128xbf16>
    %c0_55 = arith.constant 0 : index
    %c2_56 = arith.constant 2 : index
    %c0_57 = arith.constant 0 : index
    %c0_58 = arith.constant 0 : index
    %65 = vector.load %arg3[%c0_55, %c2_56, %c0_57, %c0_58] : memref<3x3x128x128xbf16, #tpu.memory_space<vmem>>, vector<1x1x128x128xbf16>
    %66 = vector.shape_cast %65 : vector<1x1x128x128xbf16> to vector<128x128xbf16>
    %cst_59 = arith.constant dense<0.000000e+00> : vector<128x128xf32>
    %67 = tpu.matmul %64, %66, %cst_59 {dimension_numbers = #tpu.dot_dimension_numbers<[1], [0], [0], [1], [0, 0, 1, 1], [], []>} : vector<128x128xbf16>, vector<128x128xbf16>, vector<128x128xf32> -> vector<128x128xf32>
    %c0_60 = arith.constant 0 : index
    %c0_61 = arith.constant 0 : index
    %68 = vector.load %arg12[%c0_60, %c0_61] : memref<128x128xf32, #tpu.memory_space<vmem>>, vector<128x128xf32>
    %69 = arith.addf %68, %67 : vector<128x128xf32>
    %c0_62 = arith.constant 0 : index
    %c0_63 = arith.constant 0 : index
    %70 = vector.load %arg12[%c0_62, %c0_63] : memref<128x128xf32, #tpu.memory_space<vmem>>, vector<128x128xf32>
    tpu.vector_store %arg12[%c0_62, %c0_63], %69 {strides = array<i32>} : memref<128x128xf32, #tpu.memory_space<vmem>>, vector<128x128xf32>,
    %71 = vector.extract_strided_slice %49 {offsets = [16, 0], sizes = [128, 128], strides = [1, 1]} : vector<160x128xbf16> to vector<128x128xbf16>
    %c1_64 = arith.constant 1 : index
    %c0_65 = arith.constant 0 : index
    %c0_66 = arith.constant 0 : index
    %c0_67 = arith.constant 0 : index
    %72 = vector.load %arg3[%c1_64, %c0_65, %c0_66, %c0_67] : memref<3x3x128x128xbf16, #tpu.memory_space<vmem>>, vector<1x1x128x128xbf16>
    %73 = vector.shape_cast %72 : vector<1x1x128x128xbf16> to vector<128x128xbf16>
    %cst_68 = arith.constant dense<0.000000e+00> : vector<128x128xf32>
    %74 = tpu.matmul %71, %73, %cst_68 {dimension_numbers = #tpu.dot_dimension_numbers<[1], [0], [0], [1], [0, 0, 1, 1], [], []>} : vector<128x128xbf16>, vector<128x128xbf16>, vector<128x128xf32> -> vector<128x128xf32>
    %c0_69 = arith.constant 0 : index
    %c0_70 = arith.constant 0 : index
    %75 = vector.load %arg12[%c0_69, %c0_70] : memref<128x128xf32, #tpu.memory_space<vmem>>, vector<128x128xf32>
    %76 = arith.addf %75, %74 : vector<128x128xf32>
    %c0_71 = arith.constant 0 : index
    %c0_72 = arith.constant 0 : index
    %77 = vector.load %arg12[%c0_71, %c0_72] : memref<128x128xf32, #tpu.memory_space<vmem>>, vector<128x128xf32>
    tpu.vector_store %arg12[%c0_71, %c0_72], %76 {strides = array<i32>} : memref<128x128xf32, #tpu.memory_space<vmem>>, vector<128x128xf32>,
    %78 = vector.extract_strided_slice %47 {offsets = [16, 0], sizes = [128, 128], strides = [1, 1]} : vector<160x128xbf16> to vector<128x128xbf16>
    %c1_73 = arith.constant 1 : index
    %c1_74 = arith.constant 1 : index
    %c0_75 = arith.constant 0 : index
    %c0_76 = arith.constant 0 : index
    %79 = vector.load %arg3[%c1_73, %c1_74, %c0_75, %c0_76] : memref<3x3x128x128xbf16, #tpu.memory_space<vmem>>, vector<1x1x128x128xbf16>
    %80 = vector.shape_cast %79 : vector<1x1x128x128xbf16> to vector<128x128xbf16>
    %cst_77 = arith.constant dense<0.000000e+00> : vector<128x128xf32>
    %81 = tpu.matmul %78, %80, %cst_77 {dimension_numbers = #tpu.dot_dimension_numbers<[1], [0], [0], [1], [0, 0, 1, 1], [], []>} : vector<128x128xbf16>, vector<128x128xbf16>, vector<128x128xf32> -> vector<128x128xf32>
    %c0_78 = arith.constant 0 : index
    %c0_79 = arith.constant 0 : index
    %82 = vector.load %arg12[%c0_78, %c0_79] : memref<128x128xf32, #tpu.memory_space<vmem>>, vector<128x128xf32>
    %83 = arith.addf %82, %81 : vector<128x128xf32>
    %c0_80 = arith.constant 0 : index
    %c0_81 = arith.constant 0 : index
    %84 = vector.load %arg12[%c0_80, %c0_81] : memref<128x128xf32, #tpu.memory_space<vmem>>, vector<128x128xf32>
    tpu.vector_store %arg12[%c0_80, %c0_81], %83 {strides = array<i32>} : memref<128x128xf32, #tpu.memory_space<vmem>>, vector<128x128xf32>,
    %85 = vector.extract_strided_slice %51 {offsets = [16, 0], sizes = [128, 128], strides = [1, 1]} : vector<160x128xbf16> to vector<128x128xbf16>
    %c1_82 = arith.constant 1 : index
    %c2_83 = arith.constant 2 : index
    %c0_84 = arith.constant 0 : index
    %c0_85 = arith.constant 0 : index
    %86 = vector.load %arg3[%c1_82, %c2_83, %c0_84, %c0_85] : memref<3x3x128x128xbf16, #tpu.memory_space<vmem>>, vector<1x1x128x128xbf16>
    %87 = vector.shape_cast %86 : vector<1x1x128x128xbf16> to vector<128x128xbf16>
    %cst_86 = arith.constant dense<0.000000e+00> : vector<128x128xf32>
    %88 = tpu.matmul %85, %87, %cst_86 {dimension_numbers = #tpu.dot_dimension_numbers<[1], [0], [0], [1], [0, 0, 1, 1], [], []>} : vector<128x128xbf16>, vector<128x128xbf16>, vector<128x128xf32> -> vector<128x128xf32>
    %c0_87 = arith.constant 0 : index
    %c0_88 = arith.constant 0 : index
    %89 = vector.load %arg12[%c0_87, %c0_88] : memref<128x128xf32, #tpu.memory_space<vmem>>, vector<128x128xf32>
    %90 = arith.addf %89, %88 : vector<128x128xf32>
    %c0_89 = arith.constant 0 : index
    %c0_90 = arith.constant 0 : index
    %91 = vector.load %arg12[%c0_89, %c0_90] : memref<128x128xf32, #tpu.memory_space<vmem>>, vector<128x128xf32>
    tpu.vector_store %arg12[%c0_89, %c0_90], %90 {strides = array<i32>} : memref<128x128xf32, #tpu.memory_space<vmem>>, vector<128x128xf32>,
    %92 = vector.extract_strided_slice %49 {offsets = [32, 0], sizes = [128, 128], strides = [1, 1]} : vector<160x128xbf16> to vector<128x128xbf16>
    %c2_91 = arith.constant 2 : index
    %c0_92 = arith.constant 0 : index
    %c0_93 = arith.constant 0 : index
    %c0_94 = arith.constant 0 : index
    %93 = vector.load %arg3[%c2_91, %c0_92, %c0_93, %c0_94] : memref<3x3x128x128xbf16, #tpu.memory_space<vmem>>, vector<1x1x128x128xbf16>
    %94 = vector.shape_cast %93 : vector<1x1x128x128xbf16> to vector<128x128xbf16>
    %cst_95 = arith.constant dense<0.000000e+00> : vector<128x128xf32>
    %95 = tpu.matmul %92, %94, %cst_95 {dimension_numbers = #tpu.dot_dimension_numbers<[1], [0], [0], [1], [0, 0, 1, 1], [], []>} : vector<128x128xbf16>, vector<128x128xbf16>, vector<128x128xf32> -> vector<128x128xf32>
    %c0_96 = arith.constant 0 : index
    %c0_97 = arith.constant 0 : index
    %96 = vector.load %arg12[%c0_96, %c0_97] : memref<128x128xf32, #tpu.memory_space<vmem>>, vector<128x128xf32>
    %97 = arith.addf %96, %95 : vector<128x128xf32>
    %c0_98 = arith.constant 0 : index
    %c0_99 = arith.constant 0 : index
    %98 = vector.load %arg12[%c0_98, %c0_99] : memref<128x128xf32, #tpu.memory_space<vmem>>, vector<128x128xf32>
    tpu.vector_store %arg12[%c0_98, %c0_99], %97 {strides = array<i32>} : memref<128x128xf32, #tpu.memory_space<vmem>>, vector<128x128xf32>,
    %99 = vector.extract_strided_slice %47 {offsets = [32, 0], sizes = [128, 128], strides = [1, 1]} : vector<160x128xbf16> to vector<128x128xbf16>
    %c2_100 = arith.constant 2 : index
    %c1_101 = arith.constant 1 : index
    %c0_102 = arith.constant 0 : index
    %c0_103 = arith.constant 0 : index
    %100 = vector.load %arg3[%c2_100, %c1_101, %c0_102, %c0_103] : memref<3x3x128x128xbf16, #tpu.memory_space<vmem>>, vector<1x1x128x128xbf16>
    %101 = vector.shape_cast %100 : vector<1x1x128x128xbf16> to vector<128x128xbf16>
    %cst_104 = arith.constant dense<0.000000e+00> : vector<128x128xf32>
    %102 = tpu.matmul %99, %101, %cst_104 {dimension_numbers = #tpu.dot_dimension_numbers<[1], [0], [0], [1], [0, 0, 1, 1], [], []>} : vector<128x128xbf16>, vector<128x128xbf16>, vector<128x128xf32> -> vector<128x128xf32>
    %c0_105 = arith.constant 0 : index
    %c0_106 = arith.constant 0 : index
    %103 = vector.load %arg12[%c0_105, %c0_106] : memref<128x128xf32, #tpu.memory_space<vmem>>, vector<128x128xf32>
    %104 = arith.addf %103, %102 : vector<128x128xf32>
    %c0_107 = arith.constant 0 : index
    %c0_108 = arith.constant 0 : index
    %105 = vector.load %arg12[%c0_107, %c0_108] : memref<128x128xf32, #tpu.memory_space<vmem>>, vector<128x128xf32>
    tpu.vector_store %arg12[%c0_107, %c0_108], %104 {strides = array<i32>} : memref<128x128xf32, #tpu.memory_space<vmem>>, vector<128x128xf32>,
    %106 = vector.extract_strided_slice %51 {offsets = [32, 0], sizes = [128, 128], strides = [1, 1]} : vector<160x128xbf16> to vector<128x128xbf16>
    %c2_109 = arith.constant 2 : index
    %c2_110 = arith.constant 2 : index
    %c0_111 = arith.constant 0 : index
    %c0_112 = arith.constant 0 : index
    %107 = vector.load %arg3[%c2_109, %c2_110, %c0_111, %c0_112] : memref<3x3x128x128xbf16, #tpu.memory_space<vmem>>, vector<1x1x128x128xbf16>
    %108 = vector.shape_cast %107 : vector<1x1x128x128xbf16> to vector<128x128xbf16>
    %cst_113 = arith.constant dense<0.000000e+00> : vector<128x128xf32>
    %109 = tpu.matmul %106, %108, %cst_113 {dimension_numbers = #tpu.dot_dimension_numbers<[1], [0], [0], [1], [0, 0, 1, 1], [], []>} : vector<128x128xbf16>, vector<128x128xbf16>, vector<128x128xf32> -> vector<128x128xf32>
    %c0_114 = arith.constant 0 : index
    %c0_115 = arith.constant 0 : index
    %110 = vector.load %arg12[%c0_114, %c0_115] : memref<128x128xf32, #tpu.memory_space<vmem>>, vector<128x128xf32>
    %111 = arith.addf %110, %109 : vector<128x128xf32>
    %c0_116 = arith.constant 0 : index
    %c0_117 = arith.constant 0 : index
    %112 = vector.load %arg12[%c0_116, %c0_117] : memref<128x128xf32, #tpu.memory_space<vmem>>, vector<128x128xf32>
    tpu.vector_store %arg12[%c0_116, %c0_117], %111 {strides = array<i32>} : memref<128x128xf32, #tpu.memory_space<vmem>>, vector<128x128xf32>,
    %c0_118 = arith.constant 0 : index
    %c0_119 = arith.constant 0 : index
    %113 = vector.load %arg12[%c0_118, %c0_119] : memref<128x128xf32, #tpu.memory_space<vmem>>, vector<128x128xf32>
    %c0_120 = arith.constant 0 : index
    %c0_121 = arith.constant 0 : index
    %114 = vector.load %arg4[%c0_120, %c0_121] : memref<1x128xf32, #tpu.memory_space<vmem>>, vector<1x128xf32>
    %115 = vector.shape_cast %114 : vector<1x128xf32> to vector<128xf32>
    %116 = vector.shape_cast %115 : vector<128xf32> to vector<1x128xf32>
    %117 = vector.broadcast %116 : vector<1x128xf32> to vector<128x128xf32>
    %118 = arith.addf %113, %117 : vector<128x128xf32>
    %119 = vector.shape_cast %118 : vector<128x128xf32> to vector<8x16x128xf32>
    %120 = arith.truncf %119 : vector<8x16x128xf32> to vector<8x16x128xbf16>
    %c0_122 = arith.constant 0 : index
    %c0_123 = arith.constant 0 : index
    %c0_124 = arith.constant 0 : index
    %c0_125 = arith.constant 0 : index
    %121 = vector.load %arg7[%c0_122, %c0_123, %c0_124, %c0_125] : memref<1x8x16x128xbf16, #tpu.memory_space<vmem>>, vector<1x8x16x128xbf16>
    %122 = vector.shape_cast %121 : vector<1x8x16x128xbf16> to vector<8x16x128xbf16>
    %123 = vector.shape_cast %120 : vector<8x16x128xbf16> to vector<1x8x16x128xbf16>
    tpu.vector_store %arg7[%c0_122, %c0_123, %c0_124, %c0_125], %123 {strides = array<i32>} : memref<1x8x16x128xbf16, #tpu.memory_space<vmem>>, vector<1x8x16x128xbf16>,
    %cst_126 = arith.constant dense<0.000000e+00> : vector<128xf32>
    %124 = vector.multi_reduction <add>, %118, %cst_126 [0] : vector<128x128xf32> to vector<128xf32>
    %125 = vector.shape_cast %124 : vector<128xf32> to vector<1x128xf32>
    %126 = arith.mulf %118, %118 : vector<128x128xf32>
    %cst_127 = arith.constant dense<0.000000e+00> : vector<128xf32>
    %127 = vector.multi_reduction <add>, %126, %cst_127 [0] : vector<128x128xf32> to vector<128xf32>
    %128 = vector.shape_cast %127 : vector<128xf32> to vector<1x128xf32>
    %129 = tpu.concatenate %125, %128 in 0 : vector<1x128xf32>, vector<1x128xf32> -> vector<2x128xf32>
    %c0_128 = arith.constant 0 : index
    %c0_129 = arith.constant 0 : index
    %c0_130 = arith.constant 0 : index
    %c0_131 = arith.constant 0 : index
    %130 = vector.load %arg8[%c0_128, %c0_129, %c0_130, %c0_131] : memref<1x1x2x128xf32, #tpu.memory_space<vmem>>, vector<1x1x2x128xf32>
    %131 = vector.shape_cast %130 : vector<1x1x2x128xf32> to vector<2x128xf32>
    %132 = vector.shape_cast %129 : vector<2x128xf32> to vector<1x1x2x128xf32>
    tpu.vector_store %arg8[%c0_128, %c0_129, %c0_130, %c0_131], %132 {strides = array<i32>} : memref<1x1x2x128xf32, #tpu.memory_space<vmem>>, vector<1x1x2x128xf32>,
    return
  }
  func.func @transform_1(%arg0: i32, %arg1: i32) -> (i32, i32, i32, i32) {
    %c0_i32 = arith.constant 0 : i32
    %c0_i32_0 = arith.constant 0 : i32
    %c0_i32_1 = arith.constant 0 : i32
    %c0_i32_2 = arith.constant 0 : i32
    %c0_i32_3 = arith.constant 0 : i32
    return %c0_i32, %c0_i32_0, %c0_i32_1, %c0_i32_2 : i32, i32, i32, i32
  }
  func.func @transform_2(%arg0: i32, %arg1: i32) -> (i32, i32) {
    %c0_i32 = arith.constant 0 : i32
    %c0_i32_0 = arith.constant 0 : i32
    %c0_i32_1 = arith.constant 0 : i32
    return %c0_i32, %c0_i32_0 : i32, i32
  }
  func.func @transform_3(%arg0: i32, %arg1: i32) -> (i32, i32) {
    %c0_i32 = arith.constant 0 : i32
    %c0_i32_0 = arith.constant 0 : i32
    %c0_i32_1 = arith.constant 0 : i32
    return %c0_i32, %c0_i32_0 : i32, i32
  }
  func.func @transform_4(%arg0: i32, %arg1: i32) -> (i32, i32) {
    %c0_i32 = arith.constant 0 : i32
    %c0_i32_0 = arith.constant 0 : i32
    %c0_i32_1 = arith.constant 0 : i32
    return %c0_i32, %c0_i32_0 : i32, i32
  }
  func.func @transform_5(%arg0: i32, %arg1: i32) -> (i32, i32, i32, i32) {
    %c0_i32 = arith.constant 0 : i32
    %c0_i32_0 = arith.constant 0 : i32
    %c0_i32_1 = arith.constant 0 : i32
    return %arg0, %arg1, %c0_i32, %c0_i32_0 : i32, i32, i32, i32
  }
  func.func @transform_6(%arg0: i32, %arg1: i32) -> (i32, i32, i32, i32) {
    %c0_i32 = arith.constant 0 : i32
    %c0_i32_0 = arith.constant 0 : i32
    %c0_i32_1 = arith.constant 0 : i32
    return %arg0, %arg1, %c0_i32, %c0_i32_0 : i32, i32, i32, i32
  }
}

module attributes {stable_mosaic.version = 11 : i64} {
  func.func @_bn_relu_kernel(%arg0: i32, %arg1: i32, %arg2: memref<1x8x16x128xbf16, #tpu.memory_space<vmem>>, %arg3: memref<1x128xf32, #tpu.memory_space<vmem>>, %arg4: memref<1x128xf32, #tpu.memory_space<vmem>>, %arg5: memref<1x8x16x128xf32, #tpu.memory_space<vmem>>) attributes {dimension_semantics = [#tpu.dimension_semantics<parallel>, #tpu.dimension_semantics<parallel>], iteration_bounds = array<i64: 2, 2>, scalar_prefetch = 0 : i64, scratch_operands = 0 : i64, tpu.core_type = #tpu.core_type<tc>, window_params = [{transform_indices = @transform_0, window_bounds = array<i64: 1, 8, 16, 128>}, {pipeline_mode = #tpu.pipeline_mode<synchronous>, transform_indices = @transform_1, window_bounds = array<i64: 1, 128>}, {pipeline_mode = #tpu.pipeline_mode<synchronous>, transform_indices = @transform_2, window_bounds = array<i64: 1, 128>}, {transform_indices = @transform_3, window_bounds = array<i64: 1, 8, 16, 128>}]} {
    %c0 = arith.constant 0 : index
    %c0_0 = arith.constant 0 : index
    %c0_1 = arith.constant 0 : index
    %c0_2 = arith.constant 0 : index
    %0 = vector.load %arg2[%c0, %c0_0, %c0_1, %c0_2] : memref<1x8x16x128xbf16, #tpu.memory_space<vmem>>, vector<1x8x16x128xbf16>
    %1 = arith.extf %0 : vector<1x8x16x128xbf16> to vector<1x8x16x128xf32>
    %c0_3 = arith.constant 0 : index
    %c0_4 = arith.constant 0 : index
    %2 = vector.load %arg3[%c0_3, %c0_4] : memref<1x128xf32, #tpu.memory_space<vmem>>, vector<1x128xf32>
    %3 = vector.shape_cast %2 : vector<1x128xf32> to vector<128xf32>
    %4 = vector.shape_cast %3 : vector<128xf32> to vector<1x1x1x128xf32>
    %5 = vector.broadcast %4 : vector<1x1x1x128xf32> to vector<1x8x16x128xf32>
    %6 = arith.mulf %1, %5 : vector<1x8x16x128xf32>
    %c0_5 = arith.constant 0 : index
    %c0_6 = arith.constant 0 : index
    %7 = vector.load %arg4[%c0_5, %c0_6] : memref<1x128xf32, #tpu.memory_space<vmem>>, vector<1x128xf32>
    %8 = vector.shape_cast %7 : vector<1x128xf32> to vector<128xf32>
    %9 = vector.shape_cast %8 : vector<128xf32> to vector<1x1x1x128xf32>
    %10 = vector.broadcast %9 : vector<1x1x1x128xf32> to vector<1x8x16x128xf32>
    %11 = arith.addf %6, %10 : vector<1x8x16x128xf32>
    %cst = arith.constant 0.000000e+00 : f32
    %12 = vector.broadcast %cst : f32 to vector<1x8x16x128xf32>
    %13 = arith.maximumf %11, %12 : vector<1x8x16x128xf32>
    %c0_7 = arith.constant 0 : index
    %c0_8 = arith.constant 0 : index
    %c0_9 = arith.constant 0 : index
    %c0_10 = arith.constant 0 : index
    %14 = vector.load %arg5[%c0_7, %c0_8, %c0_9, %c0_10] : memref<1x8x16x128xf32, #tpu.memory_space<vmem>>, vector<1x8x16x128xf32>
    tpu.vector_store %arg5[%c0_7, %c0_8, %c0_9, %c0_10], %13 {strides = array<i32>} : memref<1x8x16x128xf32, #tpu.memory_space<vmem>>, vector<1x8x16x128xf32>,
    return
  }
  func.func @transform_0(%arg0: i32, %arg1: i32) -> (i32, i32, i32, i32) {
    %c0_i32 = arith.constant 0 : i32
    %c0_i32_0 = arith.constant 0 : i32
    %c0_i32_1 = arith.constant 0 : i32
    return %arg0, %arg1, %c0_i32, %c0_i32_0 : i32, i32, i32, i32
  }
  func.func @transform_1(%arg0: i32, %arg1: i32) -> (i32, i32) {
    %c0_i32 = arith.constant 0 : i32
    %c0_i32_0 = arith.constant 0 : i32
    %c0_i32_1 = arith.constant 0 : i32
    return %c0_i32, %c0_i32_0 : i32, i32
  }
  func.func @transform_2(%arg0: i32, %arg1: i32) -> (i32, i32) {
    %c0_i32 = arith.constant 0 : i32
    %c0_i32_0 = arith.constant 0 : i32
    %c0_i32_1 = arith.constant 0 : i32
    return %c0_i32, %c0_i32_0 : i32, i32
  }
  func.func @transform_3(%arg0: i32, %arg1: i32) -> (i32, i32, i32, i32) {
    %c0_i32 = arith.constant 0 : i32
    %c0_i32_0 = arith.constant 0 : i32
    %c0_i32_1 = arith.constant 0 : i32
    return %arg0, %arg1, %c0_i32, %c0_i32_0 : i32, i32, i32, i32
  }
}

module attributes {stable_mosaic.version = 11 : i64} {
  func.func @_conv_pass_kernel(%arg0: i32, %arg1: i32, %arg2: memref<2x16x16x128xbf16, #tpu.memory_space<any>>, %arg3: memref<3x3x128x128xbf16, #tpu.memory_space<vmem>>, %arg4: memref<1x128xf32, #tpu.memory_space<vmem>>, %arg5: memref<1x128xf32, #tpu.memory_space<vmem>>, %arg6: memref<1x128xf32, #tpu.memory_space<vmem>>, %arg7: memref<1x8x16x128xbf16, #tpu.memory_space<vmem>>, %arg8: memref<1x1x2x128xf32, #tpu.memory_space<vmem>>, %arg9: memref<2x10x16x128xbf16, #tpu.memory_space<vmem>>, %arg10: memref<10x18x128xbf16, #tpu.memory_space<vmem>>, %arg11: memref<2x3x!tpu.dma_semaphore, #tpu.memory_space<semaphore_mem>>, %arg12: memref<128x128xf32, #tpu.memory_space<vmem>>) attributes {dimension_semantics = [#tpu.dimension_semantics<parallel>, #tpu.dimension_semantics<arbitrary>], iteration_bounds = array<i64: 2, 2>, scalar_prefetch = 0 : i64, scratch_operands = 4 : i64, tpu.core_type = #tpu.core_type<tc>, window_params = [{}, {pipeline_mode = #tpu.pipeline_mode<synchronous>, transform_indices = @transform_1, window_bounds = array<i64: 3, 3, 128, 128>}, {pipeline_mode = #tpu.pipeline_mode<synchronous>, transform_indices = @transform_2, window_bounds = array<i64: 1, 128>}, {pipeline_mode = #tpu.pipeline_mode<synchronous>, transform_indices = @transform_3, window_bounds = array<i64: 1, 128>}, {pipeline_mode = #tpu.pipeline_mode<synchronous>, transform_indices = @transform_4, window_bounds = array<i64: 1, 128>}, {transform_indices = @transform_5, window_bounds = array<i64: 1, 8, 16, 128>}, {transform_indices = @transform_6, window_bounds = array<i64: 1, 1, 2, 128>}]} {
    %c2_i32 = arith.constant 2 : i32
    %c0_i32 = arith.constant 0 : i32
    %0 = arith.cmpi eq, %c2_i32, %c0_i32 : i32
    %c1_i32 = arith.constant 1 : i32
    %1 = arith.select %0, %c1_i32, %c2_i32 : i32
    %2 = arith.remsi %arg1, %1 : i32
    %c0_i32_0 = arith.constant 0 : i32
    %3 = arith.cmpi ne, %2, %c0_i32_0 : i32
    %c0_i32_1 = arith.constant 0 : i32
    %4 = arith.cmpi slt, %2, %c0_i32_1 : i32
    %c0_i32_2 = arith.constant 0 : i32
    %5 = arith.cmpi slt, %1, %c0_i32_2 : i32
    %6 = arith.xori %4, %5 : i1
    %7 = arith.andi %6, %3 : i1
    %8 = arith.addi %2, %1 : i32
    %9 = arith.select %7, %8, %2 : i32
    %c0_i32_3 = arith.constant 0 : i32
    %10 = arith.cmpi eq, %arg1, %c0_i32_3 : i32
    %11 = arith.extui %10 : i1 to i32
    %c0_i32_4 = arith.constant 0 : i32
    %12 = arith.cmpi ne, %11, %c0_i32_4 : i32
    scf.if %12 {
      %c8_i32_140 = arith.constant 8 : i32
      %161 = arith.muli %arg1, %c8_i32_140 : i32
      %c0_i32_141 = arith.constant 0 : i32
      %c0_i32_142 = arith.constant 0 : i32
      %c0_i32_143 = arith.constant 0 : i32
      %162 = tpu.memref_slice %arg2[%arg0, %161, %c0_i32_142, %c0_i32_143] : memref<2x16x16x128xbf16, #tpu.memory_space<any>> -> memref<1x8x16x128xbf16, #tpu.memory_space<any>>
      %163 = tpu.memref_squeeze %162 : memref<1x8x16x128xbf16, #tpu.memory_space<any>> -> memref<8x16x128xbf16, #tpu.memory_space<any>>
      %c1_i32_144 = arith.constant 1 : i32
      %c0_i32_145 = arith.constant 0 : i32
      %c0_i32_146 = arith.constant 0 : i32
      %164 = tpu.memref_slice %arg9[%9, %c1_i32_144, %c0_i32_145, %c0_i32_146] : memref<2x10x16x128xbf16, #tpu.memory_space<vmem>> -> memref<1x8x16x128xbf16, #tpu.memory_space<vmem>>
      %165 = tpu.memref_squeeze %164 : memref<1x8x16x128xbf16, #tpu.memory_space<vmem>> -> memref<8x16x128xbf16, #tpu.memory_space<vmem>>
      %166 = tpu.memref_slice %arg11[%9, %c0_i32_141] : memref<2x3x!tpu.dma_semaphore, #tpu.memory_space<semaphore_mem>> -> memref<1x1x!tpu.dma_semaphore, #tpu.memory_space<semaphore_mem>>
      %167 = tpu.memref_squeeze %166 : memref<1x1x!tpu.dma_semaphore, #tpu.memory_space<semaphore_mem>> -> memref<!tpu.dma_semaphore, #tpu.memory_space<semaphore_mem>>
      tpu.enqueue_dma source(%163 : memref<8x16x128xbf16, #tpu.memory_space<any>>) target(%165 : memref<8x16x128xbf16, #tpu.memory_space<vmem>>) target_semaphore(%167 : memref<!tpu.dma_semaphore, #tpu.memory_space<semaphore_mem>>)
      %c0_i32_147 = arith.constant 0 : i32
      %168 = arith.cmpi sgt, %arg1, %c0_i32_147 : i32
      %169 = arith.extui %168 : i1 to i32
      %c0_i32_148 = arith.constant 0 : i32
      %170 = arith.cmpi ne, %169, %c0_i32_148 : i32
      scf.if %170 {
        %c1_i32_151 = arith.constant 1 : i32
        %174 = arith.subi %161, %c1_i32_151 : i32
        %c1_i32_152 = arith.constant 1 : i32
        %c0_i32_153 = arith.constant 0 : i32
        %c0_i32_154 = arith.constant 0 : i32
        %175 = tpu.memref_slice %arg2[%arg0, %174, %c0_i32_153, %c0_i32_154] : memref<2x16x16x128xbf16, #tpu.memory_space<any>> -> memref<1x1x16x128xbf16, #tpu.memory_space<any>>
        %176 = tpu.memref_squeeze %175 : memref<1x1x16x128xbf16, #tpu.memory_space<any>> -> memref<1x16x128xbf16, #tpu.memory_space<any>>
        %c0_i32_155 = arith.constant 0 : i32
        %c0_i32_156 = arith.constant 0 : i32
        %c0_i32_157 = arith.constant 0 : i32
        %177 = tpu.memref_slice %arg9[%9, %c0_i32_155, %c0_i32_156, %c0_i32_157] : memref<2x10x16x128xbf16, #tpu.memory_space<vmem>> -> memref<1x1x16x128xbf16, #tpu.memory_space<vmem>>
        %178 = tpu.memref_squeeze %177 : memref<1x1x16x128xbf16, #tpu.memory_space<vmem>> -> memref<1x16x128xbf16, #tpu.memory_space<vmem>>
        %179 = tpu.memref_slice %arg11[%9, %c1_i32_152] : memref<2x3x!tpu.dma_semaphore, #tpu.memory_space<semaphore_mem>> -> memref<1x1x!tpu.dma_semaphore, #tpu.memory_space<semaphore_mem>>
        %180 = tpu.memref_squeeze %179 : memref<1x1x!tpu.dma_semaphore, #tpu.memory_space<semaphore_mem>> -> memref<!tpu.dma_semaphore, #tpu.memory_space<semaphore_mem>>
        tpu.enqueue_dma source(%176 : memref<1x16x128xbf16, #tpu.memory_space<any>>) target(%178 : memref<1x16x128xbf16, #tpu.memory_space<vmem>>) target_semaphore(%180 : memref<!tpu.dma_semaphore, #tpu.memory_space<semaphore_mem>>)
      } else {
      }
      %c1_i32_149 = arith.constant 1 : i32
      %171 = arith.cmpi slt, %arg1, %c1_i32_149 : i32
      %172 = arith.extui %171 : i1 to i32
      %c0_i32_150 = arith.constant 0 : i32
      %173 = arith.cmpi ne, %172, %c0_i32_150 : i32
      scf.if %173 {
        %c8_i32_151 = arith.constant 8 : i32
        %174 = arith.addi %161, %c8_i32_151 : i32
        %c2_i32_152 = arith.constant 2 : i32
        %c0_i32_153 = arith.constant 0 : i32
        %c0_i32_154 = arith.constant 0 : i32
        %175 = tpu.memref_slice %arg2[%arg0, %174, %c0_i32_153, %c0_i32_154] : memref<2x16x16x128xbf16, #tpu.memory_space<any>> -> memref<1x1x16x128xbf16, #tpu.memory_space<any>>
        %176 = tpu.memref_squeeze %175 : memref<1x1x16x128xbf16, #tpu.memory_space<any>> -> memref<1x16x128xbf16, #tpu.memory_space<any>>
        %c9_i32 = arith.constant 9 : i32
        %c0_i32_155 = arith.constant 0 : i32
        %c0_i32_156 = arith.constant 0 : i32
        %177 = tpu.memref_slice %arg9[%9, %c9_i32, %c0_i32_155, %c0_i32_156] : memref<2x10x16x128xbf16, #tpu.memory_space<vmem>> -> memref<1x1x16x128xbf16, #tpu.memory_space<vmem>>
        %178 = tpu.memref_squeeze %177 : memref<1x1x16x128xbf16, #tpu.memory_space<vmem>> -> memref<1x16x128xbf16, #tpu.memory_space<vmem>>
        %179 = tpu.memref_slice %arg11[%9, %c2_i32_152] : memref<2x3x!tpu.dma_semaphore, #tpu.memory_space<semaphore_mem>> -> memref<1x1x!tpu.dma_semaphore, #tpu.memory_space<semaphore_mem>>
        %180 = tpu.memref_squeeze %179 : memref<1x1x!tpu.dma_semaphore, #tpu.memory_space<semaphore_mem>> -> memref<!tpu.dma_semaphore, #tpu.memory_space<semaphore_mem>>
        tpu.enqueue_dma source(%176 : memref<1x16x128xbf16, #tpu.memory_space<any>>) target(%178 : memref<1x16x128xbf16, #tpu.memory_space<vmem>>) target_semaphore(%180 : memref<!tpu.dma_semaphore, #tpu.memory_space<semaphore_mem>>)
      } else {
      }
    } else {
    }
    %c0_i32_5 = arith.constant 0 : i32
    %c0_i32_6 = arith.constant 0 : i32
    %c0_i32_7 = arith.constant 0 : i32
    %c0_i32_8 = arith.constant 0 : i32
    %c0_i32_9 = arith.constant 0 : i32
    %13 = tpu.memref_slice %arg2[%c0_i32_5, %c0_i32_7, %c0_i32_8, %c0_i32_9] : memref<2x16x16x128xbf16, #tpu.memory_space<any>> -> memref<1x8x16x128xbf16, #tpu.memory_space<any>>
    %14 = tpu.memref_squeeze %13 : memref<1x8x16x128xbf16, #tpu.memory_space<any>> -> memref<8x16x128xbf16, #tpu.memory_space<any>>
    %c1_i32_10 = arith.constant 1 : i32
    %c0_i32_11 = arith.constant 0 : i32
    %c0_i32_12 = arith.constant 0 : i32
    %15 = tpu.memref_slice %arg9[%9, %c1_i32_10, %c0_i32_11, %c0_i32_12] : memref<2x10x16x128xbf16, #tpu.memory_space<vmem>> -> memref<1x8x16x128xbf16, #tpu.memory_space<vmem>>
    %16 = tpu.memref_squeeze %15 : memref<1x8x16x128xbf16, #tpu.memory_space<vmem>> -> memref<8x16x128xbf16, #tpu.memory_space<vmem>>
    %17 = tpu.memref_slice %arg11[%9, %c0_i32_6] : memref<2x3x!tpu.dma_semaphore, #tpu.memory_space<semaphore_mem>> -> memref<1x1x!tpu.dma_semaphore, #tpu.memory_space<semaphore_mem>>
    %18 = tpu.memref_squeeze %17 : memref<1x1x!tpu.dma_semaphore, #tpu.memory_space<semaphore_mem>> -> memref<!tpu.dma_semaphore, #tpu.memory_space<semaphore_mem>>
    tpu.wait_dma2 semaphore(%18 : memref<!tpu.dma_semaphore, #tpu.memory_space<semaphore_mem>>) src(%14 : memref<8x16x128xbf16, #tpu.memory_space<any>>) dst(%16 : memref<8x16x128xbf16, #tpu.memory_space<vmem>>)
    %c0_i32_13 = arith.constant 0 : i32
    %19 = arith.cmpi sgt, %arg1, %c0_i32_13 : i32
    %20 = arith.extui %19 : i1 to i32
    %c0_i32_14 = arith.constant 0 : i32
    %21 = arith.cmpi ne, %20, %c0_i32_14 : i32
    scf.if %21 {
      %c0_i32_140 = arith.constant 0 : i32
      %c1_i32_141 = arith.constant 1 : i32
      %c0_i32_142 = arith.constant 0 : i32
      %c0_i32_143 = arith.constant 0 : i32
      %c0_i32_144 = arith.constant 0 : i32
      %161 = tpu.memref_slice %arg2[%c0_i32_140, %c0_i32_142, %c0_i32_143, %c0_i32_144] : memref<2x16x16x128xbf16, #tpu.memory_space<any>> -> memref<1x1x16x128xbf16, #tpu.memory_space<any>>
      %162 = tpu.memref_squeeze %161 : memref<1x1x16x128xbf16, #tpu.memory_space<any>> -> memref<1x16x128xbf16, #tpu.memory_space<any>>
      %c0_i32_145 = arith.constant 0 : i32
      %c0_i32_146 = arith.constant 0 : i32
      %c0_i32_147 = arith.constant 0 : i32
      %163 = tpu.memref_slice %arg9[%9, %c0_i32_145, %c0_i32_146, %c0_i32_147] : memref<2x10x16x128xbf16, #tpu.memory_space<vmem>> -> memref<1x1x16x128xbf16, #tpu.memory_space<vmem>>
      %164 = tpu.memref_squeeze %163 : memref<1x1x16x128xbf16, #tpu.memory_space<vmem>> -> memref<1x16x128xbf16, #tpu.memory_space<vmem>>
      %165 = tpu.memref_slice %arg11[%9, %c1_i32_141] : memref<2x3x!tpu.dma_semaphore, #tpu.memory_space<semaphore_mem>> -> memref<1x1x!tpu.dma_semaphore, #tpu.memory_space<semaphore_mem>>
      %166 = tpu.memref_squeeze %165 : memref<1x1x!tpu.dma_semaphore, #tpu.memory_space<semaphore_mem>> -> memref<!tpu.dma_semaphore, #tpu.memory_space<semaphore_mem>>
      tpu.wait_dma2 semaphore(%166 : memref<!tpu.dma_semaphore, #tpu.memory_space<semaphore_mem>>) src(%162 : memref<1x16x128xbf16, #tpu.memory_space<any>>) dst(%164 : memref<1x16x128xbf16, #tpu.memory_space<vmem>>)
    } else {
    }
    %c1_i32_15 = arith.constant 1 : i32
    %22 = arith.cmpi slt, %arg1, %c1_i32_15 : i32
    %23 = arith.extui %22 : i1 to i32
    %c0_i32_16 = arith.constant 0 : i32
    %24 = arith.cmpi ne, %23, %c0_i32_16 : i32
    scf.if %24 {
      %c0_i32_140 = arith.constant 0 : i32
      %c2_i32_141 = arith.constant 2 : i32
      %c0_i32_142 = arith.constant 0 : i32
      %c0_i32_143 = arith.constant 0 : i32
      %c0_i32_144 = arith.constant 0 : i32
      %161 = tpu.memref_slice %arg2[%c0_i32_140, %c0_i32_142, %c0_i32_143, %c0_i32_144] : memref<2x16x16x128xbf16, #tpu.memory_space<any>> -> memref<1x1x16x128xbf16, #tpu.memory_space<any>>
      %162 = tpu.memref_squeeze %161 : memref<1x1x16x128xbf16, #tpu.memory_space<any>> -> memref<1x16x128xbf16, #tpu.memory_space<any>>
      %c9_i32 = arith.constant 9 : i32
      %c0_i32_145 = arith.constant 0 : i32
      %c0_i32_146 = arith.constant 0 : i32
      %163 = tpu.memref_slice %arg9[%9, %c9_i32, %c0_i32_145, %c0_i32_146] : memref<2x10x16x128xbf16, #tpu.memory_space<vmem>> -> memref<1x1x16x128xbf16, #tpu.memory_space<vmem>>
      %164 = tpu.memref_squeeze %163 : memref<1x1x16x128xbf16, #tpu.memory_space<vmem>> -> memref<1x16x128xbf16, #tpu.memory_space<vmem>>
      %165 = tpu.memref_slice %arg11[%9, %c2_i32_141] : memref<2x3x!tpu.dma_semaphore, #tpu.memory_space<semaphore_mem>> -> memref<1x1x!tpu.dma_semaphore, #tpu.memory_space<semaphore_mem>>
      %166 = tpu.memref_squeeze %165 : memref<1x1x!tpu.dma_semaphore, #tpu.memory_space<semaphore_mem>> -> memref<!tpu.dma_semaphore, #tpu.memory_space<semaphore_mem>>
      tpu.wait_dma2 semaphore(%166 : memref<!tpu.dma_semaphore, #tpu.memory_space<semaphore_mem>>) src(%162 : memref<1x16x128xbf16, #tpu.memory_space<any>>) dst(%164 : memref<1x16x128xbf16, #tpu.memory_space<vmem>>)
    } else {
    }
    %c1_i32_17 = arith.constant 1 : i32
    %25 = arith.addi %arg1, %c1_i32_17 : i32
    %c2_i32_18 = arith.constant 2 : i32
    %26 = arith.cmpi slt, %25, %c2_i32_18 : i32
    %27 = arith.extui %26 : i1 to i32
    %c0_i32_19 = arith.constant 0 : i32
    %28 = arith.cmpi ne, %27, %c0_i32_19 : i32
    scf.if %28 {
      %c1_i32_140 = arith.constant 1 : i32
      %161 = arith.addi %arg1, %c1_i32_140 : i32
      %c1_i32_141 = arith.constant 1 : i32
      %162 = arith.subi %c1_i32_141, %9 : i32
      %c8_i32_142 = arith.constant 8 : i32
      %163 = arith.muli %161, %c8_i32_142 : i32
      %c0_i32_143 = arith.constant 0 : i32
      %c0_i32_144 = arith.constant 0 : i32
      %c0_i32_145 = arith.constant 0 : i32
      %164 = tpu.memref_slice %arg2[%arg0, %163, %c0_i32_144, %c0_i32_145] : memref<2x16x16x128xbf16, #tpu.memory_space<any>> -> memref<1x8x16x128xbf16, #tpu.memory_space<any>>
      %165 = tpu.memref_squeeze %164 : memref<1x8x16x128xbf16, #tpu.memory_space<any>> -> memref<8x16x128xbf16, #tpu.memory_space<any>>
      %c1_i32_146 = arith.constant 1 : i32
      %c0_i32_147 = arith.constant 0 : i32
      %c0_i32_148 = arith.constant 0 : i32
      %166 = tpu.memref_slice %arg9[%162, %c1_i32_146, %c0_i32_147, %c0_i32_148] : memref<2x10x16x128xbf16, #tpu.memory_space<vmem>> -> memref<1x8x16x128xbf16, #tpu.memory_space<vmem>>
      %167 = tpu.memref_squeeze %166 : memref<1x8x16x128xbf16, #tpu.memory_space<vmem>> -> memref<8x16x128xbf16, #tpu.memory_space<vmem>>
      %168 = tpu.memref_slice %arg11[%162, %c0_i32_143] : memref<2x3x!tpu.dma_semaphore, #tpu.memory_space<semaphore_mem>> -> memref<1x1x!tpu.dma_semaphore, #tpu.memory_space<semaphore_mem>>
      %169 = tpu.memref_squeeze %168 : memref<1x1x!tpu.dma_semaphore, #tpu.memory_space<semaphore_mem>> -> memref<!tpu.dma_semaphore, #tpu.memory_space<semaphore_mem>>
      tpu.enqueue_dma source(%165 : memref<8x16x128xbf16, #tpu.memory_space<any>>) target(%167 : memref<8x16x128xbf16, #tpu.memory_space<vmem>>) target_semaphore(%169 : memref<!tpu.dma_semaphore, #tpu.memory_space<semaphore_mem>>)
      %c0_i32_149 = arith.constant 0 : i32
      %170 = arith.cmpi sgt, %161, %c0_i32_149 : i32
      %171 = arith.extui %170 : i1 to i32
      %c0_i32_150 = arith.constant 0 : i32
      %172 = arith.cmpi ne, %171, %c0_i32_150 : i32
      scf.if %172 {
        %c1_i32_153 = arith.constant 1 : i32
        %176 = arith.subi %163, %c1_i32_153 : i32
        %c1_i32_154 = arith.constant 1 : i32
        %c0_i32_155 = arith.constant 0 : i32
        %c0_i32_156 = arith.constant 0 : i32
        %177 = tpu.memref_slice %arg2[%arg0, %176, %c0_i32_155, %c0_i32_156] : memref<2x16x16x128xbf16, #tpu.memory_space<any>> -> memref<1x1x16x128xbf16, #tpu.memory_space<any>>
        %178 = tpu.memref_squeeze %177 : memref<1x1x16x128xbf16, #tpu.memory_space<any>> -> memref<1x16x128xbf16, #tpu.memory_space<any>>
        %c0_i32_157 = arith.constant 0 : i32
        %c0_i32_158 = arith.constant 0 : i32
        %c0_i32_159 = arith.constant 0 : i32
        %179 = tpu.memref_slice %arg9[%162, %c0_i32_157, %c0_i32_158, %c0_i32_159] : memref<2x10x16x128xbf16, #tpu.memory_space<vmem>> -> memref<1x1x16x128xbf16, #tpu.memory_space<vmem>>
        %180 = tpu.memref_squeeze %179 : memref<1x1x16x128xbf16, #tpu.memory_space<vmem>> -> memref<1x16x128xbf16, #tpu.memory_space<vmem>>
        %181 = tpu.memref_slice %arg11[%162, %c1_i32_154] : memref<2x3x!tpu.dma_semaphore, #tpu.memory_space<semaphore_mem>> -> memref<1x1x!tpu.dma_semaphore, #tpu.memory_space<semaphore_mem>>
        %182 = tpu.memref_squeeze %181 : memref<1x1x!tpu.dma_semaphore, #tpu.memory_space<semaphore_mem>> -> memref<!tpu.dma_semaphore, #tpu.memory_space<semaphore_mem>>
        tpu.enqueue_dma source(%178 : memref<1x16x128xbf16, #tpu.memory_space<any>>) target(%180 : memref<1x16x128xbf16, #tpu.memory_space<vmem>>) target_semaphore(%182 : memref<!tpu.dma_semaphore, #tpu.memory_space<semaphore_mem>>)
      } else {
      }
      %c1_i32_151 = arith.constant 1 : i32
      %173 = arith.cmpi slt, %161, %c1_i32_151 : i32
      %174 = arith.extui %173 : i1 to i32
      %c0_i32_152 = arith.constant 0 : i32
      %175 = arith.cmpi ne, %174, %c0_i32_152 : i32
      scf.if %175 {
        %c8_i32_153 = arith.constant 8 : i32
        %176 = arith.addi %163, %c8_i32_153 : i32
        %c2_i32_154 = arith.constant 2 : i32
        %c0_i32_155 = arith.constant 0 : i32
        %c0_i32_156 = arith.constant 0 : i32
        %177 = tpu.memref_slice %arg2[%arg0, %176, %c0_i32_155, %c0_i32_156] : memref<2x16x16x128xbf16, #tpu.memory_space<any>> -> memref<1x1x16x128xbf16, #tpu.memory_space<any>>
        %178 = tpu.memref_squeeze %177 : memref<1x1x16x128xbf16, #tpu.memory_space<any>> -> memref<1x16x128xbf16, #tpu.memory_space<any>>
        %c9_i32 = arith.constant 9 : i32
        %c0_i32_157 = arith.constant 0 : i32
        %c0_i32_158 = arith.constant 0 : i32
        %179 = tpu.memref_slice %arg9[%162, %c9_i32, %c0_i32_157, %c0_i32_158] : memref<2x10x16x128xbf16, #tpu.memory_space<vmem>> -> memref<1x1x16x128xbf16, #tpu.memory_space<vmem>>
        %180 = tpu.memref_squeeze %179 : memref<1x1x16x128xbf16, #tpu.memory_space<vmem>> -> memref<1x16x128xbf16, #tpu.memory_space<vmem>>
        %181 = tpu.memref_slice %arg11[%162, %c2_i32_154] : memref<2x3x!tpu.dma_semaphore, #tpu.memory_space<semaphore_mem>> -> memref<1x1x!tpu.dma_semaphore, #tpu.memory_space<semaphore_mem>>
        %182 = tpu.memref_squeeze %181 : memref<1x1x!tpu.dma_semaphore, #tpu.memory_space<semaphore_mem>> -> memref<!tpu.dma_semaphore, #tpu.memory_space<semaphore_mem>>
        tpu.enqueue_dma source(%178 : memref<1x16x128xbf16, #tpu.memory_space<any>>) target(%180 : memref<1x16x128xbf16, #tpu.memory_space<vmem>>) target_semaphore(%182 : memref<!tpu.dma_semaphore, #tpu.memory_space<semaphore_mem>>)
      } else {
      }
    } else {
    }
    %c0_i32_20 = arith.constant 0 : i32
    %29 = arith.cmpi eq, %arg1, %c0_i32_20 : i32
    %30 = arith.extui %29 : i1 to i32
    %c0_i32_21 = arith.constant 0 : i32
    %31 = arith.cmpi ne, %30, %c0_i32_21 : i32
    scf.if %31 {
      %cst_140 = arith.constant 0.000000e+00 : bf16
      %161 = vector.broadcast %cst_140 : bf16 to vector<16x128xbf16>
      %162 = arith.index_cast %9 : i32 to index
      %c0_141 = arith.constant 0 : index
      %c0_142 = arith.constant 0 : index
      %c0_143 = arith.constant 0 : index
      %163 = vector.load %arg9[%162, %c0_141, %c0_142, %c0_143] : memref<2x10x16x128xbf16, #tpu.memory_space<vmem>>, vector<1x1x16x128xbf16>
      %164 = vector.shape_cast %163 : vector<1x1x16x128xbf16> to vector<16x128xbf16>
      %165 = vector.shape_cast %161 : vector<16x128xbf16> to vector<1x1x16x128xbf16>
      tpu.vector_store %arg9[%162, %c0_141, %c0_142, %c0_143], %165 {strides = array<i32>} : memref<2x10x16x128xbf16, #tpu.memory_space<vmem>>, vector<1x1x16x128xbf16>,
    } else {
    }
    %c1_i32_22 = arith.constant 1 : i32
    %32 = arith.cmpi eq, %arg1, %c1_i32_22 : i32
    %33 = arith.extui %32 : i1 to i32
    %c0_i32_23 = arith.constant 0 : i32
    %34 = arith.cmpi ne, %33, %c0_i32_23 : i32
    scf.if %34 {
      %cst_140 = arith.constant 0.000000e+00 : bf16
      %161 = vector.broadcast %cst_140 : bf16 to vector<16x128xbf16>
      %162 = arith.index_cast %9 : i32 to index
      %c9 = arith.constant 9 : index
      %c0_141 = arith.constant 0 : index
      %c0_142 = arith.constant 0 : index
      %163 = vector.load %arg9[%162, %c9, %c0_141, %c0_142] : memref<2x10x16x128xbf16, #tpu.memory_space<vmem>>, vector<1x1x16x128xbf16>
      %164 = vector.shape_cast %163 : vector<1x1x16x128xbf16> to vector<16x128xbf16>
      %165 = vector.shape_cast %161 : vector<16x128xbf16> to vector<1x1x16x128xbf16>
      tpu.vector_store %arg9[%162, %c9, %c0_141, %c0_142], %165 {strides = array<i32>} : memref<2x10x16x128xbf16, #tpu.memory_space<vmem>>, vector<1x1x16x128xbf16>,
    } else {
    }
    %35 = arith.index_cast %9 : i32 to index
    %c0 = arith.constant 0 : index
    %c0_24 = arith.constant 0 : index
    %c0_25 = arith.constant 0 : index
    %36 = vector.load %arg9[%35, %c0, %c0_24, %c0_25] : memref<2x10x16x128xbf16, #tpu.memory_space<vmem>>, vector<1x10x16x128xbf16>
    %37 = vector.shape_cast %36 : vector<1x10x16x128xbf16> to vector<10x16x128xbf16>
    %38 = arith.extf %37 : vector<10x16x128xbf16> to vector<10x16x128xf32>
    %c0_26 = arith.constant 0 : index
    %c0_27 = arith.constant 0 : index
    %39 = vector.load %arg5[%c0_26, %c0_27] : memref<1x128xf32, #tpu.memory_space<vmem>>, vector<1x128xf32>
    %40 = vector.shape_cast %39 : vector<1x128xf32> to vector<128xf32>
    %41 = vector.shape_cast %40 : vector<128xf32> to vector<1x1x128xf32>
    %42 = vector.broadcast %41 : vector<1x1x128xf32> to vector<10x16x128xf32>
    %43 = arith.mulf %38, %42 : vector<10x16x128xf32>
    %c0_28 = arith.constant 0 : index
    %c0_29 = arith.constant 0 : index
    %44 = vector.load %arg6[%c0_28, %c0_29] : memref<1x128xf32, #tpu.memory_space<vmem>>, vector<1x128xf32>
    %45 = vector.shape_cast %44 : vector<1x128xf32> to vector<128xf32>
    %46 = vector.shape_cast %45 : vector<128xf32> to vector<1x1x128xf32>
    %47 = vector.broadcast %46 : vector<1x1x128xf32> to vector<10x16x128xf32>
    %48 = arith.addf %43, %47 : vector<10x16x128xf32>
    %cst = arith.constant 0.000000e+00 : f32
    %49 = vector.broadcast %cst : f32 to vector<10x16x128xf32>
    %50 = arith.maximumf %48, %49 : vector<10x16x128xf32>
    %c8_i32 = arith.constant 8 : i32
    %51 = arith.muli %arg1, %c8_i32 : i32
    %c1_i32_30 = arith.constant 1 : i32
    %52 = arith.subi %51, %c1_i32_30 : i32
    %53 = tpu.iota {dimensions = array<i32: 0>} : vector<10x1x1xi32>
    %54 = vector.broadcast %52 : i32 to vector<10x1x1xi32>
    %55 = arith.addi %54, %53 : vector<10x1x1xi32>
    %c0_i32_31 = arith.constant 0 : i32
    %56 = vector.broadcast %c0_i32_31 : i32 to vector<10x1x1xi32>
    %57 = arith.cmpi sge, %55, %56 : vector<10x1x1xi32>
    %c16_i32 = arith.constant 16 : i32
    %58 = vector.broadcast %c16_i32 : i32 to vector<10x1x1xi32>
    %59 = arith.cmpi slt, %55, %58 : vector<10x1x1xi32>
    %60 = arith.andi %57, %59 : vector<10x1x1xi1>
    %cst_32 = arith.constant 0.000000e+00 : f32
    %61 = vector.shape_cast %60 : vector<10x1x1xi1> to vector<10x1x1xi1>
    %62 = vector.broadcast %61 : vector<10x1x1xi1> to vector<10x16x128xi1>
    %63 = vector.broadcast %cst_32 : f32 to vector<10x16x128xf32>
    %64 = arith.select %62, %50, %63 : vector<10x16x128xi1>, vector<10x16x128xf32>
    %65 = arith.truncf %64 : vector<10x16x128xf32> to vector<10x16x128xbf16>
    %c0_33 = arith.constant 0 : index
    %c1 = arith.constant 1 : index
    %c0_34 = arith.constant 0 : index
    %66 = vector.load %arg10[%c0_33, %c1, %c0_34] : memref<10x18x128xbf16, #tpu.memory_space<vmem>>, vector<10x16x128xbf16>
    tpu.vector_store %arg10[%c0_33, %c1, %c0_34], %65 {strides = array<i32>} : memref<10x18x128xbf16, #tpu.memory_space<vmem>>, vector<10x16x128xbf16>,
    %cst_35 = arith.constant 0.000000e+00 : bf16
    %67 = vector.broadcast %cst_35 : bf16 to vector<10x128xbf16>
    %c0_36 = arith.constant 0 : index
    %c0_37 = arith.constant 0 : index
    %c0_38 = arith.constant 0 : index
    %68 = vector.load %arg10[%c0_36, %c0_37, %c0_38] : memref<10x18x128xbf16, #tpu.memory_space<vmem>>, vector<10x1x128xbf16>
    %69 = vector.shape_cast %68 : vector<10x1x128xbf16> to vector<10x128xbf16>
    %70 = vector.shape_cast %67 : vector<10x128xbf16> to vector<10x1x128xbf16>
    tpu.vector_store %arg10[%c0_36, %c0_37, %c0_38], %70 {strides = array<i32>} : memref<10x18x128xbf16, #tpu.memory_space<vmem>>, vector<10x1x128xbf16>,
    %cst_39 = arith.constant 0.000000e+00 : bf16
    %71 = vector.broadcast %cst_39 : bf16 to vector<10x128xbf16>
    %c0_40 = arith.constant 0 : index
    %c17 = arith.constant 17 : index
    %c0_41 = arith.constant 0 : index
    %72 = vector.load %arg10[%c0_40, %c17, %c0_41] : memref<10x18x128xbf16, #tpu.memory_space<vmem>>, vector<10x1x128xbf16>
    %73 = vector.shape_cast %72 : vector<10x1x128xbf16> to vector<10x128xbf16>
    %74 = vector.shape_cast %71 : vector<10x128xbf16> to vector<10x1x128xbf16>
    tpu.vector_store %arg10[%c0_40, %c17, %c0_41], %74 {strides = array<i32>} : memref<10x18x128xbf16, #tpu.memory_space<vmem>>, vector<10x1x128xbf16>,
    %75 = vector.shape_cast %65 : vector<10x16x128xbf16> to vector<160x128xbf16>
    %c0_42 = arith.constant 0 : index
    %c0_43 = arith.constant 0 : index
    %c0_44 = arith.constant 0 : index
    %76 = vector.load %arg10[%c0_42, %c0_43, %c0_44] : memref<10x18x128xbf16, #tpu.memory_space<vmem>>, vector<10x16x128xbf16>
    %77 = vector.shape_cast %76 : vector<10x16x128xbf16> to vector<160x128xbf16>
    %c0_45 = arith.constant 0 : index
    %c2 = arith.constant 2 : index
    %c0_46 = arith.constant 0 : index
    %78 = vector.load %arg10[%c0_45, %c2, %c0_46] : memref<10x18x128xbf16, #tpu.memory_space<vmem>>, vector<10x16x128xbf16>
    %79 = vector.shape_cast %78 : vector<10x16x128xbf16> to vector<160x128xbf16>
    %80 = vector.extract_strided_slice %77 {offsets = [0, 0], sizes = [128, 128], strides = [1, 1]} : vector<160x128xbf16> to vector<128x128xbf16>
    %c0_47 = arith.constant 0 : index
    %c0_48 = arith.constant 0 : index
    %c0_49 = arith.constant 0 : index
    %c0_50 = arith.constant 0 : index
    %81 = vector.load %arg3[%c0_47, %c0_48, %c0_49, %c0_50] : memref<3x3x128x128xbf16, #tpu.memory_space<vmem>>, vector<1x1x128x128xbf16>
    %82 = vector.shape_cast %81 : vector<1x1x128x128xbf16> to vector<128x128xbf16>
    %cst_51 = arith.constant dense<0.000000e+00> : vector<128x128xf32>
    %83 = tpu.matmul %80, %82, %cst_51 {dimension_numbers = #tpu.dot_dimension_numbers<[1], [0], [0], [1], [0, 0, 1, 1], [], []>} : vector<128x128xbf16>, vector<128x128xbf16>, vector<128x128xf32> -> vector<128x128xf32>
    %c0_52 = arith.constant 0 : index
    %c0_53 = arith.constant 0 : index
    %84 = vector.load %arg12[%c0_52, %c0_53] : memref<128x128xf32, #tpu.memory_space<vmem>>, vector<128x128xf32>
    tpu.vector_store %arg12[%c0_52, %c0_53], %83 {strides = array<i32>} : memref<128x128xf32, #tpu.memory_space<vmem>>, vector<128x128xf32>,
    %85 = vector.extract_strided_slice %75 {offsets = [0, 0], sizes = [128, 128], strides = [1, 1]} : vector<160x128xbf16> to vector<128x128xbf16>
    %c0_54 = arith.constant 0 : index
    %c1_55 = arith.constant 1 : index
    %c0_56 = arith.constant 0 : index
    %c0_57 = arith.constant 0 : index
    %86 = vector.load %arg3[%c0_54, %c1_55, %c0_56, %c0_57] : memref<3x3x128x128xbf16, #tpu.memory_space<vmem>>, vector<1x1x128x128xbf16>
    %87 = vector.shape_cast %86 : vector<1x1x128x128xbf16> to vector<128x128xbf16>
    %cst_58 = arith.constant dense<0.000000e+00> : vector<128x128xf32>
    %88 = tpu.matmul %85, %87, %cst_58 {dimension_numbers = #tpu.dot_dimension_numbers<[1], [0], [0], [1], [0, 0, 1, 1], [], []>} : vector<128x128xbf16>, vector<128x128xbf16>, vector<128x128xf32> -> vector<128x128xf32>
    %c0_59 = arith.constant 0 : index
    %c0_60 = arith.constant 0 : index
    %89 = vector.load %arg12[%c0_59, %c0_60] : memref<128x128xf32, #tpu.memory_space<vmem>>, vector<128x128xf32>
    %90 = arith.addf %89, %88 : vector<128x128xf32>
    %c0_61 = arith.constant 0 : index
    %c0_62 = arith.constant 0 : index
    %91 = vector.load %arg12[%c0_61, %c0_62] : memref<128x128xf32, #tpu.memory_space<vmem>>, vector<128x128xf32>
    tpu.vector_store %arg12[%c0_61, %c0_62], %90 {strides = array<i32>} : memref<128x128xf32, #tpu.memory_space<vmem>>, vector<128x128xf32>,
    %92 = vector.extract_strided_slice %79 {offsets = [0, 0], sizes = [128, 128], strides = [1, 1]} : vector<160x128xbf16> to vector<128x128xbf16>
    %c0_63 = arith.constant 0 : index
    %c2_64 = arith.constant 2 : index
    %c0_65 = arith.constant 0 : index
    %c0_66 = arith.constant 0 : index
    %93 = vector.load %arg3[%c0_63, %c2_64, %c0_65, %c0_66] : memref<3x3x128x128xbf16, #tpu.memory_space<vmem>>, vector<1x1x128x128xbf16>
    %94 = vector.shape_cast %93 : vector<1x1x128x128xbf16> to vector<128x128xbf16>
    %cst_67 = arith.constant dense<0.000000e+00> : vector<128x128xf32>
    %95 = tpu.matmul %92, %94, %cst_67 {dimension_numbers = #tpu.dot_dimension_numbers<[1], [0], [0], [1], [0, 0, 1, 1], [], []>} : vector<128x128xbf16>, vector<128x128xbf16>, vector<128x128xf32> -> vector<128x128xf32>
    %c0_68 = arith.constant 0 : index
    %c0_69 = arith.constant 0 : index
    %96 = vector.load %arg12[%c0_68, %c0_69] : memref<128x128xf32, #tpu.memory_space<vmem>>, vector<128x128xf32>
    %97 = arith.addf %96, %95 : vector<128x128xf32>
    %c0_70 = arith.constant 0 : index
    %c0_71 = arith.constant 0 : index
    %98 = vector.load %arg12[%c0_70, %c0_71] : memref<128x128xf32, #tpu.memory_space<vmem>>, vector<128x128xf32>
    tpu.vector_store %arg12[%c0_70, %c0_71], %97 {strides = array<i32>} : memref<128x128xf32, #tpu.memory_space<vmem>>, vector<128x128xf32>,
    %99 = vector.extract_strided_slice %77 {offsets = [16, 0], sizes = [128, 128], strides = [1, 1]} : vector<160x128xbf16> to vector<128x128xbf16>
    %c1_72 = arith.constant 1 : index
    %c0_73 = arith.constant 0 : index
    %c0_74 = arith.constant 0 : index
    %c0_75 = arith.constant 0 : index
    %100 = vector.load %arg3[%c1_72, %c0_73, %c0_74, %c0_75] : memref<3x3x128x128xbf16, #tpu.memory_space<vmem>>, vector<1x1x128x128xbf16>
    %101 = vector.shape_cast %100 : vector<1x1x128x128xbf16> to vector<128x128xbf16>
    %cst_76 = arith.constant dense<0.000000e+00> : vector<128x128xf32>
    %102 = tpu.matmul %99, %101, %cst_76 {dimension_numbers = #tpu.dot_dimension_numbers<[1], [0], [0], [1], [0, 0, 1, 1], [], []>} : vector<128x128xbf16>, vector<128x128xbf16>, vector<128x128xf32> -> vector<128x128xf32>
    %c0_77 = arith.constant 0 : index
    %c0_78 = arith.constant 0 : index
    %103 = vector.load %arg12[%c0_77, %c0_78] : memref<128x128xf32, #tpu.memory_space<vmem>>, vector<128x128xf32>
    %104 = arith.addf %103, %102 : vector<128x128xf32>
    %c0_79 = arith.constant 0 : index
    %c0_80 = arith.constant 0 : index
    %105 = vector.load %arg12[%c0_79, %c0_80] : memref<128x128xf32, #tpu.memory_space<vmem>>, vector<128x128xf32>
    tpu.vector_store %arg12[%c0_79, %c0_80], %104 {strides = array<i32>} : memref<128x128xf32, #tpu.memory_space<vmem>>, vector<128x128xf32>,
    %106 = vector.extract_strided_slice %75 {offsets = [16, 0], sizes = [128, 128], strides = [1, 1]} : vector<160x128xbf16> to vector<128x128xbf16>
    %c1_81 = arith.constant 1 : index
    %c1_82 = arith.constant 1 : index
    %c0_83 = arith.constant 0 : index
    %c0_84 = arith.constant 0 : index
    %107 = vector.load %arg3[%c1_81, %c1_82, %c0_83, %c0_84] : memref<3x3x128x128xbf16, #tpu.memory_space<vmem>>, vector<1x1x128x128xbf16>
    %108 = vector.shape_cast %107 : vector<1x1x128x128xbf16> to vector<128x128xbf16>
    %cst_85 = arith.constant dense<0.000000e+00> : vector<128x128xf32>
    %109 = tpu.matmul %106, %108, %cst_85 {dimension_numbers = #tpu.dot_dimension_numbers<[1], [0], [0], [1], [0, 0, 1, 1], [], []>} : vector<128x128xbf16>, vector<128x128xbf16>, vector<128x128xf32> -> vector<128x128xf32>
    %c0_86 = arith.constant 0 : index
    %c0_87 = arith.constant 0 : index
    %110 = vector.load %arg12[%c0_86, %c0_87] : memref<128x128xf32, #tpu.memory_space<vmem>>, vector<128x128xf32>
    %111 = arith.addf %110, %109 : vector<128x128xf32>
    %c0_88 = arith.constant 0 : index
    %c0_89 = arith.constant 0 : index
    %112 = vector.load %arg12[%c0_88, %c0_89] : memref<128x128xf32, #tpu.memory_space<vmem>>, vector<128x128xf32>
    tpu.vector_store %arg12[%c0_88, %c0_89], %111 {strides = array<i32>} : memref<128x128xf32, #tpu.memory_space<vmem>>, vector<128x128xf32>,
    %113 = vector.extract_strided_slice %79 {offsets = [16, 0], sizes = [128, 128], strides = [1, 1]} : vector<160x128xbf16> to vector<128x128xbf16>
    %c1_90 = arith.constant 1 : index
    %c2_91 = arith.constant 2 : index
    %c0_92 = arith.constant 0 : index
    %c0_93 = arith.constant 0 : index
    %114 = vector.load %arg3[%c1_90, %c2_91, %c0_92, %c0_93] : memref<3x3x128x128xbf16, #tpu.memory_space<vmem>>, vector<1x1x128x128xbf16>
    %115 = vector.shape_cast %114 : vector<1x1x128x128xbf16> to vector<128x128xbf16>
    %cst_94 = arith.constant dense<0.000000e+00> : vector<128x128xf32>
    %116 = tpu.matmul %113, %115, %cst_94 {dimension_numbers = #tpu.dot_dimension_numbers<[1], [0], [0], [1], [0, 0, 1, 1], [], []>} : vector<128x128xbf16>, vector<128x128xbf16>, vector<128x128xf32> -> vector<128x128xf32>
    %c0_95 = arith.constant 0 : index
    %c0_96 = arith.constant 0 : index
    %117 = vector.load %arg12[%c0_95, %c0_96] : memref<128x128xf32, #tpu.memory_space<vmem>>, vector<128x128xf32>
    %118 = arith.addf %117, %116 : vector<128x128xf32>
    %c0_97 = arith.constant 0 : index
    %c0_98 = arith.constant 0 : index
    %119 = vector.load %arg12[%c0_97, %c0_98] : memref<128x128xf32, #tpu.memory_space<vmem>>, vector<128x128xf32>
    tpu.vector_store %arg12[%c0_97, %c0_98], %118 {strides = array<i32>} : memref<128x128xf32, #tpu.memory_space<vmem>>, vector<128x128xf32>,
    %120 = vector.extract_strided_slice %77 {offsets = [32, 0], sizes = [128, 128], strides = [1, 1]} : vector<160x128xbf16> to vector<128x128xbf16>
    %c2_99 = arith.constant 2 : index
    %c0_100 = arith.constant 0 : index
    %c0_101 = arith.constant 0 : index
    %c0_102 = arith.constant 0 : index
    %121 = vector.load %arg3[%c2_99, %c0_100, %c0_101, %c0_102] : memref<3x3x128x128xbf16, #tpu.memory_space<vmem>>, vector<1x1x128x128xbf16>
    %122 = vector.shape_cast %121 : vector<1x1x128x128xbf16> to vector<128x128xbf16>
    %cst_103 = arith.constant dense<0.000000e+00> : vector<128x128xf32>
    %123 = tpu.matmul %120, %122, %cst_103 {dimension_numbers = #tpu.dot_dimension_numbers<[1], [0], [0], [1], [0, 0, 1, 1], [], []>} : vector<128x128xbf16>, vector<128x128xbf16>, vector<128x128xf32> -> vector<128x128xf32>
    %c0_104 = arith.constant 0 : index
    %c0_105 = arith.constant 0 : index
    %124 = vector.load %arg12[%c0_104, %c0_105] : memref<128x128xf32, #tpu.memory_space<vmem>>, vector<128x128xf32>
    %125 = arith.addf %124, %123 : vector<128x128xf32>
    %c0_106 = arith.constant 0 : index
    %c0_107 = arith.constant 0 : index
    %126 = vector.load %arg12[%c0_106, %c0_107] : memref<128x128xf32, #tpu.memory_space<vmem>>, vector<128x128xf32>
    tpu.vector_store %arg12[%c0_106, %c0_107], %125 {strides = array<i32>} : memref<128x128xf32, #tpu.memory_space<vmem>>, vector<128x128xf32>,
    %127 = vector.extract_strided_slice %75 {offsets = [32, 0], sizes = [128, 128], strides = [1, 1]} : vector<160x128xbf16> to vector<128x128xbf16>
    %c2_108 = arith.constant 2 : index
    %c1_109 = arith.constant 1 : index
    %c0_110 = arith.constant 0 : index
    %c0_111 = arith.constant 0 : index
    %128 = vector.load %arg3[%c2_108, %c1_109, %c0_110, %c0_111] : memref<3x3x128x128xbf16, #tpu.memory_space<vmem>>, vector<1x1x128x128xbf16>
    %129 = vector.shape_cast %128 : vector<1x1x128x128xbf16> to vector<128x128xbf16>
    %cst_112 = arith.constant dense<0.000000e+00> : vector<128x128xf32>
    %130 = tpu.matmul %127, %129, %cst_112 {dimension_numbers = #tpu.dot_dimension_numbers<[1], [0], [0], [1], [0, 0, 1, 1], [], []>} : vector<128x128xbf16>, vector<128x128xbf16>, vector<128x128xf32> -> vector<128x128xf32>
    %c0_113 = arith.constant 0 : index
    %c0_114 = arith.constant 0 : index
    %131 = vector.load %arg12[%c0_113, %c0_114] : memref<128x128xf32, #tpu.memory_space<vmem>>, vector<128x128xf32>
    %132 = arith.addf %131, %130 : vector<128x128xf32>
    %c0_115 = arith.constant 0 : index
    %c0_116 = arith.constant 0 : index
    %133 = vector.load %arg12[%c0_115, %c0_116] : memref<128x128xf32, #tpu.memory_space<vmem>>, vector<128x128xf32>
    tpu.vector_store %arg12[%c0_115, %c0_116], %132 {strides = array<i32>} : memref<128x128xf32, #tpu.memory_space<vmem>>, vector<128x128xf32>,
    %134 = vector.extract_strided_slice %79 {offsets = [32, 0], sizes = [128, 128], strides = [1, 1]} : vector<160x128xbf16> to vector<128x128xbf16>
    %c2_117 = arith.constant 2 : index
    %c2_118 = arith.constant 2 : index
    %c0_119 = arith.constant 0 : index
    %c0_120 = arith.constant 0 : index
    %135 = vector.load %arg3[%c2_117, %c2_118, %c0_119, %c0_120] : memref<3x3x128x128xbf16, #tpu.memory_space<vmem>>, vector<1x1x128x128xbf16>
    %136 = vector.shape_cast %135 : vector<1x1x128x128xbf16> to vector<128x128xbf16>
    %cst_121 = arith.constant dense<0.000000e+00> : vector<128x128xf32>
    %137 = tpu.matmul %134, %136, %cst_121 {dimension_numbers = #tpu.dot_dimension_numbers<[1], [0], [0], [1], [0, 0, 1, 1], [], []>} : vector<128x128xbf16>, vector<128x128xbf16>, vector<128x128xf32> -> vector<128x128xf32>
    %c0_122 = arith.constant 0 : index
    %c0_123 = arith.constant 0 : index
    %138 = vector.load %arg12[%c0_122, %c0_123] : memref<128x128xf32, #tpu.memory_space<vmem>>, vector<128x128xf32>
    %139 = arith.addf %138, %137 : vector<128x128xf32>
    %c0_124 = arith.constant 0 : index
    %c0_125 = arith.constant 0 : index
    %140 = vector.load %arg12[%c0_124, %c0_125] : memref<128x128xf32, #tpu.memory_space<vmem>>, vector<128x128xf32>
    tpu.vector_store %arg12[%c0_124, %c0_125], %139 {strides = array<i32>} : memref<128x128xf32, #tpu.memory_space<vmem>>, vector<128x128xf32>,
    %c0_126 = arith.constant 0 : index
    %c0_127 = arith.constant 0 : index
    %141 = vector.load %arg12[%c0_126, %c0_127] : memref<128x128xf32, #tpu.memory_space<vmem>>, vector<128x128xf32>
    %c0_128 = arith.constant 0 : index
    %c0_129 = arith.constant 0 : index
    %142 = vector.load %arg4[%c0_128, %c0_129] : memref<1x128xf32, #tpu.memory_space<vmem>>, vector<1x128xf32>
    %143 = vector.shape_cast %142 : vector<1x128xf32> to vector<128xf32>
    %144 = vector.shape_cast %143 : vector<128xf32> to vector<1x128xf32>
    %145 = vector.broadcast %144 : vector<1x128xf32> to vector<128x128xf32>
    %146 = arith.addf %141, %145 : vector<128x128xf32>
    %147 = vector.shape_cast %146 : vector<128x128xf32> to vector<8x16x128xf32>
    %148 = arith.truncf %147 : vector<8x16x128xf32> to vector<8x16x128xbf16>
    %c0_130 = arith.constant 0 : index
    %c0_131 = arith.constant 0 : index
    %c0_132 = arith.constant 0 : index
    %c0_133 = arith.constant 0 : index
    %149 = vector.load %arg7[%c0_130, %c0_131, %c0_132, %c0_133] : memref<1x8x16x128xbf16, #tpu.memory_space<vmem>>, vector<1x8x16x128xbf16>
    %150 = vector.shape_cast %149 : vector<1x8x16x128xbf16> to vector<8x16x128xbf16>
    %151 = vector.shape_cast %148 : vector<8x16x128xbf16> to vector<1x8x16x128xbf16>
    tpu.vector_store %arg7[%c0_130, %c0_131, %c0_132, %c0_133], %151 {strides = array<i32>} : memref<1x8x16x128xbf16, #tpu.memory_space<vmem>>, vector<1x8x16x128xbf16>,
    %cst_134 = arith.constant dense<0.000000e+00> : vector<128xf32>
    %152 = vector.multi_reduction <add>, %146, %cst_134 [0] : vector<128x128xf32> to vector<128xf32>
    %153 = vector.shape_cast %152 : vector<128xf32> to vector<1x128xf32>
    %154 = arith.mulf %146, %146 : vector<128x128xf32>
    %cst_135 = arith.constant dense<0.000000e+00> : vector<128xf32>
    %155 = vector.multi_reduction <add>, %154, %cst_135 [0] : vector<128x128xf32> to vector<128xf32>
    %156 = vector.shape_cast %155 : vector<128xf32> to vector<1x128xf32>
    %157 = tpu.concatenate %153, %156 in 0 : vector<1x128xf32>, vector<1x128xf32> -> vector<2x128xf32>
    %c0_136 = arith.constant 0 : index
    %c0_137 = arith.constant 0 : index
    %c0_138 = arith.constant 0 : index
    %c0_139 = arith.constant 0 : index
    %158 = vector.load %arg8[%c0_136, %c0_137, %c0_138, %c0_139] : memref<1x1x2x128xf32, #tpu.memory_space<vmem>>, vector<1x1x2x128xf32>
    %159 = vector.shape_cast %158 : vector<1x1x2x128xf32> to vector<2x128xf32>
    %160 = vector.shape_cast %157 : vector<2x128xf32> to vector<1x1x2x128xf32>
    tpu.vector_store %arg8[%c0_136, %c0_137, %c0_138, %c0_139], %160 {strides = array<i32>} : memref<1x1x2x128xf32, #tpu.memory_space<vmem>>, vector<1x1x2x128xf32>,
    return
  }
  func.func @transform_1(%arg0: i32, %arg1: i32) -> (i32, i32, i32, i32) {
    %c0_i32 = arith.constant 0 : i32
    %c0_i32_0 = arith.constant 0 : i32
    %c0_i32_1 = arith.constant 0 : i32
    %c0_i32_2 = arith.constant 0 : i32
    %c0_i32_3 = arith.constant 0 : i32
    return %c0_i32, %c0_i32_0, %c0_i32_1, %c0_i32_2 : i32, i32, i32, i32
  }
  func.func @transform_2(%arg0: i32, %arg1: i32) -> (i32, i32) {
    %c0_i32 = arith.constant 0 : i32
    %c0_i32_0 = arith.constant 0 : i32
    %c0_i32_1 = arith.constant 0 : i32
    return %c0_i32, %c0_i32_0 : i32, i32
  }
  func.func @transform_3(%arg0: i32, %arg1: i32) -> (i32, i32) {
    %c0_i32 = arith.constant 0 : i32
    %c0_i32_0 = arith.constant 0 : i32
    %c0_i32_1 = arith.constant 0 : i32
    return %c0_i32, %c0_i32_0 : i32, i32
  }
  func.func @transform_4(%arg0: i32, %arg1: i32) -> (i32, i32) {
    %c0_i32 = arith.constant 0 : i32
    %c0_i32_0 = arith.constant 0 : i32
    %c0_i32_1 = arith.constant 0 : i32
    return %c0_i32, %c0_i32_0 : i32, i32
  }
  func.func @transform_5(%arg0: i32, %arg1: i32) -> (i32, i32, i32, i32) {
    %c0_i32 = arith.constant 0 : i32
    %c0_i32_0 = arith.constant 0 : i32
    %c0_i32_1 = arith.constant 0 : i32
    return %arg0, %arg1, %c0_i32, %c0_i32_0 : i32, i32, i32, i32
  }
  func.func @transform_6(%arg0: i32, %arg1: i32) -> (i32, i32, i32, i32) {
    %c0_i32 = arith.constant 0 : i32
    %c0_i32_0 = arith.constant 0 : i32
    %c0_i32_1 = arith.constant 0 : i32
    return %arg0, %arg1, %c0_i32, %c0_i32_0 : i32, i32, i32, i32
  }
}

</mosaic_0001>

<llo_original>
// kernel: double_conv_forward.5
$region0: #{double_conv_forward.5}
  #allocation0 [shape = 'u32[]', space=smem, size = 0x4, offset = 0x4, fixed_abs, tag = 'smem constant byte address 0x4 - core index']
  #allocation1 [shape = 'u32[144,128]{1,0:T(1,128)}', space=vmem, size = 0x12000, scoped, tag = 'internal scratch']
  %s0 = inlined_call_operand.vmem [shape: bf16[2,16,16,128], index: 0, kind: input, shape index: {}]
  %s1 = inlined_call_operand.vmem [shape: f32[1,128], index: 1, kind: input, shape index: {}]
  %s2 = inlined_call_operand.vmem [shape: f32[1,128], index: 2, kind: input, shape index: {}]
  %s3 = inlined_call_operand.vmem [shape: f32[2,16,16,128], index: 3, kind: output, shape index: {}]
  %s4 = sld [smem:[#allocation0]]
  $region45: #{double_conv_forward.5} parent=0
    _
  %s6 = ssub.s32 1, %s4
  %s7 = scalar_select 0, %s6, %s4
  loop: start=0, step=1, limit=6
  $region2: #{double_conv_forward.5} parent=0 // loop_pre_header
    _
  $region3: #{double_conv_forward.5} parent=0 // loop_header
    %s9 = sphi 0, %s13
    %p10 = scmp.ge.s32.totalorder %s9, 6
    %s16 = sphi 0, %s28
    %s17 = sphi 0, %s24
    %s18 = sphi 0, %s16
    %s19 = sphi 0, %s17
    %s20 = sphi 0, %s18
    %s21 = sphi 0, %s19
    %s33 = sphi 0, %s35
    %s36 = sphi 0, %s33
    %s37 = sphi 0, %s36
    %s53 = sphi 0, %s37
    %s57 = sphi 0, %s57
    %s59 = sphi 0, %s57
    %s60 = sphi 0, %s59
    %s74 = sphi 0, %s60
    %s78 = sphi 0, %s78
    %s80 = sphi 0, %s78
    %s81 = sphi 0, %s80
    %s95 = sphi 0, %s81
    %s103 = sphi 0, %s105
    %s106 = sphi 0, %s103
    %s107 = sphi 0, %s106
    %s123 = sphi 0, %s107
  $region4: #{double_conv_forward.5} parent=0 // loop_header_branch
    %12 = sbr.rel (%p10) target = $region8
  $region5: #{double_conv_forward.5} parent=0 // loop_body
    %s14 = ssub.s32 %s9, 1
    %s15 = ssub.s32 %s9, 2
    %s22 = sadd.s32 1, %s17
    %p23 = scmp.ge.s32.totalorder %s22, 2
    %s24 = scalar_select %p23, 0, %s22
    %s25 = sadd.s32 1, %s16
    %s26 = scalar_select %p23, %s25, %s16
    %p27 = scmp.ge.s32.totalorder %s26, 2
    %s28 = scalar_select %p27, 0, %s26
    %s29 = ssub.s32 %s16, %s28
    %s30 = ssub.s32 %s17, %s24
    %s31 = sor.u32 %s29, %s30
    %p32 = scmp.eq.s32.totalorder %s31, 0
    %s34 = sadd.s32 %s33, 1
    %s35 = scalar_select %p32, %s33, %s34
    %p38 = pneg %p32
    %p39 = scmp.eq.s32.totalorder %s9, 3
    %p40 = por %p38, %p39
    %p41 = scmp.ne.s32.totalorder %s33, %s36
    %p42 = scmp.eq.s32.totalorder %s9, 0
    %p43 = por %p41, %p42
    %p44 = scmp.ne.s32.totalorder %s33, %s36
    %p45 = scmp.eq.s32.totalorder %s14, 3
    %p46 = por %p44, %p45
    %p47 = scmp.ne.s32.totalorder %s36, %s37
    %p48 = scmp.eq.s32.totalorder %s14, 0
    %p49 = por %p47, %p48
    %p50 = scmp.ne.s32.totalorder %s36, %s37
    %p51 = scmp.eq.s32.totalorder %s15, 3
    %p52 = por %p50, %p51
    %p54 = scmp.ne.s32.totalorder %s37, %s53
    %p55 = scmp.eq.s32.totalorder %s15, 0
    %p56 = por %p54, %p55
    %s58 = sadd.s32 %s57, 1
    %p61 = scmp.eq.s32.totalorder %s9, 3
    %p62 = scmp.ne.s32.totalorder %s57, %s59
    %p63 = scmp.eq.s32.totalorder %s9, 0
    %p64 = por %p62, %p63
    %p65 = scmp.ne.s32.totalorder %s57, %s59
    %p66 = scmp.eq.s32.totalorder %s14, 3
    %p67 = por %p65, %p66
    %p68 = scmp.ne.s32.totalorder %s59, %s60
    %p69 = scmp.eq.s32.totalorder %s14, 0
    %p70 = por %p68, %p69
    %p71 = scmp.ne.s32.totalorder %s59, %s60
    %p72 = scmp.eq.s32.totalorder %s15, 3
    %p73 = por %p71, %p72
    %p75 = scmp.ne.s32.totalorder %s60, %s74
    %p76 = scmp.eq.s32.totalorder %s15, 0
    %p77 = por %p75, %p76
    %s79 = sadd.s32 %s78, 1
    %p82 = scmp.eq.s32.totalorder %s9, 3
    %p83 = scmp.ne.s32.totalorder %s78, %s80
    %p84 = scmp.eq.s32.totalorder %s9, 0
    %p85 = por %p83, %p84
    %p86 = scmp.ne.s32.totalorder %s78, %s80
    %p87 = scmp.eq.s32.totalorder %s14, 3
    %p88 = por %p86, %p87
    %p89 = scmp.ne.s32.totalorder %s80, %s81
    %p90 = scmp.eq.s32.totalorder %s14, 0
    %p91 = por %p89, %p90
    %p92 = scmp.ne.s32.totalorder %s80, %s81
    %p93 = scmp.eq.s32.totalorder %s15, 3
    %p94 = por %p92, %p93
    %p96 = scmp.ne.s32.totalorder %s81, %s95
    %p97 = scmp.eq.s32.totalorder %s15, 0
    %p98 = por %p96, %p97
    %s99 = ssub.s32 %s16, %s28
    %s100 = ssub.s32 %s17, %s24
    %s101 = sor.u32 %s99, %s100
    %p102 = scmp.eq.s32.totalorder %s101, 0
    %s104 = sadd.s32 %s103, 1
    %s105 = scalar_select %p102, %s103, %s104
    %p108 = pneg %p102
    %p109 = scmp.eq.s32.totalorder %s9, 3
    %p110 = por %p108, %p109
    %p111 = scmp.ne.s32.totalorder %s103, %s106
    %p112 = scmp.eq.s32.totalorder %s9, 0
    %p113 = por %p111, %p112
    %p114 = scmp.ne.s32.totalorder %s103, %s106
    %p115 = scmp.eq.s32.totalorder %s14, 3
    %p116 = por %p114, %p115
    %p117 = scmp.ne.s32.totalorder %s106, %s107
    %p118 = scmp.eq.s32.totalorder %s14, 0
    %p119 = por %p117, %p118
    %p120 = scmp.ne.s32.totalorder %s106, %s107
    %p121 = scmp.eq.s32.totalorder %s15, 3
    %p122 = por %p120, %p121
    %p124 = scmp.ne.s32.totalorder %s107, %s123
    %p125 = scmp.eq.s32.totalorder %s15, 0
    %p126 = por %p124, %p125
    %p127 = scmp.le.s32.totalorder 1, %s9
    %p128 = scmp.lt.s32.totalorder %s9, 5
    %p129 = pnand %p127, %p128
    %p130 = pneg %p129
    // Predicated region
    $region9: #{double_conv_forward.5} parent=5 // pred_check
      _
    $region10: #{double_conv_forward.5} parent=5 // pred_check_branch
      %132 = sbr.rel (%p129) target = $region12
    $region11: #{double_conv_forward.5} parent=5 // pred_region
      %s133 = ssub.s32 %s9, 1
      // Predicated region
      $region13: #{double_conv_forward.5} parent=11 // pred_check
        %p134 = pneg %p70
      $region14: #{double_conv_forward.5} parent=11 // pred_check_branch
        %136 = sbr.rel (%p134) target = $region16
      $region15: #{double_conv_forward.5} parent=11 // pred_region
        _
      $region16: #{double_conv_forward.5} parent=11 // pred_fallthru
        _
      // Predicated region
      $region17: #{double_conv_forward.5} parent=11 // pred_check
        %p137 = pneg %p91
      $region18: #{double_conv_forward.5} parent=11 // pred_check_branch
        %139 = sbr.rel (%p137) target = $region20
      $region19: #{double_conv_forward.5} parent=11 // pred_region
        _
      $region20: #{double_conv_forward.5} parent=11 // pred_fallthru
        _
    $region12: #{double_conv_forward.5} parent=5 // pred_fallthru
      _
    %p140 = scmp.lt.s32.totalorder %s9, 4
    // Predicated region
    $region21: #{double_conv_forward.5} parent=5 // pred_check
      %p141 = pneg %p140
    $region22: #{double_conv_forward.5} parent=5 // pred_check_branch
      %143 = sbr.rel (%p141) target = $region24
    $region23: #{double_conv_forward.5} parent=5 // pred_region
      // Predicated region
      $region25: #{double_conv_forward.5} parent=23 // pred_check
        %p144 = pneg %p43
      $region26: #{double_conv_forward.5} parent=23 // pred_check_branch
        %146 = sbr.rel (%p144) target = $region28
      $region27: #{double_conv_forward.5} parent=23 // pred_region
        %s147 = smul.u32 8, %s17
        %p148 = scmp.lt.s32.totalorder %s16, 1
        %s149 = scalar_select %p148, %s16, 1
        %p150 = scmp.lt.s32.totalorder %s147, 15
        %s151 = scalar_select %p150, %s147, 15
        %s152 = smul.addr %s151, 2
        %s153 = smul.addr %s149, 32
        %s154 = sadd.s32 %s152, %s153
        %s155 = smul.addr %s154, 4
        %s156 = scalar_lea.vmem %s0, %s155
        %s157 = smul.u32 8, %s17
      $region28: #{double_conv_forward.5} parent=23 // pred_fallthru
        _
    $region24: #{double_conv_forward.5} parent=5 // pred_fallthru
      _
    %p158 = scmp.le.s32.totalorder 1, %s9
    %p159 = scmp.lt.s32.totalorder %s9, 5
    %p160 = pnand %p158, %p159
    %p161 = pneg %p160
    // Predicated region
    $region29: #{double_conv_forward.5} parent=5 // pred_check
      _
    $region30: #{double_conv_forward.5} parent=5 // pred_check_branch
      %163 = sbr.rel (%p160) target = $region32
    $region31: #{double_conv_forward.5} parent=5 // pred_region
      %s164 = ssub.s32 %s9, 1
      %s165 = smul.u32 8, %s19
      %p166 = scmp.lt.s32.totalorder %s18, 1
      %s167 = scalar_select %p166, %s18, 1
      %p168 = scmp.lt.s32.totalorder %s165, 15
      %s169 = scalar_select %p168, %s165, 15
      %s170 = smul.addr %s169, 2
      %s171 = smul.addr %s167, 32
      %s172 = sadd.s32 %s170, %s171
      %s173 = smul.addr %s172, 4
      %s174 = scalar_lea.vmem %s0, %s173
      %p175 = pneg %p49
      %p176 = pneg %p46
      %p177 = pneg %p70
      %p178 = pneg %p67
      %p179 = pneg %p91
      %p180 = pneg %p88
      %p181 = pneg %p119
      %p182 = pneg %p116
      %s183 = smul.u32 8, %s19
      %p184 = scmp.lt.s32.totalorder %s18, 1
      %s185 = scalar_select %p184, %s18, 1
      %p186 = scmp.lt.s32.totalorder %s183, 15
      %s187 = scalar_select %p186, %s183, 15
      %s188 = smul.addr %s187, 2
      %s189 = smul.addr %s185, 32
      %s190 = sadd.s32 %s188, %s189
      %s191 = smul.addr %s190, 8
      %s192 = scalar_lea.vmem %s3, %s191
      %s193 = smul.u32 8, %s19
      %p194 = scmp.lt.s32.totalorder %s18, 1
      %s195 = scalar_select %p194, %s18, 1
      %p196 = scmp.lt.s32.totalorder %s193, 15
      %s197 = scalar_select %p196, %s193, 15
      %s198 = smul.addr %s197, 2
      %s199 = smul.addr %s195, 32
      %s200 = sadd.s32 %s198, %s199
      %s201 = smul.addr %s200, 4
      %s202 = scalar_lea.vmem %s0, %s201
      %s203 = smul.u32 8, %s19
      %s204 = smul.u32 8, %s19
      %p205 = scmp.lt.s32.totalorder %s18, 1
      %s206 = scalar_select %p205, %s18, 1
      %p207 = scmp.lt.s32.totalorder %s204, 15
      %s208 = scalar_select %p207, %s204, 15
      %s209 = smul.addr %s208, 2
      %s210 = smul.addr %s206, 32
      %s211 = sadd.s32 %s209, %s210
      %s212 = smul.addr %s211, 8
      %s213 = scalar_lea.vmem %s3, %s212
      %s214 = smul.u32 8, %s19
      %v215 = vld [vmem:[%s202] sm:$0xf]
      %v216 = vld [vmem:[%s202 + $0x4] sm:$0xf]
      %v217 = vld [vmem:[%s202 + $0x8] sm:$0xf]
      %v218 = vld [vmem:[%s202 + $0xc] sm:$0xf]
      %v219 = vld [vmem:[%s202 + $0x10] sm:$0xf]
      %v220 = vld [vmem:[%s202 + $0x14] sm:$0xf]
      %v221 = vld [vmem:[%s202 + $0x18] sm:$0xf]
      %v222 = vld [vmem:[%s202 + $0x1c] sm:$0xf]
      %v223 = vld [vmem:[%s202 + $0x20] sm:$0xf]
      %v224 = vld [vmem:[%s202 + $0x24] sm:$0xf]
      %v225 = vld [vmem:[%s202 + $0x28] sm:$0xf]
      %v226 = vld [vmem:[%s202 + $0x2c] sm:$0xf]
      %v227 = vld [vmem:[%s202 + $0x30] sm:$0xf]
      %v228 = vld [vmem:[%s202 + $0x34] sm:$0xf]
      %v229 = vld [vmem:[%s202 + $0x38] sm:$0xf]
      %v230 = vld [vmem:[%s202 + $0x3c] sm:$0xf]
      %v231 = vunpack.c.l.bf16 %v215
      %v232 = vunpack.c.l.bf16 %v216
      %v233 = vunpack.c.l.bf16 %v217
      %v234 = vunpack.c.l.bf16 %v218
      %v235 = vunpack.c.l.bf16 %v219
      %v236 = vunpack.c.l.bf16 %v220
      %v237 = vunpack.c.l.bf16 %v221
      %v238 = vunpack.c.l.bf16 %v222
      %v239 = vunpack.c.l.bf16 %v223
      %v240 = vunpack.c.l.bf16 %v224
      %v241 = vunpack.c.l.bf16 %v225
      %v242 = vunpack.c.l.bf16 %v226
      %v243 = vunpack.c.l.bf16 %v227
      %v244 = vunpack.c.l.bf16 %v228
      %v245 = vunpack.c.l.bf16 %v229
      %v246 = vunpack.c.l.bf16 %v230
      %v247 = vld [vmem:[%s1] sm:$0x1]
      %v249 = vlaneseq
      %v250 = vshrl.u32 %v249, 7
      %v251 = vsub.s32 0, %v250
      %v252 = vrot.slane %v247, %v251
      %v254 = vmul.f32 %v231, %v252
      %v255 = vmul.f32 %v232, %v252
      %v256 = vmul.f32 %v233, %v252
      %v257 = vmul.f32 %v234, %v252
      %v258 = vmul.f32 %v235, %v252
      %v259 = vmul.f32 %v236, %v252
      %v260 = vmul.f32 %v237, %v252
      %v261 = vmul.f32 %v238, %v252
      %v262 = vmul.f32 %v239, %v252
      %v263 = vmul.f32 %v240, %v252
      %v264 = vmul.f32 %v241, %v252
      %v265 = vmul.f32 %v242, %v252
      %v266 = vmul.f32 %v243, %v252
      %v267 = vmul.f32 %v244, %v252
      %v268 = vmul.f32 %v245, %v252
      %v269 = vmul.f32 %v246, %v252
      %v270 = vld [vmem:[%s2] sm:$0x1]
      %v272 = vlaneseq
      %v273 = vshrl.u32 %v272, 7
      %v274 = vsub.s32 0, %v273
      %v275 = vrot.slane %v270, %v274
      %v277 = vadd.f32 %v254, %v275
      %v278 = vadd.f32 %v255, %v275
      %v279 = vadd.f32 %v256, %v275
      %v280 = vadd.f32 %v257, %v275
      %v281 = vadd.f32 %v258, %v275
      %v282 = vadd.f32 %v259, %v275
      %v283 = vadd.f32 %v260, %v275
      %v284 = vadd.f32 %v261, %v275
      %v285 = vadd.f32 %v262, %v275
      %v286 = vadd.f32 %v263, %v275
      %v287 = vadd.f32 %v264, %v275
      %v288 = vadd.f32 %v265, %v275
      %v289 = vadd.f32 %v266, %v275
      %v290 = vadd.f32 %v267, %v275
      %v291 = vadd.f32 %v268, %v275
      %v292 = vadd.f32 %v269, %v275
      %v293 = vmax.f32 %v277, 0.0
      %v294 = vmax.f32 %v278, 0.0
      %v295 = vmax.f32 %v279, 0.0
      %v296 = vmax.f32 %v280, 0.0
      %v297 = vmax.f32 %v281, 0.0
      %v298 = vmax.f32 %v282, 0.0
      %v299 = vmax.f32 %v283, 0.0
      %v300 = vmax.f32 %v284, 0.0
      %v301 = vmax.f32 %v285, 0.0
      %v302 = vmax.f32 %v286, 0.0
      %v303 = vmax.f32 %v287, 0.0
      %v304 = vmax.f32 %v288, 0.0
      %v305 = vmax.f32 %v289, 0.0
      %v306 = vmax.f32 %v290, 0.0
      %v307 = vmax.f32 %v291, 0.0
      %v308 = vmax.f32 %v292, 0.0
      %309 = vst [vmem:[%s213] sm:$0xff] %v293
      %310 = vst [vmem:[%s213 + $0x8] sm:$0xff] %v294
      %311 = vst [vmem:[%s213 + $0x10] sm:$0xff] %v295
      %312 = vst [vmem:[%s213 + $0x18] sm:$0xff] %v296
      %313 = vst [vmem:[%s213 + $0x20] sm:$0xff] %v297
      %314 = vst [vmem:[%s213 + $0x28] sm:$0xff] %v298
      %315 = vst [vmem:[%s213 + $0x30] sm:$0xff] %v299
      %316 = vst [vmem:[%s213 + $0x38] sm:$0xff] %v300
      %317 = vst [vmem:[%s213 + $0x40] sm:$0xff] %v301
      %318 = vst [vmem:[%s213 + $0x48] sm:$0xff] %v302
      %319 = vst [vmem:[%s213 + $0x50] sm:$0xff] %v303
      %320 = vst [vmem:[%s213 + $0x58] sm:$0xff] %v304
      %321 = vst [vmem:[%s213 + $0x60] sm:$0xff] %v305
      %322 = vst [vmem:[%s213 + $0x68] sm:$0xff] %v306
      %323 = vst [vmem:[%s213 + $0x70] sm:$0xff] %v307
      %324 = vst [vmem:[%s213 + $0x78] sm:$0xff] %v308
      %s325 = smul.u32 8, %s19
      %p326 = scmp.lt.s32.totalorder %s18, 1
      %s327 = scalar_select %p326, %s18, 1
      %p328 = scmp.lt.s32.totalorder %s325, 15
      %s329 = scalar_select %p328, %s325, 15
      %s330 = smul.addr %s329, 2
      %s331 = smul.addr %s327, 32
      %s332 = sadd.s32 %s330, %s331
      %s333 = smul.addr %s332, 8
      %s334 = scalar_lea.vmem %s3, %s333
      // Predicated region
      $region33: #{double_conv_forward.5} parent=31 // pred_check
        %p335 = pneg %p116
      $region34: #{double_conv_forward.5} parent=31 // pred_check_branch
        %337 = sbr.rel (%p335) target = $region36
      $region35: #{double_conv_forward.5} parent=31 // pred_region
        %s338 = smul.u32 8, %s19
      $region36: #{double_conv_forward.5} parent=31 // pred_fallthru
        _
    $region32: #{double_conv_forward.5} parent=5 // pred_fallthru
      _
    %p339 = scmp.le.s32.totalorder 2, %s9
    // Predicated region
    $region37: #{double_conv_forward.5} parent=5 // pred_check
      %p340 = pneg %p339
    $region38: #{double_conv_forward.5} parent=5 // pred_check_branch
      %342 = sbr.rel (%p340) target = $region40
    $region39: #{double_conv_forward.5} parent=5 // pred_region
      %s343 = ssub.s32 %s9, 2
      // Predicated region
      $region41: #{double_conv_forward.5} parent=39 // pred_check
        %p344 = pneg %p122
      $region42: #{double_conv_forward.5} parent=39 // pred_check_branch
        %346 = sbr.rel (%p344) target = $region44
      $region43: #{double_conv_forward.5} parent=39 // pred_region
        %s347 = smul.u32 8, %s21
        %p348 = scmp.lt.s32.totalorder %s20, 1
        %s349 = scalar_select %p348, %s20, 1
        %p350 = scmp.lt.s32.totalorder %s347, 15
        %s351 = scalar_select %p350, %s347, 15
        %s352 = smul.addr %s351, 2
        %s353 = smul.addr %s349, 32
        %s354 = sadd.s32 %s352, %s353
        %s355 = smul.addr %s354, 8
        %s356 = scalar_lea.vmem %s3, %s355
      $region44: #{double_conv_forward.5} parent=39 // pred_fallthru
        _
    $region40: #{double_conv_forward.5} parent=5 // pred_fallthru
      _
  $region6: #{double_conv_forward.5} parent=0 // loop_footer
    %s13 = sadd.s32 1, %s9
  $region7: #{double_conv_forward.5} parent=0 // loop_footer_branch
    %8 = sbr.rel target = $region3
  $region8: #{double_conv_forward.5} parent=0 // loop_exit
    _

// kernel: double_conv_forward.3
$region0: #{double_conv_forward.3}
  #allocation0 [shape = 'u32[]', space=smem, size = 0x4, offset = 0x4, fixed_abs, tag = 'smem constant byte address 0x4 - core index']
  #allocation1 [shape = 'u32[144,128]{1,0:T(1,128)}', space=vmem, size = 0x12000, scoped, tag = 'internal scratch']
  #allocation2 [shape = 'bf16[2,10,16,128]{3,2,1,0:T(16,128)(2,1)}', space=vmem, size = 0x14000, scoped, tag = 'scratch operand']
  #allocation3 [shape = 'bf16[10,18,128]{2,1,0:T(8,128)(2,1)}', space=vmem, size = 0xf000, scoped, tag = 'scratch operand']
  #allocation4 [shape = 's32[6]{0}', space=sflag, size = 0x18, scoped, tag = 'scratch operand']
  #allocation5 [shape = 'f32[128,128]{1,0:T(8,128)}', space=vmem, size = 0x10000, scoped, tag = 'scratch operand']
  #allocation6 [shape = 's32[]', space=sflag, size = 0x4, offset = 0, fixed_abs, tag = 'sflag constant byte address 0x0 - dummy sync flag']
  #allocation7 [shape = 's32[]', space=sflag, size = 0x4, offset = 0, fixed_abs, tag = 'sflag constant byte address 0x0 - dummy sync flag']
  #allocation8 [shape = 's32[]', space=sflag, size = 0x4, offset = 0, fixed_abs, tag = 'sflag constant byte address 0x0 - dummy sync flag']
  #allocation9 [shape = 's32[]', space=sflag, size = 0x4, offset = 0, fixed_abs, tag = 'sflag constant byte address 0x0 - dummy sync flag']
  #allocation10 [shape = 's32[]', space=sflag, size = 0x4, offset = 0, fixed_abs, tag = 'sflag constant byte address 0x0 - dummy sync flag']
  #allocation11 [shape = 's32[]', space=sflag, size = 0x4, offset = 0, fixed_abs, tag = 'sflag constant byte address 0x0 - dummy sync flag']
  %s0 = inlined_call_operand.vmem [shape: bf16[2,16,16,128], index: 0, kind: input, shape index: {}]
  %s1 = inlined_call_operand.vmem [shape: bf16[3,3,128,128], index: 1, kind: input, shape index: {}]
  %s2 = inlined_call_operand.vmem [shape: f32[1,128], index: 2, kind: input, shape index: {}]
  %s3 = inlined_call_operand.vmem [shape: f32[1,128], index: 3, kind: input, shape index: {}]
  %s4 = inlined_call_operand.vmem [shape: f32[1,128], index: 4, kind: input, shape index: {}]
  %s5 = inlined_call_operand.vmem [shape: bf16[2,16,16,128], index: 5, kind: output, shape index: {0}]
  %s6 = inlined_call_operand.vmem [shape: f32[2,2,2,128], index: 6, kind: output, shape index: {1}]
  %7 = xla_tuple %s5, %s6
  %s8 = sld [smem:[#allocation0]]
  $region301: #{double_conv_forward.3} parent=0
    _
  %s10 = ssub.s32 1, %s8
  %s11 = scalar_select 0, %s10, %s8
  loop: start=0, step=1, limit=6
  $region2: #{double_conv_forward.3} parent=0 // loop_pre_header
    _
  $region3: #{double_conv_forward.3} parent=0 // loop_header
    %s13 = sphi 0, %s17
    %p14 = scmp.ge.s32.totalorder %s13, 6
    %s20 = sphi 0, %s32
    %s21 = sphi 0, %s28
    %s22 = sphi 0, %s20
    %s23 = sphi 0, %s21
    %s24 = sphi 0, %s22
    %s25 = sphi 0, %s23
    %s33 = sphi 0, %s33
    %s35 = sphi 0, %s33
    %s36 = sphi 0, %s35
    %s50 = sphi 0, %s36
    %s54 = sphi 0, %s54
    %s56 = sphi 0, %s54
    %s57 = sphi 0, %s56
    %s71 = sphi 0, %s57
    %s75 = sphi 0, %s75
    %s77 = sphi 0, %s75
    %s78 = sphi 0, %s77
    %s92 = sphi 0, %s78
    %s96 = sphi 0, %s96
    %s98 = sphi 0, %s96
    %s99 = sphi 0, %s98
    %s113 = sphi 0, %s99
    %s121 = sphi 0, %s123
    %s124 = sphi 0, %s121
    %s125 = sphi 0, %s124
    %s141 = sphi 0, %s125
    %s149 = sphi 0, %s151
    %s152 = sphi 0, %s149
    %s153 = sphi 0, %s152
    %s169 = sphi 0, %s153
  $region4: #{double_conv_forward.3} parent=0 // loop_header_branch
    %16 = sbr.rel (%p14) target = $region8
  $region5: #{double_conv_forward.3} parent=0 // loop_body
    %s18 = ssub.s32 %s13, 1
    %s19 = ssub.s32 %s13, 2
    %s26 = sadd.s32 1, %s21
    %p27 = scmp.ge.s32.totalorder %s26, 2
    %s28 = scalar_select %p27, 0, %s26
    %s29 = sadd.s32 1, %s20
    %s30 = scalar_select %p27, %s29, %s20
    %p31 = scmp.ge.s32.totalorder %s30, 2
    %s32 = scalar_select %p31, 0, %s30
    %s34 = sadd.s32 %s33, 1
    %p37 = scmp.eq.s32.totalorder %s13, 3
    %p38 = scmp.ne.s32.totalorder %s33, %s35
    %p39 = scmp.eq.s32.totalorder %s13, 0
    %p40 = por %p38, %p39
    %p41 = scmp.ne.s32.totalorder %s33, %s35
    %p42 = scmp.eq.s32.totalorder %s18, 3
    %p43 = por %p41, %p42
    %p44 = scmp.ne.s32.totalorder %s35, %s36
    %p45 = scmp.eq.s32.totalorder %s18, 0
    %p46 = por %p44, %p45
    %p47 = scmp.ne.s32.totalorder %s35, %s36
    %p48 = scmp.eq.s32.totalorder %s19, 3
    %p49 = por %p47, %p48
    %p51 = scmp.ne.s32.totalorder %s36, %s50
    %p52 = scmp.eq.s32.totalorder %s19, 0
    %p53 = por %p51, %p52
    %s55 = sadd.s32 %s54, 1
    %p58 = scmp.eq.s32.totalorder %s13, 3
    %p59 = scmp.ne.s32.totalorder %s54, %s56
    %p60 = scmp.eq.s32.totalorder %s13, 0
    %p61 = por %p59, %p60
    %p62 = scmp.ne.s32.totalorder %s54, %s56
    %p63 = scmp.eq.s32.totalorder %s18, 3
    %p64 = por %p62, %p63
    %p65 = scmp.ne.s32.totalorder %s56, %s57
    %p66 = scmp.eq.s32.totalorder %s18, 0
    %p67 = por %p65, %p66
    %p68 = scmp.ne.s32.totalorder %s56, %s57
    %p69 = scmp.eq.s32.totalorder %s19, 3
    %p70 = por %p68, %p69
    %p72 = scmp.ne.s32.totalorder %s57, %s71
    %p73 = scmp.eq.s32.totalorder %s19, 0
    %p74 = por %p72, %p73
    %s76 = sadd.s32 %s75, 1
    %p79 = scmp.eq.s32.totalorder %s13, 3
    %p80 = scmp.ne.s32.totalorder %s75, %s77
    %p81 = scmp.eq.s32.totalorder %s13, 0
    %p82 = por %p80, %p81
    %p83 = scmp.ne.s32.totalorder %s75, %s77
    %p84 = scmp.eq.s32.totalorder %s18, 3
    %p85 = por %p83, %p84
    %p86 = scmp.ne.s32.totalorder %s77, %s78
    %p87 = scmp.eq.s32.totalorder %s18, 0
    %p88 = por %p86, %p87
    %p89 = scmp.ne.s32.totalorder %s77, %s78
    %p90 = scmp.eq.s32.totalorder %s19, 3
    %p91 = por %p89, %p90
    %p93 = scmp.ne.s32.totalorder %s78, %s92
    %p94 = scmp.eq.s32.totalorder %s19, 0
    %p95 = por %p93, %p94
    %s97 = sadd.s32 %s96, 1
    %p100 = scmp.eq.s32.totalorder %s13, 3
    %p101 = scmp.ne.s32.totalorder %s96, %s98
    %p102 = scmp.eq.s32.totalorder %s13, 0
    %p103 = por %p101, %p102
    %p104 = scmp.ne.s32.totalorder %s96, %s98
    %p105 = scmp.eq.s32.totalorder %s18, 3
    %p106 = por %p104, %p105
    %p107 = scmp.ne.s32.totalorder %s98, %s99
    %p108 = scmp.eq.s32.totalorder %s18, 0
    %p109 = por %p107, %p108
    %p110 = scmp.ne.s32.totalorder %s98, %s99
    %p111 = scmp.eq.s32.totalorder %s19, 3
    %p112 = por %p110, %p111
    %p114 = scmp.ne.s32.totalorder %s99, %s113
    %p115 = scmp.eq.s32.totalorder %s19, 0
    %p116 = por %p114, %p115
    %s117 = ssub.s32 %s20, %s32
    %s118 = ssub.s32 %s21, %s28
    %s119 = sor.u32 %s117, %s118
    %p120 = scmp.eq.s32.totalorder %s119, 0
    %s122 = sadd.s32 %s121, 1
    %s123 = scalar_select %p120, %s121, %s122
    %p126 = pneg %p120
    %p127 = scmp.eq.s32.totalorder %s13, 3
    %p128 = por %p126, %p127
    %p129 = scmp.ne.s32.totalorder %s121, %s124
    %p130 = scmp.eq.s32.totalorder %s13, 0
    %p131 = por %p129, %p130
    %p132 = scmp.ne.s32.totalorder %s121, %s124
    %p133 = scmp.eq.s32.totalorder %s18, 3
    %p134 = por %p132, %p133
    %p135 = scmp.ne.s32.totalorder %s124, %s125
    %p136 = scmp.eq.s32.totalorder %s18, 0
    %p137 = por %p135, %p136
    %p138 = scmp.ne.s32.totalorder %s124, %s125
    %p139 = scmp.eq.s32.totalorder %s19, 3
    %p140 = por %p138, %p139
    %p142 = scmp.ne.s32.totalorder %s125, %s141
    %p143 = scmp.eq.s32.totalorder %s19, 0
    %p144 = por %p142, %p143
    %s145 = ssub.s32 %s20, %s32
    %s146 = ssub.s32 %s21, %s28
    %s147 = sor.u32 %s145, %s146
    %p148 = scmp.eq.s32.totalorder %s147, 0
    %s150 = sadd.s32 %s149, 1
    %s151 = scalar_select %p148, %s149, %s150
    %p154 = pneg %p148
    %p155 = scmp.eq.s32.totalorder %s13, 3
    %p156 = por %p154, %p155
    %p157 = scmp.ne.s32.totalorder %s149, %s152
    %p158 = scmp.eq.s32.totalorder %s13, 0
    %p159 = por %p157, %p158
    %p160 = scmp.ne.s32.totalorder %s149, %s152
    %p161 = scmp.eq.s32.totalorder %s18, 3
    %p162 = por %p160, %p161
    %p163 = scmp.ne.s32.totalorder %s152, %s153
    %p164 = scmp.eq.s32.totalorder %s18, 0
    %p165 = por %p163, %p164
    %p166 = scmp.ne.s32.totalorder %s152, %s153
    %p167 = scmp.eq.s32.totalorder %s19, 3
    %p168 = por %p166, %p167
    %p170 = scmp.ne.s32.totalorder %s153, %s169
    %p171 = scmp.eq.s32.totalorder %s19, 0
    %p172 = por %p170, %p171
    %p173 = scmp.le.s32.totalorder 1, %s13
    %p174 = scmp.lt.s32.totalorder %s13, 5
    %p175 = pnand %p173, %p174
    %p176 = pneg %p175
    // Predicated region
    $region9: #{double_conv_forward.3} parent=5 // pred_check
      _
    $region10: #{double_conv_forward.3} parent=5 // pred_check_branch
      %178 = sbr.rel (%p175) target = $region12
    $region11: #{double_conv_forward.3} parent=5 // pred_region
      %s179 = ssub.s32 %s13, 1
      // Predicated region
      $region13: #{double_conv_forward.3} parent=11 // pred_check
        %p180 = pneg %p46
      $region14: #{double_conv_forward.3} parent=11 // pred_check_branch
        %182 = sbr.rel (%p180) target = $region16
      $region15: #{double_conv_forward.3} parent=11 // pred_region
        _
      $region16: #{double_conv_forward.3} parent=11 // pred_fallthru
        _
      // Predicated region
      $region17: #{double_conv_forward.3} parent=11 // pred_check
        %p183 = pneg %p67
      $region18: #{double_conv_forward.3} parent=11 // pred_check_branch
        %185 = sbr.rel (%p183) target = $region20
      $region19: #{double_conv_forward.3} parent=11 // pred_region
        _
      $region20: #{double_conv_forward.3} parent=11 // pred_fallthru
        _
      // Predicated region
      $region21: #{double_conv_forward.3} parent=11 // pred_check
        %p186 = pneg %p88
      $region22: #{double_conv_forward.3} parent=11 // pred_check_branch
        %188 = sbr.rel (%p186) target = $region24
      $region23: #{double_conv_forward.3} parent=11 // pred_region
        _
      $region24: #{double_conv_forward.3} parent=11 // pred_fallthru
        _
      // Predicated region
      $region25: #{double_conv_forward.3} parent=11 // pred_check
        %p189 = pneg %p109
      $region26: #{double_conv_forward.3} parent=11 // pred_check_branch
        %191 = sbr.rel (%p189) target = $region28
      $region27: #{double_conv_forward.3} parent=11 // pred_region
        _
      $region28: #{double_conv_forward.3} parent=11 // pred_fallthru
        _
    $region12: #{double_conv_forward.3} parent=5 // pred_fallthru
      _
    %p192 = scmp.lt.s32.totalorder %s13, 4
    // Predicated region
    $region29: #{double_conv_forward.3} parent=5 // pred_check
      %p193 = pneg %p192
    $region30: #{double_conv_forward.3} parent=5 // pred_check_branch
      %195 = sbr.rel (%p193) target = $region32
    $region31: #{double_conv_forward.3} parent=5 // pred_region
      _
    $region32: #{double_conv_forward.3} parent=5 // pred_fallthru
      _
    %p196 = scmp.le.s32.totalorder 1, %s13
    %p197 = scmp.lt.s32.totalorder %s13, 5
    %p198 = pnand %p196, %p197
    %p199 = pneg %p198
    // Predicated region
    $region33: #{double_conv_forward.3} parent=5 // pred_check
      _
    $region34: #{double_conv_forward.3} parent=5 // pred_check_branch
      %201 = sbr.rel (%p198) target = $region36
    $region35: #{double_conv_forward.3} parent=5 // pred_region
      %s202 = ssub.s32 %s13, 1
      %p203 = pneg %p46
      %p204 = pneg %p43
      %p205 = pneg %p67
      %p206 = pneg %p64
      %p207 = pneg %p88
      %p208 = pneg %p85
      %p209 = pneg %p109
      %p210 = pneg %p106
      %p211 = pneg %p137
      %p212 = pneg %p134
      %s213 = smul.u32 8, %s23
      %p214 = scmp.lt.s32.totalorder %s22, 1
      %s215 = scalar_select %p214, %s22, 1
      %p216 = scmp.lt.s32.totalorder %s213, 15
      %s217 = scalar_select %p216, %s213, 15
      %s218 = smul.addr %s217, 2
      %s219 = smul.addr %s215, 32
      %s220 = sadd.s32 %s218, %s219
      %s221 = smul.addr %s220, 4
      %s222 = scalar_lea.vmem %s5, %s221
      %p223 = pneg %p165
      %p224 = pneg %p162
      %p225 = scmp.lt.s32.totalorder %s22, 1
      %s226 = scalar_select %p225, %s22, 1
      %p227 = scmp.lt.s32.totalorder %s23, 1
      %s228 = scalar_select %p227, %s23, 1
      %s229 = smul.addr %s226, 2
      %s230 = sadd.s32 %s228, %s229
      %s231 = smul.addr %s230, 2
      %s232 = scalar_lea.vmem %s6, %s231
      %s233 = smul.u32 8, %s23
      %p234 = scmp.lt.s32.totalorder %s22, 1
      %s235 = scalar_select %p234, %s22, 1
      %p236 = scmp.lt.s32.totalorder %s233, 15
      %s237 = scalar_select %p236, %s233, 15
      %s238 = smul.addr %s237, 2
      %s239 = smul.addr %s235, 32
      %s240 = sadd.s32 %s238, %s239
      %s241 = smul.addr %s240, 4
      %s242 = scalar_lea.vmem %s5, %s241
      %s243 = smul.u32 8, %s23
      %p244 = scmp.lt.s32.totalorder %s22, 1
      %s245 = scalar_select %p244, %s22, 1
      %p246 = scmp.lt.s32.totalorder %s23, 1
      %s247 = scalar_select %p246, %s23, 1
      %s248 = smul.addr %s245, 2
      %s249 = sadd.s32 %s247, %s248
      %s250 = smul.addr %s249, 2
      %s251 = scalar_lea.vmem %s6, %s250
      %p253 = scmp.lt.s32.totalorder %s23, 0
      %s254 = ssub.s32 0, %s23
      %s255 = scalar_select %p253, %s254, %s23
      %s256 = sand.u32 %s255, 1
      %s257 = ssub.s32 0, %s256
      %s258 = scalar_select %p253, %s257, %s256
      %p259 = scmp.ne.s32.totalorder %s258, 0
      %p260 = scmp.lt.s32.totalorder %s258, 0
      %p261 = pnand %p260, %p259
      %p262 = pneg %p261
      %s263 = sadd.s32 %s258, 2
      %s264 = scalar_select %p262, %s263, %s258
      %p265 = scmp.eq.s32.totalorder %s23, 0
      // Predicated region
      $region37: #{double_conv_forward.3} parent=35 // pred_check
        %p266 = pneg %p265
      $region38: #{double_conv_forward.3} parent=35 // pred_check_branch
        %268 = sbr.rel (%p266) target = $region40
      $region39: #{double_conv_forward.3} parent=35 // pred_region
        %s269 = smul.u32 %s23, 8
        %s270 = smul.u32 %s269, 2
        %s271 = smul.u32 %s22, 32
        %s272 = sadd.s32 %s270, %s271
        %s273 = smul.addr %s272, 4
        %s274 = scalar_lea.vmem %s0, %s273
        %s275 = smul.u32 %s264, 10
        %s276 = sadd.s32 1, %s275
        %s277 = smul.addr %s276, 8
        %s278 = scalar_lea.vmem [#allocation2], %s277
        %s279 = smul.u32 %s264, 3
        %s280 = scalar_lea.sflag [#allocation4], %s279
        %p282 = scmp.lt.u32.totalorder 64, 8
        %p283 = pneg %p282
        // Predicated region
        $region41: #{double_conv_forward.3} parent=39 // pred_check
          _
        $region42: #{double_conv_forward.3} parent=39 // pred_check_branch
          %285 = sbr.rel (%p282) target = $region44
        $region43: #{double_conv_forward.3} parent=39 // pred_region
          %s300 = sand.u32 64, 7
          %p301 = scmp.eq.s32.totalorder %s300, 0
          // Predicated region
          $region56: #{double_conv_forward.3} parent=43 // pred_check
            %p302 = pneg %p301
          $region57: #{double_conv_forward.3} parent=43 // pred_check_branch
            %304 = sbr.rel (%p302) target = $region59
          $region58: #{double_conv_forward.3} parent=43 // pred_region
            loop: start=0, step=1, limit=1
            $region60: #{double_conv_forward.3} parent=58 // loop_pre_header
              _
            $region61: #{double_conv_forward.3} parent=58 // loop_header
              %s306 = sphi 0, %s310
              %p307 = scmp.ge.s32.totalorder %s306, 1
              %s311 = sphi %s274, %s274
              %s312 = sphi %s278, %s278
            $region62: #{double_conv_forward.3} parent=58 // loop_header_branch
              %309 = sbr.rel (%p307) target = $region66
            $region63: #{double_conv_forward.3} parent=58 // loop_body
              %v313 = vld [vmem:[%s311] sm:$0xff]
              %314 = vst [vmem:[%s312] sm:$0xff] %v313
              %v315 = vld [vmem:[%s311 + $0x8] sm:$0xff]
              %316 = vst [vmem:[%s312 + $0x8] sm:$0xff] %v315
              %v317 = vld [vmem:[%s311 + $0x10] sm:$0xff]
              %318 = vst [vmem:[%s312 + $0x10] sm:$0xff] %v317
              %v319 = vld [vmem:[%s311 + $0x18] sm:$0xff]
              %320 = vst [vmem:[%s312 + $0x18] sm:$0xff] %v319
              %v321 = vld [vmem:[%s311 + $0x20] sm:$0xff]
              %322 = vst [vmem:[%s312 + $0x20] sm:$0xff] %v321
              %v323 = vld [vmem:[%s311 + $0x28] sm:$0xff]
              %324 = vst [vmem:[%s312 + $0x28] sm:$0xff] %v323
              %v325 = vld [vmem:[%s311 + $0x30] sm:$0xff]
              %326 = vst [vmem:[%s312 + $0x30] sm:$0xff] %v325
              %v327 = vld [vmem:[%s311 + $0x38] sm:$0xff]
              %328 = vst [vmem:[%s312 + $0x38] sm:$0xff] %v327
            $region64: #{double_conv_forward.3} parent=58 // loop_footer
              %s310 = sadd.s32 1, %s306
            $region65: #{double_conv_forward.3} parent=58 // loop_footer_branch
              %305 = sbr.rel target = $region61
            $region66: #{double_conv_forward.3} parent=58 // loop_exit
              _
          $region59: #{double_conv_forward.3} parent=43 // pred_fallthru
            _
          %p329 = pneg %p301
          // Predicated region
          $region67: #{double_conv_forward.3} parent=43 // pred_check
            _
          $region68: #{double_conv_forward.3} parent=43 // pred_check_branch
            %331 = sbr.rel (%p301) target = $region70
          $region69: #{double_conv_forward.3} parent=43 // pred_region
            %s332 = sand.u32 64, 7
          $region70: #{double_conv_forward.3} parent=43 // pred_fallthru
            _
        $region44: #{double_conv_forward.3} parent=39 // pred_fallthru
          _
        // Predicated region
        $region45: #{double_conv_forward.3} parent=39 // pred_check
          %p286 = pneg %p282
        $region46: #{double_conv_forward.3} parent=39 // pred_check_branch
          %288 = sbr.rel (%p286) target = $region48
        $region47: #{double_conv_forward.3} parent=39 // pred_region
          %s289 = sshllo.u32 0, 64
          loop: start=0, step=1, limit=1
          $region49: #{double_conv_forward.3} parent=47 // loop_pre_header
            _
          $region50: #{double_conv_forward.3} parent=47 // loop_header
            %s291 = sphi 0, %s295
            %p292 = scmp.ge.s32.totalorder %s291, 1
            %s296 = sphi %s274, %s274
            %s297 = sphi %s278, %s278
          $region51: #{double_conv_forward.3} parent=47 // loop_header_branch
            %294 = sbr.rel (%p292) target = $region55
          $region52: #{double_conv_forward.3} parent=47 // loop_body
            %v298 = vld [vmem:[%s296] sm:%s289]
            %299 = vst [vmem:[%s297] sm:%s289] %v298
          $region53: #{double_conv_forward.3} parent=47 // loop_footer
            %s295 = sadd.s32 1, %s291
          $region54: #{double_conv_forward.3} parent=47 // loop_footer_branch
            %290 = sbr.rel target = $region50
          $region55: #{double_conv_forward.3} parent=47 // loop_exit
            _
        $region48: #{double_conv_forward.3} parent=39 // pred_fallthru
          _
        // Predicated region
        $region71: #{double_conv_forward.3} parent=39 // pred_check
          _
        $region72: #{double_conv_forward.3} parent=39 // pred_check_branch
          %335 = sbr.rel (0) target = $region74
        $region73: #{double_conv_forward.3} parent=39 // pred_region
          %336 = vsyncadd %s280, 1024
        $region74: #{double_conv_forward.3} parent=39 // pred_fallthru
          _
        %p337 = scmp.gt.s32.totalorder %s23, 0
        // Predicated region
        $region75: #{double_conv_forward.3} parent=39 // pred_check
          %p338 = pneg %p337
        $region76: #{double_conv_forward.3} parent=39 // pred_check_branch
          %340 = sbr.rel (%p338) target = $region78
        $region77: #{double_conv_forward.3} parent=39 // pred_region
          %s341 = ssub.s32 %s269, 1
          %s342 = smul.u32 %s341, 2
          %s343 = sadd.s32 %s342, %s271
          %s344 = smul.addr %s343, 4
          %s345 = scalar_lea.vmem %s0, %s344
          %s346 = smul.addr %s275, 8
          %s347 = scalar_lea.vmem [#allocation2], %s346
          %s348 = sadd.s32 1, %s279
          %s349 = scalar_lea.sflag [#allocation4], %s348
          %p351 = scmp.lt.u32.totalorder 8, 8
          %p352 = pneg %p351
          // Predicated region
          $region79: #{double_conv_forward.3} parent=77 // pred_check
            _
          $region80: #{double_conv_forward.3} parent=77 // pred_check_branch
            %354 = sbr.rel (%p351) target = $region82
          $region81: #{double_conv_forward.3} parent=77 // pred_region
            %s369 = sand.u32 8, 7
            %p370 = scmp.eq.s32.totalorder %s369, 0
            // Predicated region
            $region94: #{double_conv_forward.3} parent=81 // pred_check
              %p371 = pneg %p370
            $region95: #{double_conv_forward.3} parent=81 // pred_check_branch
              %373 = sbr.rel (%p371) target = $region97
            $region96: #{double_conv_forward.3} parent=81 // pred_region
              loop: start=0, step=1, limit=1
              $region98: #{double_conv_forward.3} parent=96 // loop_pre_header
                _
              $region99: #{double_conv_forward.3} parent=96 // loop_header
                %s375 = sphi 0, %s379
                %p376 = scmp.ge.s32.totalorder %s375, 1
                %s380 = sphi %s345, %s345
                %s381 = sphi %s347, %s347
              $region100: #{double_conv_forward.3} parent=96 // loop_header_branch
                %378 = sbr.rel (%p376) target = $region104
              $region101: #{double_conv_forward.3} parent=96 // loop_body
                %v382 = vld [vmem:[%s380] sm:$0xff]
                %383 = vst [vmem:[%s381] sm:$0xff] %v382
              $region102: #{double_conv_forward.3} parent=96 // loop_footer
                %s379 = sadd.s32 1, %s375
              $region103: #{double_conv_forward.3} parent=96 // loop_footer_branch
                %374 = sbr.rel target = $region99
              $region104: #{double_conv_forward.3} parent=96 // loop_exit
                _
            $region97: #{double_conv_forward.3} parent=81 // pred_fallthru
              _
            %p384 = pneg %p370
            // Predicated region
            $region105: #{double_conv_forward.3} parent=81 // pred_check
              _
            $region106: #{double_conv_forward.3} parent=81 // pred_check_branch
              %386 = sbr.rel (%p370) target = $region108
            $region107: #{double_conv_forward.3} parent=81 // pred_region
              %s387 = sand.u32 8, 7
            $region108: #{double_conv_forward.3} parent=81 // pred_fallthru
              _
          $region82: #{double_conv_forward.3} parent=77 // pred_fallthru
            _
          // Predicated region
          $region83: #{double_conv_forward.3} parent=77 // pred_check
            %p355 = pneg %p351
          $region84: #{double_conv_forward.3} parent=77 // pred_check_branch
            %357 = sbr.rel (%p355) target = $region86
          $region85: #{double_conv_forward.3} parent=77 // pred_region
            %s358 = sshllo.u32 0, 8
            loop: start=0, step=1, limit=1
            $region87: #{double_conv_forward.3} parent=85 // loop_pre_header
              _
            $region88: #{double_conv_forward.3} parent=85 // loop_header
              %s360 = sphi 0, %s364
              %p361 = scmp.ge.s32.totalorder %s360, 1
              %s365 = sphi %s345, %s345
              %s366 = sphi %s347, %s347
            $region89: #{double_conv_forward.3} parent=85 // loop_header_branch
              %363 = sbr.rel (%p361) target = $region93
            $region90: #{double_conv_forward.3} parent=85 // loop_body
              %v367 = vld [vmem:[%s365] sm:%s358]
              %368 = vst [vmem:[%s366] sm:%s358] %v367
            $region91: #{double_conv_forward.3} parent=85 // loop_footer
              %s364 = sadd.s32 1, %s360
            $region92: #{double_conv_forward.3} parent=85 // loop_footer_branch
              %359 = sbr.rel target = $region88
            $region93: #{double_conv_forward.3} parent=85 // loop_exit
              _
          $region86: #{double_conv_forward.3} parent=77 // pred_fallthru
            _
          // Predicated region
          $region109: #{double_conv_forward.3} parent=77 // pred_check
            _
          $region110: #{double_conv_forward.3} parent=77 // pred_check_branch
            %390 = sbr.rel (0) target = $region112
          $region111: #{double_conv_forward.3} parent=77 // pred_region
            %391 = vsyncadd %s349, 128
          $region112: #{double_conv_forward.3} parent=77 // pred_fallthru
            _
        $region78: #{double_conv_forward.3} parent=39 // pred_fallthru
          _
        %p392 = scmp.lt.s32.totalorder %s23, 1
        // Predicated region
        $region113: #{double_conv_forward.3} parent=39 // pred_check
          %p393 = pneg %p392
        $region114: #{double_conv_forward.3} parent=39 // pred_check_branch
          %395 = sbr.rel (%p393) target = $region116
        $region115: #{double_conv_forward.3} parent=39 // pred_region
          %s396 = sadd.s32 %s269, 8
          %s397 = smul.u32 %s396, 2
          %s398 = sadd.s32 %s397, %s271
          %s399 = smul.addr %s398, 4
          %s400 = scalar_lea.vmem %s0, %s399
          %s401 = sadd.s32 9, %s275
          %s402 = smul.addr %s401, 8
          %s403 = scalar_lea.vmem [#allocation2], %s402
          %s404 = sadd.s32 2, %s279
          %s405 = scalar_lea.sflag [#allocation4], %s404
          %p407 = scmp.lt.u32.totalorder 8, 8
          %p408 = pneg %p407
          // Predicated region
          $region117: #{double_conv_forward.3} parent=115 // pred_check
            _
          $region118: #{double_conv_forward.3} parent=115 // pred_check_branch
            %410 = sbr.rel (%p407) target = $region120
          $region119: #{double_conv_forward.3} parent=115 // pred_region
            %s425 = sand.u32 8, 7
            %p426 = scmp.eq.s32.totalorder %s425, 0
            // Predicated region
            $region132: #{double_conv_forward.3} parent=119 // pred_check
              %p427 = pneg %p426
            $region133: #{double_conv_forward.3} parent=119 // pred_check_branch
              %429 = sbr.rel (%p427) target = $region135
            $region134: #{double_conv_forward.3} parent=119 // pred_region
              loop: start=0, step=1, limit=1
              $region136: #{double_conv_forward.3} parent=134 // loop_pre_header
                _
              $region137: #{double_conv_forward.3} parent=134 // loop_header
                %s431 = sphi 0, %s435
                %p432 = scmp.ge.s32.totalorder %s431, 1
                %s436 = sphi %s400, %s400
                %s437 = sphi %s403, %s403
              $region138: #{double_conv_forward.3} parent=134 // loop_header_branch
                %434 = sbr.rel (%p432) target = $region142
              $region139: #{double_conv_forward.3} parent=134 // loop_body
                %v438 = vld [vmem:[%s436] sm:$0xff]
                %439 = vst [vmem:[%s437] sm:$0xff] %v438
              $region140: #{double_conv_forward.3} parent=134 // loop_footer
                %s435 = sadd.s32 1, %s431
              $region141: #{double_conv_forward.3} parent=134 // loop_footer_branch
                %430 = sbr.rel target = $region137
              $region142: #{double_conv_forward.3} parent=134 // loop_exit
                _
            $region135: #{double_conv_forward.3} parent=119 // pred_fallthru
              _
            %p440 = pneg %p426
            // Predicated region
            $region143: #{double_conv_forward.3} parent=119 // pred_check
              _
            $region144: #{double_conv_forward.3} parent=119 // pred_check_branch
              %442 = sbr.rel (%p426) target = $region146
            $region145: #{double_conv_forward.3} parent=119 // pred_region
              %s443 = sand.u32 8, 7
            $region146: #{double_conv_forward.3} parent=119 // pred_fallthru
              _
          $region120: #{double_conv_forward.3} parent=115 // pred_fallthru
            _
          // Predicated region
          $region121: #{double_conv_forward.3} parent=115 // pred_check
            %p411 = pneg %p407
          $region122: #{double_conv_forward.3} parent=115 // pred_check_branch
            %413 = sbr.rel (%p411) target = $region124
          $region123: #{double_conv_forward.3} parent=115 // pred_region
            %s414 = sshllo.u32 0, 8
            loop: start=0, step=1, limit=1
            $region125: #{double_conv_forward.3} parent=123 // loop_pre_header
              _
            $region126: #{double_conv_forward.3} parent=123 // loop_header
              %s416 = sphi 0, %s420
              %p417 = scmp.ge.s32.totalorder %s416, 1
              %s421 = sphi %s400, %s400
              %s422 = sphi %s403, %s403
            $region127: #{double_conv_forward.3} parent=123 // loop_header_branch
              %419 = sbr.rel (%p417) target = $region131
            $region128: #{double_conv_forward.3} parent=123 // loop_body
              %v423 = vld [vmem:[%s421] sm:%s414]
              %424 = vst [vmem:[%s422] sm:%s414] %v423
            $region129: #{double_conv_forward.3} parent=123 // loop_footer
              %s420 = sadd.s32 1, %s416
            $region130: #{double_conv_forward.3} parent=123 // loop_footer_branch
              %415 = sbr.rel target = $region126
            $region131: #{double_conv_forward.3} parent=123 // loop_exit
              _
          $region124: #{double_conv_forward.3} parent=115 // pred_fallthru
            _
          // Predicated region
          $region147: #{double_conv_forward.3} parent=115 // pred_check
            _
          $region148: #{double_conv_forward.3} parent=115 // pred_check_branch
            %446 = sbr.rel (0) target = $region150
          $region149: #{double_conv_forward.3} parent=115 // pred_region
            %447 = vsyncadd %s405, 128
          $region150: #{double_conv_forward.3} parent=115 // pred_fallthru
            _
        $region116: #{double_conv_forward.3} parent=39 // pred_fallthru
          _
      $region40: #{double_conv_forward.3} parent=35 // pred_fallthru
        _
      %s448 = smul.u32 %s264, 3
      %s449 = scalar_lea.sflag [#allocation4], %s448
      %s450 = smul.u32 4, 8
      %s451 = smul.u32 %s450, 2
      %s452 = smul.u32 %s451, 1
      %s453 = sshll.u32 %s452, 4
      %454 = dma.done %s449, %s453
      %p455 = scmp.gt.s32.totalorder %s23, 0
      // Predicated region
      $region151: #{double_conv_forward.3} parent=35 // pred_check
        %p456 = pneg %p455
      $region152: #{double_conv_forward.3} parent=35 // pred_check_branch
        %458 = sbr.rel (%p456) target = $region154
      $region153: #{double_conv_forward.3} parent=35 // pred_region
        %s459 = sadd.s32 1, %s448
        %s460 = scalar_lea.sflag [#allocation4], %s459
        %s461 = smul.u32 4, 1
        %s462 = smul.u32 %s461, 2
        %s463 = smul.u32 %s462, 1
        %s464 = sshll.u32 %s463, 4
        %465 = dma.done %s460, %s464
      $region154: #{double_conv_forward.3} parent=35 // pred_fallthru
        _
      %p466 = scmp.lt.s32.totalorder %s23, 1
      // Predicated region
      $region155: #{double_conv_forward.3} parent=35 // pred_check
        %p467 = pneg %p466
      $region156: #{double_conv_forward.3} parent=35 // pred_check_branch
        %469 = sbr.rel (%p467) target = $region158
      $region157: #{double_conv_forward.3} parent=35 // pred_region
        %s470 = sadd.s32 2, %s448
        %s471 = scalar_lea.sflag [#allocation4], %s470
        %s472 = smul.u32 4, 1
        %s473 = smul.u32 %s472, 2
        %s474 = smul.u32 %s473, 1
        %s475 = sshll.u32 %s474, 4
        %476 = dma.done %s471, %s475
      $region158: #{double_conv_forward.3} parent=35 // pred_fallthru
        _
      %s477 = sadd.s32 %s23, 1
      %p478 = scmp.lt.s32.totalorder %s477, 2
      // Predicated region
      $region159: #{double_conv_forward.3} parent=35 // pred_check
        %p479 = pneg %p478
      $region160: #{double_conv_forward.3} parent=35 // pred_check_branch
        %481 = sbr.rel (%p479) target = $region162
      $region161: #{double_conv_forward.3} parent=35 // pred_region
        %s482 = ssub.s32 1, %s264
        %s483 = smul.u32 %s477, 8
        %s484 = smul.u32 %s483, 2
        %s485 = smul.u32 %s22, 32
        %s486 = sadd.s32 %s484, %s485
        %s487 = smul.addr %s486, 4
        %s488 = scalar_lea.vmem %s0, %s487
        %s489 = smul.u32 %s482, 10
        %s490 = sadd.s32 1, %s489
        %s491 = smul.addr %s490, 8
        %s492 = scalar_lea.vmem [#allocation2], %s491
        %s493 = smul.u32 %s482, 3
        %s494 = scalar_lea.sflag [#allocation4], %s493
        %p496 = scmp.lt.u32.totalorder 64, 8
        %p497 = pneg %p496
        // Predicated region
        $region163: #{double_conv_forward.3} parent=161 // pred_check
          _
        $region164: #{double_conv_forward.3} parent=161 // pred_check_branch
          %499 = sbr.rel (%p496) target = $region166
        $region165: #{double_conv_forward.3} parent=161 // pred_region
          %s514 = sand.u32 64, 7
          %p515 = scmp.eq.s32.totalorder %s514, 0
          // Predicated region
          $region178: #{double_conv_forward.3} parent=165 // pred_check
            %p516 = pneg %p515
          $region179: #{double_conv_forward.3} parent=165 // pred_check_branch
            %518 = sbr.rel (%p516) target = $region181
          $region180: #{double_conv_forward.3} parent=165 // pred_region
            loop: start=0, step=1, limit=1
            $region182: #{double_conv_forward.3} parent=180 // loop_pre_header
              _
            $region183: #{double_conv_forward.3} parent=180 // loop_header
              %s520 = sphi 0, %s524
              %p521 = scmp.ge.s32.totalorder %s520, 1
              %s525 = sphi %s488, %s488
              %s526 = sphi %s492, %s492
            $region184: #{double_conv_forward.3} parent=180 // loop_header_branch
              %523 = sbr.rel (%p521) target = $region188
            $region185: #{double_conv_forward.3} parent=180 // loop_body
              %v527 = vld [vmem:[%s525] sm:$0xff]
              %528 = vst [vmem:[%s526] sm:$0xff] %v527
              %v529 = vld [vmem:[%s525 + $0x8] sm:$0xff]
              %530 = vst [vmem:[%s526 + $0x8] sm:$0xff] %v529
              %v531 = vld [vmem:[%s525 + $0x10] sm:$0xff]
              %532 = vst [vmem:[%s526 + $0x10] sm:$0xff] %v531
              %v533 = vld [vmem:[%s525 + $0x18] sm:$0xff]
              %534 = vst [vmem:[%s526 + $0x18] sm:$0xff] %v533
              %v535 = vld [vmem:[%s525 + $0x20] sm:$0xff]
              %536 = vst [vmem:[%s526 + $0x20] sm:$0xff] %v535
              %v537 = vld [vmem:[%s525 + $0x28] sm:$0xff]
              %538 = vst [vmem:[%s526 + $0x28] sm:$0xff] %v537
              %v539 = vld [vmem:[%s525 + $0x30] sm:$0xff]
              %540 = vst [vmem:[%s526 + $0x30] sm:$0xff] %v539
              %v541 = vld [vmem:[%s525 + $0x38] sm:$0xff]
              %542 = vst [vmem:[%s526 + $0x38] sm:$0xff] %v541
            $region186: #{double_conv_forward.3} parent=180 // loop_footer
              %s524 = sadd.s32 1, %s520
            $region187: #{double_conv_forward.3} parent=180 // loop_footer_branch
              %519 = sbr.rel target = $region183
            $region188: #{double_conv_forward.3} parent=180 // loop_exit
              _
          $region181: #{double_conv_forward.3} parent=165 // pred_fallthru
            _
          %p543 = pneg %p515
          // Predicated region
          $region189: #{double_conv_forward.3} parent=165 // pred_check
            _
          $region190: #{double_conv_forward.3} parent=165 // pred_check_branch
            %545 = sbr.rel (%p515) target = $region192
          $region191: #{double_conv_forward.3} parent=165 // pred_region
            %s546 = sand.u32 64, 7
          $region192: #{double_conv_forward.3} parent=165 // pred_fallthru
            _
        $region166: #{double_conv_forward.3} parent=161 // pred_fallthru
          _
        // Predicated region
        $region167: #{double_conv_forward.3} parent=161 // pred_check
          %p500 = pneg %p496
        $region168: #{double_conv_forward.3} parent=161 // pred_check_branch
          %502 = sbr.rel (%p500) target = $region170
        $region169: #{double_conv_forward.3} parent=161 // pred_region
          %s503 = sshllo.u32 0, 64
          loop: start=0, step=1, limit=1
          $region171: #{double_conv_forward.3} parent=169 // loop_pre_header
            _
          $region172: #{double_conv_forward.3} parent=169 // loop_header
            %s505 = sphi 0, %s509
            %p506 = scmp.ge.s32.totalorder %s505, 1
            %s510 = sphi %s488, %s488
            %s511 = sphi %s492, %s492
          $region173: #{double_conv_forward.3} parent=169 // loop_header_branch
            %508 = sbr.rel (%p506) target = $region177
          $region174: #{double_conv_forward.3} parent=169 // loop_body
            %v512 = vld [vmem:[%s510] sm:%s503]
            %513 = vst [vmem:[%s511] sm:%s503] %v512
          $region175: #{double_conv_forward.3} parent=169 // loop_footer
            %s509 = sadd.s32 1, %s505
          $region176: #{double_conv_forward.3} parent=169 // loop_footer_branch
            %504 = sbr.rel target = $region172
          $region177: #{double_conv_forward.3} parent=169 // loop_exit
            _
        $region170: #{double_conv_forward.3} parent=161 // pred_fallthru
          _
        // Predicated region
        $region193: #{double_conv_forward.3} parent=161 // pred_check
          _
        $region194: #{double_conv_forward.3} parent=161 // pred_check_branch
          %549 = sbr.rel (0) target = $region196
        $region195: #{double_conv_forward.3} parent=161 // pred_region
          %550 = vsyncadd %s494, 1024
        $region196: #{double_conv_forward.3} parent=161 // pred_fallthru
          _
        %p551 = scmp.gt.s32.totalorder %s477, 0
        // Predicated region
        $region197: #{double_conv_forward.3} parent=161 // pred_check
          %p552 = pneg %p551
        $region198: #{double_conv_forward.3} parent=161 // pred_check_branch
          %554 = sbr.rel (%p552) target = $region200
        $region199: #{double_conv_forward.3} parent=161 // pred_region
          %s555 = ssub.s32 %s483, 1
          %s556 = smul.u32 %s555, 2
          %s557 = sadd.s32 %s556, %s485
          %s558 = smul.addr %s557, 4
          %s559 = scalar_lea.vmem %s0, %s558
          %s560 = smul.addr %s489, 8
          %s561 = scalar_lea.vmem [#allocation2], %s560
          %s562 = sadd.s32 1, %s493
          %s563 = scalar_lea.sflag [#allocation4], %s562
          %p565 = scmp.lt.u32.totalorder 8, 8
          %p566 = pneg %p565
          // Predicated region
          $region201: #{double_conv_forward.3} parent=199 // pred_check
            _
          $region202: #{double_conv_forward.3} parent=199 // pred_check_branch
            %568 = sbr.rel (%p565) target = $region204
          $region203: #{double_conv_forward.3} parent=199 // pred_region
            %s583 = sand.u32 8, 7
            %p584 = scmp.eq.s32.totalorder %s583, 0
            // Predicated region
            $region216: #{double_conv_forward.3} parent=203 // pred_check
              %p585 = pneg %p584
            $region217: #{double_conv_forward.3} parent=203 // pred_check_branch
              %587 = sbr.rel (%p585) target = $region219
            $region218: #{double_conv_forward.3} parent=203 // pred_region
              loop: start=0, step=1, limit=1
              $region220: #{double_conv_forward.3} parent=218 // loop_pre_header
                _
              $region221: #{double_conv_forward.3} parent=218 // loop_header
                %s589 = sphi 0, %s593
                %p590 = scmp.ge.s32.totalorder %s589, 1
                %s594 = sphi %s559, %s559
                %s595 = sphi %s561, %s561
              $region222: #{double_conv_forward.3} parent=218 // loop_header_branch
                %592 = sbr.rel (%p590) target = $region226
              $region223: #{double_conv_forward.3} parent=218 // loop_body
                %v596 = vld [vmem:[%s594] sm:$0xff]
                %597 = vst [vmem:[%s595] sm:$0xff] %v596
              $region224: #{double_conv_forward.3} parent=218 // loop_footer
                %s593 = sadd.s32 1, %s589
              $region225: #{double_conv_forward.3} parent=218 // loop_footer_branch
                %588 = sbr.rel target = $region221
              $region226: #{double_conv_forward.3} parent=218 // loop_exit
                _
            $region219: #{double_conv_forward.3} parent=203 // pred_fallthru
              _
            %p598 = pneg %p584
            // Predicated region
            $region227: #{double_conv_forward.3} parent=203 // pred_check
              _
            $region228: #{double_conv_forward.3} parent=203 // pred_check_branch
              %600 = sbr.rel (%p584) target = $region230
            $region229: #{double_conv_forward.3} parent=203 // pred_region
              %s601 = sand.u32 8, 7
            $region230: #{double_conv_forward.3} parent=203 // pred_fallthru
              _
          $region204: #{double_conv_forward.3} parent=199 // pred_fallthru
            _
          // Predicated region
          $region205: #{double_conv_forward.3} parent=199 // pred_check
            %p569 = pneg %p565
          $region206: #{double_conv_forward.3} parent=199 // pred_check_branch
            %571 = sbr.rel (%p569) target = $region208
          $region207: #{double_conv_forward.3} parent=199 // pred_region
            %s572 = sshllo.u32 0, 8
            loop: start=0, step=1, limit=1
            $region209: #{double_conv_forward.3} parent=207 // loop_pre_header
              _
            $region210: #{double_conv_forward.3} parent=207 // loop_header
              %s574 = sphi 0, %s578
              %p575 = scmp.ge.s32.totalorder %s574, 1
              %s579 = sphi %s559, %s559
              %s580 = sphi %s561, %s561
            $region211: #{double_conv_forward.3} parent=207 // loop_header_branch
              %577 = sbr.rel (%p575) target = $region215
            $region212: #{double_conv_forward.3} parent=207 // loop_body
              %v581 = vld [vmem:[%s579] sm:%s572]
              %582 = vst [vmem:[%s580] sm:%s572] %v581
            $region213: #{double_conv_forward.3} parent=207 // loop_footer
              %s578 = sadd.s32 1, %s574
            $region214: #{double_conv_forward.3} parent=207 // loop_footer_branch
              %573 = sbr.rel target = $region210
            $region215: #{double_conv_forward.3} parent=207 // loop_exit
              _
          $region208: #{double_conv_forward.3} parent=199 // pred_fallthru
            _
          // Predicated region
          $region231: #{double_conv_forward.3} parent=199 // pred_check
            _
          $region232: #{double_conv_forward.3} parent=199 // pred_check_branch
            %604 = sbr.rel (0) target = $region234
          $region233: #{double_conv_forward.3} parent=199 // pred_region
            %605 = vsyncadd %s563, 128
          $region234: #{double_conv_forward.3} parent=199 // pred_fallthru
            _
        $region200: #{double_conv_forward.3} parent=161 // pred_fallthru
          _
        %p606 = scmp.lt.s32.totalorder %s477, 1
        // Predicated region
        $region235: #{double_conv_forward.3} parent=161 // pred_check
          %p607 = pneg %p606
        $region236: #{double_conv_forward.3} parent=161 // pred_check_branch
          %609 = sbr.rel (%p607) target = $region238
        $region237: #{double_conv_forward.3} parent=161 // pred_region
          %s610 = sadd.s32 %s483, 8
          %s611 = smul.u32 %s610, 2
          %s612 = sadd.s32 %s611, %s485
          %s613 = smul.addr %s612, 4
          %s614 = scalar_lea.vmem %s0, %s613
          %s615 = sadd.s32 9, %s489
          %s616 = smul.addr %s615, 8
          %s617 = scalar_lea.vmem [#allocation2], %s616
          %s618 = sadd.s32 2, %s493
          %s619 = scalar_lea.sflag [#allocation4], %s618
          %p621 = scmp.lt.u32.totalorder 8, 8
          %p622 = pneg %p621
          // Predicated region
          $region239: #{double_conv_forward.3} parent=237 // pred_check
            _
          $region240: #{double_conv_forward.3} parent=237 // pred_check_branch
            %624 = sbr.rel (%p621) target = $region242
          $region241: #{double_conv_forward.3} parent=237 // pred_region
            %s639 = sand.u32 8, 7
            %p640 = scmp.eq.s32.totalorder %s639, 0
            // Predicated region
            $region254: #{double_conv_forward.3} parent=241 // pred_check
              %p641 = pneg %p640
            $region255: #{double_conv_forward.3} parent=241 // pred_check_branch
              %643 = sbr.rel (%p641) target = $region257
            $region256: #{double_conv_forward.3} parent=241 // pred_region
              loop: start=0, step=1, limit=1
              $region258: #{double_conv_forward.3} parent=256 // loop_pre_header
                _
              $region259: #{double_conv_forward.3} parent=256 // loop_header
                %s645 = sphi 0, %s649
                %p646 = scmp.ge.s32.totalorder %s645, 1
                %s650 = sphi %s614, %s614
                %s651 = sphi %s617, %s617
              $region260: #{double_conv_forward.3} parent=256 // loop_header_branch
                %648 = sbr.rel (%p646) target = $region264
              $region261: #{double_conv_forward.3} parent=256 // loop_body
                %v652 = vld [vmem:[%s650] sm:$0xff]
                %653 = vst [vmem:[%s651] sm:$0xff] %v652
              $region262: #{double_conv_forward.3} parent=256 // loop_footer
                %s649 = sadd.s32 1, %s645
              $region263: #{double_conv_forward.3} parent=256 // loop_footer_branch
                %644 = sbr.rel target = $region259
              $region264: #{double_conv_forward.3} parent=256 // loop_exit
                _
            $region257: #{double_conv_forward.3} parent=241 // pred_fallthru
              _
            %p654 = pneg %p640
            // Predicated region
            $region265: #{double_conv_forward.3} parent=241 // pred_check
              _
            $region266: #{double_conv_forward.3} parent=241 // pred_check_branch
              %656 = sbr.rel (%p640) target = $region268
            $region267: #{double_conv_forward.3} parent=241 // pred_region
              %s657 = sand.u32 8, 7
            $region268: #{double_conv_forward.3} parent=241 // pred_fallthru
              _
          $region242: #{double_conv_forward.3} parent=237 // pred_fallthru
            _
          // Predicated region
          $region243: #{double_conv_forward.3} parent=237 // pred_check
            %p625 = pneg %p621
          $region244: #{double_conv_forward.3} parent=237 // pred_check_branch
            %627 = sbr.rel (%p625) target = $region246
          $region245: #{double_conv_forward.3} parent=237 // pred_region
            %s628 = sshllo.u32 0, 8
            loop: start=0, step=1, limit=1
            $region247: #{double_conv_forward.3} parent=245 // loop_pre_header
              _
            $region248: #{double_conv_forward.3} parent=245 // loop_header
              %s630 = sphi 0, %s634
              %p631 = scmp.ge.s32.totalorder %s630, 1
              %s635 = sphi %s614, %s614
              %s636 = sphi %s617, %s617
            $region249: #{double_conv_forward.3} parent=245 // loop_header_branch
              %633 = sbr.rel (%p631) target = $region253
            $region250: #{double_conv_forward.3} parent=245 // loop_body
              %v637 = vld [vmem:[%s635] sm:%s628]
              %638 = vst [vmem:[%s636] sm:%s628] %v637
            $region251: #{double_conv_forward.3} parent=245 // loop_footer
              %s634 = sadd.s32 1, %s630
            $region252: #{double_conv_forward.3} parent=245 // loop_footer_branch
              %629 = sbr.rel target = $region248
            $region253: #{double_conv_forward.3} parent=245 // loop_exit
              _
          $region246: #{double_conv_forward.3} parent=237 // pred_fallthru
            _
          // Predicated region
          $region269: #{double_conv_forward.3} parent=237 // pred_check
            _
          $region270: #{double_conv_forward.3} parent=237 // pred_check_branch
            %660 = sbr.rel (0) target = $region272
          $region271: #{double_conv_forward.3} parent=237 // pred_region
            %661 = vsyncadd %s619, 128
          $region272: #{double_conv_forward.3} parent=237 // pred_fallthru
            _
        $region238: #{double_conv_forward.3} parent=161 // pred_fallthru
          _
      $region162: #{double_conv_forward.3} parent=35 // pred_fallthru
        _
      // Predicated region
      $region273: #{double_conv_forward.3} parent=35 // pred_check
        %p662 = pneg %p265
      $region274: #{double_conv_forward.3} parent=35 // pred_check_branch
        %664 = sbr.rel (%p662) target = $region276
      $region275: #{double_conv_forward.3} parent=35 // pred_region
        %s665 = smul.u32 %s264, 10
        %s666 = smul.addr %s665, 8
        %s667 = scalar_lea.vmem [#allocation2], %s666
        %668 = vst [vmem:[%s667] sm:$0xff] 0
      $region276: #{double_conv_forward.3} parent=35 // pred_fallthru
        _
      %p669 = scmp.eq.s32.totalorder %s23, 1
      // Predicated region
      $region277: #{double_conv_forward.3} parent=35 // pred_check
        %p670 = pneg %p669
      $region278: #{double_conv_forward.3} parent=35 // pred_check_branch
        %672 = sbr.rel (%p670) target = $region280
      $region279: #{double_conv_forward.3} parent=35 // pred_region
        %s673 = smul.u32 %s264, 10
        %s674 = sadd.s32 9, %s673
        %s675 = smul.addr %s674, 8
        %s676 = scalar_lea.vmem [#allocation2], %s675
        %677 = vst [vmem:[%s676] sm:$0xff] 0
      $region280: #{double_conv_forward.3} parent=35 // pred_fallthru
        _
      %s678 = smul.u32 %s264, 10
      %s679 = smul.addr %s678, 8
      %s680 = scalar_lea.vmem [#allocation2], %s679
      %v681 = vld [vmem:[%s680] sm:$0xff]
      %v682 = vld [vmem:[%s680 + $0x8] sm:$0xff]
      %v683 = vld [vmem:[%s680 + $0x10] sm:$0xff]
      %v684 = vld [vmem:[%s680 + $0x18] sm:$0xff]
      %v685 = vld [vmem:[%s680 + $0x20] sm:$0xff]
      %v686 = vld [vmem:[%s680 + $0x28] sm:$0xff]
      %v687 = vld [vmem:[%s680 + $0x30] sm:$0xff]
      %v688 = vld [vmem:[%s680 + $0x38] sm:$0xff]
      %v689 = vld [vmem:[%s680 + $0x40] sm:$0xff]
      %v690 = vld [vmem:[%s680 + $0x48] sm:$0xff]
      %v701 = vunpack.c.l.b16 %v681
      %v702 = vunpack.c.h.b16 %v681
      %v703 = vunpack.c.l.b16 %v682
      %v704 = vunpack.c.h.b16 %v682
      %v705 = vunpack.c.l.b16 %v683
      %v706 = vunpack.c.h.b16 %v683
      %v707 = vunpack.c.l.b16 %v684
      %v708 = vunpack.c.h.b16 %v684
      %v709 = vunpack.c.l.b16 %v685
      %v710 = vunpack.c.h.b16 %v685
      %v711 = vunpack.c.l.b16 %v686
      %v712 = vunpack.c.h.b16 %v686
      %v713 = vunpack.c.l.b16 %v687
      %v714 = vunpack.c.h.b16 %v687
      %v715 = vunpack.c.l.b16 %v688
      %v716 = vunpack.c.h.b16 %v688
      %v717 = vunpack.c.l.b16 %v689
      %v718 = vunpack.c.h.b16 %v689
      %v719 = vunpack.c.l.b16 %v690
      %v720 = vunpack.c.h.b16 %v690
      %v721 = vpack.c.b16 %v701, %v701
      %v722 = vpack.c.b16 %v702, %v702
      %v723 = vpack.c.b16 %v703, %v703
      %v724 = vpack.c.b16 %v704, %v704
      %v725 = vpack.c.b16 %v705, %v705
      %v726 = vpack.c.b16 %v706, %v706
      %v727 = vpack.c.b16 %v707, %v707
      %v728 = vpack.c.b16 %v708, %v708
      %v729 = vpack.c.b16 %v709, %v709
      %v730 = vpack.c.b16 %v710, %v710
      %v731 = vpack.c.b16 %v711, %v711
      %v732 = vpack.c.b16 %v712, %v712
      %v733 = vpack.c.b16 %v713, %v713
      %v734 = vpack.c.b16 %v714, %v714
      %v735 = vpack.c.b16 %v715, %v715
      %v736 = vpack.c.b16 %v716, %v716
      %v737 = vpack.c.b16 %v717, %v717
      %v738 = vpack.c.b16 %v718, %v718
      %v739 = vpack.c.b16 %v719, %v719
      %v740 = vpack.c.b16 %v720, %v720
      %vm741 = vsmask.f32 256
      %vm742 = vsmask.f32 4368
      %vm743 = vmor %vm741, %vm742
      %v745 = vshrl.u32 %v721, 16
      %v747 = vrot.slane %v745, 7
      %v748 = vshll.u32 %v721, 16
      %v750 = vor.u32 %v747, %v748
      %v751 = vrot.slane %v747, 4
      %v753 = vshrl.u32 %v722, 16
      %v755 = vrot.slane %v753, 7
      %v756 = vshll.u32 %v722, 16
      %v758 = vor.u32 %v755, %v756
      %v759 = vsel %vm743, %v751, %v758
      %v760 = vrot.slane %v755, 4
      %v762 = vshrl.u32 %v723, 16
      %v764 = vrot.slane %v762, 7
      %v765 = vshll.u32 %v723, 16
      %v767 = vor.u32 %v764, %v765
      %v768 = vrot.slane %v764, 4
      %v770 = vshrl.u32 %v724, 16
      %v772 = vrot.slane %v770, 7
      %v773 = vshll.u32 %v724, 16
      %v775 = vor.u32 %v772, %v773
      %v776 = vsel %vm743, %v768, %v775
      %v777 = vrot.slane %v772, 4
      %v779 = vshrl.u32 %v725, 16
      %v781 = vrot.slane %v779, 7
      %v782 = vshll.u32 %v725, 16
      %v784 = vor.u32 %v781, %v782
      %v785 = vrot.slane %v781, 4
      %v787 = vshrl.u32 %v726, 16
      %v789 = vrot.slane %v787, 7
      %v790 = vshll.u32 %v726, 16
      %v792 = vor.u32 %v789, %v790
      %v793 = vsel %vm743, %v785, %v792
      %v794 = vrot.slane %v789, 4
      %v796 = vshrl.u32 %v727, 16
      %v798 = vrot.slane %v796, 7
      %v799 = vshll.u32 %v727, 16
      %v801 = vor.u32 %v798, %v799
      %v802 = vrot.slane %v798, 4
      %v804 = vshrl.u32 %v728, 16
      %v806 = vrot.slane %v804, 7
      %v807 = vshll.u32 %v728, 16
      %v809 = vor.u32 %v806, %v807
      %v810 = vsel %vm743, %v802, %v809
      %v811 = vrot.slane %v806, 4
      %v813 = vshrl.u32 %v729, 16
      %v815 = vrot.slane %v813, 7
      %v816 = vshll.u32 %v729, 16
      %v818 = vor.u32 %v815, %v816
      %v819 = vrot.slane %v815, 4
      %v821 = vshrl.u32 %v730, 16
      %v823 = vrot.slane %v821, 7
      %v824 = vshll.u32 %v730, 16
      %v826 = vor.u32 %v823, %v824
      %v827 = vsel %vm743, %v819, %v826
      %v828 = vrot.slane %v823, 4
      %v830 = vshrl.u32 %v731, 16
      %v832 = vrot.slane %v830, 7
      %v833 = vshll.u32 %v731, 16
      %v835 = vor.u32 %v832, %v833
      %v836 = vrot.slane %v832, 4
      %v838 = vshrl.u32 %v732, 16
      %v840 = vrot.slane %v838, 7
      %v841 = vshll.u32 %v732, 16
      %v843 = vor.u32 %v840, %v841
      %v844 = vsel %vm743, %v836, %v843
      %v845 = vrot.slane %v840, 4
      %v847 = vshrl.u32 %v733, 16
      %v849 = vrot.slane %v847, 7
      %v850 = vshll.u32 %v733, 16
      %v852 = vor.u32 %v849, %v850
      %v853 = vrot.slane %v849, 4
      %v855 = vshrl.u32 %v734, 16
      %v857 = vrot.slane %v855, 7
      %v858 = vshll.u32 %v734, 16
      %v860 = vor.u32 %v857, %v858
      %v861 = vsel %vm743, %v853, %v860
      %v862 = vrot.slane %v857, 4
      %v864 = vshrl.u32 %v735, 16
      %v866 = vrot.slane %v864, 7
      %v867 = vshll.u32 %v735, 16
      %v869 = vor.u32 %v866, %v867
      %v870 = vrot.slane %v866, 4
      %v872 = vshrl.u32 %v736, 16
      %v874 = vrot.slane %v872, 7
      %v875 = vshll.u32 %v736, 16
      %v877 = vor.u32 %v874, %v875
      %v878 = vsel %vm743, %v870, %v877
      %v879 = vrot.slane %v874, 4
      %v881 = vshrl.u32 %v737, 16
      %v883 = vrot.slane %v881, 7
      %v884 = vshll.u32 %v737, 16
      %v886 = vor.u32 %v883, %v884
      %v887 = vrot.slane %v883, 4
      %v889 = vshrl.u32 %v738, 16
      %v891 = vrot.slane %v889, 7
      %v892 = vshll.u32 %v738, 16
      %v894 = vor.u32 %v891, %v892
      %v895 = vsel %vm743, %v887, %v894
      %v896 = vrot.slane %v891, 4
      %v898 = vshrl.u32 %v739, 16
      %v900 = vrot.slane %v898, 7
      %v901 = vshll.u32 %v739, 16
      %v903 = vor.u32 %v900, %v901
      %v904 = vrot.slane %v900, 4
      %v906 = vshrl.u32 %v740, 16
      %v908 = vrot.slane %v906, 7
      %v909 = vshll.u32 %v740, 16
      %v911 = vor.u32 %v908, %v909
      %v912 = vsel %vm743, %v904, %v911
      %v913 = vrot.slane %v908, 4
      %vm944 = vcmask 1043456
      %vm945 = vsmask.f32 7938
      %vm946 = vmand %vm944, %vm945
      %v947 = vld [vmem:[#allocation3] sm:$0xf]
      %v948 = vsel %vm946, %v750, %v947
      %949 = vst [vmem:[#allocation3] sm:$0xf] %v948
      %950 = vst [vmem:[#allocation3 + $0x4] sm:$0xf] %v759
      %vm951 = vcmask 1040384
      %vm952 = vmand %vm951, %vm741
      %v953 = vld [vmem:[#allocation3 + $0x8] sm:$0x1]
      %v954 = vsel %vm952, %v760, %v953
      %955 = vst [vmem:[#allocation3 + $0x8] sm:$0x1] %v954
      %v956 = vld [vmem:[#allocation3 + $0xc] sm:$0xf]
      %v957 = vsel %vm946, %v767, %v956
      %958 = vst [vmem:[#allocation3 + $0xc] sm:$0xf] %v957
      %959 = vst [vmem:[#allocation3 + $0x10] sm:$0xf] %v776
      %v960 = vld [vmem:[#allocation3 + $0x14] sm:$0x1]
      %v961 = vsel %vm952, %v777, %v960
      %962 = vst [vmem:[#allocation3 + $0x14] sm:$0x1] %v961
      %v963 = vld [vmem:[#allocation3 + $0x18] sm:$0xf]
      %v964 = vsel %vm946, %v784, %v963
      %965 = vst [vmem:[#allocation3 + $0x18] sm:$0xf] %v964
      %966 = vst [vmem:[#allocation3 + $0x1c] sm:$0xf] %v793
      %v967 = vld [vmem:[#allocation3 + $0x20] sm:$0x1]
      %v968 = vsel %vm952, %v794, %v967
      %969 = vst [vmem:[#allocation3 + $0x20] sm:$0x1] %v968
      %v970 = vld [vmem:[#allocation3 + $0x24] sm:$0xf]
      %v971 = vsel %vm946, %v801, %v970
      %972 = vst [vmem:[#allocation3 + $0x24] sm:$0xf] %v971
      %973 = vst [vmem:[#allocation3 + $0x28] sm:$0xf] %v810
      %v974 = vld [vmem:[#allocation3 + $0x2c] sm:$0x1]
      %v975 = vsel %vm952, %v811, %v974
      %976 = vst [vmem:[#allocation3 + $0x2c] sm:$0x1] %v975
      %v977 = vld [vmem:[#allocation3 + $0x30] sm:$0xf]
      %v978 = vsel %vm946, %v818, %v977
      %979 = vst [vmem:[#allocation3 + $0x30] sm:$0xf] %v978
      %980 = vst [vmem:[#allocation3 + $0x34] sm:$0xf] %v827
      %v981 = vld [vmem:[#allocation3 + $0x38] sm:$0x1]
      %v982 = vsel %vm952, %v828, %v981
      %983 = vst [vmem:[#allocation3 + $0x38] sm:$0x1] %v982
      %v984 = vld [vmem:[#allocation3 + $0x3c] sm:$0xf]
      %v985 = vsel %vm946, %v835, %v984
      %986 = vst [vmem:[#allocation3 + $0x3c] sm:$0xf] %v985
      %987 = vst [vmem:[#allocation3 + $0x40] sm:$0xf] %v844
      %v988 = vld [vmem:[#allocation3 + $0x44] sm:$0x1]
      %v989 = vsel %vm952, %v845, %v988
      %990 = vst [vmem:[#allocation3 + $0x44] sm:$0x1] %v989
      %v991 = vld [vmem:[#allocation3 + $0x48] sm:$0xf]
      %v992 = vsel %vm946, %v852, %v991
      %993 = vst [vmem:[#allocation3 + $0x48] sm:$0xf] %v992
      %994 = vst [vmem:[#allocation3 + $0x4c] sm:$0xf] %v861
      %v995 = vld [vmem:[#allocation3 + $0x50] sm:$0x1]
      %v996 = vsel %vm952, %v862, %v995
      %997 = vst [vmem:[#allocation3 + $0x50] sm:$0x1] %v996
      %v998 = vld [vmem:[#allocation3 + $0x54] sm:$0xf]
      %v999 = vsel %vm946, %v869, %v998
      %1000 = vst [vmem:[#allocation3 + $0x54] sm:$0xf] %v999
      %1001 = vst [vmem:[#allocation3 + $0x58] sm:$0xf] %v878
      %v1002 = vld [vmem:[#allocation3 + $0x5c] sm:$0x1]
      %v1003 = vsel %vm952, %v879, %v1002
      %1004 = vst [vmem:[#allocation3 + $0x5c] sm:$0x1] %v1003
      %v1005 = vld [vmem:[#allocation3 + $0x60] sm:$0xf]
      %v1006 = vsel %vm946, %v886, %v1005
      %1007 = vst [vmem:[#allocation3 + $0x60] sm:$0xf] %v1006
      %1008 = vst [vmem:[#allocation3 + $0x64] sm:$0xf] %v895
      %v1009 = vld [vmem:[#allocation3 + $0x68] sm:$0x1]
      %v1010 = vsel %vm952, %v896, %v1009
      %1011 = vst [vmem:[#allocation3 + $0x68] sm:$0x1] %v1010
      %v1012 = vld [vmem:[#allocation3 + $0x6c] sm:$0xf]
      %v1013 = vsel %vm946, %v903, %v1012
      %1014 = vst [vmem:[#allocation3 + $0x6c] sm:$0xf] %v1013
      %1015 = vst [vmem:[#allocation3 + $0x70] sm:$0xf] %v912
      %v1016 = vld [vmem:[#allocation3 + $0x74] sm:$0x1]
      %v1017 = vsel %vm952, %v913, %v1016
      %1018 = vst [vmem:[#allocation3 + $0x74] sm:$0x1] %v1017
      %v1019 = vld [vmem:[#allocation3] sm:$0x1]
      %v1020 = vsel %vm952, 0, %v1019
      %1021 = vst [vmem:[#allocation3] sm:$0x1] %v1020
      %v1022 = vld [vmem:[#allocation3 + $0xc] sm:$0x1]
      %v1023 = vsel %vm952, 0, %v1022
      %1024 = vst [vmem:[#allocation3 + $0xc] sm:$0x1] %v1023
      %v1025 = vld [vmem:[#allocation3 + $0x18] sm:$0x1]
      %v1026 = vsel %vm952, 0, %v1025
      %1027 = vst [vmem:[#allocation3 + $0x18] sm:$0x1] %v1026
      %v1028 = vld [vmem:[#allocation3 + $0x24] sm:$0x1]
      %v1029 = vsel %vm952, 0, %v1028
      %1030 = vst [vmem:[#allocation3 + $0x24] sm:$0x1] %v1029
      %v1031 = vld [vmem:[#allocation3 + $0x30] sm:$0x1]
      %v1032 = vsel %vm952, 0, %v1031
      %1033 = vst [vmem:[#allocation3 + $0x30] sm:$0x1] %v1032
      %v1034 = vld [vmem:[#allocation3 + $0x3c] sm:$0x1]
      %v1035 = vsel %vm952, 0, %v1034
      %1036 = vst [vmem:[#allocation3 + $0x3c] sm:$0x1] %v1035
      %v1037 = vld [vmem:[#allocation3 + $0x48] sm:$0x1]
      %v1038 = vsel %vm952, 0, %v1037
      %1039 = vst [vmem:[#allocation3 + $0x48] sm:$0x1] %v1038
      %v1040 = vld [vmem:[#allocation3 + $0x54] sm:$0x1]
      %v1041 = vsel %vm952, 0, %v1040
      %1042 = vst [vmem:[#allocation3 + $0x54] sm:$0x1] %v1041
      %v1043 = vld [vmem:[#allocation3 + $0x60] sm:$0x1]
      %v1044 = vsel %vm952, 0, %v1043
      %1045 = vst [vmem:[#allocation3 + $0x60] sm:$0x1] %v1044
      %v1046 = vld [vmem:[#allocation3 + $0x6c] sm:$0x1]
      %v1047 = vsel %vm952, 0, %v1046
      %1048 = vst [vmem:[#allocation3 + $0x6c] sm:$0x1] %v1047
      %vm1049 = vmand %vm951, %vm945
      %v1050 = vld [vmem:[#allocation3 + $0x8] sm:$0x1]
      %v1051 = vsel %vm1049, 0, %v1050
      %1052 = vst [vmem:[#allocation3 + $0x8] sm:$0x1] %v1051
      %v1053 = vld [vmem:[#allocation3 + $0x14] sm:$0x1]
      %v1054 = vsel %vm1049, 0, %v1053
      %1055 = vst [vmem:[#allocation3 + $0x14] sm:$0x1] %v1054
      %v1056 = vld [vmem:[#allocation3 + $0x20] sm:$0x1]
      %v1057 = vsel %vm1049, 0, %v1056
      %1058 = vst [vmem:[#allocation3 + $0x20] sm:$0x1] %v1057
      %v1059 = vld [vmem:[#allocation3 + $0x2c] sm:$0x1]
      %v1060 = vsel %vm1049, 0, %v1059
      %1061 = vst [vmem:[#allocation3 + $0x2c] sm:$0x1] %v1060
      %v1062 = vld [vmem:[#allocation3 + $0x38] sm:$0x1]
      %v1063 = vsel %vm1049, 0, %v1062
      %1064 = vst [vmem:[#allocation3 + $0x38] sm:$0x1] %v1063
      %v1065 = vld [vmem:[#allocation3 + $0x44] sm:$0x1]
      %v1066 = vsel %vm1049, 0, %v1065
      %1067 = vst [vmem:[#allocation3 + $0x44] sm:$0x1] %v1066
      %v1068 = vld [vmem:[#allocation3 + $0x50] sm:$0x1]
      %v1069 = vsel %vm1049, 0, %v1068
      %1070 = vst [vmem:[#allocation3 + $0x50] sm:$0x1] %v1069
      %v1071 = vld [vmem:[#allocation3 + $0x5c] sm:$0x1]
      %v1072 = vsel %vm1049, 0, %v1071
      %1073 = vst [vmem:[#allocation3 + $0x5c] sm:$0x1] %v1072
      %v1074 = vld [vmem:[#allocation3 + $0x68] sm:$0x1]
      %v1075 = vsel %vm1049, 0, %v1074
      %1076 = vst [vmem:[#allocation3 + $0x68] sm:$0x1] %v1075
      %v1077 = vld [vmem:[#allocation3 + $0x74] sm:$0x1]
      %v1078 = vsel %vm1049, 0, %v1077
      %1079 = vst [vmem:[#allocation3 + $0x74] sm:$0x1] %v1078
      %v1080 = vld [vmem:[#allocation3] sm:$0xf]
      %v1081 = vld [vmem:[#allocation3 + $0x4] sm:$0xf]
      %v1082 = vld [vmem:[#allocation3 + $0xc] sm:$0xf]
      %v1083 = vld [vmem:[#allocation3 + $0x10] sm:$0xf]
      %v1084 = vld [vmem:[#allocation3 + $0x18] sm:$0xf]
      %v1085 = vld [vmem:[#allocation3 + $0x1c] sm:$0xf]
      %v1086 = vld [vmem:[#allocation3 + $0x24] sm:$0xf]
      %v1087 = vld [vmem:[#allocation3 + $0x28] sm:$0xf]
      %v1088 = vld [vmem:[#allocation3 + $0x30] sm:$0xf]
      %v1089 = vld [vmem:[#allocation3 + $0x34] sm:$0xf]
      %v1090 = vld [vmem:[#allocation3 + $0x3c] sm:$0xf]
      %v1091 = vld [vmem:[#allocation3 + $0x40] sm:$0xf]
      %v1092 = vld [vmem:[#allocation3 + $0x48] sm:$0xf]
      %v1093 = vld [vmem:[#allocation3 + $0x4c] sm:$0xf]
      %v1094 = vld [vmem:[#allocation3 + $0x54] sm:$0xf]
      %v1095 = vld [vmem:[#allocation3 + $0x58] sm:$0xf]
      %v1096 = vld [vmem:[#allocation3 + $0x60] sm:$0xf]
      %v1097 = vld [vmem:[#allocation3 + $0x64] sm:$0xf]
      %v1098 = vld [vmem:[#allocation3 + $0x6c] sm:$0xf]
      %v1099 = vld [vmem:[#allocation3 + $0x70] sm:$0xf]
      %v1100 = vld [vmem:[#allocation3] sm:$0xe]
      %v1101 = vld [vmem:[#allocation3 + $0x8] sm:$0x1]
      %v1102 = vld [vmem:[#allocation3 + $0xc] sm:$0xe]
      %v1103 = vld [vmem:[#allocation3 + $0x14] sm:$0x1]
      %v1104 = vld [vmem:[#allocation3 + $0x18] sm:$0xe]
      %v1105 = vld [vmem:[#allocation3 + $0x20] sm:$0x1]
      %v1106 = vld [vmem:[#allocation3 + $0x24] sm:$0xe]
      %v1107 = vld [vmem:[#allocation3 + $0x2c] sm:$0x1]
      %v1108 = vld [vmem:[#allocation3 + $0x30] sm:$0xe]
      %v1109 = vld [vmem:[#allocation3 + $0x38] sm:$0x1]
      %v1110 = vld [vmem:[#allocation3 + $0x3c] sm:$0xe]
      %v1111 = vld [vmem:[#allocation3 + $0x44] sm:$0x1]
      %v1112 = vld [vmem:[#allocation3 + $0x48] sm:$0xe]
      %v1113 = vld [vmem:[#allocation3 + $0x50] sm:$0x1]
      %v1114 = vld [vmem:[#allocation3 + $0x54] sm:$0xe]
      %v1115 = vld [vmem:[#allocation3 + $0x5c] sm:$0x1]
      %v1116 = vld [vmem:[#allocation3 + $0x60] sm:$0xe]
      %v1117 = vld [vmem:[#allocation3 + $0x68] sm:$0x1]
      %v1118 = vld [vmem:[#allocation3 + $0x6c] sm:$0xe]
      %v1119 = vld [vmem:[#allocation3 + $0x74] sm:$0x1]
      %vm1150 = vcmask 1042432
      %vm1151 = vcmask 1046532
      %vm1152 = vmor %vm1150, %vm1151
      %v1153 = vrot.slane %v1100, 5
      %v1154 = vrot.slane %v1153, 4
      %v1155 = vrot.slane %v1081, 5
      %v1156 = vsel %vm1152, %v1154, %v1155
      %v1157 = vrot.slane %v1155, 4
      %v1158 = vrot.slane %v1101, 5
      %v1159 = vsel %vm1152, %v1157, %v1158
      %v1160 = vrot.slane %v1102, 5
      %v1161 = vrot.slane %v1160, 4
      %v1162 = vrot.slane %v1083, 5
      %v1163 = vsel %vm1152, %v1161, %v1162
      %v1164 = vrot.slane %v1162, 4
      %v1165 = vrot.slane %v1103, 5
      %v1166 = vsel %vm1152, %v1164, %v1165
      %v1167 = vrot.slane %v1104, 5
      %v1168 = vrot.slane %v1167, 4
      %v1169 = vrot.slane %v1085, 5
      %v1170 = vsel %vm1152, %v1168, %v1169
      %v1171 = vrot.slane %v1169, 4
      %v1172 = vrot.slane %v1105, 5
      %v1173 = vsel %vm1152, %v1171, %v1172
      %v1174 = vrot.slane %v1106, 5
      %v1175 = vrot.slane %v1174, 4
      %v1176 = vrot.slane %v1087, 5
      %v1177 = vsel %vm1152, %v1175, %v1176
      %v1178 = vrot.slane %v1176, 4
      %v1179 = vrot.slane %v1107, 5
      %v1180 = vsel %vm1152, %v1178, %v1179
      %v1181 = vrot.slane %v1108, 5
      %v1182 = vrot.slane %v1181, 4
      %v1183 = vrot.slane %v1089, 5
      %v1184 = vsel %vm1152, %v1182, %v1183
      %v1185 = vrot.slane %v1183, 4
      %v1186 = vrot.slane %v1109, 5
      %v1187 = vsel %vm1152, %v1185, %v1186
      %v1188 = vrot.slane %v1110, 5
      %v1189 = vrot.slane %v1188, 4
      %v1190 = vrot.slane %v1091, 5
      %v1191 = vsel %vm1152, %v1189, %v1190
      %v1192 = vrot.slane %v1190, 4
      %v1193 = vrot.slane %v1111, 5
      %v1194 = vsel %vm1152, %v1192, %v1193
      %v1195 = vrot.slane %v1112, 5
      %v1196 = vrot.slane %v1195, 4
      %v1197 = vrot.slane %v1093, 5
      %v1198 = vsel %vm1152, %v1196, %v1197
      %v1199 = vrot.slane %v1197, 4
      %v1200 = vrot.slane %v1113, 5
      %v1201 = vsel %vm1152, %v1199, %v1200
      %v1202 = vrot.slane %v1114, 5
      %v1203 = vrot.slane %v1202, 4
      %v1204 = vrot.slane %v1095, 5
      %v1205 = vsel %vm1152, %v1203, %v1204
      %v1206 = vrot.slane %v1204, 4
      %v1207 = vrot.slane %v1115, 5
      %v1208 = vsel %vm1152, %v1206, %v1207
      %v1209 = vrot.slane %v1116, 5
      %v1210 = vrot.slane %v1209, 4
      %v1211 = vrot.slane %v1097, 5
      %v1212 = vsel %vm1152, %v1210, %v1211
      %v1213 = vrot.slane %v1211, 4
      %v1214 = vrot.slane %v1117, 5
      %v1215 = vsel %vm1152, %v1213, %v1214
      %v1216 = vrot.slane %v1118, 5
      %v1217 = vrot.slane %v1216, 4
      %v1218 = vrot.slane %v1099, 5
      %v1219 = vsel %vm1152, %v1217, %v1218
      %v1220 = vrot.slane %v1218, 4
      %v1221 = vrot.slane %v1119, 5
      %v1222 = vsel %vm1152, %v1220, %v1221
      %v1223 = vld [vmem:[%s1] sm:$0xf]
      %v1224 = vld [vmem:[%s1 + $0x4] sm:$0xf]
      %v1225 = vld [vmem:[%s1 + $0x8] sm:$0xf]
      %v1226 = vld [vmem:[%s1 + $0xc] sm:$0xf]
      %v1227 = vld [vmem:[%s1 + $0x10] sm:$0xf]
      %v1228 = vld [vmem:[%s1 + $0x14] sm:$0xf]
      %v1229 = vld [vmem:[%s1 + $0x18] sm:$0xf]
      %v1230 = vld [vmem:[%s1 + $0x1c] sm:$0xf]
      %v1231 = vld [vmem:[%s1 + $0x20] sm:$0xf]
      %v1232 = vld [vmem:[%s1 + $0x24] sm:$0xf]
      %v1233 = vld [vmem:[%s1 + $0x28] sm:$0xf]
      %v1234 = vld [vmem:[%s1 + $0x2c] sm:$0xf]
      %v1235 = vld [vmem:[%s1 + $0x30] sm:$0xf]
      %v1236 = vld [vmem:[%s1 + $0x34] sm:$0xf]
      %v1237 = vld [vmem:[%s1 + $0x38] sm:$0xf]
      %v1238 = vld [vmem:[%s1 + $0x3c] sm:$0xf]
      %v1247 = vunpack.c.l.b16 %v1080
      %v1248 = vunpack.c.l.b16 %v1081
      %v1249 = vunpack.c.l.b16 %v1082
      %v1250 = vunpack.c.l.b16 %v1083
      %v1251 = vunpack.c.l.b16 %v1084
      %v1252 = vunpack.c.l.b16 %v1085
      %v1253 = vunpack.c.l.b16 %v1086
      %v1254 = vunpack.c.l.b16 %v1087
      %v1255 = vunpack.c.l.b16 %v1088
      %v1256 = vunpack.c.l.b16 %v1089
      %v1257 = vunpack.c.l.b16 %v1090
      %v1258 = vunpack.c.l.b16 %v1091
      %v1259 = vunpack.c.l.b16 %v1092
      %v1260 = vunpack.c.l.b16 %v1093
      %v1261 = vunpack.c.l.b16 %v1094
      %v1262 = vunpack.c.l.b16 %v1095
      %v1263 = vpack.c.b16 %v1248, %v1247
      %v1264 = vpack.c.b16 %v1250, %v1249
      %v1265 = vpack.c.b16 %v1252, %v1251
      %v1266 = vpack.c.b16 %v1254, %v1253
      %v1267 = vpack.c.b16 %v1256, %v1255
      %v1268 = vpack.c.b16 %v1258, %v1257
      %v1269 = vpack.c.b16 %v1260, %v1259
      %v1270 = vpack.c.b16 %v1262, %v1261
      %v1295 = vunpack.c.l.b16 %v1223
      %v1296 = vunpack.c.l.b16 %v1224
      %v1297 = vunpack.c.l.b16 %v1225
      %v1298 = vunpack.c.l.b16 %v1226
      %v1299 = vunpack.c.l.b16 %v1227
      %v1300 = vunpack.c.l.b16 %v1228
      %v1301 = vunpack.c.l.b16 %v1229
      %v1302 = vunpack.c.l.b16 %v1230
      %v1303 = vunpack.c.l.b16 %v1231
      %v1304 = vunpack.c.l.b16 %v1232
      %v1305 = vunpack.c.l.b16 %v1233
      %v1306 = vunpack.c.l.b16 %v1234
      %v1307 = vunpack.c.l.b16 %v1235
      %v1308 = vunpack.c.l.b16 %v1236
      %v1309 = vunpack.c.l.b16 %v1237
      %v1310 = vunpack.c.l.b16 %v1238
      %v1311 = vpack.c.b16 %v1296, %v1295
      %v1312 = vpack.c.b16 %v1298, %v1297
      %v1313 = vpack.c.b16 %v1300, %v1299
      %v1314 = vpack.c.b16 %v1302, %v1301
      %v1315 = vpack.c.b16 %v1304, %v1303
      %v1316 = vpack.c.b16 %v1306, %v1305
      %v1317 = vpack.c.b16 %v1308, %v1307
      %v1318 = vpack.c.b16 %v1310, %v1309
      %1327 = vmatprep.subr.bf16.mxu0 0
      %1328 = vmatpush1.bf16.msra.mxu0 %v1311
      %1329 = vmatprep.subr.bf16.mxu0 0
      %1330 = vmatpush1.bf16.msra.mxu0 %v1312
      %1331 = vmatprep.subr.bf16.mxu0 0
      %1332 = vmatpush1.bf16.msra.mxu0 %v1313
      %1333 = vmatprep.subr.bf16.mxu0 0
      %1334 = vmatpush1.bf16.msra.mxu0 %v1314
      %1335 = vmatprep.subr.bf16.mxu0 0
      %1336 = vmatpush1.bf16.msra.mxu0 %v1315
      %1337 = vmatprep.subr.bf16.mxu0 0
      %1338 = vmatpush1.bf16.msra.mxu0 %v1316
      %1339 = vmatprep.subr.bf16.mxu0 0
      %1340 = vmatpush1.bf16.msra.mxu0 %v1317
      %1341 = vmatprep.subr.bf16.mxu0 0
      %1342 = vmatpush1.bf16.msra.mxu0 %v1318
      %1343 = vmatprep.subr.bf16.mxu0 0
      %1344 = vmatpush1.bf16.msra.mxu0 0
      %1345 = vmatprep.subr.bf16.mxu0 0
      %1346 = vmatpush1.bf16.msra.mxu0 0
      %1347 = vmatprep.subr.bf16.mxu0 0
      %1348 = vmatpush1.bf16.msra.mxu0 0
      %1349 = vmatprep.subr.bf16.mxu0 0
      %1350 = vmatpush1.bf16.msra.mxu0 0
      %1351 = vmatprep.subr.bf16.mxu0 0
      %1352 = vmatpush1.bf16.msra.mxu0 0
      %1353 = vmatprep.subr.bf16.mxu0 0
      %1354 = vmatpush1.bf16.msra.mxu0 0
      %1355 = vmatprep.subr.bf16.mxu0 0
      %1356 = vmatpush1.bf16.msra.mxu0 0
      %1357 = vmatprep.subr.bf16.mxu0 0
      %1358 = vmatpush1.bf16.msra.mxu0 0
      %1359 = vmatprep.mubr.bf16.mxu0 0
      %1360 = vmatmul.mubr.bf16.gmra.mrb[0].mxu0 %v1263
      %v1361 = vpop.f32.mrb[0].mxu0
      %v1362 = vadd.f32 0.0, %v1361
      %v1363 = vpop.f32.mrb[0].mxu0
      %v1364 = vpop.f32.mrb[0].mxu0
      %v1365 = vadd.f32 0.0, %v1364
      %v1366 = vpop.f32.mrb[0].mxu0
      %1367 = vmatprep.mubr.bf16.mxu0 0
      %1368 = vmatmul.mubr.bf16.gmra.mrb[0].mxu0 %v1264
      %v1369 = vpop.f32.mrb[0].mxu0
      %v1370 = vadd.f32 0.0, %v1369
      %v1371 = vpop.f32.mrb[0].mxu0
      %v1372 = vpop.f32.mrb[0].mxu0
      %v1373 = vadd.f32 0.0, %v1372
      %v1374 = vpop.f32.mrb[0].mxu0
      %1375 = vmatprep.mubr.bf16.mxu0 0
      %1376 = vmatmul.mubr.bf16.gmra.mrb[0].mxu0 %v1265
      %v1377 = vpop.f32.mrb[0].mxu0
      %v1378 = vadd.f32 0.0, %v1377
      %v1379 = vpop.f32.mrb[0].mxu0
      %v1380 = vpop.f32.mrb[0].mxu0
      %v1381 = vadd.f32 0.0, %v1380
      %v1382 = vpop.f32.mrb[0].mxu0
      %1383 = vmatprep.mubr.bf16.mxu0 0
      %1384 = vmatmul.mubr.bf16.gmra.mrb[0].mxu0 %v1266
      %v1385 = vpop.f32.mrb[0].mxu0
      %v1386 = vadd.f32 0.0, %v1385
      %v1387 = vpop.f32.mrb[0].mxu0
      %v1388 = vpop.f32.mrb[0].mxu0
      %v1389 = vadd.f32 0.0, %v1388
      %v1390 = vpop.f32.mrb[0].mxu0
      %1391 = vmatprep.mubr.bf16.mxu0 0
      %1392 = vmatmul.mubr.bf16.gmra.mrb[0].mxu0 %v1267
      %v1393 = vpop.f32.mrb[0].mxu0
      %v1394 = vadd.f32 0.0, %v1393
      %v1395 = vpop.f32.mrb[0].mxu0
      %v1396 = vpop.f32.mrb[0].mxu0
      %v1397 = vadd.f32 0.0, %v1396
      %v1398 = vpop.f32.mrb[0].mxu0
      %1399 = vmatprep.mubr.bf16.mxu0 0
      %1400 = vmatmul.mubr.bf16.gmra.mrb[0].mxu0 %v1268
      %v1401 = vpop.f32.mrb[0].mxu0
      %v1402 = vadd.f32 0.0, %v1401
      %v1403 = vpop.f32.mrb[0].mxu0
      %v1404 = vpop.f32.mrb[0].mxu0
      %v1405 = vadd.f32 0.0, %v1404
      %v1406 = vpop.f32.mrb[0].mxu0
      %1407 = vmatprep.mubr.bf16.mxu0 0
      %1408 = vmatmul.mubr.bf16.gmra.mrb[0].mxu0 %v1269
      %v1409 = vpop.f32.mrb[0].mxu0
      %v1410 = vadd.f32 0.0, %v1409
      %v1411 = vpop.f32.mrb[0].mxu0
      %v1412 = vpop.f32.mrb[0].mxu0
      %v1413 = vadd.f32 0.0, %v1412
      %v1414 = vpop.f32.mrb[0].mxu0
      %1415 = vmatprep.mubr.bf16.mxu0 0
      %1416 = vmatmul.mubr.bf16.gmra.mrb[0].mxu0 %v1270
      %v1417 = vpop.f32.mrb[0].mxu0
      %v1418 = vadd.f32 0.0, %v1417
      %v1419 = vpop.f32.mrb[0].mxu0
      %v1420 = vpop.f32.mrb[0].mxu0
      %v1421 = vadd.f32 0.0, %v1420
      %v1422 = vpop.f32.mrb[0].mxu0
      %1423 = vdwg.mxu0
      %1424 = vst [vmem:[#allocation5] sm:$0xff] %v1362
      %1425 = vst [vmem:[#allocation5 + $0x8] sm:$0xff] %v1365
      %1426 = vst [vmem:[#allocation5 + $0x10] sm:$0xff] %v1370
      %1427 = vst [vmem:[#allocation5 + $0x18] sm:$0xff] %v1373
      %1428 = vst [vmem:[#allocation5 + $0x20] sm:$0xff] %v1378
      %1429 = vst [vmem:[#allocation5 + $0x28] sm:$0xff] %v1381
      %1430 = vst [vmem:[#allocation5 + $0x30] sm:$0xff] %v1386
      %1431 = vst [vmem:[#allocation5 + $0x38] sm:$0xff] %v1389
      %1432 = vst [vmem:[#allocation5 + $0x40] sm:$0xff] %v1394
      %1433 = vst [vmem:[#allocation5 + $0x48] sm:$0xff] %v1397
      %1434 = vst [vmem:[#allocation5 + $0x50] sm:$0xff] %v1402
      %1435 = vst [vmem:[#allocation5 + $0x58] sm:$0xff] %v1405
      %1436 = vst [vmem:[#allocation5 + $0x60] sm:$0xff] %v1410
      %1437 = vst [vmem:[#allocation5 + $0x68] sm:$0xff] %v1413
      %1438 = vst [vmem:[#allocation5 + $0x70] sm:$0xff] %v1418
      %1439 = vst [vmem:[#allocation5 + $0x78] sm:$0xff] %v1421
      %s1440 = scalar_lea.vmem %s1, 64
      %v1441 = vld [vmem:[%s1440] sm:$0xf]
      %v1442 = vld [vmem:[%s1440 + $0x4] sm:$0xf]
      %v1443 = vld [vmem:[%s1440 + $0x8] sm:$0xf]
      %v1444 = vld [vmem:[%s1440 + $0xc] sm:$0xf]
      %v1445 = vld [vmem:[%s1440 + $0x10] sm:$0xf]
      %v1446 = vld [vmem:[%s1440 + $0x14] sm:$0xf]
      %v1447 = vld [vmem:[%s1440 + $0x18] sm:$0xf]
      %v1448 = vld [vmem:[%s1440 + $0x1c] sm:$0xf]
      %v1449 = vld [vmem:[%s1440 + $0x20] sm:$0xf]
      %v1450 = vld [vmem:[%s1440 + $0x24] sm:$0xf]
      %v1451 = vld [vmem:[%s1440 + $0x28] sm:$0xf]
      %v1452 = vld [vmem:[%s1440 + $0x2c] sm:$0xf]
      %v1453 = vld [vmem:[%s1440 + $0x30] sm:$0xf]
      %v1454 = vld [vmem:[%s1440 + $0x34] sm:$0xf]
      %v1455 = vld [vmem:[%s1440 + $0x38] sm:$0xf]
      %v1456 = vld [vmem:[%s1440 + $0x3c] sm:$0xf]
      %v1473 = vunpack.c.l.b16 %v1441
      %v1474 = vunpack.c.l.b16 %v1442
      %v1475 = vunpack.c.l.b16 %v1443
      %v1476 = vunpack.c.l.b16 %v1444
      %v1477 = vunpack.c.l.b16 %v1445
      %v1478 = vunpack.c.l.b16 %v1446
      %v1479 = vunpack.c.l.b16 %v1447
      %v1480 = vunpack.c.l.b16 %v1448
      %v1481 = vunpack.c.l.b16 %v1449
      %v1482 = vunpack.c.l.b16 %v1450
      %v1483 = vunpack.c.l.b16 %v1451
      %v1484 = vunpack.c.l.b16 %v1452
      %v1485 = vunpack.c.l.b16 %v1453
      %v1486 = vunpack.c.l.b16 %v1454
      %v1487 = vunpack.c.l.b16 %v1455
      %v1488 = vunpack.c.l.b16 %v1456
      %v1489 = vpack.c.b16 %v1474, %v1473
      %v1490 = vpack.c.b16 %v1476, %v1475
      %v1491 = vpack.c.b16 %v1478, %v1477
      %v1492 = vpack.c.b16 %v1480, %v1479
      %v1493 = vpack.c.b16 %v1482, %v1481
      %v1494 = vpack.c.b16 %v1484, %v1483
      %v1495 = vpack.c.b16 %v1486, %v1485
      %v1496 = vpack.c.b16 %v1488, %v1487
      %1505 = vmatprep.subr.bf16.mxu0 0
      %1506 = vmatpush1.bf16.msra.mxu0 %v1489
      %1507 = vmatprep.subr.bf16.mxu0 0
      %1508 = vmatpush1.bf16.msra.mxu0 %v1490
      %1509 = vmatprep.subr.bf16.mxu0 0
      %1510 = vmatpush1.bf16.msra.mxu0 %v1491
      %1511 = vmatprep.subr.bf16.mxu0 0
      %1512 = vmatpush1.bf16.msra.mxu0 %v1492
      %1513 = vmatprep.subr.bf16.mxu0 0
      %1514 = vmatpush1.bf16.msra.mxu0 %v1493
      %1515 = vmatprep.subr.bf16.mxu0 0
      %1516 = vmatpush1.bf16.msra.mxu0 %v1494
      %1517 = vmatprep.subr.bf16.mxu0 0
      %1518 = vmatpush1.bf16.msra.mxu0 %v1495
      %1519 = vmatprep.subr.bf16.mxu0 0
      %1520 = vmatpush1.bf16.msra.mxu0 %v1496
      %1521 = vmatprep.subr.bf16.mxu0 0
      %1522 = vmatpush1.bf16.msra.mxu0 0
      %1523 = vmatprep.subr.bf16.mxu0 0
      %1524 = vmatpush1.bf16.msra.mxu0 0
      %1525 = vmatprep.subr.bf16.mxu0 0
      %1526 = vmatpush1.bf16.msra.mxu0 0
      %1527 = vmatprep.subr.bf16.mxu0 0
      %1528 = vmatpush1.bf16.msra.mxu0 0
      %1529 = vmatprep.subr.bf16.mxu0 0
      %1530 = vmatpush1.bf16.msra.mxu0 0
      %1531 = vmatprep.subr.bf16.mxu0 0
      %1532 = vmatpush1.bf16.msra.mxu0 0
      %1533 = vmatprep.subr.bf16.mxu0 0
      %1534 = vmatpush1.bf16.msra.mxu0 0
      %1535 = vmatprep.subr.bf16.mxu0 0
      %1536 = vmatpush1.bf16.msra.mxu0 0
      %1537 = vmatprep.mubr.bf16.mxu0 0
      %1538 = vmatmul.mubr.bf16.gmra.mrb[0].mxu0 %v681
      %v1539 = vpop.f32.mrb[0].mxu0
      %v1540 = vadd.f32 0.0, %v1539
      %v1541 = vpop.f32.mrb[0].mxu0
      %v1542 = vpop.f32.mrb[0].mxu0
      %v1543 = vadd.f32 0.0, %v1542
      %v1544 = vpop.f32.mrb[0].mxu0
      %1545 = vmatprep.mubr.bf16.mxu0 0
      %1546 = vmatmul.mubr.bf16.gmra.mrb[0].mxu0 %v682
      %v1547 = vpop.f32.mrb[0].mxu0
      %v1548 = vadd.f32 0.0, %v1547
      %v1549 = vpop.f32.mrb[0].mxu0
      %v1550 = vpop.f32.mrb[0].mxu0
      %v1551 = vadd.f32 0.0, %v1550
      %v1552 = vpop.f32.mrb[0].mxu0
      %1553 = vmatprep.mubr.bf16.mxu0 0
      %1554 = vmatmul.mubr.bf16.gmra.mrb[0].mxu0 %v683
      %v1555 = vpop.f32.mrb[0].mxu0
      %v1556 = vadd.f32 0.0, %v1555
      %v1557 = vpop.f32.mrb[0].mxu0
      %v1558 = vpop.f32.mrb[0].mxu0
      %v1559 = vadd.f32 0.0, %v1558
      %v1560 = vpop.f32.mrb[0].mxu0
      %1561 = vmatprep.mubr.bf16.mxu0 0
      %1562 = vmatmul.mubr.bf16.gmra.mrb[0].mxu0 %v684
      %v1563 = vpop.f32.mrb[0].mxu0
      %v1564 = vadd.f32 0.0, %v1563
      %v1565 = vpop.f32.mrb[0].mxu0
      %v1566 = vpop.f32.mrb[0].mxu0
      %v1567 = vadd.f32 0.0, %v1566
      %v1568 = vpop.f32.mrb[0].mxu0
      %1569 = vmatprep.mubr.bf16.mxu0 0
      %1570 = vmatmul.mubr.bf16.gmra.mrb[0].mxu0 %v685
      %v1571 = vpop.f32.mrb[0].mxu0
      %v1572 = vadd.f32 0.0, %v1571
      %v1573 = vpop.f32.mrb[0].mxu0
      %v1574 = vpop.f32.mrb[0].mxu0
      %v1575 = vadd.f32 0.0, %v1574
      %v1576 = vpop.f32.mrb[0].mxu0
      %1577 = vmatprep.mubr.bf16.mxu0 0
      %1578 = vmatmul.mubr.bf16.gmra.mrb[0].mxu0 %v686
      %v1579 = vpop.f32.mrb[0].mxu0
      %v1580 = vadd.f32 0.0, %v1579
      %v1581 = vpop.f32.mrb[0].mxu0
      %v1582 = vpop.f32.mrb[0].mxu0
      %v1583 = vadd.f32 0.0, %v1582
      %v1584 = vpop.f32.mrb[0].mxu0
      %1585 = vmatprep.mubr.bf16.mxu0 0
      %1586 = vmatmul.mubr.bf16.gmra.mrb[0].mxu0 %v687
      %v1587 = vpop.f32.mrb[0].mxu0
      %v1588 = vadd.f32 0.0, %v1587
      %v1589 = vpop.f32.mrb[0].mxu0
      %v1590 = vpop.f32.mrb[0].mxu0
      %v1591 = vadd.f32 0.0, %v1590
      %v1592 = vpop.f32.mrb[0].mxu0
      %1593 = vmatprep.mubr.bf16.mxu0 0
      %1594 = vmatmul.mubr.bf16.gmra.mrb[0].mxu0 %v688
      %v1595 = vpop.f32.mrb[0].mxu0
      %v1596 = vadd.f32 0.0, %v1595
      %v1597 = vpop.f32.mrb[0].mxu0
      %v1598 = vpop.f32.mrb[0].mxu0
      %v1599 = vadd.f32 0.0, %v1598
      %v1600 = vpop.f32.mrb[0].mxu0
      %1601 = vdwg.mxu0
      %v1602 = vld [vmem:[#allocation5] sm:$0xff]
      %v1603 = vld [vmem:[#allocation5 + $0x8] sm:$0xff]
      %v1604 = vld [vmem:[#allocation5 + $0x10] sm:$0xff]
      %v1605 = vld [vmem:[#allocation5 + $0x18] sm:$0xff]
      %v1606 = vld [vmem:[#allocation5 + $0x20] sm:$0xff]
      %v1607 = vld [vmem:[#allocation5 + $0x28] sm:$0xff]
      %v1608 = vld [vmem:[#allocation5 + $0x30] sm:$0xff]
      %v1609 = vld [vmem:[#allocation5 + $0x38] sm:$0xff]
      %v1610 = vld [vmem:[#allocation5 + $0x40] sm:$0xff]
      %v1611 = vld [vmem:[#allocation5 + $0x48] sm:$0xff]
      %v1612 = vld [vmem:[#allocation5 + $0x50] sm:$0xff]
      %v1613 = vld [vmem:[#allocation5 + $0x58] sm:$0xff]
      %v1614 = vld [vmem:[#allocation5 + $0x60] sm:$0xff]
      %v1615 = vld [vmem:[#allocation5 + $0x68] sm:$0xff]
      %v1616 = vld [vmem:[#allocation5 + $0x70] sm:$0xff]
      %v1617 = vld [vmem:[#allocation5 + $0x78] sm:$0xff]
      %v1618 = vadd.f32 %v1602, %v1540
      %v1619 = vadd.f32 %v1603, %v1543
      %v1620 = vadd.f32 %v1604, %v1548
      %v1621 = vadd.f32 %v1605, %v1551
      %v1622 = vadd.f32 %v1606, %v1556
      %v1623 = vadd.f32 %v1607, %v1559
      %v1624 = vadd.f32 %v1608, %v1564
      %v1625 = vadd.f32 %v1609, %v1567
      %v1626 = vadd.f32 %v1610, %v1572
      %v1627 = vadd.f32 %v1611, %v1575
      %v1628 = vadd.f32 %v1612, %v1580
      %v1629 = vadd.f32 %v1613, %v1583
      %v1630 = vadd.f32 %v1614, %v1588
      %v1631 = vadd.f32 %v1615, %v1591
      %v1632 = vadd.f32 %v1616, %v1596
      %v1633 = vadd.f32 %v1617, %v1599
      %1634 = vst [vmem:[#allocation5] sm:$0xff] %v1618
      %1635 = vst [vmem:[#allocation5 + $0x8] sm:$0xff] %v1619
      %1636 = vst [vmem:[#allocation5 + $0x10] sm:$0xff] %v1620
      %1637 = vst [vmem:[#allocation5 + $0x18] sm:$0xff] %v1621
      %1638 = vst [vmem:[#allocation5 + $0x20] sm:$0xff] %v1622
      %1639 = vst [vmem:[#allocation5 + $0x28] sm:$0xff] %v1623
      %1640 = vst [vmem:[#allocation5 + $0x30] sm:$0xff] %v1624
      %1641 = vst [vmem:[#allocation5 + $0x38] sm:$0xff] %v1625
      %1642 = vst [vmem:[#allocation5 + $0x40] sm:$0xff] %v1626
      %1643 = vst [vmem:[#allocation5 + $0x48] sm:$0xff] %v1627
      %1644 = vst [vmem:[#allocation5 + $0x50] sm:$0xff] %v1628
      %1645 = vst [vmem:[#allocation5 + $0x58] sm:$0xff] %v1629
      %1646 = vst [vmem:[#allocation5 + $0x60] sm:$0xff] %v1630
      %1647 = vst [vmem:[#allocation5 + $0x68] sm:$0xff] %v1631
      %1648 = vst [vmem:[#allocation5 + $0x70] sm:$0xff] %v1632
      %1649 = vst [vmem:[#allocation5 + $0x78] sm:$0xff] %v1633
      %s1650 = scalar_lea.vmem %s1, 128
      %v1651 = vld [vmem:[%s1650] sm:$0xf]
      %v1652 = vld [vmem:[%s1650 + $0x4] sm:$0xf]
      %v1653 = vld [vmem:[%s1650 + $0x8] sm:$0xf]
      %v1654 = vld [vmem:[%s1650 + $0xc] sm:$0xf]
      %v1655 = vld [vmem:[%s1650 + $0x10] sm:$0xf]
      %v1656 = vld [vmem:[%s1650 + $0x14] sm:$0xf]
      %v1657 = vld [vmem:[%s1650 + $0x18] sm:$0xf]
      %v1658 = vld [vmem:[%s1650 + $0x1c] sm:$0xf]
      %v1659 = vld [vmem:[%s1650 + $0x20] sm:$0xf]
      %v1660 = vld [vmem:[%s1650 + $0x24] sm:$0xf]
      %v1661 = vld [vmem:[%s1650 + $0x28] sm:$0xf]
      %v1662 = vld [vmem:[%s1650 + $0x2c] sm:$0xf]
      %v1663 = vld [vmem:[%s1650 + $0x30] sm:$0xf]
      %v1664 = vld [vmem:[%s1650 + $0x34] sm:$0xf]
      %v1665 = vld [vmem:[%s1650 + $0x38] sm:$0xf]
      %v1666 = vld [vmem:[%s1650 + $0x3c] sm:$0xf]
      %v1667 = vunpack.c.l.b16 %v1156
      %v1668 = vunpack.c.l.b16 %v1159
      %v1669 = vunpack.c.l.b16 %v1163
      %v1670 = vunpack.c.l.b16 %v1166
      %v1671 = vunpack.c.l.b16 %v1170
      %v1672 = vunpack.c.l.b16 %v1173
      %v1673 = vunpack.c.l.b16 %v1177
      %v1674 = vunpack.c.l.b16 %v1180
      %v1675 = vunpack.c.l.b16 %v1184
      %v1676 = vunpack.c.l.b16 %v1187
      %v1677 = vunpack.c.l.b16 %v1191
      %v1678 = vunpack.c.l.b16 %v1194
      %v1679 = vunpack.c.l.b16 %v1198
      %v1680 = vunpack.c.l.b16 %v1201
      %v1681 = vunpack.c.l.b16 %v1205
      %v1682 = vunpack.c.l.b16 %v1208
      %v1683 = vpack.c.b16 %v1668, %v1667
      %v1684 = vpack.c.b16 %v1670, %v1669
      %v1685 = vpack.c.b16 %v1672, %v1671
      %v1686 = vpack.c.b16 %v1674, %v1673
      %v1687 = vpack.c.b16 %v1676, %v1675
      %v1688 = vpack.c.b16 %v1678, %v1677
      %v1689 = vpack.c.b16 %v1680, %v1679
      %v1690 = vpack.c.b16 %v1682, %v1681
      %v1715 = vunpack.c.l.b16 %v1651
      %v1716 = vunpack.c.l.b16 %v1652
      %v1717 = vunpack.c.l.b16 %v1653
      %v1718 = vunpack.c.l.b16 %v1654
      %v1719 = vunpack.c.l.b16 %v1655
      %v1720 = vunpack.c.l.b16 %v1656
      %v1721 = vunpack.c.l.b16 %v1657
      %v1722 = vunpack.c.l.b16 %v1658
      %v1723 = vunpack.c.l.b16 %v1659
      %v1724 = vunpack.c.l.b16 %v1660
      %v1725 = vunpack.c.l.b16 %v1661
      %v1726 = vunpack.c.l.b16 %v1662
      %v1727 = vunpack.c.l.b16 %v1663
      %v1728 = vunpack.c.l.b16 %v1664
      %v1729 = vunpack.c.l.b16 %v1665
      %v1730 = vunpack.c.l.b16 %v1666
      %v1731 = vpack.c.b16 %v1716, %v1715
      %v1732 = vpack.c.b16 %v1718, %v1717
      %v1733 = vpack.c.b16 %v1720, %v1719
      %v1734 = vpack.c.b16 %v1722, %v1721
      %v1735 = vpack.c.b16 %v1724, %v1723
      %v1736 = vpack.c.b16 %v1726, %v1725
      %v1737 = vpack.c.b16 %v1728, %v1727
      %v1738 = vpack.c.b16 %v1730, %v1729
      %1747 = vmatprep.subr.bf16.mxu0 0
      %1748 = vmatpush1.bf16.msra.mxu0 %v1731
      %1749 = vmatprep.subr.bf16.mxu0 0
      %1750 = vmatpush1.bf16.msra.mxu0 %v1732
      %1751 = vmatprep.subr.bf16.mxu0 0
      %1752 = vmatpush1.bf16.msra.mxu0 %v1733
      %1753 = vmatprep.subr.bf16.mxu0 0
      %1754 = vmatpush1.bf16.msra.mxu0 %v1734
      %1755 = vmatprep.subr.bf16.mxu0 0
      %1756 = vmatpush1.bf16.msra.mxu0 %v1735
      %1757 = vmatprep.subr.bf16.mxu0 0
      %1758 = vmatpush1.bf16.msra.mxu0 %v1736
      %1759 = vmatprep.subr.bf16.mxu0 0
      %1760 = vmatpush1.bf16.msra.mxu0 %v1737
      %1761 = vmatprep.subr.bf16.mxu0 0
      %1762 = vmatpush1.bf16.msra.mxu0 %v1738
      %1763 = vmatprep.subr.bf16.mxu0 0
      %1764 = vmatpush1.bf16.msra.mxu0 0
      %1765 = vmatprep.subr.bf16.mxu0 0
      %1766 = vmatpush1.bf16.msra.mxu0 0
      %1767 = vmatprep.subr.bf16.mxu0 0
      %1768 = vmatpush1.bf16.msra.mxu0 0
      %1769 = vmatprep.subr.bf16.mxu0 0
      %1770 = vmatpush1.bf16.msra.mxu0 0
      %1771 = vmatprep.subr.bf16.mxu0 0
      %1772 = vmatpush1.bf16.msra.mxu0 0
      %1773 = vmatprep.subr.bf16.mxu0 0
      %1774 = vmatpush1.bf16.msra.mxu0 0
      %1775 = vmatprep.subr.bf16.mxu0 0
      %1776 = vmatpush1.bf16.msra.mxu0 0
      %1777 = vmatprep.subr.bf16.mxu0 0
      %1778 = vmatpush1.bf16.msra.mxu0 0
      %1779 = vmatprep.mubr.bf16.mxu0 0
      %1780 = vmatmul.mubr.bf16.gmra.mrb[0].mxu0 %v1683
      %v1781 = vpop.f32.mrb[0].mxu0
      %v1782 = vadd.f32 0.0, %v1781
      %v1783 = vpop.f32.mrb[0].mxu0
      %v1784 = vpop.f32.mrb[0].mxu0
      %v1785 = vadd.f32 0.0, %v1784
      %v1786 = vpop.f32.mrb[0].mxu0
      %1787 = vmatprep.mubr.bf16.mxu0 0
      %1788 = vmatmul.mubr.bf16.gmra.mrb[0].mxu0 %v1684
      %v1789 = vpop.f32.mrb[0].mxu0
      %v1790 = vadd.f32 0.0, %v1789
      %v1791 = vpop.f32.mrb[0].mxu0
      %v1792 = vpop.f32.mrb[0].mxu0
      %v1793 = vadd.f32 0.0, %v1792
      %v1794 = vpop.f32.mrb[0].mxu0
      %1795 = vmatprep.mubr.bf16.mxu0 0
      %1796 = vmatmul.mubr.bf16.gmra.mrb[0].mxu0 %v1685
      %v1797 = vpop.f32.mrb[0].mxu0
      %v1798 = vadd.f32 0.0, %v1797
      %v1799 = vpop.f32.mrb[0].mxu0
      %v1800 = vpop.f32.mrb[0].mxu0
      %v1801 = vadd.f32 0.0, %v1800
      %v1802 = vpop.f32.mrb[0].mxu0
      %1803 = vmatprep.mubr.bf16.mxu0 0
      %1804 = vmatmul.mubr.bf16.gmra.mrb[0].mxu0 %v1686
      %v1805 = vpop.f32.mrb[0].mxu0
      %v1806 = vadd.f32 0.0, %v1805
      %v1807 = vpop.f32.mrb[0].mxu0
      %v1808 = vpop.f32.mrb[0].mxu0
      %v1809 = vadd.f32 0.0, %v1808
      %v1810 = vpop.f32.mrb[0].mxu0
      %1811 = vmatprep.mubr.bf16.mxu0 0
      %1812 = vmatmul.mubr.bf16.gmra.mrb[0].mxu0 %v1687
      %v1813 = vpop.f32.mrb[0].mxu0
      %v1814 = vadd.f32 0.0, %v1813
      %v1815 = vpop.f32.mrb[0].mxu0
      %v1816 = vpop.f32.mrb[0].mxu0
      %v1817 = vadd.f32 0.0, %v1816
      %v1818 = vpop.f32.mrb[0].mxu0
      %1819 = vmatprep.mubr.bf16.mxu0 0
      %1820 = vmatmul.mubr.bf16.gmra.mrb[0].mxu0 %v1688
      %v1821 = vpop.f32.mrb[0].mxu0
      %v1822 = vadd.f32 0.0, %v1821
      %v1823 = vpop.f32.mrb[0].mxu0
      %v1824 = vpop.f32.mrb[0].mxu0
      %v1825 = vadd.f32 0.0, %v1824
      %v1826 = vpop.f32.mrb[0].mxu0
      %1827 = vmatprep.mubr.bf16.mxu0 0
      %1828 = vmatmul.mubr.bf16.gmra.mrb[0].mxu0 %v1689
      %v1829 = vpop.f32.mrb[0].mxu0
      %v1830 = vadd.f32 0.0, %v1829
      %v1831 = vpop.f32.mrb[0].mxu0
      %v1832 = vpop.f32.mrb[0].mxu0
      %v1833 = vadd.f32 0.0, %v1832
      %v1834 = vpop.f32.mrb[0].mxu0
      %1835 = vmatprep.mubr.bf16.mxu0 0
      %1836 = vmatmul.mubr.bf16.gmra.mrb[0].mxu0 %v1690
      %v1837 = vpop.f32.mrb[0].mxu0
      %v1838 = vadd.f32 0.0, %v1837
      %v1839 = vpop.f32.mrb[0].mxu0
      %v1840 = vpop.f32.mrb[0].mxu0
      %v1841 = vadd.f32 0.0, %v1840
      %v1842 = vpop.f32.mrb[0].mxu0
      %1843 = vdwg.mxu0
      %v1844 = vld [vmem:[#allocation5] sm:$0xff]
      %v1845 = vld [vmem:[#allocation5 + $0x8] sm:$0xff]
      %v1846 = vld [vmem:[#allocation5 + $0x10] sm:$0xff]
      %v1847 = vld [vmem:[#allocation5 + $0x18] sm:$0xff]
      %v1848 = vld [vmem:[#allocation5 + $0x20] sm:$0xff]
      %v1849 = vld [vmem:[#allocation5 + $0x28] sm:$0xff]
      %v1850 = vld [vmem:[#allocation5 + $0x30] sm:$0xff]
      %v1851 = vld [vmem:[#allocation5 + $0x38] sm:$0xff]
      %v1852 = vld [vmem:[#allocation5 + $0x40] sm:$0xff]
      %v1853 = vld [vmem:[#allocation5 + $0x48] sm:$0xff]
      %v1854 = vld [vmem:[#allocation5 + $0x50] sm:$0xff]
      %v1855 = vld [vmem:[#allocation5 + $0x58] sm:$0xff]
      %v1856 = vld [vmem:[#allocation5 + $0x60] sm:$0xff]
      %v1857 = vld [vmem:[#allocation5 + $0x68] sm:$0xff]
      %v1858 = vld [vmem:[#allocation5 + $0x70] sm:$0xff]
      %v1859 = vld [vmem:[#allocation5 + $0x78] sm:$0xff]
      %v1860 = vadd.f32 %v1844, %v1782
      %v1861 = vadd.f32 %v1845, %v1785
      %v1862 = vadd.f32 %v1846, %v1790
      %v1863 = vadd.f32 %v1847, %v1793
      %v1864 = vadd.f32 %v1848, %v1798
      %v1865 = vadd.f32 %v1849, %v1801
      %v1866 = vadd.f32 %v1850, %v1806
      %v1867 = vadd.f32 %v1851, %v1809
      %v1868 = vadd.f32 %v1852, %v1814
      %v1869 = vadd.f32 %v1853, %v1817
      %v1870 = vadd.f32 %v1854, %v1822
      %v1871 = vadd.f32 %v1855, %v1825
      %v1872 = vadd.f32 %v1856, %v1830
      %v1873 = vadd.f32 %v1857, %v1833
      %v1874 = vadd.f32 %v1858, %v1838
      %v1875 = vadd.f32 %v1859, %v1841
      %1876 = vst [vmem:[#allocation5] sm:$0xff] %v1860
      %1877 = vst [vmem:[#allocation5 + $0x8] sm:$0xff] %v1861
      %1878 = vst [vmem:[#allocation5 + $0x10] sm:$0xff] %v1862
      %1879 = vst [vmem:[#allocation5 + $0x18] sm:$0xff] %v1863
      %1880 = vst [vmem:[#allocation5 + $0x20] sm:$0xff] %v1864
      %1881 = vst [vmem:[#allocation5 + $0x28] sm:$0xff] %v1865
      %1882 = vst [vmem:[#allocation5 + $0x30] sm:$0xff] %v1866
      %1883 = vst [vmem:[#allocation5 + $0x38] sm:$0xff] %v1867
      %1884 = vst [vmem:[#allocation5 + $0x40] sm:$0xff] %v1868
      %1885 = vst [vmem:[#allocation5 + $0x48] sm:$0xff] %v1869
      %1886 = vst [vmem:[#allocation5 + $0x50] sm:$0xff] %v1870
      %1887 = vst [vmem:[#allocation5 + $0x58] sm:$0xff] %v1871
      %1888 = vst [vmem:[#allocation5 + $0x60] sm:$0xff] %v1872
      %1889 = vst [vmem:[#allocation5 + $0x68] sm:$0xff] %v1873
      %1890 = vst [vmem:[#allocation5 + $0x70] sm:$0xff] %v1874
      %1891 = vst [vmem:[#allocation5 + $0x78] sm:$0xff] %v1875
      %s1892 = scalar_lea.vmem %s1, 192
      %v1893 = vld [vmem:[%s1892] sm:$0xf]
      %v1894 = vld [vmem:[%s1892 + $0x4] sm:$0xf]
      %v1895 = vld [vmem:[%s1892 + $0x8] sm:$0xf]
      %v1896 = vld [vmem:[%s1892 + $0xc] sm:$0xf]
      %v1897 = vld [vmem:[%s1892 + $0x10] sm:$0xf]
      %v1898 = vld [vmem:[%s1892 + $0x14] sm:$0xf]
      %v1899 = vld [vmem:[%s1892 + $0x18] sm:$0xf]
      %v1900 = vld [vmem:[%s1892 + $0x1c] sm:$0xf]
      %v1901 = vld [vmem:[%s1892 + $0x20] sm:$0xf]
      %v1902 = vld [vmem:[%s1892 + $0x24] sm:$0xf]
      %v1903 = vld [vmem:[%s1892 + $0x28] sm:$0xf]
      %v1904 = vld [vmem:[%s1892 + $0x2c] sm:$0xf]
      %v1905 = vld [vmem:[%s1892 + $0x30] sm:$0xf]
      %v1906 = vld [vmem:[%s1892 + $0x34] sm:$0xf]
      %v1907 = vld [vmem:[%s1892 + $0x38] sm:$0xf]
      %v1908 = vld [vmem:[%s1892 + $0x3c] sm:$0xf]
      %v1910 = vunpack.c.l.b16 %v1096
      %v1911 = vunpack.c.l.b16 %v1097
      %v1912 = vpack.c.b16 %v1911, %v1910
      %v1930 = vunpack.c.l.b16 %v1893
      %v1931 = vunpack.c.l.b16 %v1894
      %v1932 = vunpack.c.l.b16 %v1895
      %v1933 = vunpack.c.l.b16 %v1896
      %v1934 = vunpack.c.l.b16 %v1897
      %v1935 = vunpack.c.l.b16 %v1898
      %v1936 = vunpack.c.l.b16 %v1899
      %v1937 = vunpack.c.l.b16 %v1900
      %v1938 = vunpack.c.l.b16 %v1901
      %v1939 = vunpack.c.l.b16 %v1902
      %v1940 = vunpack.c.l.b16 %v1903
      %v1941 = vunpack.c.l.b16 %v1904
      %v1942 = vunpack.c.l.b16 %v1905
      %v1943 = vunpack.c.l.b16 %v1906
      %v1944 = vunpack.c.l.b16 %v1907
      %v1945 = vunpack.c.l.b16 %v1908
      %v1946 = vpack.c.b16 %v1931, %v1930
      %v1947 = vpack.c.b16 %v1933, %v1932
      %v1948 = vpack.c.b16 %v1935, %v1934
      %v1949 = vpack.c.b16 %v1937, %v1936
      %v1950 = vpack.c.b16 %v1939, %v1938
      %v1951 = vpack.c.b16 %v1941, %v1940
      %v1952 = vpack.c.b16 %v1943, %v1942
      %v1953 = vpack.c.b16 %v1945, %v1944
      %1962 = vmatprep.subr.bf16.mxu0 0
      %1963 = vmatpush1.bf16.msra.mxu0 %v1946
      %1964 = vmatprep.subr.bf16.mxu0 0
      %1965 = vmatpush1.bf16.msra.mxu0 %v1947
      %1966 = vmatprep.subr.bf16.mxu0 0
      %1967 = vmatpush1.bf16.msra.mxu0 %v1948
      %1968 = vmatprep.subr.bf16.mxu0 0
      %1969 = vmatpush1.bf16.msra.mxu0 %v1949
      %1970 = vmatprep.subr.bf16.mxu0 0
      %1971 = vmatpush1.bf16.msra.mxu0 %v1950
      %1972 = vmatprep.subr.bf16.mxu0 0
      %1973 = vmatpush1.bf16.msra.mxu0 %v1951
      %1974 = vmatprep.subr.bf16.mxu0 0
      %1975 = vmatpush1.bf16.msra.mxu0 %v1952
      %1976 = vmatprep.subr.bf16.mxu0 0
      %1977 = vmatpush1.bf16.msra.mxu0 %v1953
      %1978 = vmatprep.subr.bf16.mxu0 0
      %1979 = vmatpush1.bf16.msra.mxu0 0
      %1980 = vmatprep.subr.bf16.mxu0 0
      %1981 = vmatpush1.bf16.msra.mxu0 0
      %1982 = vmatprep.subr.bf16.mxu0 0
      %1983 = vmatpush1.bf16.msra.mxu0 0
      %1984 = vmatprep.subr.bf16.mxu0 0
      %1985 = vmatpush1.bf16.msra.mxu0 0
      %1986 = vmatprep.subr.bf16.mxu0 0
      %1987 = vmatpush1.bf16.msra.mxu0 0
      %1988 = vmatprep.subr.bf16.mxu0 0
      %1989 = vmatpush1.bf16.msra.mxu0 0
      %1990 = vmatprep.subr.bf16.mxu0 0
      %1991 = vmatpush1.bf16.msra.mxu0 0
      %1992 = vmatprep.subr.bf16.mxu0 0
      %1993 = vmatpush1.bf16.msra.mxu0 0
      %1994 = vmatprep.mubr.bf16.mxu0 0
      %1995 = vmatmul.mubr.bf16.gmra.mrb[0].mxu0 %v1264
      %v1996 = vpop.f32.mrb[0].mxu0
      %v1997 = vadd.f32 0.0, %v1996
      %v1998 = vpop.f32.mrb[0].mxu0
      %v1999 = vpop.f32.mrb[0].mxu0
      %v2000 = vadd.f32 0.0, %v1999
      %v2001 = vpop.f32.mrb[0].mxu0
      %2002 = vmatprep.mubr.bf16.mxu0 0
      %2003 = vmatmul.mubr.bf16.gmra.mrb[0].mxu0 %v1265
      %v2004 = vpop.f32.mrb[0].mxu0
      %v2005 = vadd.f32 0.0, %v2004
      %v2006 = vpop.f32.mrb[0].mxu0
      %v2007 = vpop.f32.mrb[0].mxu0
      %v2008 = vadd.f32 0.0, %v2007
      %v2009 = vpop.f32.mrb[0].mxu0
      %2010 = vmatprep.mubr.bf16.mxu0 0
      %2011 = vmatmul.mubr.bf16.gmra.mrb[0].mxu0 %v1266
      %v2012 = vpop.f32.mrb[0].mxu0
      %v2013 = vadd.f32 0.0, %v2012
      %v2014 = vpop.f32.mrb[0].mxu0
      %v2015 = vpop.f32.mrb[0].mxu0
      %v2016 = vadd.f32 0.0, %v2015
      %v2017 = vpop.f32.mrb[0].mxu0
      %2018 = vmatprep.mubr.bf16.mxu0 0
      %2019 = vmatmul.mubr.bf16.gmra.mrb[0].mxu0 %v1267
      %v2020 = vpop.f32.mrb[0].mxu0
      %v2021 = vadd.f32 0.0, %v2020
      %v2022 = vpop.f32.mrb[0].mxu0
      %v2023 = vpop.f32.mrb[0].mxu0
      %v2024 = vadd.f32 0.0, %v2023
      %v2025 = vpop.f32.mrb[0].mxu0
      %2026 = vmatprep.mubr.bf16.mxu0 0
      %2027 = vmatmul.mubr.bf16.gmra.mrb[0].mxu0 %v1268
      %v2028 = vpop.f32.mrb[0].mxu0
      %v2029 = vadd.f32 0.0, %v2028
      %v2030 = vpop.f32.mrb[0].mxu0
      %v2031 = vpop.f32.mrb[0].mxu0
      %v2032 = vadd.f32 0.0, %v2031
      %v2033 = vpop.f32.mrb[0].mxu0
      %2034 = vmatprep.mubr.bf16.mxu0 0
      %2035 = vmatmul.mubr.bf16.gmra.mrb[0].mxu0 %v1269
      %v2036 = vpop.f32.mrb[0].mxu0
      %v2037 = vadd.f32 0.0, %v2036
      %v2038 = vpop.f32.mrb[0].mxu0
      %v2039 = vpop.f32.mrb[0].mxu0
      %v2040 = vadd.f32 0.0, %v2039
      %v2041 = vpop.f32.mrb[0].mxu0
      %2042 = vmatprep.mubr.bf16.mxu0 0
      %2043 = vmatmul.mubr.bf16.gmra.mrb[0].mxu0 %v1270
      %v2044 = vpop.f32.mrb[0].mxu0
      %v2045 = vadd.f32 0.0, %v2044
      %v2046 = vpop.f32.mrb[0].mxu0
      %v2047 = vpop.f32.mrb[0].mxu0
      %v2048 = vadd.f32 0.0, %v2047
      %v2049 = vpop.f32.mrb[0].mxu0
      %2050 = vmatprep.mubr.bf16.mxu0 0
      %2051 = vmatmul.mubr.bf16.gmra.mrb[0].mxu0 %v1912
      %v2052 = vpop.f32.mrb[0].mxu0
      %v2053 = vadd.f32 0.0, %v2052
      %v2054 = vpop.f32.mrb[0].mxu0
      %v2055 = vpop.f32.mrb[0].mxu0
      %v2056 = vadd.f32 0.0, %v2055
      %v2057 = vpop.f32.mrb[0].mxu0
      %2058 = vdwg.mxu0
      %v2059 = vld [vmem:[#allocation5] sm:$0xff]
      %v2060 = vld [vmem:[#allocation5 + $0x8] sm:$0xff]
      %v2061 = vld [vmem:[#allocation5 + $0x10] sm:$0xff]
      %v2062 = vld [vmem:[#allocation5 + $0x18] sm:$0xff]
      %v2063 = vld [vmem:[#allocation5 + $0x20] sm:$0xff]
      %v2064 = vld [vmem:[#allocation5 + $0x28] sm:$0xff]
      %v2065 = vld [vmem:[#allocation5 + $0x30] sm:$0xff]
      %v2066 = vld [vmem:[#allocation5 + $0x38] sm:$0xff]
      %v2067 = vld [vmem:[#allocation5 + $0x40] sm:$0xff]
      %v2068 = vld [vmem:[#allocation5 + $0x48] sm:$0xff]
      %v2069 = vld [vmem:[#allocation5 + $0x50] sm:$0xff]
      %v2070 = vld [vmem:[#allocation5 + $0x58] sm:$0xff]
      %v2071 = vld [vmem:[#allocation5 + $0x60] sm:$0xff]
      %v2072 = vld [vmem:[#allocation5 + $0x68] sm:$0xff]
      %v2073 = vld [vmem:[#allocation5 + $0x70] sm:$0xff]
      %v2074 = vld [vmem:[#allocation5 + $0x78] sm:$0xff]
      %v2075 = vadd.f32 %v2059, %v1997
      %v2076 = vadd.f32 %v2060, %v2000
      %v2077 = vadd.f32 %v2061, %v2005
      %v2078 = vadd.f32 %v2062, %v2008
      %v2079 = vadd.f32 %v2063, %v2013
      %v2080 = vadd.f32 %v2064, %v2016
      %v2081 = vadd.f32 %v2065, %v2021
      %v2082 = vadd.f32 %v2066, %v2024
      %v2083 = vadd.f32 %v2067, %v2029
      %v2084 = vadd.f32 %v2068, %v2032
      %v2085 = vadd.f32 %v2069, %v2037
      %v2086 = vadd.f32 %v2070, %v2040
      %v2087 = vadd.f32 %v2071, %v2045
      %v2088 = vadd.f32 %v2072, %v2048
      %v2089 = vadd.f32 %v2073, %v2053
      %v2090 = vadd.f32 %v2074, %v2056
      %2091 = vst [vmem:[#allocation5] sm:$0xff] %v2075
      %2092 = vst [vmem:[#allocation5 + $0x8] sm:$0xff] %v2076
      %2093 = vst [vmem:[#allocation5 + $0x10] sm:$0xff] %v2077
      %2094 = vst [vmem:[#allocation5 + $0x18] sm:$0xff] %v2078
      %2095 = vst [vmem:[#allocation5 + $0x20] sm:$0xff] %v2079
      %2096 = vst [vmem:[#allocation5 + $0x28] sm:$0xff] %v2080
      %2097 = vst [vmem:[#allocation5 + $0x30] sm:$0xff] %v2081
      %2098 = vst [vmem:[#allocation5 + $0x38] sm:$0xff] %v2082
      %2099 = vst [vmem:[#allocation5 + $0x40] sm:$0xff] %v2083
      %2100 = vst [vmem:[#allocation5 + $0x48] sm:$0xff] %v2084
      %2101 = vst [vmem:[#allocation5 + $0x50] sm:$0xff] %v2085
      %2102 = vst [vmem:[#allocation5 + $0x58] sm:$0xff] %v2086
      %2103 = vst [vmem:[#allocation5 + $0x60] sm:$0xff] %v2087
      %2104 = vst [vmem:[#allocation5 + $0x68] sm:$0xff] %v2088
      %2105 = vst [vmem:[#allocation5 + $0x70] sm:$0xff] %v2089
      %2106 = vst [vmem:[#allocation5 + $0x78] sm:$0xff] %v2090
      %s2107 = scalar_lea.vmem %s1, 256
      %v2108 = vld [vmem:[%s2107] sm:$0xf]
      %v2109 = vld [vmem:[%s2107 + $0x4] sm:$0xf]
      %v2110 = vld [vmem:[%s2107 + $0x8] sm:$0xf]
      %v2111 = vld [vmem:[%s2107 + $0xc] sm:$0xf]
      %v2112 = vld [vmem:[%s2107 + $0x10] sm:$0xf]
      %v2113 = vld [vmem:[%s2107 + $0x14] sm:$0xf]
      %v2114 = vld [vmem:[%s2107 + $0x18] sm:$0xf]
      %v2115 = vld [vmem:[%s2107 + $0x1c] sm:$0xf]
      %v2116 = vld [vmem:[%s2107 + $0x20] sm:$0xf]
      %v2117 = vld [vmem:[%s2107 + $0x24] sm:$0xf]
      %v2118 = vld [vmem:[%s2107 + $0x28] sm:$0xf]
      %v2119 = vld [vmem:[%s2107 + $0x2c] sm:$0xf]
      %v2120 = vld [vmem:[%s2107 + $0x30] sm:$0xf]
      %v2121 = vld [vmem:[%s2107 + $0x34] sm:$0xf]
      %v2122 = vld [vmem:[%s2107 + $0x38] sm:$0xf]
      %v2123 = vld [vmem:[%s2107 + $0x3c] sm:$0xf]
      %v2140 = vunpack.c.l.b16 %v2108
      %v2141 = vunpack.c.l.b16 %v2109
      %v2142 = vunpack.c.l.b16 %v2110
      %v2143 = vunpack.c.l.b16 %v2111
      %v2144 = vunpack.c.l.b16 %v2112
      %v2145 = vunpack.c.l.b16 %v2113
      %v2146 = vunpack.c.l.b16 %v2114
      %v2147 = vunpack.c.l.b16 %v2115
      %v2148 = vunpack.c.l.b16 %v2116
      %v2149 = vunpack.c.l.b16 %v2117
      %v2150 = vunpack.c.l.b16 %v2118
      %v2151 = vunpack.c.l.b16 %v2119
      %v2152 = vunpack.c.l.b16 %v2120
      %v2153 = vunpack.c.l.b16 %v2121
      %v2154 = vunpack.c.l.b16 %v2122
      %v2155 = vunpack.c.l.b16 %v2123
      %v2156 = vpack.c.b16 %v2141, %v2140
      %v2157 = vpack.c.b16 %v2143, %v2142
      %v2158 = vpack.c.b16 %v2145, %v2144
      %v2159 = vpack.c.b16 %v2147, %v2146
      %v2160 = vpack.c.b16 %v2149, %v2148
      %v2161 = vpack.c.b16 %v2151, %v2150
      %v2162 = vpack.c.b16 %v2153, %v2152
      %v2163 = vpack.c.b16 %v2155, %v2154
      %2172 = vmatprep.subr.bf16.mxu0 0
      %2173 = vmatpush1.bf16.msra.mxu0 %v2156
      %2174 = vmatprep.subr.bf16.mxu0 0
      %2175 = vmatpush1.bf16.msra.mxu0 %v2157
      %2176 = vmatprep.subr.bf16.mxu0 0
      %2177 = vmatpush1.bf16.msra.mxu0 %v2158
      %2178 = vmatprep.subr.bf16.mxu0 0
      %2179 = vmatpush1.bf16.msra.mxu0 %v2159
      %2180 = vmatprep.subr.bf16.mxu0 0
      %2181 = vmatpush1.bf16.msra.mxu0 %v2160
      %2182 = vmatprep.subr.bf16.mxu0 0
      %2183 = vmatpush1.bf16.msra.mxu0 %v2161
      %2184 = vmatprep.subr.bf16.mxu0 0
      %2185 = vmatpush1.bf16.msra.mxu0 %v2162
      %2186 = vmatprep.subr.bf16.mxu0 0
      %2187 = vmatpush1.bf16.msra.mxu0 %v2163
      %2188 = vmatprep.subr.bf16.mxu0 0
      %2189 = vmatpush1.bf16.msra.mxu0 0
      %2190 = vmatprep.subr.bf16.mxu0 0
      %2191 = vmatpush1.bf16.msra.mxu0 0
      %2192 = vmatprep.subr.bf16.mxu0 0
      %2193 = vmatpush1.bf16.msra.mxu0 0
      %2194 = vmatprep.subr.bf16.mxu0 0
      %2195 = vmatpush1.bf16.msra.mxu0 0
      %2196 = vmatprep.subr.bf16.mxu0 0
      %2197 = vmatpush1.bf16.msra.mxu0 0
      %2198 = vmatprep.subr.bf16.mxu0 0
      %2199 = vmatpush1.bf16.msra.mxu0 0
      %2200 = vmatprep.subr.bf16.mxu0 0
      %2201 = vmatpush1.bf16.msra.mxu0 0
      %2202 = vmatprep.subr.bf16.mxu0 0
      %2203 = vmatpush1.bf16.msra.mxu0 0
      %2204 = vmatprep.mubr.bf16.mxu0 0
      %2205 = vmatmul.mubr.bf16.gmra.mrb[0].mxu0 %v682
      %v2206 = vpop.f32.mrb[0].mxu0
      %v2207 = vadd.f32 0.0, %v2206
      %v2208 = vpop.f32.mrb[0].mxu0
      %v2209 = vpop.f32.mrb[0].mxu0
      %v2210 = vadd.f32 0.0, %v2209
      %v2211 = vpop.f32.mrb[0].mxu0
      %2212 = vmatprep.mubr.bf16.mxu0 0
      %2213 = vmatmul.mubr.bf16.gmra.mrb[0].mxu0 %v683
      %v2214 = vpop.f32.mrb[0].mxu0
      %v2215 = vadd.f32 0.0, %v2214
      %v2216 = vpop.f32.mrb[0].mxu0
      %v2217 = vpop.f32.mrb[0].mxu0
      %v2218 = vadd.f32 0.0, %v2217
      %v2219 = vpop.f32.mrb[0].mxu0
      %2220 = vmatprep.mubr.bf16.mxu0 0
      %2221 = vmatmul.mubr.bf16.gmra.mrb[0].mxu0 %v684
      %v2222 = vpop.f32.mrb[0].mxu0
      %v2223 = vadd.f32 0.0, %v2222
      %v2224 = vpop.f32.mrb[0].mxu0
      %v2225 = vpop.f32.mrb[0].mxu0
      %v2226 = vadd.f32 0.0, %v2225
      %v2227 = vpop.f32.mrb[0].mxu0
      %2228 = vmatprep.mubr.bf16.mxu0 0
      %2229 = vmatmul.mubr.bf16.gmra.mrb[0].mxu0 %v685
      %v2230 = vpop.f32.mrb[0].mxu0
      %v2231 = vadd.f32 0.0, %v2230
      %v2232 = vpop.f32.mrb[0].mxu0
      %v2233 = vpop.f32.mrb[0].mxu0
      %v2234 = vadd.f32 0.0, %v2233
      %v2235 = vpop.f32.mrb[0].mxu0
      %2236 = vmatprep.mubr.bf16.mxu0 0
      %2237 = vmatmul.mubr.bf16.gmra.mrb[0].mxu0 %v686
      %v2238 = vpop.f32.mrb[0].mxu0
      %v2239 = vadd.f32 0.0, %v2238
      %v2240 = vpop.f32.mrb[0].mxu0
      %v2241 = vpop.f32.mrb[0].mxu0
      %v2242 = vadd.f32 0.0, %v2241
      %v2243 = vpop.f32.mrb[0].mxu0
      %2244 = vmatprep.mubr.bf16.mxu0 0
      %2245 = vmatmul.mubr.bf16.gmra.mrb[0].mxu0 %v687
      %v2246 = vpop.f32.mrb[0].mxu0
      %v2247 = vadd.f32 0.0, %v2246
      %v2248 = vpop.f32.mrb[0].mxu0
      %v2249 = vpop.f32.mrb[0].mxu0
      %v2250 = vadd.f32 0.0, %v2249
      %v2251 = vpop.f32.mrb[0].mxu0
      %2252 = vmatprep.mubr.bf16.mxu0 0
      %2253 = vmatmul.mubr.bf16.gmra.mrb[0].mxu0 %v688
      %v2254 = vpop.f32.mrb[0].mxu0
      %v2255 = vadd.f32 0.0, %v2254
      %v2256 = vpop.f32.mrb[0].mxu0
      %v2257 = vpop.f32.mrb[0].mxu0
      %v2258 = vadd.f32 0.0, %v2257
      %v2259 = vpop.f32.mrb[0].mxu0
      %2260 = vmatprep.mubr.bf16.mxu0 0
      %2261 = vmatmul.mubr.bf16.gmra.mrb[0].mxu0 %v689
      %v2262 = vpop.f32.mrb[0].mxu0
      %v2263 = vadd.f32 0.0, %v2262
      %v2264 = vpop.f32.mrb[0].mxu0
      %v2265 = vpop.f32.mrb[0].mxu0
      %v2266 = vadd.f32 0.0, %v2265
      %v2267 = vpop.f32.mrb[0].mxu0
      %2268 = vdwg.mxu0
      %v2269 = vld [vmem:[#allocation5] sm:$0xff]
      %v2270 = vld [vmem:[#allocation5 + $0x8] sm:$0xff]
      %v2271 = vld [vmem:[#allocation5 + $0x10] sm:$0xff]
      %v2272 = vld [vmem:[#allocation5 + $0x18] sm:$0xff]
      %v2273 = vld [vmem:[#allocation5 + $0x20] sm:$0xff]
      %v2274 = vld [vmem:[#allocation5 + $0x28] sm:$0xff]
      %v2275 = vld [vmem:[#allocation5 + $0x30] sm:$0xff]
      %v2276 = vld [vmem:[#allocation5 + $0x38] sm:$0xff]
      %v2277 = vld [vmem:[#allocation5 + $0x40] sm:$0xff]
      %v2278 = vld [vmem:[#allocation5 + $0x48] sm:$0xff]
      %v2279 = vld [vmem:[#allocation5 + $0x50] sm:$0xff]
      %v2280 = vld [vmem:[#allocation5 + $0x58] sm:$0xff]
      %v2281 = vld [vmem:[#allocation5 + $0x60] sm:$0xff]
      %v2282 = vld [vmem:[#allocation5 + $0x68] sm:$0xff]
      %v2283 = vld [vmem:[#allocation5 + $0x70] sm:$0xff]
      %v2284 = vld [vmem:[#allocation5 + $0x78] sm:$0xff]
      %v2285 = vadd.f32 %v2269, %v2207
      %v2286 = vadd.f32 %v2270, %v2210
      %v2287 = vadd.f32 %v2271, %v2215
      %v2288 = vadd.f32 %v2272, %v2218
      %v2289 = vadd.f32 %v2273, %v2223
      %v2290 = vadd.f32 %v2274, %v2226
      %v2291 = vadd.f32 %v2275, %v2231
      %v2292 = vadd.f32 %v2276, %v2234
      %v2293 = vadd.f32 %v2277, %v2239
      %v2294 = vadd.f32 %v2278, %v2242
      %v2295 = vadd.f32 %v2279, %v2247
      %v2296 = vadd.f32 %v2280, %v2250
      %v2297 = vadd.f32 %v2281, %v2255
      %v2298 = vadd.f32 %v2282, %v2258
      %v2299 = vadd.f32 %v2283, %v2263
      %v2300 = vadd.f32 %v2284, %v2266
      %2301 = vst [vmem:[#allocation5] sm:$0xff] %v2285
      %2302 = vst [vmem:[#allocation5 + $0x8] sm:$0xff] %v2286
      %2303 = vst [vmem:[#allocation5 + $0x10] sm:$0xff] %v2287
      %2304 = vst [vmem:[#allocation5 + $0x18] sm:$0xff] %v2288
      %2305 = vst [vmem:[#allocation5 + $0x20] sm:$0xff] %v2289
      %2306 = vst [vmem:[#allocation5 + $0x28] sm:$0xff] %v2290
      %2307 = vst [vmem:[#allocation5 + $0x30] sm:$0xff] %v2291
      %2308 = vst [vmem:[#allocation5 + $0x38] sm:$0xff] %v2292
      %2309 = vst [vmem:[#allocation5 + $0x40] sm:$0xff] %v2293
      %2310 = vst [vmem:[#allocation5 + $0x48] sm:$0xff] %v2294
      %2311 = vst [vmem:[#allocation5 + $0x50] sm:$0xff] %v2295
      %2312 = vst [vmem:[#allocation5 + $0x58] sm:$0xff] %v2296
      %2313 = vst [vmem:[#allocation5 + $0x60] sm:$0xff] %v2297
      %2314 = vst [vmem:[#allocation5 + $0x68] sm:$0xff] %v2298
      %2315 = vst [vmem:[#allocation5 + $0x70] sm:$0xff] %v2299
      %2316 = vst [vmem:[#allocation5 + $0x78] sm:$0xff] %v2300
      %s2317 = scalar_lea.vmem %s1, 320
      %v2318 = vld [vmem:[%s2317] sm:$0xf]
      %v2319 = vld [vmem:[%s2317 + $0x4] sm:$0xf]
      %v2320 = vld [vmem:[%s2317 + $0x8] sm:$0xf]
      %v2321 = vld [vmem:[%s2317 + $0xc] sm:$0xf]
      %v2322 = vld [vmem:[%s2317 + $0x10] sm:$0xf]
      %v2323 = vld [vmem:[%s2317 + $0x14] sm:$0xf]
      %v2324 = vld [vmem:[%s2317 + $0x18] sm:$0xf]
      %v2325 = vld [vmem:[%s2317 + $0x1c] sm:$0xf]
      %v2326 = vld [vmem:[%s2317 + $0x20] sm:$0xf]
      %v2327 = vld [vmem:[%s2317 + $0x24] sm:$0xf]
      %v2328 = vld [vmem:[%s2317 + $0x28] sm:$0xf]
      %v2329 = vld [vmem:[%s2317 + $0x2c] sm:$0xf]
      %v2330 = vld [vmem:[%s2317 + $0x30] sm:$0xf]
      %v2331 = vld [vmem:[%s2317 + $0x34] sm:$0xf]
      %v2332 = vld [vmem:[%s2317 + $0x38] sm:$0xf]
      %v2333 = vld [vmem:[%s2317 + $0x3c] sm:$0xf]
      %v2334 = vunpack.c.l.b16 %v1212
      %v2335 = vunpack.c.l.b16 %v1215
      %v2336 = vpack.c.b16 %v2335, %v2334
      %v2354 = vunpack.c.l.b16 %v2318
      %v2355 = vunpack.c.l.b16 %v2319
      %v2356 = vunpack.c.l.b16 %v2320
      %v2357 = vunpack.c.l.b16 %v2321
      %v2358 = vunpack.c.l.b16 %v2322
      %v2359 = vunpack.c.l.b16 %v2323
      %v2360 = vunpack.c.l.b16 %v2324
      %v2361 = vunpack.c.l.b16 %v2325
      %v2362 = vunpack.c.l.b16 %v2326
      %v2363 = vunpack.c.l.b16 %v2327
      %v2364 = vunpack.c.l.b16 %v2328
      %v2365 = vunpack.c.l.b16 %v2329
      %v2366 = vunpack.c.l.b16 %v2330
      %v2367 = vunpack.c.l.b16 %v2331
      %v2368 = vunpack.c.l.b16 %v2332
      %v2369 = vunpack.c.l.b16 %v2333
      %v2370 = vpack.c.b16 %v2355, %v2354
      %v2371 = vpack.c.b16 %v2357, %v2356
      %v2372 = vpack.c.b16 %v2359, %v2358
      %v2373 = vpack.c.b16 %v2361, %v2360
      %v2374 = vpack.c.b16 %v2363, %v2362
      %v2375 = vpack.c.b16 %v2365, %v2364
      %v2376 = vpack.c.b16 %v2367, %v2366
      %v2377 = vpack.c.b16 %v2369, %v2368
      %2386 = vmatprep.subr.bf16.mxu0 0
      %2387 = vmatpush1.bf16.msra.mxu0 %v2370
      %2388 = vmatprep.subr.bf16.mxu0 0
      %2389 = vmatpush1.bf16.msra.mxu0 %v2371
      %2390 = vmatprep.subr.bf16.mxu0 0
      %2391 = vmatpush1.bf16.msra.mxu0 %v2372
      %2392 = vmatprep.subr.bf16.mxu0 0
      %2393 = vmatpush1.bf16.msra.mxu0 %v2373
      %2394 = vmatprep.subr.bf16.mxu0 0
      %2395 = vmatpush1.bf16.msra.mxu0 %v2374
      %2396 = vmatprep.subr.bf16.mxu0 0
      %2397 = vmatpush1.bf16.msra.mxu0 %v2375
      %2398 = vmatprep.subr.bf16.mxu0 0
      %2399 = vmatpush1.bf16.msra.mxu0 %v2376
      %2400 = vmatprep.subr.bf16.mxu0 0
      %2401 = vmatpush1.bf16.msra.mxu0 %v2377
      %2402 = vmatprep.subr.bf16.mxu0 0
      %2403 = vmatpush1.bf16.msra.mxu0 0
      %2404 = vmatprep.subr.bf16.mxu0 0
      %2405 = vmatpush1.bf16.msra.mxu0 0
      %2406 = vmatprep.subr.bf16.mxu0 0
      %2407 = vmatpush1.bf16.msra.mxu0 0
      %2408 = vmatprep.subr.bf16.mxu0 0
      %2409 = vmatpush1.bf16.msra.mxu0 0
      %2410 = vmatprep.subr.bf16.mxu0 0
      %2411 = vmatpush1.bf16.msra.mxu0 0
      %2412 = vmatprep.subr.bf16.mxu0 0
      %2413 = vmatpush1.bf16.msra.mxu0 0
      %2414 = vmatprep.subr.bf16.mxu0 0
      %2415 = vmatpush1.bf16.msra.mxu0 0
      %2416 = vmatprep.subr.bf16.mxu0 0
      %2417 = vmatpush1.bf16.msra.mxu0 0
      %2418 = vmatprep.mubr.bf16.mxu0 0
      %2419 = vmatmul.mubr.bf16.gmra.mrb[0].mxu0 %v1684
      %v2420 = vpop.f32.mrb[0].mxu0
      %v2421 = vadd.f32 0.0, %v2420
      %v2422 = vpop.f32.mrb[0].mxu0
      %v2423 = vpop.f32.mrb[0].mxu0
      %v2424 = vadd.f32 0.0, %v2423
      %v2425 = vpop.f32.mrb[0].mxu0
      %2426 = vmatprep.mubr.bf16.mxu0 0
      %2427 = vmatmul.mubr.bf16.gmra.mrb[0].mxu0 %v1685
      %v2428 = vpop.f32.mrb[0].mxu0
      %v2429 = vadd.f32 0.0, %v2428
      %v2430 = vpop.f32.mrb[0].mxu0
      %v2431 = vpop.f32.mrb[0].mxu0
      %v2432 = vadd.f32 0.0, %v2431
      %v2433 = vpop.f32.mrb[0].mxu0
      %2434 = vmatprep.mubr.bf16.mxu0 0
      %2435 = vmatmul.mubr.bf16.gmra.mrb[0].mxu0 %v1686
      %v2436 = vpop.f32.mrb[0].mxu0
      %v2437 = vadd.f32 0.0, %v2436
      %v2438 = vpop.f32.mrb[0].mxu0
      %v2439 = vpop.f32.mrb[0].mxu0
      %v2440 = vadd.f32 0.0, %v2439
      %v2441 = vpop.f32.mrb[0].mxu0
      %2442 = vmatprep.mubr.bf16.mxu0 0
      %2443 = vmatmul.mubr.bf16.gmra.mrb[0].mxu0 %v1687
      %v2444 = vpop.f32.mrb[0].mxu0
      %v2445 = vadd.f32 0.0, %v2444
      %v2446 = vpop.f32.mrb[0].mxu0
      %v2447 = vpop.f32.mrb[0].mxu0
      %v2448 = vadd.f32 0.0, %v2447
      %v2449 = vpop.f32.mrb[0].mxu0
      %2450 = vmatprep.mubr.bf16.mxu0 0
      %2451 = vmatmul.mubr.bf16.gmra.mrb[0].mxu0 %v1688
      %v2452 = vpop.f32.mrb[0].mxu0
      %v2453 = vadd.f32 0.0, %v2452
      %v2454 = vpop.f32.mrb[0].mxu0
      %v2455 = vpop.f32.mrb[0].mxu0
      %v2456 = vadd.f32 0.0, %v2455
      %v2457 = vpop.f32.mrb[0].mxu0
      %2458 = vmatprep.mubr.bf16.mxu0 0
      %2459 = vmatmul.mubr.bf16.gmra.mrb[0].mxu0 %v1689
      %v2460 = vpop.f32.mrb[0].mxu0
      %v2461 = vadd.f32 0.0, %v2460
      %v2462 = vpop.f32.mrb[0].mxu0
      %v2463 = vpop.f32.mrb[0].mxu0
      %v2464 = vadd.f32 0.0, %v2463
      %v2465 = vpop.f32.mrb[0].mxu0
      %2466 = vmatprep.mubr.bf16.mxu0 0
      %2467 = vmatmul.mubr.bf16.gmra.mrb[0].mxu0 %v1690
      %v2468 = vpop.f32.mrb[0].mxu0
      %v2469 = vadd.f32 0.0, %v2468
      %v2470 = vpop.f32.mrb[0].mxu0
      %v2471 = vpop.f32.mrb[0].mxu0
      %v2472 = vadd.f32 0.0, %v2471
      %v2473 = vpop.f32.mrb[0].mxu0
      %2474 = vmatprep.mubr.bf16.mxu0 0
      %2475 = vmatmul.mubr.bf16.gmra.mrb[0].mxu0 %v2336
      %v2476 = vpop.f32.mrb[0].mxu0
      %v2477 = vadd.f32 0.0, %v2476
      %v2478 = vpop.f32.mrb[0].mxu0
      %v2479 = vpop.f32.mrb[0].mxu0
      %v2480 = vadd.f32 0.0, %v2479
      %v2481 = vpop.f32.mrb[0].mxu0
      %2482 = vdwg.mxu0
      %v2483 = vld [vmem:[#allocation5] sm:$0xff]
      %v2484 = vld [vmem:[#allocation5 + $0x8] sm:$0xff]
      %v2485 = vld [vmem:[#allocation5 + $0x10] sm:$0xff]
      %v2486 = vld [vmem:[#allocation5 + $0x18] sm:$0xff]
      %v2487 = vld [vmem:[#allocation5 + $0x20] sm:$0xff]
      %v2488 = vld [vmem:[#allocation5 + $0x28] sm:$0xff]
      %v2489 = vld [vmem:[#allocation5 + $0x30] sm:$0xff]
      %v2490 = vld [vmem:[#allocation5 + $0x38] sm:$0xff]
      %v2491 = vld [vmem:[#allocation5 + $0x40] sm:$0xff]
      %v2492 = vld [vmem:[#allocation5 + $0x48] sm:$0xff]
      %v2493 = vld [vmem:[#allocation5 + $0x50] sm:$0xff]
      %v2494 = vld [vmem:[#allocation5 + $0x58] sm:$0xff]
      %v2495 = vld [vmem:[#allocation5 + $0x60] sm:$0xff]
      %v2496 = vld [vmem:[#allocation5 + $0x68] sm:$0xff]
      %v2497 = vld [vmem:[#allocation5 + $0x70] sm:$0xff]
      %v2498 = vld [vmem:[#allocation5 + $0x78] sm:$0xff]
      %v2499 = vadd.f32 %v2483, %v2421
      %v2500 = vadd.f32 %v2484, %v2424
      %v2501 = vadd.f32 %v2485, %v2429
      %v2502 = vadd.f32 %v2486, %v2432
      %v2503 = vadd.f32 %v2487, %v2437
      %v2504 = vadd.f32 %v2488, %v2440
      %v2505 = vadd.f32 %v2489, %v2445
      %v2506 = vadd.f32 %v2490, %v2448
      %v2507 = vadd.f32 %v2491, %v2453
      %v2508 = vadd.f32 %v2492, %v2456
      %v2509 = vadd.f32 %v2493, %v2461
      %v2510 = vadd.f32 %v2494, %v2464
      %v2511 = vadd.f32 %v2495, %v2469
      %v2512 = vadd.f32 %v2496, %v2472
      %v2513 = vadd.f32 %v2497, %v2477
      %v2514 = vadd.f32 %v2498, %v2480
      %2515 = vst [vmem:[#allocation5] sm:$0xff] %v2499
      %2516 = vst [vmem:[#allocation5 + $0x8] sm:$0xff] %v2500
      %2517 = vst [vmem:[#allocation5 + $0x10] sm:$0xff] %v2501
      %2518 = vst [vmem:[#allocation5 + $0x18] sm:$0xff] %v2502
      %2519 = vst [vmem:[#allocation5 + $0x20] sm:$0xff] %v2503
      %2520 = vst [vmem:[#allocation5 + $0x28] sm:$0xff] %v2504
      %2521 = vst [vmem:[#allocation5 + $0x30] sm:$0xff] %v2505
      %2522 = vst [vmem:[#allocation5 + $0x38] sm:$0xff] %v2506
      %2523 = vst [vmem:[#allocation5 + $0x40] sm:$0xff] %v2507
      %2524 = vst [vmem:[#allocation5 + $0x48] sm:$0xff] %v2508
      %2525 = vst [vmem:[#allocation5 + $0x50] sm:$0xff] %v2509
      %2526 = vst [vmem:[#allocation5 + $0x58] sm:$0xff] %v2510
      %2527 = vst [vmem:[#allocation5 + $0x60] sm:$0xff] %v2511
      %2528 = vst [vmem:[#allocation5 + $0x68] sm:$0xff] %v2512
      %2529 = vst [vmem:[#allocation5 + $0x70] sm:$0xff] %v2513
      %2530 = vst [vmem:[#allocation5 + $0x78] sm:$0xff] %v2514
      %s2531 = scalar_lea.vmem %s1, 384
      %v2532 = vld [vmem:[%s2531] sm:$0xf]
      %v2533 = vld [vmem:[%s2531 + $0x4] sm:$0xf]
      %v2534 = vld [vmem:[%s2531 + $0x8] sm:$0xf]
      %v2535 = vld [vmem:[%s2531 + $0xc] sm:$0xf]
      %v2536 = vld [vmem:[%s2531 + $0x10] sm:$0xf]
      %v2537 = vld [vmem:[%s2531 + $0x14] sm:$0xf]
      %v2538 = vld [vmem:[%s2531 + $0x18] sm:$0xf]
      %v2539 = vld [vmem:[%s2531 + $0x1c] sm:$0xf]
      %v2540 = vld [vmem:[%s2531 + $0x20] sm:$0xf]
      %v2541 = vld [vmem:[%s2531 + $0x24] sm:$0xf]
      %v2542 = vld [vmem:[%s2531 + $0x28] sm:$0xf]
      %v2543 = vld [vmem:[%s2531 + $0x2c] sm:$0xf]
      %v2544 = vld [vmem:[%s2531 + $0x30] sm:$0xf]
      %v2545 = vld [vmem:[%s2531 + $0x34] sm:$0xf]
      %v2546 = vld [vmem:[%s2531 + $0x38] sm:$0xf]
      %v2547 = vld [vmem:[%s2531 + $0x3c] sm:$0xf]
      %v2549 = vunpack.c.l.b16 %v1098
      %v2550 = vunpack.c.l.b16 %v1099
      %v2551 = vpack.c.b16 %v2550, %v2549
      %v2569 = vunpack.c.l.b16 %v2532
      %v2570 = vunpack.c.l.b16 %v2533
      %v2571 = vunpack.c.l.b16 %v2534
      %v2572 = vunpack.c.l.b16 %v2535
      %v2573 = vunpack.c.l.b16 %v2536
      %v2574 = vunpack.c.l.b16 %v2537
      %v2575 = vunpack.c.l.b16 %v2538
      %v2576 = vunpack.c.l.b16 %v2539
      %v2577 = vunpack.c.l.b16 %v2540
      %v2578 = vunpack.c.l.b16 %v2541
      %v2579 = vunpack.c.l.b16 %v2542
      %v2580 = vunpack.c.l.b16 %v2543
      %v2581 = vunpack.c.l.b16 %v2544
      %v2582 = vunpack.c.l.b16 %v2545
      %v2583 = vunpack.c.l.b16 %v2546
      %v2584 = vunpack.c.l.b16 %v2547
      %v2585 = vpack.c.b16 %v2570, %v2569
      %v2586 = vpack.c.b16 %v2572, %v2571
      %v2587 = vpack.c.b16 %v2574, %v2573
      %v2588 = vpack.c.b16 %v2576, %v2575
      %v2589 = vpack.c.b16 %v2578, %v2577
      %v2590 = vpack.c.b16 %v2580, %v2579
      %v2591 = vpack.c.b16 %v2582, %v2581
      %v2592 = vpack.c.b16 %v2584, %v2583
      %2601 = vmatprep.subr.bf16.mxu0 0
      %2602 = vmatpush1.bf16.msra.mxu0 %v2585
      %2603 = vmatprep.subr.bf16.mxu0 0
      %2604 = vmatpush1.bf16.msra.mxu0 %v2586
      %2605 = vmatprep.subr.bf16.mxu0 0
      %2606 = vmatpush1.bf16.msra.mxu0 %v2587
      %2607 = vmatprep.subr.bf16.mxu0 0
      %2608 = vmatpush1.bf16.msra.mxu0 %v2588
      %2609 = vmatprep.subr.bf16.mxu0 0
      %2610 = vmatpush1.bf16.msra.mxu0 %v2589
      %2611 = vmatprep.subr.bf16.mxu0 0
      %2612 = vmatpush1.bf16.msra.mxu0 %v2590
      %2613 = vmatprep.subr.bf16.mxu0 0
      %2614 = vmatpush1.bf16.msra.mxu0 %v2591
      %2615 = vmatprep.subr.bf16.mxu0 0
      %2616 = vmatpush1.bf16.msra.mxu0 %v2592
      %2617 = vmatprep.subr.bf16.mxu0 0
      %2618 = vmatpush1.bf16.msra.mxu0 0
      %2619 = vmatprep.subr.bf16.mxu0 0
      %2620 = vmatpush1.bf16.msra.mxu0 0
      %2621 = vmatprep.subr.bf16.mxu0 0
      %2622 = vmatpush1.bf16.msra.mxu0 0
      %2623 = vmatprep.subr.bf16.mxu0 0
      %2624 = vmatpush1.bf16.msra.mxu0 0
      %2625 = vmatprep.subr.bf16.mxu0 0
      %2626 = vmatpush1.bf16.msra.mxu0 0
      %2627 = vmatprep.subr.bf16.mxu0 0
      %2628 = vmatpush1.bf16.msra.mxu0 0
      %2629 = vmatprep.subr.bf16.mxu0 0
      %2630 = vmatpush1.bf16.msra.mxu0 0
      %2631 = vmatprep.subr.bf16.mxu0 0
      %2632 = vmatpush1.bf16.msra.mxu0 0
      %2633 = vmatprep.mubr.bf16.mxu0 0
      %2634 = vmatmul.mubr.bf16.gmra.mrb[0].mxu0 %v1265
      %v2635 = vpop.f32.mrb[0].mxu0
      %v2636 = vadd.f32 0.0, %v2635
      %v2637 = vpop.f32.mrb[0].mxu0
      %v2638 = vpop.f32.mrb[0].mxu0
      %v2639 = vadd.f32 0.0, %v2638
      %v2640 = vpop.f32.mrb[0].mxu0
      %2641 = vmatprep.mubr.bf16.mxu0 0
      %2642 = vmatmul.mubr.bf16.gmra.mrb[0].mxu0 %v1266
      %v2643 = vpop.f32.mrb[0].mxu0
      %v2644 = vadd.f32 0.0, %v2643
      %v2645 = vpop.f32.mrb[0].mxu0
      %v2646 = vpop.f32.mrb[0].mxu0
      %v2647 = vadd.f32 0.0, %v2646
      %v2648 = vpop.f32.mrb[0].mxu0
      %2649 = vmatprep.mubr.bf16.mxu0 0
      %2650 = vmatmul.mubr.bf16.gmra.mrb[0].mxu0 %v1267
      %v2651 = vpop.f32.mrb[0].mxu0
      %v2652 = vadd.f32 0.0, %v2651
      %v2653 = vpop.f32.mrb[0].mxu0
      %v2654 = vpop.f32.mrb[0].mxu0
      %v2655 = vadd.f32 0.0, %v2654
      %v2656 = vpop.f32.mrb[0].mxu0
      %2657 = vmatprep.mubr.bf16.mxu0 0
      %2658 = vmatmul.mubr.bf16.gmra.mrb[0].mxu0 %v1268
      %v2659 = vpop.f32.mrb[0].mxu0
      %v2660 = vadd.f32 0.0, %v2659
      %v2661 = vpop.f32.mrb[0].mxu0
      %v2662 = vpop.f32.mrb[0].mxu0
      %v2663 = vadd.f32 0.0, %v2662
      %v2664 = vpop.f32.mrb[0].mxu0
      %2665 = vmatprep.mubr.bf16.mxu0 0
      %2666 = vmatmul.mubr.bf16.gmra.mrb[0].mxu0 %v1269
      %v2667 = vpop.f32.mrb[0].mxu0
      %v2668 = vadd.f32 0.0, %v2667
      %v2669 = vpop.f32.mrb[0].mxu0
      %v2670 = vpop.f32.mrb[0].mxu0
      %v2671 = vadd.f32 0.0, %v2670
      %v2672 = vpop.f32.mrb[0].mxu0
      %2673 = vmatprep.mubr.bf16.mxu0 0
      %2674 = vmatmul.mubr.bf16.gmra.mrb[0].mxu0 %v1270
      %v2675 = vpop.f32.mrb[0].mxu0
      %v2676 = vadd.f32 0.0, %v2675
      %v2677 = vpop.f32.mrb[0].mxu0
      %v2678 = vpop.f32.mrb[0].mxu0
      %v2679 = vadd.f32 0.0, %v2678
      %v2680 = vpop.f32.mrb[0].mxu0
      %2681 = vmatprep.mubr.bf16.mxu0 0
      %2682 = vmatmul.mubr.bf16.gmra.mrb[0].mxu0 %v1912
      %v2683 = vpop.f32.mrb[0].mxu0
      %v2684 = vadd.f32 0.0, %v2683
      %v2685 = vpop.f32.mrb[0].mxu0
      %v2686 = vpop.f32.mrb[0].mxu0
      %v2687 = vadd.f32 0.0, %v2686
      %v2688 = vpop.f32.mrb[0].mxu0
      %2689 = vmatprep.mubr.bf16.mxu0 0
      %2690 = vmatmul.mubr.bf16.gmra.mrb[0].mxu0 %v2551
      %v2691 = vpop.f32.mrb[0].mxu0
      %v2692 = vadd.f32 0.0, %v2691
      %v2693 = vpop.f32.mrb[0].mxu0
      %v2694 = vpop.f32.mrb[0].mxu0
      %v2695 = vadd.f32 0.0, %v2694
      %v2696 = vpop.f32.mrb[0].mxu0
      %2697 = vdwg.mxu0
      %v2698 = vld [vmem:[#allocation5] sm:$0xff]
      %v2699 = vld [vmem:[#allocation5 + $0x8] sm:$0xff]
      %v2700 = vld [vmem:[#allocation5 + $0x10] sm:$0xff]
      %v2701 = vld [vmem:[#allocation5 + $0x18] sm:$0xff]
      %v2702 = vld [vmem:[#allocation5 + $0x20] sm:$0xff]
      %v2703 = vld [vmem:[#allocation5 + $0x28] sm:$0xff]
      %v2704 = vld [vmem:[#allocation5 + $0x30] sm:$0xff]
      %v2705 = vld [vmem:[#allocation5 + $0x38] sm:$0xff]
      %v2706 = vld [vmem:[#allocation5 + $0x40] sm:$0xff]
      %v2707 = vld [vmem:[#allocation5 + $0x48] sm:$0xff]
      %v2708 = vld [vmem:[#allocation5 + $0x50] sm:$0xff]
      %v2709 = vld [vmem:[#allocation5 + $0x58] sm:$0xff]
      %v2710 = vld [vmem:[#allocation5 + $0x60] sm:$0xff]
      %v2711 = vld [vmem:[#allocation5 + $0x68] sm:$0xff]
      %v2712 = vld [vmem:[#allocation5 + $0x70] sm:$0xff]
      %v2713 = vld [vmem:[#allocation5 + $0x78] sm:$0xff]
      %v2714 = vadd.f32 %v2698, %v2636
      %v2715 = vadd.f32 %v2699, %v2639
      %v2716 = vadd.f32 %v2700, %v2644
      %v2717 = vadd.f32 %v2701, %v2647
      %v2718 = vadd.f32 %v2702, %v2652
      %v2719 = vadd.f32 %v2703, %v2655
      %v2720 = vadd.f32 %v2704, %v2660
      %v2721 = vadd.f32 %v2705, %v2663
      %v2722 = vadd.f32 %v2706, %v2668
      %v2723 = vadd.f32 %v2707, %v2671
      %v2724 = vadd.f32 %v2708, %v2676
      %v2725 = vadd.f32 %v2709, %v2679
      %v2726 = vadd.f32 %v2710, %v2684
      %v2727 = vadd.f32 %v2711, %v2687
      %v2728 = vadd.f32 %v2712, %v2692
      %v2729 = vadd.f32 %v2713, %v2695
      %2730 = vst [vmem:[#allocation5] sm:$0xff] %v2714
      %2731 = vst [vmem:[#allocation5 + $0x8] sm:$0xff] %v2715
      %2732 = vst [vmem:[#allocation5 + $0x10] sm:$0xff] %v2716
      %2733 = vst [vmem:[#allocation5 + $0x18] sm:$0xff] %v2717
      %2734 = vst [vmem:[#allocation5 + $0x20] sm:$0xff] %v2718
      %2735 = vst [vmem:[#allocation5 + $0x28] sm:$0xff] %v2719
      %2736 = vst [vmem:[#allocation5 + $0x30] sm:$0xff] %v2720
      %2737 = vst [vmem:[#allocation5 + $0x38] sm:$0xff] %v2721
      %2738 = vst [vmem:[#allocation5 + $0x40] sm:$0xff] %v2722
      %2739 = vst [vmem:[#allocation5 + $0x48] sm:$0xff] %v2723
      %2740 = vst [vmem:[#allocation5 + $0x50] sm:$0xff] %v2724
      %2741 = vst [vmem:[#allocation5 + $0x58] sm:$0xff] %v2725
      %2742 = vst [vmem:[#allocation5 + $0x60] sm:$0xff] %v2726
      %2743 = vst [vmem:[#allocation5 + $0x68] sm:$0xff] %v2727
      %2744 = vst [vmem:[#allocation5 + $0x70] sm:$0xff] %v2728
      %2745 = vst [vmem:[#allocation5 + $0x78] sm:$0xff] %v2729
      %s2746 = scalar_lea.vmem %s1, 448
      %v2747 = vld [vmem:[%s2746] sm:$0xf]
      %v2748 = vld [vmem:[%s2746 + $0x4] sm:$0xf]
      %v2749 = vld [vmem:[%s2746 + $0x8] sm:$0xf]
      %v2750 = vld [vmem:[%s2746 + $0xc] sm:$0xf]
      %v2751 = vld [vmem:[%s2746 + $0x10] sm:$0xf]
      %v2752 = vld [vmem:[%s2746 + $0x14] sm:$0xf]
      %v2753 = vld [vmem:[%s2746 + $0x18] sm:$0xf]
      %v2754 = vld [vmem:[%s2746 + $0x1c] sm:$0xf]
      %v2755 = vld [vmem:[%s2746 + $0x20] sm:$0xf]
      %v2756 = vld [vmem:[%s2746 + $0x24] sm:$0xf]
      %v2757 = vld [vmem:[%s2746 + $0x28] sm:$0xf]
      %v2758 = vld [vmem:[%s2746 + $0x2c] sm:$0xf]
      %v2759 = vld [vmem:[%s2746 + $0x30] sm:$0xf]
      %v2760 = vld [vmem:[%s2746 + $0x34] sm:$0xf]
      %v2761 = vld [vmem:[%s2746 + $0x38] sm:$0xf]
      %v2762 = vld [vmem:[%s2746 + $0x3c] sm:$0xf]
      %v2779 = vunpack.c.l.b16 %v2747
      %v2780 = vunpack.c.l.b16 %v2748
      %v2781 = vunpack.c.l.b16 %v2749
      %v2782 = vunpack.c.l.b16 %v2750
      %v2783 = vunpack.c.l.b16 %v2751
      %v2784 = vunpack.c.l.b16 %v2752
      %v2785 = vunpack.c.l.b16 %v2753
      %v2786 = vunpack.c.l.b16 %v2754
      %v2787 = vunpack.c.l.b16 %v2755
      %v2788 = vunpack.c.l.b16 %v2756
      %v2789 = vunpack.c.l.b16 %v2757
      %v2790 = vunpack.c.l.b16 %v2758
      %v2791 = vunpack.c.l.b16 %v2759
      %v2792 = vunpack.c.l.b16 %v2760
      %v2793 = vunpack.c.l.b16 %v2761
      %v2794 = vunpack.c.l.b16 %v2762
      %v2795 = vpack.c.b16 %v2780, %v2779
      %v2796 = vpack.c.b16 %v2782, %v2781
      %v2797 = vpack.c.b16 %v2784, %v2783
      %v2798 = vpack.c.b16 %v2786, %v2785
      %v2799 = vpack.c.b16 %v2788, %v2787
      %v2800 = vpack.c.b16 %v2790, %v2789
      %v2801 = vpack.c.b16 %v2792, %v2791
      %v2802 = vpack.c.b16 %v2794, %v2793
      %2811 = vmatprep.subr.bf16.mxu0 0
      %2812 = vmatpush1.bf16.msra.mxu0 %v2795
      %2813 = vmatprep.subr.bf16.mxu0 0
      %2814 = vmatpush1.bf16.msra.mxu0 %v2796
      %2815 = vmatprep.subr.bf16.mxu0 0
      %2816 = vmatpush1.bf16.msra.mxu0 %v2797
      %2817 = vmatprep.subr.bf16.mxu0 0
      %2818 = vmatpush1.bf16.msra.mxu0 %v2798
      %2819 = vmatprep.subr.bf16.mxu0 0
      %2820 = vmatpush1.bf16.msra.mxu0 %v2799
      %2821 = vmatprep.subr.bf16.mxu0 0
      %2822 = vmatpush1.bf16.msra.mxu0 %v2800
      %2823 = vmatprep.subr.bf16.mxu0 0
      %2824 = vmatpush1.bf16.msra.mxu0 %v2801
      %2825 = vmatprep.subr.bf16.mxu0 0
      %2826 = vmatpush1.bf16.msra.mxu0 %v2802
      %2827 = vmatprep.subr.bf16.mxu0 0
      %2828 = vmatpush1.bf16.msra.mxu0 0
      %2829 = vmatprep.subr.bf16.mxu0 0
      %2830 = vmatpush1.bf16.msra.mxu0 0
      %2831 = vmatprep.subr.bf16.mxu0 0
      %2832 = vmatpush1.bf16.msra.mxu0 0
      %2833 = vmatprep.subr.bf16.mxu0 0
      %2834 = vmatpush1.bf16.msra.mxu0 0
      %2835 = vmatprep.subr.bf16.mxu0 0
      %2836 = vmatpush1.bf16.msra.mxu0 0
      %2837 = vmatprep.subr.bf16.mxu0 0
      %2838 = vmatpush1.bf16.msra.mxu0 0
      %2839 = vmatprep.subr.bf16.mxu0 0
      %2840 = vmatpush1.bf16.msra.mxu0 0
      %2841 = vmatprep.subr.bf16.mxu0 0
      %2842 = vmatpush1.bf16.msra.mxu0 0
      %2843 = vmatprep.mubr.bf16.mxu0 0
      %2844 = vmatmul.mubr.bf16.gmra.mrb[0].mxu0 %v683
      %v2845 = vpop.f32.mrb[0].mxu0
      %v2846 = vadd.f32 0.0, %v2845
      %v2847 = vpop.f32.mrb[0].mxu0
      %v2848 = vpop.f32.mrb[0].mxu0
      %v2849 = vadd.f32 0.0, %v2848
      %v2850 = vpop.f32.mrb[0].mxu0
      %2851 = vmatprep.mubr.bf16.mxu0 0
      %2852 = vmatmul.mubr.bf16.gmra.mrb[0].mxu0 %v684
      %v2853 = vpop.f32.mrb[0].mxu0
      %v2854 = vadd.f32 0.0, %v2853
      %v2855 = vpop.f32.mrb[0].mxu0
      %v2856 = vpop.f32.mrb[0].mxu0
      %v2857 = vadd.f32 0.0, %v2856
      %v2858 = vpop.f32.mrb[0].mxu0
      %2859 = vmatprep.mubr.bf16.mxu0 0
      %2860 = vmatmul.mubr.bf16.gmra.mrb[0].mxu0 %v685
      %v2861 = vpop.f32.mrb[0].mxu0
      %v2862 = vadd.f32 0.0, %v2861
      %v2863 = vpop.f32.mrb[0].mxu0
      %v2864 = vpop.f32.mrb[0].mxu0
      %v2865 = vadd.f32 0.0, %v2864
      %v2866 = vpop.f32.mrb[0].mxu0
      %2867 = vmatprep.mubr.bf16.mxu0 0
      %2868 = vmatmul.mubr.bf16.gmra.mrb[0].mxu0 %v686
      %v2869 = vpop.f32.mrb[0].mxu0
      %v2870 = vadd.f32 0.0, %v2869
      %v2871 = vpop.f32.mrb[0].mxu0
      %v2872 = vpop.f32.mrb[0].mxu0
      %v2873 = vadd.f32 0.0, %v2872
      %v2874 = vpop.f32.mrb[0].mxu0
      %2875 = vmatprep.mubr.bf16.mxu0 0
      %2876 = vmatmul.mubr.bf16.gmra.mrb[0].mxu0 %v687
      %v2877 = vpop.f32.mrb[0].mxu0
      %v2878 = vadd.f32 0.0, %v2877
      %v2879 = vpop.f32.mrb[0].mxu0
      %v2880 = vpop.f32.mrb[0].mxu0
      %v2881 = vadd.f32 0.0, %v2880
      %v2882 = vpop.f32.mrb[0].mxu0
      %2883 = vmatprep.mubr.bf16.mxu0 0
      %2884 = vmatmul.mubr.bf16.gmra.mrb[0].mxu0 %v688
      %v2885 = vpop.f32.mrb[0].mxu0
      %v2886 = vadd.f32 0.0, %v2885
      %v2887 = vpop.f32.mrb[0].mxu0
      %v2888 = vpop.f32.mrb[0].mxu0
      %v2889 = vadd.f32 0.0, %v2888
      %v2890 = vpop.f32.mrb[0].mxu0
      %2891 = vmatprep.mubr.bf16.mxu0 0
      %2892 = vmatmul.mubr.bf16.gmra.mrb[0].mxu0 %v689
      %v2893 = vpop.f32.mrb[0].mxu0
      %v2894 = vadd.f32 0.0, %v2893
      %v2895 = vpop.f32.mrb[0].mxu0
      %v2896 = vpop.f32.mrb[0].mxu0
      %v2897 = vadd.f32 0.0, %v2896
      %v2898 = vpop.f32.mrb[0].mxu0
      %2899 = vmatprep.mubr.bf16.mxu0 0
      %2900 = vmatmul.mubr.bf16.gmra.mrb[0].mxu0 %v690
      %v2901 = vpop.f32.mrb[0].mxu0
      %v2902 = vadd.f32 0.0, %v2901
      %v2903 = vpop.f32.mrb[0].mxu0
      %v2904 = vpop.f32.mrb[0].mxu0
      %v2905 = vadd.f32 0.0, %v2904
      %v2906 = vpop.f32.mrb[0].mxu0
      %2907 = vdwg.mxu0
      %v2908 = vld [vmem:[#allocation5] sm:$0xff]
      %v2909 = vld [vmem:[#allocation5 + $0x8] sm:$0xff]
      %v2910 = vld [vmem:[#allocation5 + $0x10] sm:$0xff]
      %v2911 = vld [vmem:[#allocation5 + $0x18] sm:$0xff]
      %v2912 = vld [vmem:[#allocation5 + $0x20] sm:$0xff]
      %v2913 = vld [vmem:[#allocation5 + $0x28] sm:$0xff]
      %v2914 = vld [vmem:[#allocation5 + $0x30] sm:$0xff]
      %v2915 = vld [vmem:[#allocation5 + $0x38] sm:$0xff]
      %v2916 = vld [vmem:[#allocation5 + $0x40] sm:$0xff]
      %v2917 = vld [vmem:[#allocation5 + $0x48] sm:$0xff]
      %v2918 = vld [vmem:[#allocation5 + $0x50] sm:$0xff]
      %v2919 = vld [vmem:[#allocation5 + $0x58] sm:$0xff]
      %v2920 = vld [vmem:[#allocation5 + $0x60] sm:$0xff]
      %v2921 = vld [vmem:[#allocation5 + $0x68] sm:$0xff]
      %v2922 = vld [vmem:[#allocation5 + $0x70] sm:$0xff]
      %v2923 = vld [vmem:[#allocation5 + $0x78] sm:$0xff]
      %v2924 = vadd.f32 %v2908, %v2846
      %v2925 = vadd.f32 %v2909, %v2849
      %v2926 = vadd.f32 %v2910, %v2854
      %v2927 = vadd.f32 %v2911, %v2857
      %v2928 = vadd.f32 %v2912, %v2862
      %v2929 = vadd.f32 %v2913, %v2865
      %v2930 = vadd.f32 %v2914, %v2870
      %v2931 = vadd.f32 %v2915, %v2873
      %v2932 = vadd.f32 %v2916, %v2878
      %v2933 = vadd.f32 %v2917, %v2881
      %v2934 = vadd.f32 %v2918, %v2886
      %v2935 = vadd.f32 %v2919, %v2889
      %v2936 = vadd.f32 %v2920, %v2894
      %v2937 = vadd.f32 %v2921, %v2897
      %v2938 = vadd.f32 %v2922, %v2902
      %v2939 = vadd.f32 %v2923, %v2905
      %2940 = vst [vmem:[#allocation5] sm:$0xff] %v2924
      %2941 = vst [vmem:[#allocation5 + $0x8] sm:$0xff] %v2925
      %2942 = vst [vmem:[#allocation5 + $0x10] sm:$0xff] %v2926
      %2943 = vst [vmem:[#allocation5 + $0x18] sm:$0xff] %v2927
      %2944 = vst [vmem:[#allocation5 + $0x20] sm:$0xff] %v2928
      %2945 = vst [vmem:[#allocation5 + $0x28] sm:$0xff] %v2929
      %2946 = vst [vmem:[#allocation5 + $0x30] sm:$0xff] %v2930
      %2947 = vst [vmem:[#allocation5 + $0x38] sm:$0xff] %v2931
      %2948 = vst [vmem:[#allocation5 + $0x40] sm:$0xff] %v2932
      %2949 = vst [vmem:[#allocation5 + $0x48] sm:$0xff] %v2933
      %2950 = vst [vmem:[#allocation5 + $0x50] sm:$0xff] %v2934
      %2951 = vst [vmem:[#allocation5 + $0x58] sm:$0xff] %v2935
      %2952 = vst [vmem:[#allocation5 + $0x60] sm:$0xff] %v2936
      %2953 = vst [vmem:[#allocation5 + $0x68] sm:$0xff] %v2937
      %2954 = vst [vmem:[#allocation5 + $0x70] sm:$0xff] %v2938
      %2955 = vst [vmem:[#allocation5 + $0x78] sm:$0xff] %v2939
      %s2956 = scalar_lea.vmem %s1, 512
      %v2957 = vld [vmem:[%s2956] sm:$0xf]
      %v2958 = vld [vmem:[%s2956 + $0x4] sm:$0xf]
      %v2959 = vld [vmem:[%s2956 + $0x8] sm:$0xf]
      %v2960 = vld [vmem:[%s2956 + $0xc] sm:$0xf]
      %v2961 = vld [vmem:[%s2956 + $0x10] sm:$0xf]
      %v2962 = vld [vmem:[%s2956 + $0x14] sm:$0xf]
      %v2963 = vld [vmem:[%s2956 + $0x18] sm:$0xf]
      %v2964 = vld [vmem:[%s2956 + $0x1c] sm:$0xf]
      %v2965 = vld [vmem:[%s2956 + $0x20] sm:$0xf]
      %v2966 = vld [vmem:[%s2956 + $0x24] sm:$0xf]
      %v2967 = vld [vmem:[%s2956 + $0x28] sm:$0xf]
      %v2968 = vld [vmem:[%s2956 + $0x2c] sm:$0xf]
      %v2969 = vld [vmem:[%s2956 + $0x30] sm:$0xf]
      %v2970 = vld [vmem:[%s2956 + $0x34] sm:$0xf]
      %v2971 = vld [vmem:[%s2956 + $0x38] sm:$0xf]
      %v2972 = vld [vmem:[%s2956 + $0x3c] sm:$0xf]
      %v2973 = vunpack.c.l.b16 %v1219
      %v2974 = vunpack.c.l.b16 %v1222
      %v2975 = vpack.c.b16 %v2974, %v2973
      %v2993 = vunpack.c.l.b16 %v2957
      %v2994 = vunpack.c.l.b16 %v2958
      %v2995 = vunpack.c.l.b16 %v2959
      %v2996 = vunpack.c.l.b16 %v2960
      %v2997 = vunpack.c.l.b16 %v2961
      %v2998 = vunpack.c.l.b16 %v2962
      %v2999 = vunpack.c.l.b16 %v2963
      %v3000 = vunpack.c.l.b16 %v2964
      %v3001 = vunpack.c.l.b16 %v2965
      %v3002 = vunpack.c.l.b16 %v2966
      %v3003 = vunpack.c.l.b16 %v2967
      %v3004 = vunpack.c.l.b16 %v2968
      %v3005 = vunpack.c.l.b16 %v2969
      %v3006 = vunpack.c.l.b16 %v2970
      %v3007 = vunpack.c.l.b16 %v2971
      %v3008 = vunpack.c.l.b16 %v2972
      %v3009 = vpack.c.b16 %v2994, %v2993
      %v3010 = vpack.c.b16 %v2996, %v2995
      %v3011 = vpack.c.b16 %v2998, %v2997
      %v3012 = vpack.c.b16 %v3000, %v2999
      %v3013 = vpack.c.b16 %v3002, %v3001
      %v3014 = vpack.c.b16 %v3004, %v3003
      %v3015 = vpack.c.b16 %v3006, %v3005
      %v3016 = vpack.c.b16 %v3008, %v3007
      %3025 = vmatprep.subr.bf16.mxu0 0
      %3026 = vmatpush1.bf16.msra.mxu0 %v3009
      %3027 = vmatprep.subr.bf16.mxu0 0
      %3028 = vmatpush1.bf16.msra.mxu0 %v3010
      %3029 = vmatprep.subr.bf16.mxu0 0
      %3030 = vmatpush1.bf16.msra.mxu0 %v3011
      %3031 = vmatprep.subr.bf16.mxu0 0
      %3032 = vmatpush1.bf16.msra.mxu0 %v3012
      %3033 = vmatprep.subr.bf16.mxu0 0
      %3034 = vmatpush1.bf16.msra.mxu0 %v3013
      %3035 = vmatprep.subr.bf16.mxu0 0
      %3036 = vmatpush1.bf16.msra.mxu0 %v3014
      %3037 = vmatprep.subr.bf16.mxu0 0
      %3038 = vmatpush1.bf16.msra.mxu0 %v3015
      %3039 = vmatprep.subr.bf16.mxu0 0
      %3040 = vmatpush1.bf16.msra.mxu0 %v3016
      %3041 = vmatprep.subr.bf16.mxu0 0
      %3042 = vmatpush1.bf16.msra.mxu0 0
      %3043 = vmatprep.subr.bf16.mxu0 0
      %3044 = vmatpush1.bf16.msra.mxu0 0
      %3045 = vmatprep.subr.bf16.mxu0 0
      %3046 = vmatpush1.bf16.msra.mxu0 0
      %3047 = vmatprep.subr.bf16.mxu0 0
      %3048 = vmatpush1.bf16.msra.mxu0 0
      %3049 = vmatprep.subr.bf16.mxu0 0
      %3050 = vmatpush1.bf16.msra.mxu0 0
      %3051 = vmatprep.subr.bf16.mxu0 0
      %3052 = vmatpush1.bf16.msra.mxu0 0
      %3053 = vmatprep.subr.bf16.mxu0 0
      %3054 = vmatpush1.bf16.msra.mxu0 0
      %3055 = vmatprep.subr.bf16.mxu0 0
      %3056 = vmatpush1.bf16.msra.mxu0 0
      %3057 = vmatprep.mubr.bf16.mxu0 0
      %3058 = vmatmul.mubr.bf16.gmra.mrb[0].mxu0 %v1685
      %v3059 = vpop.f32.mrb[0].mxu0
      %v3060 = vadd.f32 0.0, %v3059
      %v3061 = vpop.f32.mrb[0].mxu0
      %v3062 = vpop.f32.mrb[0].mxu0
      %v3063 = vadd.f32 0.0, %v3062
      %v3064 = vpop.f32.mrb[0].mxu0
      %3065 = vmatprep.mubr.bf16.mxu0 0
      %3066 = vmatmul.mubr.bf16.gmra.mrb[0].mxu0 %v1686
      %v3067 = vpop.f32.mrb[0].mxu0
      %v3068 = vadd.f32 0.0, %v3067
      %v3069 = vpop.f32.mrb[0].mxu0
      %v3070 = vpop.f32.mrb[0].mxu0
      %v3071 = vadd.f32 0.0, %v3070
      %v3072 = vpop.f32.mrb[0].mxu0
      %3073 = vmatprep.mubr.bf16.mxu0 0
      %3074 = vmatmul.mubr.bf16.gmra.mrb[0].mxu0 %v1687
      %v3075 = vpop.f32.mrb[0].mxu0
      %v3076 = vadd.f32 0.0, %v3075
      %v3077 = vpop.f32.mrb[0].mxu0
      %v3078 = vpop.f32.mrb[0].mxu0
      %v3079 = vadd.f32 0.0, %v3078
      %v3080 = vpop.f32.mrb[0].mxu0
      %3081 = vmatprep.mubr.bf16.mxu0 0
      %3082 = vmatmul.mubr.bf16.gmra.mrb[0].mxu0 %v1688
      %v3083 = vpop.f32.mrb[0].mxu0
      %v3084 = vadd.f32 0.0, %v3083
      %v3085 = vpop.f32.mrb[0].mxu0
      %v3086 = vpop.f32.mrb[0].mxu0
      %v3087 = vadd.f32 0.0, %v3086
      %v3088 = vpop.f32.mrb[0].mxu0
      %3089 = vmatprep.mubr.bf16.mxu0 0
      %3090 = vmatmul.mubr.bf16.gmra.mrb[0].mxu0 %v1689
      %v3091 = vpop.f32.mrb[0].mxu0
      %v3092 = vadd.f32 0.0, %v3091
      %v3093 = vpop.f32.mrb[0].mxu0
      %v3094 = vpop.f32.mrb[0].mxu0
      %v3095 = vadd.f32 0.0, %v3094
      %v3096 = vpop.f32.mrb[0].mxu0
      %3097 = vmatprep.mubr.bf16.mxu0 0
      %3098 = vmatmul.mubr.bf16.gmra.mrb[0].mxu0 %v1690
      %v3099 = vpop.f32.mrb[0].mxu0
      %v3100 = vadd.f32 0.0, %v3099
      %v3101 = vpop.f32.mrb[0].mxu0
      %v3102 = vpop.f32.mrb[0].mxu0
      %v3103 = vadd.f32 0.0, %v3102
      %v3104 = vpop.f32.mrb[0].mxu0
      %3105 = vmatprep.mubr.bf16.mxu0 0
      %3106 = vmatmul.mubr.bf16.gmra.mrb[0].mxu0 %v2336
      %v3107 = vpop.f32.mrb[0].mxu0
      %v3108 = vadd.f32 0.0, %v3107
      %v3109 = vpop.f32.mrb[0].mxu0
      %v3110 = vpop.f32.mrb[0].mxu0
      %v3111 = vadd.f32 0.0, %v3110
      %v3112 = vpop.f32.mrb[0].mxu0
      %3113 = vmatprep.mubr.bf16.mxu0 0
      %3114 = vmatmul.mubr.bf16.gmra.mrb[0].mxu0 %v2975
      %v3115 = vpop.f32.mrb[0].mxu0
      %v3116 = vadd.f32 0.0, %v3115
      %v3117 = vpop.f32.mrb[0].mxu0
      %v3118 = vpop.f32.mrb[0].mxu0
      %v3119 = vadd.f32 0.0, %v3118
      %v3120 = vpop.f32.mrb[0].mxu0
      %3121 = vdwg.mxu0
      %v3122 = vld [vmem:[#allocation5] sm:$0xff]
      %v3123 = vld [vmem:[#allocation5 + $0x8] sm:$0xff]
      %v3124 = vld [vmem:[#allocation5 + $0x10] sm:$0xff]
      %v3125 = vld [vmem:[#allocation5 + $0x18] sm:$0xff]
      %v3126 = vld [vmem:[#allocation5 + $0x20] sm:$0xff]
      %v3127 = vld [vmem:[#allocation5 + $0x28] sm:$0xff]
      %v3128 = vld [vmem:[#allocation5 + $0x30] sm:$0xff]
      %v3129 = vld [vmem:[#allocation5 + $0x38] sm:$0xff]
      %v3130 = vld [vmem:[#allocation5 + $0x40] sm:$0xff]
      %v3131 = vld [vmem:[#allocation5 + $0x48] sm:$0xff]
      %v3132 = vld [vmem:[#allocation5 + $0x50] sm:$0xff]
      %v3133 = vld [vmem:[#allocation5 + $0x58] sm:$0xff]
      %v3134 = vld [vmem:[#allocation5 + $0x60] sm:$0xff]
      %v3135 = vld [vmem:[#allocation5 + $0x68] sm:$0xff]
      %v3136 = vld [vmem:[#allocation5 + $0x70] sm:$0xff]
      %v3137 = vld [vmem:[#allocation5 + $0x78] sm:$0xff]
      %v3138 = vadd.f32 %v3122, %v3060
      %v3139 = vadd.f32 %v3123, %v3063
      %v3140 = vadd.f32 %v3124, %v3068
      %v3141 = vadd.f32 %v3125, %v3071
      %v3142 = vadd.f32 %v3126, %v3076
      %v3143 = vadd.f32 %v3127, %v3079
      %v3144 = vadd.f32 %v3128, %v3084
      %v3145 = vadd.f32 %v3129, %v3087
      %v3146 = vadd.f32 %v3130, %v3092
      %v3147 = vadd.f32 %v3131, %v3095
      %v3148 = vadd.f32 %v3132, %v3100
      %v3149 = vadd.f32 %v3133, %v3103
      %v3150 = vadd.f32 %v3134, %v3108
      %v3151 = vadd.f32 %v3135, %v3111
      %v3152 = vadd.f32 %v3136, %v3116
      %v3153 = vadd.f32 %v3137, %v3119
      %3154 = vst [vmem:[#allocation5] sm:$0xff] %v3138
      %3155 = vst [vmem:[#allocation5 + $0x8] sm:$0xff] %v3139
      %3156 = vst [vmem:[#allocation5 + $0x10] sm:$0xff] %v3140
      %3157 = vst [vmem:[#allocation5 + $0x18] sm:$0xff] %v3141
      %3158 = vst [vmem:[#allocation5 + $0x20] sm:$0xff] %v3142
      %3159 = vst [vmem:[#allocation5 + $0x28] sm:$0xff] %v3143
      %3160 = vst [vmem:[#allocation5 + $0x30] sm:$0xff] %v3144
      %3161 = vst [vmem:[#allocation5 + $0x38] sm:$0xff] %v3145
      %3162 = vst [vmem:[#allocation5 + $0x40] sm:$0xff] %v3146
      %3163 = vst [vmem:[#allocation5 + $0x48] sm:$0xff] %v3147
      %3164 = vst [vmem:[#allocation5 + $0x50] sm:$0xff] %v3148
      %3165 = vst [vmem:[#allocation5 + $0x58] sm:$0xff] %v3149
      %3166 = vst [vmem:[#allocation5 + $0x60] sm:$0xff] %v3150
      %3167 = vst [vmem:[#allocation5 + $0x68] sm:$0xff] %v3151
      %3168 = vst [vmem:[#allocation5 + $0x70] sm:$0xff] %v3152
      %3169 = vst [vmem:[#allocation5 + $0x78] sm:$0xff] %v3153
      %v3170 = vld [vmem:[#allocation5] sm:$0xff]
      %v3171 = vld [vmem:[#allocation5 + $0x8] sm:$0xff]
      %v3172 = vld [vmem:[#allocation5 + $0x10] sm:$0xff]
      %v3173 = vld [vmem:[#allocation5 + $0x18] sm:$0xff]
      %v3174 = vld [vmem:[#allocation5 + $0x20] sm:$0xff]
      %v3175 = vld [vmem:[#allocation5 + $0x28] sm:$0xff]
      %v3176 = vld [vmem:[#allocation5 + $0x30] sm:$0xff]
      %v3177 = vld [vmem:[#allocation5 + $0x38] sm:$0xff]
      %v3178 = vld [vmem:[#allocation5 + $0x40] sm:$0xff]
      %v3179 = vld [vmem:[#allocation5 + $0x48] sm:$0xff]
      %v3180 = vld [vmem:[#allocation5 + $0x50] sm:$0xff]
      %v3181 = vld [vmem:[#allocation5 + $0x58] sm:$0xff]
      %v3182 = vld [vmem:[#allocation5 + $0x60] sm:$0xff]
      %v3183 = vld [vmem:[#allocation5 + $0x68] sm:$0xff]
      %v3184 = vld [vmem:[#allocation5 + $0x70] sm:$0xff]
      %v3185 = vld [vmem:[#allocation5 + $0x78] sm:$0xff]
      %v3186 = vld [vmem:[%s2] sm:$0x1]
      %v3188 = vlaneseq
      %v3189 = vshrl.u32 %v3188, 7
      %v3190 = vsub.s32 0, %v3189
      %v3191 = vrot.slane %v3186, %v3190
      %v3193 = vadd.f32 %v3170, %v3191
      %v3194 = vadd.f32 %v3171, %v3191
      %v3195 = vadd.f32 %v3172, %v3191
      %v3196 = vadd.f32 %v3173, %v3191
      %v3197 = vadd.f32 %v3174, %v3191
      %v3198 = vadd.f32 %v3175, %v3191
      %v3199 = vadd.f32 %v3176, %v3191
      %v3200 = vadd.f32 %v3177, %v3191
      %v3201 = vadd.f32 %v3178, %v3191
      %v3202 = vadd.f32 %v3179, %v3191
      %v3203 = vadd.f32 %v3180, %v3191
      %v3204 = vadd.f32 %v3181, %v3191
      %v3205 = vadd.f32 %v3182, %v3191
      %v3206 = vadd.f32 %v3183, %v3191
      %v3207 = vadd.f32 %v3184, %v3191
      %v3208 = vadd.f32 %v3185, %v3191
      %v3209 = vpack.c.bf16 %v3194, %v3193
      %v3210 = vpack.c.bf16 %v3196, %v3195
      %v3211 = vpack.c.bf16 %v3198, %v3197
      %v3212 = vpack.c.bf16 %v3200, %v3199
      %v3213 = vpack.c.bf16 %v3202, %v3201
      %v3214 = vpack.c.bf16 %v3204, %v3203
      %v3215 = vpack.c.bf16 %v3206, %v3205
      %v3216 = vpack.c.bf16 %v3208, %v3207
      %v3225 = vunpack.c.l.b16 %v3209
      %v3226 = vunpack.c.h.b16 %v3209
      %v3227 = vunpack.c.l.b16 %v3210
      %v3228 = vunpack.c.h.b16 %v3210
      %v3229 = vunpack.c.l.b16 %v3211
      %v3230 = vunpack.c.h.b16 %v3211
      %v3231 = vunpack.c.l.b16 %v3212
      %v3232 = vunpack.c.h.b16 %v3212
      %v3233 = vunpack.c.l.b16 %v3213
      %v3234 = vunpack.c.h.b16 %v3213
      %v3235 = vunpack.c.l.b16 %v3214
      %v3236 = vunpack.c.h.b16 %v3214
      %v3237 = vunpack.c.l.b16 %v3215
      %v3238 = vunpack.c.h.b16 %v3215
      %v3239 = vunpack.c.l.b16 %v3216
      %v3240 = vunpack.c.h.b16 %v3216
      %v3241 = vpack.c.b16 %v3225, %v3225
      %v3242 = vpack.c.b16 %v3226, %v3226
      %v3243 = vpack.c.b16 %v3227, %v3227
      %v3244 = vpack.c.b16 %v3228, %v3228
      %v3245 = vpack.c.b16 %v3229, %v3229
      %v3246 = vpack.c.b16 %v3230, %v3230
      %v3247 = vpack.c.b16 %v3231, %v3231
      %v3248 = vpack.c.b16 %v3232, %v3232
      %v3249 = vpack.c.b16 %v3233, %v3233
      %v3250 = vpack.c.b16 %v3234, %v3234
      %v3251 = vpack.c.b16 %v3235, %v3235
      %v3252 = vpack.c.b16 %v3236, %v3236
      %v3253 = vpack.c.b16 %v3237, %v3237
      %v3254 = vpack.c.b16 %v3238, %v3238
      %v3255 = vpack.c.b16 %v3239, %v3239
      %v3256 = vpack.c.b16 %v3240, %v3240
      %3273 = vst [vmem:[%s242] sm:$0xf] %v3241
      %3274 = vst [vmem:[%s242 + $0x4] sm:$0xf] %v3242
      %3275 = vst [vmem:[%s242 + $0x8] sm:$0xf] %v3243
      %3276 = vst [vmem:[%s242 + $0xc] sm:$0xf] %v3244
      %3277 = vst [vmem:[%s242 + $0x10] sm:$0xf] %v3245
      %3278 = vst [vmem:[%s242 + $0x14] sm:$0xf] %v3246
      %3279 = vst [vmem:[%s242 + $0x18] sm:$0xf] %v3247
      %3280 = vst [vmem:[%s242 + $0x1c] sm:$0xf] %v3248
      %3281 = vst [vmem:[%s242 + $0x20] sm:$0xf] %v3249
      %3282 = vst [vmem:[%s242 + $0x24] sm:$0xf] %v3250
      %3283 = vst [vmem:[%s242 + $0x28] sm:$0xf] %v3251
      %3284 = vst [vmem:[%s242 + $0x2c] sm:$0xf] %v3252
      %3285 = vst [vmem:[%s242 + $0x30] sm:$0xf] %v3253
      %3286 = vst [vmem:[%s242 + $0x34] sm:$0xf] %v3254
      %3287 = vst [vmem:[%s242 + $0x38] sm:$0xf] %v3255
      %3288 = vst [vmem:[%s242 + $0x3c] sm:$0xf] %v3256
      %v3289 = vadd.f32 %v3193, %v3194
      %v3290 = vadd.f32 %v3289, %v3195
      %v3291 = vadd.f32 %v3290, %v3196
      %v3292 = vadd.f32 %v3291, %v3197
      %v3293 = vadd.f32 %v3292, %v3198
      %v3294 = vadd.f32 %v3293, %v3199
      %v3295 = vadd.f32 %v3294, %v3200
      %v3296 = vadd.f32 %v3295, %v3201
      %v3297 = vadd.f32 %v3296, %v3202
      %v3298 = vadd.f32 %v3297, %v3203
      %v3299 = vadd.f32 %v3298, %v3204
      %v3300 = vadd.f32 %v3299, %v3205
      %v3301 = vadd.f32 %v3300, %v3206
      %v3302 = vadd.f32 %v3301, %v3207
      %v3303 = vadd.f32 %v3302, %v3208
      %v3304 = vrot.slane %v3303, 4
      %v3305 = vadd.f32 %v3303, %v3304
      %v3306 = vrot.slane %v3305, 2
      %v3307 = vadd.f32 %v3305, %v3306
      %v3308 = vrot.slane %v3307, 1
      %v3309 = vadd.f32 %v3307, %v3308
      %v3310 = vmul.f32 %v3193, %v3193
      %v3311 = vmul.f32 %v3194, %v3194
      %v3312 = vmul.f32 %v3195, %v3195
      %v3313 = vmul.f32 %v3196, %v3196
      %v3314 = vmul.f32 %v3197, %v3197
      %v3315 = vmul.f32 %v3198, %v3198
      %v3316 = vmul.f32 %v3199, %v3199
      %v3317 = vmul.f32 %v3200, %v3200
      %v3318 = vmul.f32 %v3201, %v3201
      %v3319 = vmul.f32 %v3202, %v3202
      %v3320 = vmul.f32 %v3203, %v3203
      %v3321 = vmul.f32 %v3204, %v3204
      %v3322 = vmul.f32 %v3205, %v3205
      %v3323 = vmul.f32 %v3206, %v3206
      %v3324 = vmul.f32 %v3207, %v3207
      %v3325 = vmul.f32 %v3208, %v3208
      %v3326 = vadd.f32 %v3310, %v3311
      %v3327 = vadd.f32 %v3326, %v3312
      %v3328 = vadd.f32 %v3327, %v3313
      %v3329 = vadd.f32 %v3328, %v3314
      %v3330 = vadd.f32 %v3329, %v3315
      %v3331 = vadd.f32 %v3330, %v3316
      %v3332 = vadd.f32 %v3331, %v3317
      %v3333 = vadd.f32 %v3332, %v3318
      %v3334 = vadd.f32 %v3333, %v3319
      %v3335 = vadd.f32 %v3334, %v3320
      %v3336 = vadd.f32 %v3335, %v3321
      %v3337 = vadd.f32 %v3336, %v3322
      %v3338 = vadd.f32 %v3337, %v3323
      %v3339 = vadd.f32 %v3338, %v3324
      %v3340 = vadd.f32 %v3339, %v3325
      %v3341 = vrot.slane %v3340, 4
      %v3342 = vadd.f32 %v3340, %v3341
      %v3343 = vrot.slane %v3342, 2
      %v3344 = vadd.f32 %v3342, %v3343
      %v3345 = vrot.slane %v3344, 1
      %v3346 = vadd.f32 %v3344, %v3345
      %vm3347 = vcmask 1040384
      %v3348 = vsel %vm3347, %v3309, %v3346
      %3349 = vst [vmem:[%s251] sm:$0x3] %v3348
      %s3350 = smul.u32 8, %s23
      %p3351 = scmp.lt.s32.totalorder %s22, 1
      %s3352 = scalar_select %p3351, %s22, 1
      %p3353 = scmp.lt.s32.totalorder %s3350, 15
      %s3354 = scalar_select %p3353, %s3350, 15
      %s3355 = smul.addr %s3354, 2
      %s3356 = smul.addr %s3352, 32
      %s3357 = sadd.s32 %s3355, %s3356
      %s3358 = smul.addr %s3357, 4
      %s3359 = scalar_lea.vmem %s5, %s3358
      %p3360 = scmp.lt.s32.totalorder %s22, 1
      %s3361 = scalar_select %p3360, %s22, 1
      %p3362 = scmp.lt.s32.totalorder %s23, 1
      %s3363 = scalar_select %p3362, %s23, 1
      %s3364 = smul.addr %s3361, 2
      %s3365 = sadd.s32 %s3363, %s3364
      %s3366 = smul.addr %s3365, 2
      %s3367 = scalar_lea.vmem %s6, %s3366
      // Predicated region
      $region281: #{double_conv_forward.3} parent=35 // pred_check
        %p3368 = pneg %p134
      $region282: #{double_conv_forward.3} parent=35 // pred_check_branch
        %3370 = sbr.rel (%p3368) target = $region284
      $region283: #{double_conv_forward.3} parent=35 // pred_region
        %s3371 = smul.u32 8, %s23
      $region284: #{double_conv_forward.3} parent=35 // pred_fallthru
        _
      // Predicated region
      $region285: #{double_conv_forward.3} parent=35 // pred_check
        %p3372 = pneg %p162
      $region286: #{double_conv_forward.3} parent=35 // pred_check_branch
        %3374 = sbr.rel (%p3372) target = $region288
      $region287: #{double_conv_forward.3} parent=35 // pred_region
        _
      $region288: #{double_conv_forward.3} parent=35 // pred_fallthru
        _
    $region36: #{double_conv_forward.3} parent=5 // pred_fallthru
      _
    %p3375 = scmp.le.s32.totalorder 2, %s13
    // Predicated region
    $region289: #{double_conv_forward.3} parent=5 // pred_check
      %p3376 = pneg %p3375
    $region290: #{double_conv_forward.3} parent=5 // pred_check_branch
      %3378 = sbr.rel (%p3376) target = $region292
    $region291: #{double_conv_forward.3} parent=5 // pred_region
      %s3379 = ssub.s32 %s13, 2
      // Predicated region
      $region293: #{double_conv_forward.3} parent=291 // pred_check
        %p3380 = pneg %p140
      $region294: #{double_conv_forward.3} parent=291 // pred_check_branch
        %3382 = sbr.rel (%p3380) target = $region296
      $region295: #{double_conv_forward.3} parent=291 // pred_region
        %s3383 = smul.u32 8, %s25
        %p3384 = scmp.lt.s32.totalorder %s24, 1
        %s3385 = scalar_select %p3384, %s24, 1
        %p3386 = scmp.lt.s32.totalorder %s3383, 15
        %s3387 = scalar_select %p3386, %s3383, 15
        %s3388 = smul.addr %s3387, 2
        %s3389 = smul.addr %s3385, 32
        %s3390 = sadd.s32 %s3388, %s3389
        %s3391 = smul.addr %s3390, 4
        %s3392 = scalar_lea.vmem %s5, %s3391
      $region296: #{double_conv_forward.3} parent=291 // pred_fallthru
        _
      // Predicated region
      $region297: #{double_conv_forward.3} parent=291 // pred_check
        %p3393 = pneg %p168
      $region298: #{double_conv_forward.3} parent=291 // pred_check_branch
        %3395 = sbr.rel (%p3393) target = $region300
      $region299: #{double_conv_forward.3} parent=291 // pred_region
        %p3396 = scmp.lt.s32.totalorder %s24, 1
        %s3397 = scalar_select %p3396, %s24, 1
        %p3398 = scmp.lt.s32.totalorder %s25, 1
        %s3399 = scalar_select %p3398, %s25, 1
        %s3400 = smul.addr %s3397, 2
        %s3401 = sadd.s32 %s3399, %s3400
        %s3402 = smul.addr %s3401, 2
        %s3403 = scalar_lea.vmem %s6, %s3402
      $region300: #{double_conv_forward.3} parent=291 // pred_fallthru
        _
    $region292: #{double_conv_forward.3} parent=5 // pred_fallthru
      _
  $region6: #{double_conv_forward.3} parent=0 // loop_footer
    %s17 = sadd.s32 1, %s13
  $region7: #{double_conv_forward.3} parent=0 // loop_footer_branch
    %12 = sbr.rel target = $region3
  $region8: #{double_conv_forward.3} parent=0 // loop_exit
    _
  %3404 = vsyncmov [#allocation4]
  %s3405 = vpop.sfrf %3404
  %p3406 = scmp.eq.s32.totalorder %s3405, 0
  %p3407 = pneg %p3406
  %3409 = shalt.err (%p3407)
  %s3410 = scalar_lea.sflag [#allocation4], 1
  %3411 = vsyncmov %s3410
  %s3412 = vpop.sfrf %3411
  %p3413 = scmp.eq.s32.totalorder %s3412, 0
  %p3414 = pneg %p3413
  %3416 = shalt.err (%p3414)
  %s3417 = scalar_lea.sflag [#allocation4], 2
  %3418 = vsyncmov %s3417
  %s3419 = vpop.sfrf %3418
  %p3420 = scmp.eq.s32.totalorder %s3419, 0
  %p3421 = pneg %p3420
  %3423 = shalt.err (%p3421)
  %s3424 = scalar_lea.sflag [#allocation4], 3
  %3425 = vsyncmov %s3424
  %s3426 = vpop.sfrf %3425
  %p3427 = scmp.eq.s32.totalorder %s3426, 0
  %p3428 = pneg %p3427
  %3430 = shalt.err (%p3428)
  %s3431 = scalar_lea.sflag [#allocation4], 4
  %3432 = vsyncmov %s3431
  %s3433 = vpop.sfrf %3432
  %p3434 = scmp.eq.s32.totalorder %s3433, 0
  %p3435 = pneg %p3434
  %3437 = shalt.err (%p3435)
  %s3438 = scalar_lea.sflag [#allocation4], 5
  %3439 = vsyncmov %s3438
  %s3440 = vpop.sfrf %3439
  %p3441 = scmp.eq.s32.totalorder %s3440, 0
  %p3442 = pneg %p3441
  %3444 = shalt.err (%p3442)

// kernel: double_conv_forward.4
$region0: #{double_conv_forward.4}
  #allocation0 [shape = 'u32[]', space=smem, size = 0x4, offset = 0x4, fixed_abs, tag = 'smem constant byte address 0x4 - core index']
  #allocation1 [shape = 'u32[144,128]{1,0:T(1,128)}', space=vmem, size = 0x12000, scoped, tag = 'internal scratch']
  #allocation2 [shape = 'bf16[2,10,16,128]{3,2,1,0:T(16,128)(2,1)}', space=vmem, size = 0x14000, scoped, tag = 'scratch operand']
  #allocation3 [shape = 'bf16[10,18,128]{2,1,0:T(8,128)(2,1)}', space=vmem, size = 0xf000, scoped, tag = 'scratch operand']
  #allocation4 [shape = 's32[6]{0}', space=sflag, size = 0x18, scoped, tag = 'scratch operand']
  #allocation5 [shape = 'f32[128,128]{1,0:T(8,128)}', space=vmem, size = 0x10000, scoped, tag = 'scratch operand']
  #allocation6 [shape = 's32[]', space=sflag, size = 0x4, offset = 0, fixed_abs, tag = 'sflag constant byte address 0x0 - dummy sync flag']
  #allocation7 [shape = 's32[]', space=sflag, size = 0x4, offset = 0, fixed_abs, tag = 'sflag constant byte address 0x0 - dummy sync flag']
  #allocation8 [shape = 's32[]', space=sflag, size = 0x4, offset = 0, fixed_abs, tag = 'sflag constant byte address 0x0 - dummy sync flag']
  #allocation9 [shape = 's32[]', space=sflag, size = 0x4, offset = 0, fixed_abs, tag = 'sflag constant byte address 0x0 - dummy sync flag']
  #allocation10 [shape = 's32[]', space=sflag, size = 0x4, offset = 0, fixed_abs, tag = 'sflag constant byte address 0x0 - dummy sync flag']
  #allocation11 [shape = 's32[]', space=sflag, size = 0x4, offset = 0, fixed_abs, tag = 'sflag constant byte address 0x0 - dummy sync flag']
  %s0 = inlined_call_operand.vmem [shape: bf16[2,16,16,128], index: 0, kind: input, shape index: {}]
  %s1 = inlined_call_operand.vmem [shape: bf16[3,3,128,128], index: 1, kind: input, shape index: {}]
  %s2 = inlined_call_operand.vmem [shape: f32[1,128], index: 2, kind: input, shape index: {}]
  %s3 = inlined_call_operand.vmem [shape: f32[1,128], index: 3, kind: input, shape index: {}]
  %s4 = inlined_call_operand.vmem [shape: f32[1,128], index: 4, kind: input, shape index: {}]
  %s5 = inlined_call_operand.vmem [shape: bf16[2,16,16,128], index: 5, kind: output, shape index: {0}]
  %s6 = inlined_call_operand.vmem [shape: f32[2,2,2,128], index: 6, kind: output, shape index: {1}]
  %7 = xla_tuple %s5, %s6
  %s8 = sld [smem:[#allocation0]]
  $region301: #{double_conv_forward.4} parent=0
    _
  %s10 = ssub.s32 1, %s8
  %s11 = scalar_select 0, %s10, %s8
  loop: start=0, step=1, limit=6
  $region2: #{double_conv_forward.4} parent=0 // loop_pre_header
    _
  $region3: #{double_conv_forward.4} parent=0 // loop_header
    %s13 = sphi 0, %s17
    %p14 = scmp.ge.s32.totalorder %s13, 6
    %s20 = sphi 0, %s32
    %s21 = sphi 0, %s28
    %s22 = sphi 0, %s20
    %s23 = sphi 0, %s21
    %s24 = sphi 0, %s22
    %s25 = sphi 0, %s23
    %s33 = sphi 0, %s33
    %s35 = sphi 0, %s33
    %s36 = sphi 0, %s35
    %s50 = sphi 0, %s36
    %s54 = sphi 0, %s54
    %s56 = sphi 0, %s54
    %s57 = sphi 0, %s56
    %s71 = sphi 0, %s57
    %s75 = sphi 0, %s75
    %s77 = sphi 0, %s75
    %s78 = sphi 0, %s77
    %s92 = sphi 0, %s78
    %s96 = sphi 0, %s96
    %s98 = sphi 0, %s96
    %s99 = sphi 0, %s98
    %s113 = sphi 0, %s99
    %s121 = sphi 0, %s123
    %s124 = sphi 0, %s121
    %s125 = sphi 0, %s124
    %s141 = sphi 0, %s125
    %s149 = sphi 0, %s151
    %s152 = sphi 0, %s149
    %s153 = sphi 0, %s152
    %s169 = sphi 0, %s153
  $region4: #{double_conv_forward.4} parent=0 // loop_header_branch
    %16 = sbr.rel (%p14) target = $region8
  $region5: #{double_conv_forward.4} parent=0 // loop_body
    %s18 = ssub.s32 %s13, 1
    %s19 = ssub.s32 %s13, 2
    %s26 = sadd.s32 1, %s21
    %p27 = scmp.ge.s32.totalorder %s26, 2
    %s28 = scalar_select %p27, 0, %s26
    %s29 = sadd.s32 1, %s20
    %s30 = scalar_select %p27, %s29, %s20
    %p31 = scmp.ge.s32.totalorder %s30, 2
    %s32 = scalar_select %p31, 0, %s30
    %s34 = sadd.s32 %s33, 1
    %p37 = scmp.eq.s32.totalorder %s13, 3
    %p38 = scmp.ne.s32.totalorder %s33, %s35
    %p39 = scmp.eq.s32.totalorder %s13, 0
    %p40 = por %p38, %p39
    %p41 = scmp.ne.s32.totalorder %s33, %s35
    %p42 = scmp.eq.s32.totalorder %s18, 3
    %p43 = por %p41, %p42
    %p44 = scmp.ne.s32.totalorder %s35, %s36
    %p45 = scmp.eq.s32.totalorder %s18, 0
    %p46 = por %p44, %p45
    %p47 = scmp.ne.s32.totalorder %s35, %s36
    %p48 = scmp.eq.s32.totalorder %s19, 3
    %p49 = por %p47, %p48
    %p51 = scmp.ne.s32.totalorder %s36, %s50
    %p52 = scmp.eq.s32.totalorder %s19, 0
    %p53 = por %p51, %p52
    %s55 = sadd.s32 %s54, 1
    %p58 = scmp.eq.s32.totalorder %s13, 3
    %p59 = scmp.ne.s32.totalorder %s54, %s56
    %p60 = scmp.eq.s32.totalorder %s13, 0
    %p61 = por %p59, %p60
    %p62 = scmp.ne.s32.totalorder %s54, %s56
    %p63 = scmp.eq.s32.totalorder %s18, 3
    %p64 = por %p62, %p63
    %p65 = scmp.ne.s32.totalorder %s56, %s57
    %p66 = scmp.eq.s32.totalorder %s18, 0
    %p67 = por %p65, %p66
    %p68 = scmp.ne.s32.totalorder %s56, %s57
    %p69 = scmp.eq.s32.totalorder %s19, 3
    %p70 = por %p68, %p69
    %p72 = scmp.ne.s32.totalorder %s57, %s71
    %p73 = scmp.eq.s32.totalorder %s19, 0
    %p74 = por %p72, %p73
    %s76 = sadd.s32 %s75, 1
    %p79 = scmp.eq.s32.totalorder %s13, 3
    %p80 = scmp.ne.s32.totalorder %s75, %s77
    %p81 = scmp.eq.s32.totalorder %s13, 0
    %p82 = por %p80, %p81
    %p83 = scmp.ne.s32.totalorder %s75, %s77
    %p84 = scmp.eq.s32.totalorder %s18, 3
    %p85 = por %p83, %p84
    %p86 = scmp.ne.s32.totalorder %s77, %s78
    %p87 = scmp.eq.s32.totalorder %s18, 0
    %p88 = por %p86, %p87
    %p89 = scmp.ne.s32.totalorder %s77, %s78
    %p90 = scmp.eq.s32.totalorder %s19, 3
    %p91 = por %p89, %p90
    %p93 = scmp.ne.s32.totalorder %s78, %s92
    %p94 = scmp.eq.s32.totalorder %s19, 0
    %p95 = por %p93, %p94
    %s97 = sadd.s32 %s96, 1
    %p100 = scmp.eq.s32.totalorder %s13, 3
    %p101 = scmp.ne.s32.totalorder %s96, %s98
    %p102 = scmp.eq.s32.totalorder %s13, 0
    %p103 = por %p101, %p102
    %p104 = scmp.ne.s32.totalorder %s96, %s98
    %p105 = scmp.eq.s32.totalorder %s18, 3
    %p106 = por %p104, %p105
    %p107 = scmp.ne.s32.totalorder %s98, %s99
    %p108 = scmp.eq.s32.totalorder %s18, 0
    %p109 = por %p107, %p108
    %p110 = scmp.ne.s32.totalorder %s98, %s99
    %p111 = scmp.eq.s32.totalorder %s19, 3
    %p112 = por %p110, %p111
    %p114 = scmp.ne.s32.totalorder %s99, %s113
    %p115 = scmp.eq.s32.totalorder %s19, 0
    %p116 = por %p114, %p115
    %s117 = ssub.s32 %s20, %s32
    %s118 = ssub.s32 %s21, %s28
    %s119 = sor.u32 %s117, %s118
    %p120 = scmp.eq.s32.totalorder %s119, 0
    %s122 = sadd.s32 %s121, 1
    %s123 = scalar_select %p120, %s121, %s122
    %p126 = pneg %p120
    %p127 = scmp.eq.s32.totalorder %s13, 3
    %p128 = por %p126, %p127
    %p129 = scmp.ne.s32.totalorder %s121, %s124
    %p130 = scmp.eq.s32.totalorder %s13, 0
    %p131 = por %p129, %p130
    %p132 = scmp.ne.s32.totalorder %s121, %s124
    %p133 = scmp.eq.s32.totalorder %s18, 3
    %p134 = por %p132, %p133
    %p135 = scmp.ne.s32.totalorder %s124, %s125
    %p136 = scmp.eq.s32.totalorder %s18, 0
    %p137 = por %p135, %p136
    %p138 = scmp.ne.s32.totalorder %s124, %s125
    %p139 = scmp.eq.s32.totalorder %s19, 3
    %p140 = por %p138, %p139
    %p142 = scmp.ne.s32.totalorder %s125, %s141
    %p143 = scmp.eq.s32.totalorder %s19, 0
    %p144 = por %p142, %p143
    %s145 = ssub.s32 %s20, %s32
    %s146 = ssub.s32 %s21, %s28
    %s147 = sor.u32 %s145, %s146
    %p148 = scmp.eq.s32.totalorder %s147, 0
    %s150 = sadd.s32 %s149, 1
    %s151 = scalar_select %p148, %s149, %s150
    %p154 = pneg %p148
    %p155 = scmp.eq.s32.totalorder %s13, 3
    %p156 = por %p154, %p155
    %p157 = scmp.ne.s32.totalorder %s149, %s152
    %p158 = scmp.eq.s32.totalorder %s13, 0
    %p159 = por %p157, %p158
    %p160 = scmp.ne.s32.totalorder %s149, %s152
    %p161 = scmp.eq.s32.totalorder %s18, 3
    %p162 = por %p160, %p161
    %p163 = scmp.ne.s32.totalorder %s152, %s153
    %p164 = scmp.eq.s32.totalorder %s18, 0
    %p165 = por %p163, %p164
    %p166 = scmp.ne.s32.totalorder %s152, %s153
    %p167 = scmp.eq.s32.totalorder %s19, 3
    %p168 = por %p166, %p167
    %p170 = scmp.ne.s32.totalorder %s153, %s169
    %p171 = scmp.eq.s32.totalorder %s19, 0
    %p172 = por %p170, %p171
    %p173 = scmp.le.s32.totalorder 1, %s13
    %p174 = scmp.lt.s32.totalorder %s13, 5
    %p175 = pnand %p173, %p174
    %p176 = pneg %p175
    // Predicated region
    $region9: #{double_conv_forward.4} parent=5 // pred_check
      _
    $region10: #{double_conv_forward.4} parent=5 // pred_check_branch
      %178 = sbr.rel (%p175) target = $region12
    $region11: #{double_conv_forward.4} parent=5 // pred_region
      %s179 = ssub.s32 %s13, 1
      // Predicated region
      $region13: #{double_conv_forward.4} parent=11 // pred_check
        %p180 = pneg %p46
      $region14: #{double_conv_forward.4} parent=11 // pred_check_branch
        %182 = sbr.rel (%p180) target = $region16
      $region15: #{double_conv_forward.4} parent=11 // pred_region
        _
      $region16: #{double_conv_forward.4} parent=11 // pred_fallthru
        _
      // Predicated region
      $region17: #{double_conv_forward.4} parent=11 // pred_check
        %p183 = pneg %p67
      $region18: #{double_conv_forward.4} parent=11 // pred_check_branch
        %185 = sbr.rel (%p183) target = $region20
      $region19: #{double_conv_forward.4} parent=11 // pred_region
        _
      $region20: #{double_conv_forward.4} parent=11 // pred_fallthru
        _
      // Predicated region
      $region21: #{double_conv_forward.4} parent=11 // pred_check
        %p186 = pneg %p88
      $region22: #{double_conv_forward.4} parent=11 // pred_check_branch
        %188 = sbr.rel (%p186) target = $region24
      $region23: #{double_conv_forward.4} parent=11 // pred_region
        _
      $region24: #{double_conv_forward.4} parent=11 // pred_fallthru
        _
      // Predicated region
      $region25: #{double_conv_forward.4} parent=11 // pred_check
        %p189 = pneg %p109
      $region26: #{double_conv_forward.4} parent=11 // pred_check_branch
        %191 = sbr.rel (%p189) target = $region28
      $region27: #{double_conv_forward.4} parent=11 // pred_region
        _
      $region28: #{double_conv_forward.4} parent=11 // pred_fallthru
        _
    $region12: #{double_conv_forward.4} parent=5 // pred_fallthru
      _
    %p192 = scmp.lt.s32.totalorder %s13, 4
    // Predicated region
    $region29: #{double_conv_forward.4} parent=5 // pred_check
      %p193 = pneg %p192
    $region30: #{double_conv_forward.4} parent=5 // pred_check_branch
      %195 = sbr.rel (%p193) target = $region32
    $region31: #{double_conv_forward.4} parent=5 // pred_region
      _
    $region32: #{double_conv_forward.4} parent=5 // pred_fallthru
      _
    %p196 = scmp.le.s32.totalorder 1, %s13
    %p197 = scmp.lt.s32.totalorder %s13, 5
    %p198 = pnand %p196, %p197
    %p199 = pneg %p198
    // Predicated region
    $region33: #{double_conv_forward.4} parent=5 // pred_check
      _
    $region34: #{double_conv_forward.4} parent=5 // pred_check_branch
      %201 = sbr.rel (%p198) target = $region36
    $region35: #{double_conv_forward.4} parent=5 // pred_region
      %s202 = ssub.s32 %s13, 1
      %p203 = pneg %p46
      %p204 = pneg %p43
      %p205 = pneg %p67
      %p206 = pneg %p64
      %p207 = pneg %p88
      %p208 = pneg %p85
      %p209 = pneg %p109
      %p210 = pneg %p106
      %p211 = pneg %p137
      %p212 = pneg %p134
      %s213 = smul.u32 8, %s23
      %p214 = scmp.lt.s32.totalorder %s22, 1
      %s215 = scalar_select %p214, %s22, 1
      %p216 = scmp.lt.s32.totalorder %s213, 15
      %s217 = scalar_select %p216, %s213, 15
      %s218 = smul.addr %s217, 2
      %s219 = smul.addr %s215, 32
      %s220 = sadd.s32 %s218, %s219
      %s221 = smul.addr %s220, 4
      %s222 = scalar_lea.vmem %s5, %s221
      %p223 = pneg %p165
      %p224 = pneg %p162
      %p225 = scmp.lt.s32.totalorder %s22, 1
      %s226 = scalar_select %p225, %s22, 1
      %p227 = scmp.lt.s32.totalorder %s23, 1
      %s228 = scalar_select %p227, %s23, 1
      %s229 = smul.addr %s226, 2
      %s230 = sadd.s32 %s228, %s229
      %s231 = smul.addr %s230, 2
      %s232 = scalar_lea.vmem %s6, %s231
      %s233 = smul.u32 8, %s23
      %p234 = scmp.lt.s32.totalorder %s22, 1
      %s235 = scalar_select %p234, %s22, 1
      %p236 = scmp.lt.s32.totalorder %s233, 15
      %s237 = scalar_select %p236, %s233, 15
      %s238 = smul.addr %s237, 2
      %s239 = smul.addr %s235, 32
      %s240 = sadd.s32 %s238, %s239
      %s241 = smul.addr %s240, 4
      %s242 = scalar_lea.vmem %s5, %s241
      %s243 = smul.u32 8, %s23
      %p244 = scmp.lt.s32.totalorder %s22, 1
      %s245 = scalar_select %p244, %s22, 1
      %p246 = scmp.lt.s32.totalorder %s23, 1
      %s247 = scalar_select %p246, %s23, 1
      %s248 = smul.addr %s245, 2
      %s249 = sadd.s32 %s247, %s248
      %s250 = smul.addr %s249, 2
      %s251 = scalar_lea.vmem %s6, %s250
      %p253 = scmp.lt.s32.totalorder %s23, 0
      %s254 = ssub.s32 0, %s23
      %s255 = scalar_select %p253, %s254, %s23
      %s256 = sand.u32 %s255, 1
      %s257 = ssub.s32 0, %s256
      %s258 = scalar_select %p253, %s257, %s256
      %p259 = scmp.ne.s32.totalorder %s258, 0
      %p260 = scmp.lt.s32.totalorder %s258, 0
      %p261 = pnand %p260, %p259
      %p262 = pneg %p261
      %s263 = sadd.s32 %s258, 2
      %s264 = scalar_select %p262, %s263, %s258
      %p265 = scmp.eq.s32.totalorder %s23, 0
      // Predicated region
      $region37: #{double_conv_forward.4} parent=35 // pred_check
        %p266 = pneg %p265
      $region38: #{double_conv_forward.4} parent=35 // pred_check_branch
        %268 = sbr.rel (%p266) target = $region40
      $region39: #{double_conv_forward.4} parent=35 // pred_region
        %s269 = smul.u32 %s23, 8
        %s270 = smul.u32 %s269, 2
        %s271 = smul.u32 %s22, 32
        %s272 = sadd.s32 %s270, %s271
        %s273 = smul.addr %s272, 4
        %s274 = scalar_lea.vmem %s0, %s273
        %s275 = smul.u32 %s264, 10
        %s276 = sadd.s32 1, %s275
        %s277 = smul.addr %s276, 8
        %s278 = scalar_lea.vmem [#allocation2], %s277
        %s279 = smul.u32 %s264, 3
        %s280 = scalar_lea.sflag [#allocation4], %s279
        %p282 = scmp.lt.u32.totalorder 64, 8
        %p283 = pneg %p282
        // Predicated region
        $region41: #{double_conv_forward.4} parent=39 // pred_check
          _
        $region42: #{double_conv_forward.4} parent=39 // pred_check_branch
          %285 = sbr.rel (%p282) target = $region44
        $region43: #{double_conv_forward.4} parent=39 // pred_region
          %s300 = sand.u32 64, 7
          %p301 = scmp.eq.s32.totalorder %s300, 0
          // Predicated region
          $region56: #{double_conv_forward.4} parent=43 // pred_check
            %p302 = pneg %p301
          $region57: #{double_conv_forward.4} parent=43 // pred_check_branch
            %304 = sbr.rel (%p302) target = $region59
          $region58: #{double_conv_forward.4} parent=43 // pred_region
            loop: start=0, step=1, limit=1
            $region60: #{double_conv_forward.4} parent=58 // loop_pre_header
              _
            $region61: #{double_conv_forward.4} parent=58 // loop_header
              %s306 = sphi 0, %s310
              %p307 = scmp.ge.s32.totalorder %s306, 1
              %s311 = sphi %s274, %s274
              %s312 = sphi %s278, %s278
            $region62: #{double_conv_forward.4} parent=58 // loop_header_branch
              %309 = sbr.rel (%p307) target = $region66
            $region63: #{double_conv_forward.4} parent=58 // loop_body
              %v313 = vld [vmem:[%s311] sm:$0xff]
              %314 = vst [vmem:[%s312] sm:$0xff] %v313
              %v315 = vld [vmem:[%s311 + $0x8] sm:$0xff]
              %316 = vst [vmem:[%s312 + $0x8] sm:$0xff] %v315
              %v317 = vld [vmem:[%s311 + $0x10] sm:$0xff]
              %318 = vst [vmem:[%s312 + $0x10] sm:$0xff] %v317
              %v319 = vld [vmem:[%s311 + $0x18] sm:$0xff]
              %320 = vst [vmem:[%s312 + $0x18] sm:$0xff] %v319
              %v321 = vld [vmem:[%s311 + $0x20] sm:$0xff]
              %322 = vst [vmem:[%s312 + $0x20] sm:$0xff] %v321
              %v323 = vld [vmem:[%s311 + $0x28] sm:$0xff]
              %324 = vst [vmem:[%s312 + $0x28] sm:$0xff] %v323
              %v325 = vld [vmem:[%s311 + $0x30] sm:$0xff]
              %326 = vst [vmem:[%s312 + $0x30] sm:$0xff] %v325
              %v327 = vld [vmem:[%s311 + $0x38] sm:$0xff]
              %328 = vst [vmem:[%s312 + $0x38] sm:$0xff] %v327
            $region64: #{double_conv_forward.4} parent=58 // loop_footer
              %s310 = sadd.s32 1, %s306
            $region65: #{double_conv_forward.4} parent=58 // loop_footer_branch
              %305 = sbr.rel target = $region61
            $region66: #{double_conv_forward.4} parent=58 // loop_exit
              _
          $region59: #{double_conv_forward.4} parent=43 // pred_fallthru
            _
          %p329 = pneg %p301
          // Predicated region
          $region67: #{double_conv_forward.4} parent=43 // pred_check
            _
          $region68: #{double_conv_forward.4} parent=43 // pred_check_branch
            %331 = sbr.rel (%p301) target = $region70
          $region69: #{double_conv_forward.4} parent=43 // pred_region
            %s332 = sand.u32 64, 7
          $region70: #{double_conv_forward.4} parent=43 // pred_fallthru
            _
        $region44: #{double_conv_forward.4} parent=39 // pred_fallthru
          _
        // Predicated region
        $region45: #{double_conv_forward.4} parent=39 // pred_check
          %p286 = pneg %p282
        $region46: #{double_conv_forward.4} parent=39 // pred_check_branch
          %288 = sbr.rel (%p286) target = $region48
        $region47: #{double_conv_forward.4} parent=39 // pred_region
          %s289 = sshllo.u32 0, 64
          loop: start=0, step=1, limit=1
          $region49: #{double_conv_forward.4} parent=47 // loop_pre_header
            _
          $region50: #{double_conv_forward.4} parent=47 // loop_header
            %s291 = sphi 0, %s295
            %p292 = scmp.ge.s32.totalorder %s291, 1
            %s296 = sphi %s274, %s274
            %s297 = sphi %s278, %s278
          $region51: #{double_conv_forward.4} parent=47 // loop_header_branch
            %294 = sbr.rel (%p292) target = $region55
          $region52: #{double_conv_forward.4} parent=47 // loop_body
            %v298 = vld [vmem:[%s296] sm:%s289]
            %299 = vst [vmem:[%s297] sm:%s289] %v298
          $region53: #{double_conv_forward.4} parent=47 // loop_footer
            %s295 = sadd.s32 1, %s291
          $region54: #{double_conv_forward.4} parent=47 // loop_footer_branch
            %290 = sbr.rel target = $region50
          $region55: #{double_conv_forward.4} parent=47 // loop_exit
            _
        $region48: #{double_conv_forward.4} parent=39 // pred_fallthru
          _
        // Predicated region
        $region71: #{double_conv_forward.4} parent=39 // pred_check
          _
        $region72: #{double_conv_forward.4} parent=39 // pred_check_branch
          %335 = sbr.rel (0) target = $region74
        $region73: #{double_conv_forward.4} parent=39 // pred_region
          %336 = vsyncadd %s280, 1024
        $region74: #{double_conv_forward.4} parent=39 // pred_fallthru
          _
        %p337 = scmp.gt.s32.totalorder %s23, 0
        // Predicated region
        $region75: #{double_conv_forward.4} parent=39 // pred_check
          %p338 = pneg %p337
        $region76: #{double_conv_forward.4} parent=39 // pred_check_branch
          %340 = sbr.rel (%p338) target = $region78
        $region77: #{double_conv_forward.4} parent=39 // pred_region
          %s341 = ssub.s32 %s269, 1
          %s342 = smul.u32 %s341, 2
          %s343 = sadd.s32 %s342, %s271
          %s344 = smul.addr %s343, 4
          %s345 = scalar_lea.vmem %s0, %s344
          %s346 = smul.addr %s275, 8
          %s347 = scalar_lea.vmem [#allocation2], %s346
          %s348 = sadd.s32 1, %s279
          %s349 = scalar_lea.sflag [#allocation4], %s348
          %p351 = scmp.lt.u32.totalorder 8, 8
          %p352 = pneg %p351
          // Predicated region
          $region79: #{double_conv_forward.4} parent=77 // pred_check
            _
          $region80: #{double_conv_forward.4} parent=77 // pred_check_branch
            %354 = sbr.rel (%p351) target = $region82
          $region81: #{double_conv_forward.4} parent=77 // pred_region
            %s369 = sand.u32 8, 7
            %p370 = scmp.eq.s32.totalorder %s369, 0
            // Predicated region
            $region94: #{double_conv_forward.4} parent=81 // pred_check
              %p371 = pneg %p370
            $region95: #{double_conv_forward.4} parent=81 // pred_check_branch
              %373 = sbr.rel (%p371) target = $region97
            $region96: #{double_conv_forward.4} parent=81 // pred_region
              loop: start=0, step=1, limit=1
              $region98: #{double_conv_forward.4} parent=96 // loop_pre_header
                _
              $region99: #{double_conv_forward.4} parent=96 // loop_header
                %s375 = sphi 0, %s379
                %p376 = scmp.ge.s32.totalorder %s375, 1
                %s380 = sphi %s345, %s345
                %s381 = sphi %s347, %s347
              $region100: #{double_conv_forward.4} parent=96 // loop_header_branch
                %378 = sbr.rel (%p376) target = $region104
              $region101: #{double_conv_forward.4} parent=96 // loop_body
                %v382 = vld [vmem:[%s380] sm:$0xff]
                %383 = vst [vmem:[%s381] sm:$0xff] %v382
              $region102: #{double_conv_forward.4} parent=96 // loop_footer
                %s379 = sadd.s32 1, %s375
              $region103: #{double_conv_forward.4} parent=96 // loop_footer_branch
                %374 = sbr.rel target = $region99
              $region104: #{double_conv_forward.4} parent=96 // loop_exit
                _
            $region97: #{double_conv_forward.4} parent=81 // pred_fallthru
              _
            %p384 = pneg %p370
            // Predicated region
            $region105: #{double_conv_forward.4} parent=81 // pred_check
              _
            $region106: #{double_conv_forward.4} parent=81 // pred_check_branch
              %386 = sbr.rel (%p370) target = $region108
            $region107: #{double_conv_forward.4} parent=81 // pred_region
              %s387 = sand.u32 8, 7
            $region108: #{double_conv_forward.4} parent=81 // pred_fallthru
              _
          $region82: #{double_conv_forward.4} parent=77 // pred_fallthru
            _
          // Predicated region
          $region83: #{double_conv_forward.4} parent=77 // pred_check
            %p355 = pneg %p351
          $region84: #{double_conv_forward.4} parent=77 // pred_check_branch
            %357 = sbr.rel (%p355) target = $region86
          $region85: #{double_conv_forward.4} parent=77 // pred_region
            %s358 = sshllo.u32 0, 8
            loop: start=0, step=1, limit=1
            $region87: #{double_conv_forward.4} parent=85 // loop_pre_header
              _
            $region88: #{double_conv_forward.4} parent=85 // loop_header
              %s360 = sphi 0, %s364
              %p361 = scmp.ge.s32.totalorder %s360, 1
              %s365 = sphi %s345, %s345
              %s366 = sphi %s347, %s347
            $region89: #{double_conv_forward.4} parent=85 // loop_header_branch
              %363 = sbr.rel (%p361) target = $region93
            $region90: #{double_conv_forward.4} parent=85 // loop_body
              %v367 = vld [vmem:[%s365] sm:%s358]
              %368 = vst [vmem:[%s366] sm:%s358] %v367
            $region91: #{double_conv_forward.4} parent=85 // loop_footer
              %s364 = sadd.s32 1, %s360
            $region92: #{double_conv_forward.4} parent=85 // loop_footer_branch
              %359 = sbr.rel target = $region88
            $region93: #{double_conv_forward.4} parent=85 // loop_exit
              _
          $region86: #{double_conv_forward.4} parent=77 // pred_fallthru
            _
          // Predicated region
          $region109: #{double_conv_forward.4} parent=77 // pred_check
            _
          $region110: #{double_conv_forward.4} parent=77 // pred_check_branch
            %390 = sbr.rel (0) target = $region112
          $region111: #{double_conv_forward.4} parent=77 // pred_region
            %391 = vsyncadd %s349, 128
          $region112: #{double_conv_forward.4} parent=77 // pred_fallthru
            _
        $region78: #{double_conv_forward.4} parent=39 // pred_fallthru
          _
        %p392 = scmp.lt.s32.totalorder %s23, 1
        // Predicated region
        $region113: #{double_conv_forward.4} parent=39 // pred_check
          %p393 = pneg %p392
        $region114: #{double_conv_forward.4} parent=39 // pred_check_branch
          %395 = sbr.rel (%p393) target = $region116
        $region115: #{double_conv_forward.4} parent=39 // pred_region
          %s396 = sadd.s32 %s269, 8
          %s397 = smul.u32 %s396, 2
          %s398 = sadd.s32 %s397, %s271
          %s399 = smul.addr %s398, 4
          %s400 = scalar_lea.vmem %s0, %s399
          %s401 = sadd.s32 9, %s275
          %s402 = smul.addr %s401, 8
          %s403 = scalar_lea.vmem [#allocation2], %s402
          %s404 = sadd.s32 2, %s279
          %s405 = scalar_lea.sflag [#allocation4], %s404
          %p407 = scmp.lt.u32.totalorder 8, 8
          %p408 = pneg %p407
          // Predicated region
          $region117: #{double_conv_forward.4} parent=115 // pred_check
            _
          $region118: #{double_conv_forward.4} parent=115 // pred_check_branch
            %410 = sbr.rel (%p407) target = $region120
          $region119: #{double_conv_forward.4} parent=115 // pred_region
            %s425 = sand.u32 8, 7
            %p426 = scmp.eq.s32.totalorder %s425, 0
            // Predicated region
            $region132: #{double_conv_forward.4} parent=119 // pred_check
              %p427 = pneg %p426
            $region133: #{double_conv_forward.4} parent=119 // pred_check_branch
              %429 = sbr.rel (%p427) target = $region135
            $region134: #{double_conv_forward.4} parent=119 // pred_region
              loop: start=0, step=1, limit=1
              $region136: #{double_conv_forward.4} parent=134 // loop_pre_header
                _
              $region137: #{double_conv_forward.4} parent=134 // loop_header
                %s431 = sphi 0, %s435
                %p432 = scmp.ge.s32.totalorder %s431, 1
                %s436 = sphi %s400, %s400
                %s437 = sphi %s403, %s403
              $region138: #{double_conv_forward.4} parent=134 // loop_header_branch
                %434 = sbr.rel (%p432) target = $region142
              $region139: #{double_conv_forward.4} parent=134 // loop_body
                %v438 = vld [vmem:[%s436] sm:$0xff]
                %439 = vst [vmem:[%s437] sm:$0xff] %v438
              $region140: #{double_conv_forward.4} parent=134 // loop_footer
                %s435 = sadd.s32 1, %s431
              $region141: #{double_conv_forward.4} parent=134 // loop_footer_branch
                %430 = sbr.rel target = $region137
              $region142: #{double_conv_forward.4} parent=134 // loop_exit
                _
            $region135: #{double_conv_forward.4} parent=119 // pred_fallthru
              _
            %p440 = pneg %p426
            // Predicated region
            $region143: #{double_conv_forward.4} parent=119 // pred_check
              _
            $region144: #{double_conv_forward.4} parent=119 // pred_check_branch
              %442 = sbr.rel (%p426) target = $region146
            $region145: #{double_conv_forward.4} parent=119 // pred_region
              %s443 = sand.u32 8, 7
            $region146: #{double_conv_forward.4} parent=119 // pred_fallthru
              _
          $region120: #{double_conv_forward.4} parent=115 // pred_fallthru
            _
          // Predicated region
          $region121: #{double_conv_forward.4} parent=115 // pred_check
            %p411 = pneg %p407
          $region122: #{double_conv_forward.4} parent=115 // pred_check_branch
            %413 = sbr.rel (%p411) target = $region124
          $region123: #{double_conv_forward.4} parent=115 // pred_region
            %s414 = sshllo.u32 0, 8
            loop: start=0, step=1, limit=1
            $region125: #{double_conv_forward.4} parent=123 // loop_pre_header
              _
            $region126: #{double_conv_forward.4} parent=123 // loop_header
              %s416 = sphi 0, %s420
              %p417 = scmp.ge.s32.totalorder %s416, 1
              %s421 = sphi %s400, %s400
              %s422 = sphi %s403, %s403
            $region127: #{double_conv_forward.4} parent=123 // loop_header_branch
              %419 = sbr.rel (%p417) target = $region131
            $region128: #{double_conv_forward.4} parent=123 // loop_body
              %v423 = vld [vmem:[%s421] sm:%s414]
              %424 = vst [vmem:[%s422] sm:%s414] %v423
            $region129: #{double_conv_forward.4} parent=123 // loop_footer
              %s420 = sadd.s32 1, %s416
            $region130: #{double_conv_forward.4} parent=123 // loop_footer_branch
              %415 = sbr.rel target = $region126
            $region131: #{double_conv_forward.4} parent=123 // loop_exit
              _
          $region124: #{double_conv_forward.4} parent=115 // pred_fallthru
            _
          // Predicated region
          $region147: #{double_conv_forward.4} parent=115 // pred_check
            _
          $region148: #{double_conv_forward.4} parent=115 // pred_check_branch
            %446 = sbr.rel (0) target = $region150
          $region149: #{double_conv_forward.4} parent=115 // pred_region
            %447 = vsyncadd %s405, 128
          $region150: #{double_conv_forward.4} parent=115 // pred_fallthru
            _
        $region116: #{double_conv_forward.4} parent=39 // pred_fallthru
          _
      $region40: #{double_conv_forward.4} parent=35 // pred_fallthru
        _
      %s448 = smul.u32 %s264, 3
      %s449 = scalar_lea.sflag [#allocation4], %s448
      %s450 = smul.u32 4, 8
      %s451 = smul.u32 %s450, 2
      %s452 = smul.u32 %s451, 1
      %s453 = sshll.u32 %s452, 4
      %454 = dma.done %s449, %s453
      %p455 = scmp.gt.s32.totalorder %s23, 0
      // Predicated region
      $region151: #{double_conv_forward.4} parent=35 // pred_check
        %p456 = pneg %p455
      $region152: #{double_conv_forward.4} parent=35 // pred_check_branch
        %458 = sbr.rel (%p456) target = $region154
      $region153: #{double_conv_forward.4} parent=35 // pred_region
        %s459 = sadd.s32 1, %s448
        %s460 = scalar_lea.sflag [#allocation4], %s459
        %s461 = smul.u32 4, 1
        %s462 = smul.u32 %s461, 2
        %s463 = smul.u32 %s462, 1
        %s464 = sshll.u32 %s463, 4
        %465 = dma.done %s460, %s464
      $region154: #{double_conv_forward.4} parent=35 // pred_fallthru
        _
      %p466 = scmp.lt.s32.totalorder %s23, 1
      // Predicated region
      $region155: #{double_conv_forward.4} parent=35 // pred_check
        %p467 = pneg %p466
      $region156: #{double_conv_forward.4} parent=35 // pred_check_branch
        %469 = sbr.rel (%p467) target = $region158
      $region157: #{double_conv_forward.4} parent=35 // pred_region
        %s470 = sadd.s32 2, %s448
        %s471 = scalar_lea.sflag [#allocation4], %s470
        %s472 = smul.u32 4, 1
        %s473 = smul.u32 %s472, 2
        %s474 = smul.u32 %s473, 1
        %s475 = sshll.u32 %s474, 4
        %476 = dma.done %s471, %s475
      $region158: #{double_conv_forward.4} parent=35 // pred_fallthru
        _
      %s477 = sadd.s32 %s23, 1
      %p478 = scmp.lt.s32.totalorder %s477, 2
      // Predicated region
      $region159: #{double_conv_forward.4} parent=35 // pred_check
        %p479 = pneg %p478
      $region160: #{double_conv_forward.4} parent=35 // pred_check_branch
        %481 = sbr.rel (%p479) target = $region162
      $region161: #{double_conv_forward.4} parent=35 // pred_region
        %s482 = ssub.s32 1, %s264
        %s483 = smul.u32 %s477, 8
        %s484 = smul.u32 %s483, 2
        %s485 = smul.u32 %s22, 32
        %s486 = sadd.s32 %s484, %s485
        %s487 = smul.addr %s486, 4
        %s488 = scalar_lea.vmem %s0, %s487
        %s489 = smul.u32 %s482, 10
        %s490 = sadd.s32 1, %s489
        %s491 = smul.addr %s490, 8
        %s492 = scalar_lea.vmem [#allocation2], %s491
        %s493 = smul.u32 %s482, 3
        %s494 = scalar_lea.sflag [#allocation4], %s493
        %p496 = scmp.lt.u32.totalorder 64, 8
        %p497 = pneg %p496
        // Predicated region
        $region163: #{double_conv_forward.4} parent=161 // pred_check
          _
        $region164: #{double_conv_forward.4} parent=161 // pred_check_branch
          %499 = sbr.rel (%p496) target = $region166
        $region165: #{double_conv_forward.4} parent=161 // pred_region
          %s514 = sand.u32 64, 7
          %p515 = scmp.eq.s32.totalorder %s514, 0
          // Predicated region
          $region178: #{double_conv_forward.4} parent=165 // pred_check
            %p516 = pneg %p515
          $region179: #{double_conv_forward.4} parent=165 // pred_check_branch
            %518 = sbr.rel (%p516) target = $region181
          $region180: #{double_conv_forward.4} parent=165 // pred_region
            loop: start=0, step=1, limit=1
            $region182: #{double_conv_forward.4} parent=180 // loop_pre_header
              _
            $region183: #{double_conv_forward.4} parent=180 // loop_header
              %s520 = sphi 0, %s524
              %p521 = scmp.ge.s32.totalorder %s520, 1
              %s525 = sphi %s488, %s488
              %s526 = sphi %s492, %s492
            $region184: #{double_conv_forward.4} parent=180 // loop_header_branch
              %523 = sbr.rel (%p521) target = $region188
            $region185: #{double_conv_forward.4} parent=180 // loop_body
              %v527 = vld [vmem:[%s525] sm:$0xff]
              %528 = vst [vmem:[%s526] sm:$0xff] %v527
              %v529 = vld [vmem:[%s525 + $0x8] sm:$0xff]
              %530 = vst [vmem:[%s526 + $0x8] sm:$0xff] %v529
              %v531 = vld [vmem:[%s525 + $0x10] sm:$0xff]
              %532 = vst [vmem:[%s526 + $0x10] sm:$0xff] %v531
              %v533 = vld [vmem:[%s525 + $0x18] sm:$0xff]
              %534 = vst [vmem:[%s526 + $0x18] sm:$0xff] %v533
              %v535 = vld [vmem:[%s525 + $0x20] sm:$0xff]
              %536 = vst [vmem:[%s526 + $0x20] sm:$0xff] %v535
              %v537 = vld [vmem:[%s525 + $0x28] sm:$0xff]
              %538 = vst [vmem:[%s526 + $0x28] sm:$0xff] %v537
              %v539 = vld [vmem:[%s525 + $0x30] sm:$0xff]
              %540 = vst [vmem:[%s526 + $0x30] sm:$0xff] %v539
              %v541 = vld [vmem:[%s525 + $0x38] sm:$0xff]
              %542 = vst [vmem:[%s526 + $0x38] sm:$0xff] %v541
            $region186: #{double_conv_forward.4} parent=180 // loop_footer
              %s524 = sadd.s32 1, %s520
            $region187: #{double_conv_forward.4} parent=180 // loop_footer_branch
              %519 = sbr.rel target = $region183
            $region188: #{double_conv_forward.4} parent=180 // loop_exit
              _
          $region181: #{double_conv_forward.4} parent=165 // pred_fallthru
            _
          %p543 = pneg %p515
          // Predicated region
          $region189: #{double_conv_forward.4} parent=165 // pred_check
            _
          $region190: #{double_conv_forward.4} parent=165 // pred_check_branch
            %545 = sbr.rel (%p515) target = $region192
          $region191: #{double_conv_forward.4} parent=165 // pred_region
            %s546 = sand.u32 64, 7
          $region192: #{double_conv_forward.4} parent=165 // pred_fallthru
            _
        $region166: #{double_conv_forward.4} parent=161 // pred_fallthru
          _
        // Predicated region
        $region167: #{double_conv_forward.4} parent=161 // pred_check
          %p500 = pneg %p496
        $region168: #{double_conv_forward.4} parent=161 // pred_check_branch
          %502 = sbr.rel (%p500) target = $region170
        $region169: #{double_conv_forward.4} parent=161 // pred_region
          %s503 = sshllo.u32 0, 64
          loop: start=0, step=1, limit=1
          $region171: #{double_conv_forward.4} parent=169 // loop_pre_header
            _
          $region172: #{double_conv_forward.4} parent=169 // loop_header
            %s505 = sphi 0, %s509
            %p506 = scmp.ge.s32.totalorder %s505, 1
            %s510 = sphi %s488, %s488
            %s511 = sphi %s492, %s492
          $region173: #{double_conv_forward.4} parent=169 // loop_header_branch
            %508 = sbr.rel (%p506) target = $region177
          $region174: #{double_conv_forward.4} parent=169 // loop_body
            %v512 = vld [vmem:[%s510] sm:%s503]
            %513 = vst [vmem:[%s511] sm:%s503] %v512
          $region175: #{double_conv_forward.4} parent=169 // loop_footer
            %s509 = sadd.s32 1, %s505
          $region176: #{double_conv_forward.4} parent=169 // loop_footer_branch
            %504 = sbr.rel target = $region172
          $region177: #{double_conv_forward.4} parent=169 // loop_exit
            _
        $region170: #{double_conv_forward.4} parent=161 // pred_fallthru
          _
        // Predicated region
        $region193: #{double_conv_forward.4} parent=161 // pred_check
          _
        $region194: #{double_conv_forward.4} parent=161 // pred_check_branch
          %549 = sbr.rel (0) target = $region196
        $region195: #{double_conv_forward.4} parent=161 // pred_region
          %550 = vsyncadd %s494, 1024
        $region196: #{double_conv_forward.4} parent=161 // pred_fallthru
          _
        %p551 = scmp.gt.s32.totalorder %s477, 0
        // Predicated region
        $region197: #{double_conv_forward.4} parent=161 // pred_check
          %p552 = pneg %p551
        $region198: #{double_conv_forward.4} parent=161 // pred_check_branch
          %554 = sbr.rel (%p552) target = $region200
        $region199: #{double_conv_forward.4} parent=161 // pred_region
          %s555 = ssub.s32 %s483, 1
          %s556 = smul.u32 %s555, 2
          %s557 = sadd.s32 %s556, %s485
          %s558 = smul.addr %s557, 4
          %s559 = scalar_lea.vmem %s0, %s558
          %s560 = smul.addr %s489, 8
          %s561 = scalar_lea.vmem [#allocation2], %s560
          %s562 = sadd.s32 1, %s493
          %s563 = scalar_lea.sflag [#allocation4], %s562
          %p565 = scmp.lt.u32.totalorder 8, 8
          %p566 = pneg %p565
          // Predicated region
          $region201: #{double_conv_forward.4} parent=199 // pred_check
            _
          $region202: #{double_conv_forward.4} parent=199 // pred_check_branch
            %568 = sbr.rel (%p565) target = $region204
          $region203: #{double_conv_forward.4} parent=199 // pred_region
            %s583 = sand.u32 8, 7
            %p584 = scmp.eq.s32.totalorder %s583, 0
            // Predicated region
            $region216: #{double_conv_forward.4} parent=203 // pred_check
              %p585 = pneg %p584
            $region217: #{double_conv_forward.4} parent=203 // pred_check_branch
              %587 = sbr.rel (%p585) target = $region219
            $region218: #{double_conv_forward.4} parent=203 // pred_region
              loop: start=0, step=1, limit=1
              $region220: #{double_conv_forward.4} parent=218 // loop_pre_header
                _
              $region221: #{double_conv_forward.4} parent=218 // loop_header
                %s589 = sphi 0, %s593
                %p590 = scmp.ge.s32.totalorder %s589, 1
                %s594 = sphi %s559, %s559
                %s595 = sphi %s561, %s561
              $region222: #{double_conv_forward.4} parent=218 // loop_header_branch
                %592 = sbr.rel (%p590) target = $region226
              $region223: #{double_conv_forward.4} parent=218 // loop_body
                %v596 = vld [vmem:[%s594] sm:$0xff]
                %597 = vst [vmem:[%s595] sm:$0xff] %v596
              $region224: #{double_conv_forward.4} parent=218 // loop_footer
                %s593 = sadd.s32 1, %s589
              $region225: #{double_conv_forward.4} parent=218 // loop_footer_branch
                %588 = sbr.rel target = $region221
              $region226: #{double_conv_forward.4} parent=218 // loop_exit
                _
            $region219: #{double_conv_forward.4} parent=203 // pred_fallthru
              _
            %p598 = pneg %p584
            // Predicated region
            $region227: #{double_conv_forward.4} parent=203 // pred_check
              _
            $region228: #{double_conv_forward.4} parent=203 // pred_check_branch
              %600 = sbr.rel (%p584) target = $region230
            $region229: #{double_conv_forward.4} parent=203 // pred_region
              %s601 = sand.u32 8, 7
            $region230: #{double_conv_forward.4} parent=203 // pred_fallthru
              _
          $region204: #{double_conv_forward.4} parent=199 // pred_fallthru
            _
          // Predicated region
          $region205: #{double_conv_forward.4} parent=199 // pred_check
            %p569 = pneg %p565
          $region206: #{double_conv_forward.4} parent=199 // pred_check_branch
            %571 = sbr.rel (%p569) target = $region208
          $region207: #{double_conv_forward.4} parent=199 // pred_region
            %s572 = sshllo.u32 0, 8
            loop: start=0, step=1, limit=1
            $region209: #{double_conv_forward.4} parent=207 // loop_pre_header
              _
            $region210: #{double_conv_forward.4} parent=207 // loop_header
              %s574 = sphi 0, %s578
              %p575 = scmp.ge.s32.totalorder %s574, 1
              %s579 = sphi %s559, %s559
              %s580 = sphi %s561, %s561
            $region211: #{double_conv_forward.4} parent=207 // loop_header_branch
              %577 = sbr.rel (%p575) target = $region215
            $region212: #{double_conv_forward.4} parent=207 // loop_body
              %v581 = vld [vmem:[%s579] sm:%s572]
              %582 = vst [vmem:[%s580] sm:%s572] %v581
            $region213: #{double_conv_forward.4} parent=207 // loop_footer
              %s578 = sadd.s32 1, %s574
            $region214: #{double_conv_forward.4} parent=207 // loop_footer_branch
              %573 = sbr.rel target = $region210
            $region215: #{double_conv_forward.4} parent=207 // loop_exit
              _
          $region208: #{double_conv_forward.4} parent=199 // pred_fallthru
            _
          // Predicated region
          $region231: #{double_conv_forward.4} parent=199 // pred_check
            _
          $region232: #{double_conv_forward.4} parent=199 // pred_check_branch
            %604 = sbr.rel (0) target = $region234
          $region233: #{double_conv_forward.4} parent=199 // pred_region
            %605 = vsyncadd %s563, 128
          $region234: #{double_conv_forward.4} parent=199 // pred_fallthru
            _
        $region200: #{double_conv_forward.4} parent=161 // pred_fallthru
          _
        %p606 = scmp.lt.s32.totalorder %s477, 1
        // Predicated region
        $region235: #{double_conv_forward.4} parent=161 // pred_check
          %p607 = pneg %p606
        $region236: #{double_conv_forward.4} parent=161 // pred_check_branch
          %609 = sbr.rel (%p607) target = $region238
        $region237: #{double_conv_forward.4} parent=161 // pred_region
          %s610 = sadd.s32 %s483, 8
          %s611 = smul.u32 %s610, 2
          %s612 = sadd.s32 %s611, %s485
          %s613 = smul.addr %s612, 4
          %s614 = scalar_lea.vmem %s0, %s613
          %s615 = sadd.s32 9, %s489
          %s616 = smul.addr %s615, 8
          %s617 = scalar_lea.vmem [#allocation2], %s616
          %s618 = sadd.s32 2, %s493
          %s619 = scalar_lea.sflag [#allocation4], %s618
          %p621 = scmp.lt.u32.totalorder 8, 8
          %p622 = pneg %p621
          // Predicated region
          $region239: #{double_conv_forward.4} parent=237 // pred_check
            _
          $region240: #{double_conv_forward.4} parent=237 // pred_check_branch
            %624 = sbr.rel (%p621) target = $region242
          $region241: #{double_conv_forward.4} parent=237 // pred_region
            %s639 = sand.u32 8, 7
            %p640 = scmp.eq.s32.totalorder %s639, 0
            // Predicated region
            $region254: #{double_conv_forward.4} parent=241 // pred_check
              %p641 = pneg %p640
            $region255: #{double_conv_forward.4} parent=241 // pred_check_branch
              %643 = sbr.rel (%p641) target = $region257
            $region256: #{double_conv_forward.4} parent=241 // pred_region
              loop: start=0, step=1, limit=1
              $region258: #{double_conv_forward.4} parent=256 // loop_pre_header
                _
              $region259: #{double_conv_forward.4} parent=256 // loop_header
                %s645 = sphi 0, %s649
                %p646 = scmp.ge.s32.totalorder %s645, 1
                %s650 = sphi %s614, %s614
                %s651 = sphi %s617, %s617
              $region260: #{double_conv_forward.4} parent=256 // loop_header_branch
                %648 = sbr.rel (%p646) target = $region264
              $region261: #{double_conv_forward.4} parent=256 // loop_body
                %v652 = vld [vmem:[%s650] sm:$0xff]
                %653 = vst [vmem:[%s651] sm:$0xff] %v652
              $region262: #{double_conv_forward.4} parent=256 // loop_footer
                %s649 = sadd.s32 1, %s645
              $region263: #{double_conv_forward.4} parent=256 // loop_footer_branch
                %644 = sbr.rel target = $region259
              $region264: #{double_conv_forward.4} parent=256 // loop_exit
                _
            $region257: #{double_conv_forward.4} parent=241 // pred_fallthru
              _
            %p654 = pneg %p640
            // Predicated region
            $region265: #{double_conv_forward.4} parent=241 // pred_check
              _
            $region266: #{double_conv_forward.4} parent=241 // pred_check_branch
              %656 = sbr.rel (%p640) target = $region268
            $region267: #{double_conv_forward.4} parent=241 // pred_region
              %s657 = sand.u32 8, 7
            $region268: #{double_conv_forward.4} parent=241 // pred_fallthru
              _
          $region242: #{double_conv_forward.4} parent=237 // pred_fallthru
            _
          // Predicated region
          $region243: #{double_conv_forward.4} parent=237 // pred_check
            %p625 = pneg %p621
          $region244: #{double_conv_forward.4} parent=237 // pred_check_branch
            %627 = sbr.rel (%p625) target = $region246
          $region245: #{double_conv_forward.4} parent=237 // pred_region
            %s628 = sshllo.u32 0, 8
            loop: start=0, step=1, limit=1
            $region247: #{double_conv_forward.4} parent=245 // loop_pre_header
              _
            $region248: #{double_conv_forward.4} parent=245 // loop_header
              %s630 = sphi 0, %s634
              %p631 = scmp.ge.s32.totalorder %s630, 1
              %s635 = sphi %s614, %s614
              %s636 = sphi %s617, %s617
            $region249: #{double_conv_forward.4} parent=245 // loop_header_branch
              %633 = sbr.rel (%p631) target = $region253
            $region250: #{double_conv_forward.4} parent=245 // loop_body
              %v637 = vld [vmem:[%s635] sm:%s628]
              %638 = vst [vmem:[%s636] sm:%s628] %v637
            $region251: #{double_conv_forward.4} parent=245 // loop_footer
              %s634 = sadd.s32 1, %s630
            $region252: #{double_conv_forward.4} parent=245 // loop_footer_branch
              %629 = sbr.rel target = $region248
            $region253: #{double_conv_forward.4} parent=245 // loop_exit
              _
          $region246: #{double_conv_forward.4} parent=237 // pred_fallthru
            _
          // Predicated region
          $region269: #{double_conv_forward.4} parent=237 // pred_check
            _
          $region270: #{double_conv_forward.4} parent=237 // pred_check_branch
            %660 = sbr.rel (0) target = $region272
          $region271: #{double_conv_forward.4} parent=237 // pred_region
            %661 = vsyncadd %s619, 128
          $region272: #{double_conv_forward.4} parent=237 // pred_fallthru
            _
        $region238: #{double_conv_forward.4} parent=161 // pred_fallthru
          _
      $region162: #{double_conv_forward.4} parent=35 // pred_fallthru
        _
      // Predicated region
      $region273: #{double_conv_forward.4} parent=35 // pred_check
        %p662 = pneg %p265
      $region274: #{double_conv_forward.4} parent=35 // pred_check_branch
        %664 = sbr.rel (%p662) target = $region276
      $region275: #{double_conv_forward.4} parent=35 // pred_region
        %s665 = smul.u32 %s264, 10
        %s666 = smul.addr %s665, 8
        %s667 = scalar_lea.vmem [#allocation2], %s666
        %668 = vst [vmem:[%s667] sm:$0xff] 0
      $region276: #{double_conv_forward.4} parent=35 // pred_fallthru
        _
      %p669 = scmp.eq.s32.totalorder %s23, 1
      // Predicated region
      $region277: #{double_conv_forward.4} parent=35 // pred_check
        %p670 = pneg %p669
      $region278: #{double_conv_forward.4} parent=35 // pred_check_branch
        %672 = sbr.rel (%p670) target = $region280
      $region279: #{double_conv_forward.4} parent=35 // pred_region
        %s673 = smul.u32 %s264, 10
        %s674 = sadd.s32 9, %s673
        %s675 = smul.addr %s674, 8
        %s676 = scalar_lea.vmem [#allocation2], %s675
        %677 = vst [vmem:[%s676] sm:$0xff] 0
      $region280: #{double_conv_forward.4} parent=35 // pred_fallthru
        _
      %s678 = smul.u32 %s264, 10
      %s679 = smul.addr %s678, 8
      %s680 = scalar_lea.vmem [#allocation2], %s679
      %v681 = vld [vmem:[%s680] sm:$0xff]
      %v682 = vld [vmem:[%s680 + $0x8] sm:$0xff]
      %v683 = vld [vmem:[%s680 + $0x10] sm:$0xff]
      %v684 = vld [vmem:[%s680 + $0x18] sm:$0xff]
      %v685 = vld [vmem:[%s680 + $0x20] sm:$0xff]
      %v686 = vld [vmem:[%s680 + $0x28] sm:$0xff]
      %v687 = vld [vmem:[%s680 + $0x30] sm:$0xff]
      %v688 = vld [vmem:[%s680 + $0x38] sm:$0xff]
      %v689 = vld [vmem:[%s680 + $0x40] sm:$0xff]
      %v690 = vld [vmem:[%s680 + $0x48] sm:$0xff]
      %v691 = vunpack.c.l.bf16 %v681
      %v692 = vunpack.c.h.bf16 %v681
      %v693 = vunpack.c.l.bf16 %v682
      %v694 = vunpack.c.h.bf16 %v682
      %v695 = vunpack.c.l.bf16 %v683
      %v696 = vunpack.c.h.bf16 %v683
      %v697 = vunpack.c.l.bf16 %v684
      %v698 = vunpack.c.h.bf16 %v684
      %v699 = vunpack.c.l.bf16 %v685
      %v700 = vunpack.c.h.bf16 %v685
      %v701 = vunpack.c.l.bf16 %v686
      %v702 = vunpack.c.h.bf16 %v686
      %v703 = vunpack.c.l.bf16 %v687
      %v704 = vunpack.c.h.bf16 %v687
      %v705 = vunpack.c.l.bf16 %v688
      %v706 = vunpack.c.h.bf16 %v688
      %v707 = vunpack.c.l.bf16 %v689
      %v708 = vunpack.c.h.bf16 %v689
      %v709 = vunpack.c.l.bf16 %v690
      %v710 = vunpack.c.h.bf16 %v690
      %v711 = vld [vmem:[%s3] sm:$0x1]
      %v713 = vlaneseq
      %v714 = vshrl.u32 %v713, 7
      %v715 = vsub.s32 0, %v714
      %v716 = vrot.slane %v711, %v715
      %v718 = vmul.f32 %v691, %v716
      %v719 = vmul.f32 %v692, %v716
      %v720 = vmul.f32 %v693, %v716
      %v721 = vmul.f32 %v694, %v716
      %v722 = vmul.f32 %v695, %v716
      %v723 = vmul.f32 %v696, %v716
      %v724 = vmul.f32 %v697, %v716
      %v725 = vmul.f32 %v698, %v716
      %v726 = vmul.f32 %v699, %v716
      %v727 = vmul.f32 %v700, %v716
      %v728 = vmul.f32 %v701, %v716
      %v729 = vmul.f32 %v702, %v716
      %v730 = vmul.f32 %v703, %v716
      %v731 = vmul.f32 %v704, %v716
      %v732 = vmul.f32 %v705, %v716
      %v733 = vmul.f32 %v706, %v716
      %v734 = vmul.f32 %v707, %v716
      %v735 = vmul.f32 %v708, %v716
      %v736 = vmul.f32 %v709, %v716
      %v737 = vmul.f32 %v710, %v716
      %v738 = vld [vmem:[%s4] sm:$0x1]
      %v740 = vlaneseq
      %v741 = vshrl.u32 %v740, 7
      %v742 = vsub.s32 0, %v741
      %v743 = vrot.slane %v738, %v742
      %v745 = vadd.f32 %v718, %v743
      %v746 = vadd.f32 %v719, %v743
      %v747 = vadd.f32 %v720, %v743
      %v748 = vadd.f32 %v721, %v743
      %v749 = vadd.f32 %v722, %v743
      %v750 = vadd.f32 %v723, %v743
      %v751 = vadd.f32 %v724, %v743
      %v752 = vadd.f32 %v725, %v743
      %v753 = vadd.f32 %v726, %v743
      %v754 = vadd.f32 %v727, %v743
      %v755 = vadd.f32 %v728, %v743
      %v756 = vadd.f32 %v729, %v743
      %v757 = vadd.f32 %v730, %v743
      %v758 = vadd.f32 %v731, %v743
      %v759 = vadd.f32 %v732, %v743
      %v760 = vadd.f32 %v733, %v743
      %v761 = vadd.f32 %v734, %v743
      %v762 = vadd.f32 %v735, %v743
      %v763 = vadd.f32 %v736, %v743
      %v764 = vadd.f32 %v737, %v743
      %v765 = vmax.f32 %v745, 0.0
      %v766 = vmax.f32 %v746, 0.0
      %v767 = vmax.f32 %v747, 0.0
      %v768 = vmax.f32 %v748, 0.0
      %v769 = vmax.f32 %v749, 0.0
      %v770 = vmax.f32 %v750, 0.0
      %v771 = vmax.f32 %v751, 0.0
      %v772 = vmax.f32 %v752, 0.0
      %v773 = vmax.f32 %v753, 0.0
      %v774 = vmax.f32 %v754, 0.0
      %v775 = vmax.f32 %v755, 0.0
      %v776 = vmax.f32 %v756, 0.0
      %v777 = vmax.f32 %v757, 0.0
      %v778 = vmax.f32 %v758, 0.0
      %v779 = vmax.f32 %v759, 0.0
      %v780 = vmax.f32 %v760, 0.0
      %v781 = vmax.f32 %v761, 0.0
      %v782 = vmax.f32 %v762, 0.0
      %v783 = vmax.f32 %v763, 0.0
      %v784 = vmax.f32 %v764, 0.0
      %s785 = smul.u32 %s23, 8
      %s786 = ssub.s32 %s785, 1
      %v787 = vstv %s786
      %v788 = vadd.s32 %v787, 1
      %v789 = vadd.s32 %v787, 2
      %v790 = vadd.s32 %v787, 3
      %v791 = vadd.s32 %v787, 4
      %v792 = vadd.s32 %v787, 5
      %v793 = vadd.s32 %v787, 6
      %v794 = vadd.s32 %v787, 7
      %v795 = vadd.s32 %v787, 8
      %v796 = vadd.s32 %v787, 9
      %vm797 = vcmp.ge.s32.totalorder %v787, 0
      %vm798 = vcmp.ge.s32.totalorder %v788, 0
      %vm799 = vcmp.ge.s32.totalorder %v789, 0
      %vm800 = vcmp.ge.s32.totalorder %v790, 0
      %vm801 = vcmp.ge.s32.totalorder %v791, 0
      %vm802 = vcmp.ge.s32.totalorder %v792, 0
      %vm803 = vcmp.ge.s32.totalorder %v793, 0
      %vm804 = vcmp.ge.s32.totalorder %v794, 0
      %vm805 = vcmp.ge.s32.totalorder %v795, 0
      %vm806 = vcmp.ge.s32.totalorder %v796, 0
      %vm807 = vcmp.lt.s32.totalorder %v787, 16
      %vm808 = vcmp.lt.s32.totalorder %v788, 16
      %vm809 = vcmp.lt.s32.totalorder %v789, 16
      %vm810 = vcmp.lt.s32.totalorder %v790, 16
      %vm811 = vcmp.lt.s32.totalorder %v791, 16
      %vm812 = vcmp.lt.s32.totalorder %v792, 16
      %vm813 = vcmp.lt.s32.totalorder %v793, 16
      %vm814 = vcmp.lt.s32.totalorder %v794, 16
      %vm815 = vcmp.lt.s32.totalorder %v795, 16
      %vm816 = vcmp.lt.s32.totalorder %v796, 16
      %vm817 = vmand %vm797, %vm807
      %vm818 = vmand %vm798, %vm808
      %vm819 = vmand %vm799, %vm809
      %vm820 = vmand %vm800, %vm810
      %vm821 = vmand %vm801, %vm811
      %vm822 = vmand %vm802, %vm812
      %vm823 = vmand %vm803, %vm813
      %vm824 = vmand %vm804, %vm814
      %vm825 = vmand %vm805, %vm815
      %vm826 = vmand %vm806, %vm816
      %v827 = vsel %vm817, 1, 0
      %v828 = vsel %vm818, 1, 0
      %v829 = vsel %vm819, 1, 0
      %v830 = vsel %vm820, 1, 0
      %v831 = vsel %vm821, 1, 0
      %v832 = vsel %vm822, 1, 0
      %v833 = vsel %vm823, 1, 0
      %v834 = vsel %vm824, 1, 0
      %v835 = vsel %vm825, 1, 0
      %v836 = vsel %vm826, 1, 0
      %vm837 = vcmp.eq.s32.totalorder %v827, 1
      %vm838 = vcmp.eq.s32.totalorder %v828, 1
      %vm839 = vcmp.eq.s32.totalorder %v829, 1
      %vm840 = vcmp.eq.s32.totalorder %v830, 1
      %vm841 = vcmp.eq.s32.totalorder %v831, 1
      %vm842 = vcmp.eq.s32.totalorder %v832, 1
      %vm843 = vcmp.eq.s32.totalorder %v833, 1
      %vm844 = vcmp.eq.s32.totalorder %v834, 1
      %vm845 = vcmp.eq.s32.totalorder %v835, 1
      %vm846 = vcmp.eq.s32.totalorder %v836, 1
      %v847 = vsel %vm837, %v765, 0.0
      %v848 = vsel %vm837, %v766, 0.0
      %v849 = vsel %vm838, %v767, 0.0
      %v850 = vsel %vm838, %v768, 0.0
      %v851 = vsel %vm839, %v769, 0.0
      %v852 = vsel %vm839, %v770, 0.0
      %v853 = vsel %vm840, %v771, 0.0
      %v854 = vsel %vm840, %v772, 0.0
      %v855 = vsel %vm841, %v773, 0.0
      %v856 = vsel %vm841, %v774, 0.0
      %v857 = vsel %vm842, %v775, 0.0
      %v858 = vsel %vm842, %v776, 0.0
      %v859 = vsel %vm843, %v777, 0.0
      %v860 = vsel %vm843, %v778, 0.0
      %v861 = vsel %vm844, %v779, 0.0
      %v862 = vsel %vm844, %v780, 0.0
      %v863 = vsel %vm845, %v781, 0.0
      %v864 = vsel %vm845, %v782, 0.0
      %v865 = vsel %vm846, %v783, 0.0
      %v866 = vsel %vm846, %v784, 0.0
      %v867 = vpack.c.bf16 %v848, %v847
      %v868 = vpack.c.bf16 %v850, %v849
      %v869 = vpack.c.bf16 %v852, %v851
      %v870 = vpack.c.bf16 %v854, %v853
      %v871 = vpack.c.bf16 %v856, %v855
      %v872 = vpack.c.bf16 %v858, %v857
      %v873 = vpack.c.bf16 %v860, %v859
      %v874 = vpack.c.bf16 %v862, %v861
      %v875 = vpack.c.bf16 %v864, %v863
      %v876 = vpack.c.bf16 %v866, %v865
      %v887 = vunpack.c.l.b16 %v867
      %v888 = vunpack.c.h.b16 %v867
      %v889 = vunpack.c.l.b16 %v868
      %v890 = vunpack.c.h.b16 %v868
      %v891 = vunpack.c.l.b16 %v869
      %v892 = vunpack.c.h.b16 %v869
      %v893 = vunpack.c.l.b16 %v870
      %v894 = vunpack.c.h.b16 %v870
      %v895 = vunpack.c.l.b16 %v871
      %v896 = vunpack.c.h.b16 %v871
      %v897 = vunpack.c.l.b16 %v872
      %v898 = vunpack.c.h.b16 %v872
      %v899 = vunpack.c.l.b16 %v873
      %v900 = vunpack.c.h.b16 %v873
      %v901 = vunpack.c.l.b16 %v874
      %v902 = vunpack.c.h.b16 %v874
      %v903 = vunpack.c.l.b16 %v875
      %v904 = vunpack.c.h.b16 %v875
      %v905 = vunpack.c.l.b16 %v876
      %v906 = vunpack.c.h.b16 %v876
      %v907 = vpack.c.b16 %v887, %v887
      %v908 = vpack.c.b16 %v888, %v888
      %v909 = vpack.c.b16 %v889, %v889
      %v910 = vpack.c.b16 %v890, %v890
      %v911 = vpack.c.b16 %v891, %v891
      %v912 = vpack.c.b16 %v892, %v892
      %v913 = vpack.c.b16 %v893, %v893
      %v914 = vpack.c.b16 %v894, %v894
      %v915 = vpack.c.b16 %v895, %v895
      %v916 = vpack.c.b16 %v896, %v896
      %v917 = vpack.c.b16 %v897, %v897
      %v918 = vpack.c.b16 %v898, %v898
      %v919 = vpack.c.b16 %v899, %v899
      %v920 = vpack.c.b16 %v900, %v900
      %v921 = vpack.c.b16 %v901, %v901
      %v922 = vpack.c.b16 %v902, %v902
      %v923 = vpack.c.b16 %v903, %v903
      %v924 = vpack.c.b16 %v904, %v904
      %v925 = vpack.c.b16 %v905, %v905
      %v926 = vpack.c.b16 %v906, %v906
      %vm927 = vsmask.f32 256
      %vm928 = vsmask.f32 4368
      %vm929 = vmor %vm927, %vm928
      %v931 = vshrl.u32 %v907, 16
      %v933 = vrot.slane %v931, 7
      %v934 = vshll.u32 %v907, 16
      %v936 = vor.u32 %v933, %v934
      %v937 = vrot.slane %v933, 4
      %v939 = vshrl.u32 %v908, 16
      %v941 = vrot.slane %v939, 7
      %v942 = vshll.u32 %v908, 16
      %v944 = vor.u32 %v941, %v942
      %v945 = vsel %vm929, %v937, %v944
      %v946 = vrot.slane %v941, 4
      %v948 = vshrl.u32 %v909, 16
      %v950 = vrot.slane %v948, 7
      %v951 = vshll.u32 %v909, 16
      %v953 = vor.u32 %v950, %v951
      %v954 = vrot.slane %v950, 4
      %v956 = vshrl.u32 %v910, 16
      %v958 = vrot.slane %v956, 7
      %v959 = vshll.u32 %v910, 16
      %v961 = vor.u32 %v958, %v959
      %v962 = vsel %vm929, %v954, %v961
      %v963 = vrot.slane %v958, 4
      %v965 = vshrl.u32 %v911, 16
      %v967 = vrot.slane %v965, 7
      %v968 = vshll.u32 %v911, 16
      %v970 = vor.u32 %v967, %v968
      %v971 = vrot.slane %v967, 4
      %v973 = vshrl.u32 %v912, 16
      %v975 = vrot.slane %v973, 7
      %v976 = vshll.u32 %v912, 16
      %v978 = vor.u32 %v975, %v976
      %v979 = vsel %vm929, %v971, %v978
      %v980 = vrot.slane %v975, 4
      %v982 = vshrl.u32 %v913, 16
      %v984 = vrot.slane %v982, 7
      %v985 = vshll.u32 %v913, 16
      %v987 = vor.u32 %v984, %v985
      %v988 = vrot.slane %v984, 4
      %v990 = vshrl.u32 %v914, 16
      %v992 = vrot.slane %v990, 7
      %v993 = vshll.u32 %v914, 16
      %v995 = vor.u32 %v992, %v993
      %v996 = vsel %vm929, %v988, %v995
      %v997 = vrot.slane %v992, 4
      %v999 = vshrl.u32 %v915, 16
      %v1001 = vrot.slane %v999, 7
      %v1002 = vshll.u32 %v915, 16
      %v1004 = vor.u32 %v1001, %v1002
      %v1005 = vrot.slane %v1001, 4
      %v1007 = vshrl.u32 %v916, 16
      %v1009 = vrot.slane %v1007, 7
      %v1010 = vshll.u32 %v916, 16
      %v1012 = vor.u32 %v1009, %v1010
      %v1013 = vsel %vm929, %v1005, %v1012
      %v1014 = vrot.slane %v1009, 4
      %v1016 = vshrl.u32 %v917, 16
      %v1018 = vrot.slane %v1016, 7
      %v1019 = vshll.u32 %v917, 16
      %v1021 = vor.u32 %v1018, %v1019
      %v1022 = vrot.slane %v1018, 4
      %v1024 = vshrl.u32 %v918, 16
      %v1026 = vrot.slane %v1024, 7
      %v1027 = vshll.u32 %v918, 16
      %v1029 = vor.u32 %v1026, %v1027
      %v1030 = vsel %vm929, %v1022, %v1029
      %v1031 = vrot.slane %v1026, 4
      %v1033 = vshrl.u32 %v919, 16
      %v1035 = vrot.slane %v1033, 7
      %v1036 = vshll.u32 %v919, 16
      %v1038 = vor.u32 %v1035, %v1036
      %v1039 = vrot.slane %v1035, 4
      %v1041 = vshrl.u32 %v920, 16
      %v1043 = vrot.slane %v1041, 7
      %v1044 = vshll.u32 %v920, 16
      %v1046 = vor.u32 %v1043, %v1044
      %v1047 = vsel %vm929, %v1039, %v1046
      %v1048 = vrot.slane %v1043, 4
      %v1050 = vshrl.u32 %v921, 16
      %v1052 = vrot.slane %v1050, 7
      %v1053 = vshll.u32 %v921, 16
      %v1055 = vor.u32 %v1052, %v1053
      %v1056 = vrot.slane %v1052, 4
      %v1058 = vshrl.u32 %v922, 16
      %v1060 = vrot.slane %v1058, 7
      %v1061 = vshll.u32 %v922, 16
      %v1063 = vor.u32 %v1060, %v1061
      %v1064 = vsel %vm929, %v1056, %v1063
      %v1065 = vrot.slane %v1060, 4
      %v1067 = vshrl.u32 %v923, 16
      %v1069 = vrot.slane %v1067, 7
      %v1070 = vshll.u32 %v923, 16
      %v1072 = vor.u32 %v1069, %v1070
      %v1073 = vrot.slane %v1069, 4
      %v1075 = vshrl.u32 %v924, 16
      %v1077 = vrot.slane %v1075, 7
      %v1078 = vshll.u32 %v924, 16
      %v1080 = vor.u32 %v1077, %v1078
      %v1081 = vsel %vm929, %v1073, %v1080
      %v1082 = vrot.slane %v1077, 4
      %v1084 = vshrl.u32 %v925, 16
      %v1086 = vrot.slane %v1084, 7
      %v1087 = vshll.u32 %v925, 16
      %v1089 = vor.u32 %v1086, %v1087
      %v1090 = vrot.slane %v1086, 4
      %v1092 = vshrl.u32 %v926, 16
      %v1094 = vrot.slane %v1092, 7
      %v1095 = vshll.u32 %v926, 16
      %v1097 = vor.u32 %v1094, %v1095
      %v1098 = vsel %vm929, %v1090, %v1097
      %v1099 = vrot.slane %v1094, 4
      %vm1130 = vcmask 1043456
      %vm1131 = vsmask.f32 7938
      %vm1132 = vmand %vm1130, %vm1131
      %v1133 = vld [vmem:[#allocation3] sm:$0xf]
      %v1134 = vsel %vm1132, %v936, %v1133
      %1135 = vst [vmem:[#allocation3] sm:$0xf] %v1134
      %1136 = vst [vmem:[#allocation3 + $0x4] sm:$0xf] %v945
      %vm1137 = vcmask 1040384
      %vm1138 = vmand %vm1137, %vm927
      %v1139 = vld [vmem:[#allocation3 + $0x8] sm:$0x1]
      %v1140 = vsel %vm1138, %v946, %v1139
      %1141 = vst [vmem:[#allocation3 + $0x8] sm:$0x1] %v1140
      %v1142 = vld [vmem:[#allocation3 + $0xc] sm:$0xf]
      %v1143 = vsel %vm1132, %v953, %v1142
      %1144 = vst [vmem:[#allocation3 + $0xc] sm:$0xf] %v1143
      %1145 = vst [vmem:[#allocation3 + $0x10] sm:$0xf] %v962
      %v1146 = vld [vmem:[#allocation3 + $0x14] sm:$0x1]
      %v1147 = vsel %vm1138, %v963, %v1146
      %1148 = vst [vmem:[#allocation3 + $0x14] sm:$0x1] %v1147
      %v1149 = vld [vmem:[#allocation3 + $0x18] sm:$0xf]
      %v1150 = vsel %vm1132, %v970, %v1149
      %1151 = vst [vmem:[#allocation3 + $0x18] sm:$0xf] %v1150
      %1152 = vst [vmem:[#allocation3 + $0x1c] sm:$0xf] %v979
      %v1153 = vld [vmem:[#allocation3 + $0x20] sm:$0x1]
      %v1154 = vsel %vm1138, %v980, %v1153
      %1155 = vst [vmem:[#allocation3 + $0x20] sm:$0x1] %v1154
      %v1156 = vld [vmem:[#allocation3 + $0x24] sm:$0xf]
      %v1157 = vsel %vm1132, %v987, %v1156
      %1158 = vst [vmem:[#allocation3 + $0x24] sm:$0xf] %v1157
      %1159 = vst [vmem:[#allocation3 + $0x28] sm:$0xf] %v996
      %v1160 = vld [vmem:[#allocation3 + $0x2c] sm:$0x1]
      %v1161 = vsel %vm1138, %v997, %v1160
      %1162 = vst [vmem:[#allocation3 + $0x2c] sm:$0x1] %v1161
      %v1163 = vld [vmem:[#allocation3 + $0x30] sm:$0xf]
      %v1164 = vsel %vm1132, %v1004, %v1163
      %1165 = vst [vmem:[#allocation3 + $0x30] sm:$0xf] %v1164
      %1166 = vst [vmem:[#allocation3 + $0x34] sm:$0xf] %v1013
      %v1167 = vld [vmem:[#allocation3 + $0x38] sm:$0x1]
      %v1168 = vsel %vm1138, %v1014, %v1167
      %1169 = vst [vmem:[#allocation3 + $0x38] sm:$0x1] %v1168
      %v1170 = vld [vmem:[#allocation3 + $0x3c] sm:$0xf]
      %v1171 = vsel %vm1132, %v1021, %v1170
      %1172 = vst [vmem:[#allocation3 + $0x3c] sm:$0xf] %v1171
      %1173 = vst [vmem:[#allocation3 + $0x40] sm:$0xf] %v1030
      %v1174 = vld [vmem:[#allocation3 + $0x44] sm:$0x1]
      %v1175 = vsel %vm1138, %v1031, %v1174
      %1176 = vst [vmem:[#allocation3 + $0x44] sm:$0x1] %v1175
      %v1177 = vld [vmem:[#allocation3 + $0x48] sm:$0xf]
      %v1178 = vsel %vm1132, %v1038, %v1177
      %1179 = vst [vmem:[#allocation3 + $0x48] sm:$0xf] %v1178
      %1180 = vst [vmem:[#allocation3 + $0x4c] sm:$0xf] %v1047
      %v1181 = vld [vmem:[#allocation3 + $0x50] sm:$0x1]
      %v1182 = vsel %vm1138, %v1048, %v1181
      %1183 = vst [vmem:[#allocation3 + $0x50] sm:$0x1] %v1182
      %v1184 = vld [vmem:[#allocation3 + $0x54] sm:$0xf]
      %v1185 = vsel %vm1132, %v1055, %v1184
      %1186 = vst [vmem:[#allocation3 + $0x54] sm:$0xf] %v1185
      %1187 = vst [vmem:[#allocation3 + $0x58] sm:$0xf] %v1064
      %v1188 = vld [vmem:[#allocation3 + $0x5c] sm:$0x1]
      %v1189 = vsel %vm1138, %v1065, %v1188
      %1190 = vst [vmem:[#allocation3 + $0x5c] sm:$0x1] %v1189
      %v1191 = vld [vmem:[#allocation3 + $0x60] sm:$0xf]
      %v1192 = vsel %vm1132, %v1072, %v1191
      %1193 = vst [vmem:[#allocation3 + $0x60] sm:$0xf] %v1192
      %1194 = vst [vmem:[#allocation3 + $0x64] sm:$0xf] %v1081
      %v1195 = vld [vmem:[#allocation3 + $0x68] sm:$0x1]
      %v1196 = vsel %vm1138, %v1082, %v1195
      %1197 = vst [vmem:[#allocation3 + $0x68] sm:$0x1] %v1196
      %v1198 = vld [vmem:[#allocation3 + $0x6c] sm:$0xf]
      %v1199 = vsel %vm1132, %v1089, %v1198
      %1200 = vst [vmem:[#allocation3 + $0x6c] sm:$0xf] %v1199
      %1201 = vst [vmem:[#allocation3 + $0x70] sm:$0xf] %v1098
      %v1202 = vld [vmem:[#allocation3 + $0x74] sm:$0x1]
      %v1203 = vsel %vm1138, %v1099, %v1202
      %1204 = vst [vmem:[#allocation3 + $0x74] sm:$0x1] %v1203
      %v1205 = vld [vmem:[#allocation3] sm:$0x1]
      %v1206 = vsel %vm1138, 0, %v1205
      %1207 = vst [vmem:[#allocation3] sm:$0x1] %v1206
      %v1208 = vld [vmem:[#allocation3 + $0xc] sm:$0x1]
      %v1209 = vsel %vm1138, 0, %v1208
      %1210 = vst [vmem:[#allocation3 + $0xc] sm:$0x1] %v1209
      %v1211 = vld [vmem:[#allocation3 + $0x18] sm:$0x1]
      %v1212 = vsel %vm1138, 0, %v1211
      %1213 = vst [vmem:[#allocation3 + $0x18] sm:$0x1] %v1212
      %v1214 = vld [vmem:[#allocation3 + $0x24] sm:$0x1]
      %v1215 = vsel %vm1138, 0, %v1214
      %1216 = vst [vmem:[#allocation3 + $0x24] sm:$0x1] %v1215
      %v1217 = vld [vmem:[#allocation3 + $0x30] sm:$0x1]
      %v1218 = vsel %vm1138, 0, %v1217
      %1219 = vst [vmem:[#allocation3 + $0x30] sm:$0x1] %v1218
      %v1220 = vld [vmem:[#allocation3 + $0x3c] sm:$0x1]
      %v1221 = vsel %vm1138, 0, %v1220
      %1222 = vst [vmem:[#allocation3 + $0x3c] sm:$0x1] %v1221
      %v1223 = vld [vmem:[#allocation3 + $0x48] sm:$0x1]
      %v1224 = vsel %vm1138, 0, %v1223
      %1225 = vst [vmem:[#allocation3 + $0x48] sm:$0x1] %v1224
      %v1226 = vld [vmem:[#allocation3 + $0x54] sm:$0x1]
      %v1227 = vsel %vm1138, 0, %v1226
      %1228 = vst [vmem:[#allocation3 + $0x54] sm:$0x1] %v1227
      %v1229 = vld [vmem:[#allocation3 + $0x60] sm:$0x1]
      %v1230 = vsel %vm1138, 0, %v1229
      %1231 = vst [vmem:[#allocation3 + $0x60] sm:$0x1] %v1230
      %v1232 = vld [vmem:[#allocation3 + $0x6c] sm:$0x1]
      %v1233 = vsel %vm1138, 0, %v1232
      %1234 = vst [vmem:[#allocation3 + $0x6c] sm:$0x1] %v1233
      %vm1235 = vmand %vm1137, %vm1131
      %v1236 = vld [vmem:[#allocation3 + $0x8] sm:$0x1]
      %v1237 = vsel %vm1235, 0, %v1236
      %1238 = vst [vmem:[#allocation3 + $0x8] sm:$0x1] %v1237
      %v1239 = vld [vmem:[#allocation3 + $0x14] sm:$0x1]
      %v1240 = vsel %vm1235, 0, %v1239
      %1241 = vst [vmem:[#allocation3 + $0x14] sm:$0x1] %v1240
      %v1242 = vld [vmem:[#allocation3 + $0x20] sm:$0x1]
      %v1243 = vsel %vm1235, 0, %v1242
      %1244 = vst [vmem:[#allocation3 + $0x20] sm:$0x1] %v1243
      %v1245 = vld [vmem:[#allocation3 + $0x2c] sm:$0x1]
      %v1246 = vsel %vm1235, 0, %v1245
      %1247 = vst [vmem:[#allocation3 + $0x2c] sm:$0x1] %v1246
      %v1248 = vld [vmem:[#allocation3 + $0x38] sm:$0x1]
      %v1249 = vsel %vm1235, 0, %v1248
      %1250 = vst [vmem:[#allocation3 + $0x38] sm:$0x1] %v1249
      %v1251 = vld [vmem:[#allocation3 + $0x44] sm:$0x1]
      %v1252 = vsel %vm1235, 0, %v1251
      %1253 = vst [vmem:[#allocation3 + $0x44] sm:$0x1] %v1252
      %v1254 = vld [vmem:[#allocation3 + $0x50] sm:$0x1]
      %v1255 = vsel %vm1235, 0, %v1254
      %1256 = vst [vmem:[#allocation3 + $0x50] sm:$0x1] %v1255
      %v1257 = vld [vmem:[#allocation3 + $0x5c] sm:$0x1]
      %v1258 = vsel %vm1235, 0, %v1257
      %1259 = vst [vmem:[#allocation3 + $0x5c] sm:$0x1] %v1258
      %v1260 = vld [vmem:[#allocation3 + $0x68] sm:$0x1]
      %v1261 = vsel %vm1235, 0, %v1260
      %1262 = vst [vmem:[#allocation3 + $0x68] sm:$0x1] %v1261
      %v1263 = vld [vmem:[#allocation3 + $0x74] sm:$0x1]
      %v1264 = vsel %vm1235, 0, %v1263
      %1265 = vst [vmem:[#allocation3 + $0x74] sm:$0x1] %v1264
      %v1266 = vld [vmem:[#allocation3] sm:$0xf]
      %v1267 = vld [vmem:[#allocation3 + $0x4] sm:$0xf]
      %v1268 = vld [vmem:[#allocation3 + $0xc] sm:$0xf]
      %v1269 = vld [vmem:[#allocation3 + $0x10] sm:$0xf]
      %v1270 = vld [vmem:[#allocation3 + $0x18] sm:$0xf]
      %v1271 = vld [vmem:[#allocation3 + $0x1c] sm:$0xf]
      %v1272 = vld [vmem:[#allocation3 + $0x24] sm:$0xf]
      %v1273 = vld [vmem:[#allocation3 + $0x28] sm:$0xf]
      %v1274 = vld [vmem:[#allocation3 + $0x30] sm:$0xf]
      %v1275 = vld [vmem:[#allocation3 + $0x34] sm:$0xf]
      %v1276 = vld [vmem:[#allocation3 + $0x3c] sm:$0xf]
      %v1277 = vld [vmem:[#allocation3 + $0x40] sm:$0xf]
      %v1278 = vld [vmem:[#allocation3 + $0x48] sm:$0xf]
      %v1279 = vld [vmem:[#allocation3 + $0x4c] sm:$0xf]
      %v1280 = vld [vmem:[#allocation3 + $0x54] sm:$0xf]
      %v1281 = vld [vmem:[#allocation3 + $0x58] sm:$0xf]
      %v1282 = vld [vmem:[#allocation3 + $0x60] sm:$0xf]
      %v1283 = vld [vmem:[#allocation3 + $0x64] sm:$0xf]
      %v1284 = vld [vmem:[#allocation3 + $0x6c] sm:$0xf]
      %v1285 = vld [vmem:[#allocation3 + $0x70] sm:$0xf]
      %v1286 = vld [vmem:[#allocation3] sm:$0xe]
      %v1287 = vld [vmem:[#allocation3 + $0x8] sm:$0x1]
      %v1288 = vld [vmem:[#allocation3 + $0xc] sm:$0xe]
      %v1289 = vld [vmem:[#allocation3 + $0x14] sm:$0x1]
      %v1290 = vld [vmem:[#allocation3 + $0x18] sm:$0xe]
      %v1291 = vld [vmem:[#allocation3 + $0x20] sm:$0x1]
      %v1292 = vld [vmem:[#allocation3 + $0x24] sm:$0xe]
      %v1293 = vld [vmem:[#allocation3 + $0x2c] sm:$0x1]
      %v1294 = vld [vmem:[#allocation3 + $0x30] sm:$0xe]
      %v1295 = vld [vmem:[#allocation3 + $0x38] sm:$0x1]
      %v1296 = vld [vmem:[#allocation3 + $0x3c] sm:$0xe]
      %v1297 = vld [vmem:[#allocation3 + $0x44] sm:$0x1]
      %v1298 = vld [vmem:[#allocation3 + $0x48] sm:$0xe]
      %v1299 = vld [vmem:[#allocation3 + $0x50] sm:$0x1]
      %v1300 = vld [vmem:[#allocation3 + $0x54] sm:$0xe]
      %v1301 = vld [vmem:[#allocation3 + $0x5c] sm:$0x1]
      %v1302 = vld [vmem:[#allocation3 + $0x60] sm:$0xe]
      %v1303 = vld [vmem:[#allocation3 + $0x68] sm:$0x1]
      %v1304 = vld [vmem:[#allocation3 + $0x6c] sm:$0xe]
      %v1305 = vld [vmem:[#allocation3 + $0x74] sm:$0x1]
      %vm1336 = vcmask 1042432
      %vm1337 = vcmask 1046532
      %vm1338 = vmor %vm1336, %vm1337
      %v1339 = vrot.slane %v1286, 5
      %v1340 = vrot.slane %v1339, 4
      %v1341 = vrot.slane %v1267, 5
      %v1342 = vsel %vm1338, %v1340, %v1341
      %v1343 = vrot.slane %v1341, 4
      %v1344 = vrot.slane %v1287, 5
      %v1345 = vsel %vm1338, %v1343, %v1344
      %v1346 = vrot.slane %v1288, 5
      %v1347 = vrot.slane %v1346, 4
      %v1348 = vrot.slane %v1269, 5
      %v1349 = vsel %vm1338, %v1347, %v1348
      %v1350 = vrot.slane %v1348, 4
      %v1351 = vrot.slane %v1289, 5
      %v1352 = vsel %vm1338, %v1350, %v1351
      %v1353 = vrot.slane %v1290, 5
      %v1354 = vrot.slane %v1353, 4
      %v1355 = vrot.slane %v1271, 5
      %v1356 = vsel %vm1338, %v1354, %v1355
      %v1357 = vrot.slane %v1355, 4
      %v1358 = vrot.slane %v1291, 5
      %v1359 = vsel %vm1338, %v1357, %v1358
      %v1360 = vrot.slane %v1292, 5
      %v1361 = vrot.slane %v1360, 4
      %v1362 = vrot.slane %v1273, 5
      %v1363 = vsel %vm1338, %v1361, %v1362
      %v1364 = vrot.slane %v1362, 4
      %v1365 = vrot.slane %v1293, 5
      %v1366 = vsel %vm1338, %v1364, %v1365
      %v1367 = vrot.slane %v1294, 5
      %v1368 = vrot.slane %v1367, 4
      %v1369 = vrot.slane %v1275, 5
      %v1370 = vsel %vm1338, %v1368, %v1369
      %v1371 = vrot.slane %v1369, 4
      %v1372 = vrot.slane %v1295, 5
      %v1373 = vsel %vm1338, %v1371, %v1372
      %v1374 = vrot.slane %v1296, 5
      %v1375 = vrot.slane %v1374, 4
      %v1376 = vrot.slane %v1277, 5
      %v1377 = vsel %vm1338, %v1375, %v1376
      %v1378 = vrot.slane %v1376, 4
      %v1379 = vrot.slane %v1297, 5
      %v1380 = vsel %vm1338, %v1378, %v1379
      %v1381 = vrot.slane %v1298, 5
      %v1382 = vrot.slane %v1381, 4
      %v1383 = vrot.slane %v1279, 5
      %v1384 = vsel %vm1338, %v1382, %v1383
      %v1385 = vrot.slane %v1383, 4
      %v1386 = vrot.slane %v1299, 5
      %v1387 = vsel %vm1338, %v1385, %v1386
      %v1388 = vrot.slane %v1300, 5
      %v1389 = vrot.slane %v1388, 4
      %v1390 = vrot.slane %v1281, 5
      %v1391 = vsel %vm1338, %v1389, %v1390
      %v1392 = vrot.slane %v1390, 4
      %v1393 = vrot.slane %v1301, 5
      %v1394 = vsel %vm1338, %v1392, %v1393
      %v1395 = vrot.slane %v1302, 5
      %v1396 = vrot.slane %v1395, 4
      %v1397 = vrot.slane %v1283, 5
      %v1398 = vsel %vm1338, %v1396, %v1397
      %v1399 = vrot.slane %v1397, 4
      %v1400 = vrot.slane %v1303, 5
      %v1401 = vsel %vm1338, %v1399, %v1400
      %v1402 = vrot.slane %v1304, 5
      %v1403 = vrot.slane %v1402, 4
      %v1404 = vrot.slane %v1285, 5
      %v1405 = vsel %vm1338, %v1403, %v1404
      %v1406 = vrot.slane %v1404, 4
      %v1407 = vrot.slane %v1305, 5
      %v1408 = vsel %vm1338, %v1406, %v1407
      %v1409 = vld [vmem:[%s1] sm:$0xf]
      %v1410 = vld [vmem:[%s1 + $0x4] sm:$0xf]
      %v1411 = vld [vmem:[%s1 + $0x8] sm:$0xf]
      %v1412 = vld [vmem:[%s1 + $0xc] sm:$0xf]
      %v1413 = vld [vmem:[%s1 + $0x10] sm:$0xf]
      %v1414 = vld [vmem:[%s1 + $0x14] sm:$0xf]
      %v1415 = vld [vmem:[%s1 + $0x18] sm:$0xf]
      %v1416 = vld [vmem:[%s1 + $0x1c] sm:$0xf]
      %v1417 = vld [vmem:[%s1 + $0x20] sm:$0xf]
      %v1418 = vld [vmem:[%s1 + $0x24] sm:$0xf]
      %v1419 = vld [vmem:[%s1 + $0x28] sm:$0xf]
      %v1420 = vld [vmem:[%s1 + $0x2c] sm:$0xf]
      %v1421 = vld [vmem:[%s1 + $0x30] sm:$0xf]
      %v1422 = vld [vmem:[%s1 + $0x34] sm:$0xf]
      %v1423 = vld [vmem:[%s1 + $0x38] sm:$0xf]
      %v1424 = vld [vmem:[%s1 + $0x3c] sm:$0xf]
      %v1433 = vunpack.c.l.b16 %v1266
      %v1434 = vunpack.c.l.b16 %v1267
      %v1435 = vunpack.c.l.b16 %v1268
      %v1436 = vunpack.c.l.b16 %v1269
      %v1437 = vunpack.c.l.b16 %v1270
      %v1438 = vunpack.c.l.b16 %v1271
      %v1439 = vunpack.c.l.b16 %v1272
      %v1440 = vunpack.c.l.b16 %v1273
      %v1441 = vunpack.c.l.b16 %v1274
      %v1442 = vunpack.c.l.b16 %v1275
      %v1443 = vunpack.c.l.b16 %v1276
      %v1444 = vunpack.c.l.b16 %v1277
      %v1445 = vunpack.c.l.b16 %v1278
      %v1446 = vunpack.c.l.b16 %v1279
      %v1447 = vunpack.c.l.b16 %v1280
      %v1448 = vunpack.c.l.b16 %v1281
      %v1449 = vpack.c.b16 %v1434, %v1433
      %v1450 = vpack.c.b16 %v1436, %v1435
      %v1451 = vpack.c.b16 %v1438, %v1437
      %v1452 = vpack.c.b16 %v1440, %v1439
      %v1453 = vpack.c.b16 %v1442, %v1441
      %v1454 = vpack.c.b16 %v1444, %v1443
      %v1455 = vpack.c.b16 %v1446, %v1445
      %v1456 = vpack.c.b16 %v1448, %v1447
      %v1481 = vunpack.c.l.b16 %v1409
      %v1482 = vunpack.c.l.b16 %v1410
      %v1483 = vunpack.c.l.b16 %v1411
      %v1484 = vunpack.c.l.b16 %v1412
      %v1485 = vunpack.c.l.b16 %v1413
      %v1486 = vunpack.c.l.b16 %v1414
      %v1487 = vunpack.c.l.b16 %v1415
      %v1488 = vunpack.c.l.b16 %v1416
      %v1489 = vunpack.c.l.b16 %v1417
      %v1490 = vunpack.c.l.b16 %v1418
      %v1491 = vunpack.c.l.b16 %v1419
      %v1492 = vunpack.c.l.b16 %v1420
      %v1493 = vunpack.c.l.b16 %v1421
      %v1494 = vunpack.c.l.b16 %v1422
      %v1495 = vunpack.c.l.b16 %v1423
      %v1496 = vunpack.c.l.b16 %v1424
      %v1497 = vpack.c.b16 %v1482, %v1481
      %v1498 = vpack.c.b16 %v1484, %v1483
      %v1499 = vpack.c.b16 %v1486, %v1485
      %v1500 = vpack.c.b16 %v1488, %v1487
      %v1501 = vpack.c.b16 %v1490, %v1489
      %v1502 = vpack.c.b16 %v1492, %v1491
      %v1503 = vpack.c.b16 %v1494, %v1493
      %v1504 = vpack.c.b16 %v1496, %v1495
      %1513 = vmatprep.subr.bf16.mxu0 0
      %1514 = vmatpush1.bf16.msra.mxu0 %v1497
      %1515 = vmatprep.subr.bf16.mxu0 0
      %1516 = vmatpush1.bf16.msra.mxu0 %v1498
      %1517 = vmatprep.subr.bf16.mxu0 0
      %1518 = vmatpush1.bf16.msra.mxu0 %v1499
      %1519 = vmatprep.subr.bf16.mxu0 0
      %1520 = vmatpush1.bf16.msra.mxu0 %v1500
      %1521 = vmatprep.subr.bf16.mxu0 0
      %1522 = vmatpush1.bf16.msra.mxu0 %v1501
      %1523 = vmatprep.subr.bf16.mxu0 0
      %1524 = vmatpush1.bf16.msra.mxu0 %v1502
      %1525 = vmatprep.subr.bf16.mxu0 0
      %1526 = vmatpush1.bf16.msra.mxu0 %v1503
      %1527 = vmatprep.subr.bf16.mxu0 0
      %1528 = vmatpush1.bf16.msra.mxu0 %v1504
      %1529 = vmatprep.subr.bf16.mxu0 0
      %1530 = vmatpush1.bf16.msra.mxu0 0
      %1531 = vmatprep.subr.bf16.mxu0 0
      %1532 = vmatpush1.bf16.msra.mxu0 0
      %1533 = vmatprep.subr.bf16.mxu0 0
      %1534 = vmatpush1.bf16.msra.mxu0 0
      %1535 = vmatprep.subr.bf16.mxu0 0
      %1536 = vmatpush1.bf16.msra.mxu0 0
      %1537 = vmatprep.subr.bf16.mxu0 0
      %1538 = vmatpush1.bf16.msra.mxu0 0
      %1539 = vmatprep.subr.bf16.mxu0 0
      %1540 = vmatpush1.bf16.msra.mxu0 0
      %1541 = vmatprep.subr.bf16.mxu0 0
      %1542 = vmatpush1.bf16.msra.mxu0 0
      %1543 = vmatprep.subr.bf16.mxu0 0
      %1544 = vmatpush1.bf16.msra.mxu0 0
      %1545 = vmatprep.mubr.bf16.mxu0 0
      %1546 = vmatmul.mubr.bf16.gmra.mrb[0].mxu0 %v1449
      %v1547 = vpop.f32.mrb[0].mxu0
      %v1548 = vadd.f32 0.0, %v1547
      %v1549 = vpop.f32.mrb[0].mxu0
      %v1550 = vpop.f32.mrb[0].mxu0
      %v1551 = vadd.f32 0.0, %v1550
      %v1552 = vpop.f32.mrb[0].mxu0
      %1553 = vmatprep.mubr.bf16.mxu0 0
      %1554 = vmatmul.mubr.bf16.gmra.mrb[0].mxu0 %v1450
      %v1555 = vpop.f32.mrb[0].mxu0
      %v1556 = vadd.f32 0.0, %v1555
      %v1557 = vpop.f32.mrb[0].mxu0
      %v1558 = vpop.f32.mrb[0].mxu0
      %v1559 = vadd.f32 0.0, %v1558
      %v1560 = vpop.f32.mrb[0].mxu0
      %1561 = vmatprep.mubr.bf16.mxu0 0
      %1562 = vmatmul.mubr.bf16.gmra.mrb[0].mxu0 %v1451
      %v1563 = vpop.f32.mrb[0].mxu0
      %v1564 = vadd.f32 0.0, %v1563
      %v1565 = vpop.f32.mrb[0].mxu0
      %v1566 = vpop.f32.mrb[0].mxu0
      %v1567 = vadd.f32 0.0, %v1566
      %v1568 = vpop.f32.mrb[0].mxu0
      %1569 = vmatprep.mubr.bf16.mxu0 0
      %1570 = vmatmul.mubr.bf16.gmra.mrb[0].mxu0 %v1452
      %v1571 = vpop.f32.mrb[0].mxu0
      %v1572 = vadd.f32 0.0, %v1571
      %v1573 = vpop.f32.mrb[0].mxu0
      %v1574 = vpop.f32.mrb[0].mxu0
      %v1575 = vadd.f32 0.0, %v1574
      %v1576 = vpop.f32.mrb[0].mxu0
      %1577 = vmatprep.mubr.bf16.mxu0 0
      %1578 = vmatmul.mubr.bf16.gmra.mrb[0].mxu0 %v1453
      %v1579 = vpop.f32.mrb[0].mxu0
      %v1580 = vadd.f32 0.0, %v1579
      %v1581 = vpop.f32.mrb[0].mxu0
      %v1582 = vpop.f32.mrb[0].mxu0
      %v1583 = vadd.f32 0.0, %v1582
      %v1584 = vpop.f32.mrb[0].mxu0
      %1585 = vmatprep.mubr.bf16.mxu0 0
      %1586 = vmatmul.mubr.bf16.gmra.mrb[0].mxu0 %v1454
      %v1587 = vpop.f32.mrb[0].mxu0
      %v1588 = vadd.f32 0.0, %v1587
      %v1589 = vpop.f32.mrb[0].mxu0
      %v1590 = vpop.f32.mrb[0].mxu0
      %v1591 = vadd.f32 0.0, %v1590
      %v1592 = vpop.f32.mrb[0].mxu0
      %1593 = vmatprep.mubr.bf16.mxu0 0
      %1594 = vmatmul.mubr.bf16.gmra.mrb[0].mxu0 %v1455
      %v1595 = vpop.f32.mrb[0].mxu0
      %v1596 = vadd.f32 0.0, %v1595
      %v1597 = vpop.f32.mrb[0].mxu0
      %v1598 = vpop.f32.mrb[0].mxu0
      %v1599 = vadd.f32 0.0, %v1598
      %v1600 = vpop.f32.mrb[0].mxu0
      %1601 = vmatprep.mubr.bf16.mxu0 0
      %1602 = vmatmul.mubr.bf16.gmra.mrb[0].mxu0 %v1456
      %v1603 = vpop.f32.mrb[0].mxu0
      %v1604 = vadd.f32 0.0, %v1603
      %v1605 = vpop.f32.mrb[0].mxu0
      %v1606 = vpop.f32.mrb[0].mxu0
      %v1607 = vadd.f32 0.0, %v1606
      %v1608 = vpop.f32.mrb[0].mxu0
      %1609 = vdwg.mxu0
      %1610 = vst [vmem:[#allocation5] sm:$0xff] %v1548
      %1611 = vst [vmem:[#allocation5 + $0x8] sm:$0xff] %v1551
      %1612 = vst [vmem:[#allocation5 + $0x10] sm:$0xff] %v1556
      %1613 = vst [vmem:[#allocation5 + $0x18] sm:$0xff] %v1559
      %1614 = vst [vmem:[#allocation5 + $0x20] sm:$0xff] %v1564
      %1615 = vst [vmem:[#allocation5 + $0x28] sm:$0xff] %v1567
      %1616 = vst [vmem:[#allocation5 + $0x30] sm:$0xff] %v1572
      %1617 = vst [vmem:[#allocation5 + $0x38] sm:$0xff] %v1575
      %1618 = vst [vmem:[#allocation5 + $0x40] sm:$0xff] %v1580
      %1619 = vst [vmem:[#allocation5 + $0x48] sm:$0xff] %v1583
      %1620 = vst [vmem:[#allocation5 + $0x50] sm:$0xff] %v1588
      %1621 = vst [vmem:[#allocation5 + $0x58] sm:$0xff] %v1591
      %1622 = vst [vmem:[#allocation5 + $0x60] sm:$0xff] %v1596
      %1623 = vst [vmem:[#allocation5 + $0x68] sm:$0xff] %v1599
      %1624 = vst [vmem:[#allocation5 + $0x70] sm:$0xff] %v1604
      %1625 = vst [vmem:[#allocation5 + $0x78] sm:$0xff] %v1607
      %s1626 = scalar_lea.vmem %s1, 64
      %v1627 = vld [vmem:[%s1626] sm:$0xf]
      %v1628 = vld [vmem:[%s1626 + $0x4] sm:$0xf]
      %v1629 = vld [vmem:[%s1626 + $0x8] sm:$0xf]
      %v1630 = vld [vmem:[%s1626 + $0xc] sm:$0xf]
      %v1631 = vld [vmem:[%s1626 + $0x10] sm:$0xf]
      %v1632 = vld [vmem:[%s1626 + $0x14] sm:$0xf]
      %v1633 = vld [vmem:[%s1626 + $0x18] sm:$0xf]
      %v1634 = vld [vmem:[%s1626 + $0x1c] sm:$0xf]
      %v1635 = vld [vmem:[%s1626 + $0x20] sm:$0xf]
      %v1636 = vld [vmem:[%s1626 + $0x24] sm:$0xf]
      %v1637 = vld [vmem:[%s1626 + $0x28] sm:$0xf]
      %v1638 = vld [vmem:[%s1626 + $0x2c] sm:$0xf]
      %v1639 = vld [vmem:[%s1626 + $0x30] sm:$0xf]
      %v1640 = vld [vmem:[%s1626 + $0x34] sm:$0xf]
      %v1641 = vld [vmem:[%s1626 + $0x38] sm:$0xf]
      %v1642 = vld [vmem:[%s1626 + $0x3c] sm:$0xf]
      %v1659 = vunpack.c.l.b16 %v1627
      %v1660 = vunpack.c.l.b16 %v1628
      %v1661 = vunpack.c.l.b16 %v1629
      %v1662 = vunpack.c.l.b16 %v1630
      %v1663 = vunpack.c.l.b16 %v1631
      %v1664 = vunpack.c.l.b16 %v1632
      %v1665 = vunpack.c.l.b16 %v1633
      %v1666 = vunpack.c.l.b16 %v1634
      %v1667 = vunpack.c.l.b16 %v1635
      %v1668 = vunpack.c.l.b16 %v1636
      %v1669 = vunpack.c.l.b16 %v1637
      %v1670 = vunpack.c.l.b16 %v1638
      %v1671 = vunpack.c.l.b16 %v1639
      %v1672 = vunpack.c.l.b16 %v1640
      %v1673 = vunpack.c.l.b16 %v1641
      %v1674 = vunpack.c.l.b16 %v1642
      %v1675 = vpack.c.b16 %v1660, %v1659
      %v1676 = vpack.c.b16 %v1662, %v1661
      %v1677 = vpack.c.b16 %v1664, %v1663
      %v1678 = vpack.c.b16 %v1666, %v1665
      %v1679 = vpack.c.b16 %v1668, %v1667
      %v1680 = vpack.c.b16 %v1670, %v1669
      %v1681 = vpack.c.b16 %v1672, %v1671
      %v1682 = vpack.c.b16 %v1674, %v1673
      %1691 = vmatprep.subr.bf16.mxu0 0
      %1692 = vmatpush1.bf16.msra.mxu0 %v1675
      %1693 = vmatprep.subr.bf16.mxu0 0
      %1694 = vmatpush1.bf16.msra.mxu0 %v1676
      %1695 = vmatprep.subr.bf16.mxu0 0
      %1696 = vmatpush1.bf16.msra.mxu0 %v1677
      %1697 = vmatprep.subr.bf16.mxu0 0
      %1698 = vmatpush1.bf16.msra.mxu0 %v1678
      %1699 = vmatprep.subr.bf16.mxu0 0
      %1700 = vmatpush1.bf16.msra.mxu0 %v1679
      %1701 = vmatprep.subr.bf16.mxu0 0
      %1702 = vmatpush1.bf16.msra.mxu0 %v1680
      %1703 = vmatprep.subr.bf16.mxu0 0
      %1704 = vmatpush1.bf16.msra.mxu0 %v1681
      %1705 = vmatprep.subr.bf16.mxu0 0
      %1706 = vmatpush1.bf16.msra.mxu0 %v1682
      %1707 = vmatprep.subr.bf16.mxu0 0
      %1708 = vmatpush1.bf16.msra.mxu0 0
      %1709 = vmatprep.subr.bf16.mxu0 0
      %1710 = vmatpush1.bf16.msra.mxu0 0
      %1711 = vmatprep.subr.bf16.mxu0 0
      %1712 = vmatpush1.bf16.msra.mxu0 0
      %1713 = vmatprep.subr.bf16.mxu0 0
      %1714 = vmatpush1.bf16.msra.mxu0 0
      %1715 = vmatprep.subr.bf16.mxu0 0
      %1716 = vmatpush1.bf16.msra.mxu0 0
      %1717 = vmatprep.subr.bf16.mxu0 0
      %1718 = vmatpush1.bf16.msra.mxu0 0
      %1719 = vmatprep.subr.bf16.mxu0 0
      %1720 = vmatpush1.bf16.msra.mxu0 0
      %1721 = vmatprep.subr.bf16.mxu0 0
      %1722 = vmatpush1.bf16.msra.mxu0 0
      %1723 = vmatprep.mubr.bf16.mxu0 0
      %1724 = vmatmul.mubr.bf16.gmra.mrb[0].mxu0 %v867
      %v1725 = vpop.f32.mrb[0].mxu0
      %v1726 = vadd.f32 0.0, %v1725
      %v1727 = vpop.f32.mrb[0].mxu0
      %v1728 = vpop.f32.mrb[0].mxu0
      %v1729 = vadd.f32 0.0, %v1728
      %v1730 = vpop.f32.mrb[0].mxu0
      %1731 = vmatprep.mubr.bf16.mxu0 0
      %1732 = vmatmul.mubr.bf16.gmra.mrb[0].mxu0 %v868
      %v1733 = vpop.f32.mrb[0].mxu0
      %v1734 = vadd.f32 0.0, %v1733
      %v1735 = vpop.f32.mrb[0].mxu0
      %v1736 = vpop.f32.mrb[0].mxu0
      %v1737 = vadd.f32 0.0, %v1736
      %v1738 = vpop.f32.mrb[0].mxu0
      %1739 = vmatprep.mubr.bf16.mxu0 0
      %1740 = vmatmul.mubr.bf16.gmra.mrb[0].mxu0 %v869
      %v1741 = vpop.f32.mrb[0].mxu0
      %v1742 = vadd.f32 0.0, %v1741
      %v1743 = vpop.f32.mrb[0].mxu0
      %v1744 = vpop.f32.mrb[0].mxu0
      %v1745 = vadd.f32 0.0, %v1744
      %v1746 = vpop.f32.mrb[0].mxu0
      %1747 = vmatprep.mubr.bf16.mxu0 0
      %1748 = vmatmul.mubr.bf16.gmra.mrb[0].mxu0 %v870
      %v1749 = vpop.f32.mrb[0].mxu0
      %v1750 = vadd.f32 0.0, %v1749
      %v1751 = vpop.f32.mrb[0].mxu0
      %v1752 = vpop.f32.mrb[0].mxu0
      %v1753 = vadd.f32 0.0, %v1752
      %v1754 = vpop.f32.mrb[0].mxu0
      %1755 = vmatprep.mubr.bf16.mxu0 0
      %1756 = vmatmul.mubr.bf16.gmra.mrb[0].mxu0 %v871
      %v1757 = vpop.f32.mrb[0].mxu0
      %v1758 = vadd.f32 0.0, %v1757
      %v1759 = vpop.f32.mrb[0].mxu0
      %v1760 = vpop.f32.mrb[0].mxu0
      %v1761 = vadd.f32 0.0, %v1760
      %v1762 = vpop.f32.mrb[0].mxu0
      %1763 = vmatprep.mubr.bf16.mxu0 0
      %1764 = vmatmul.mubr.bf16.gmra.mrb[0].mxu0 %v872
      %v1765 = vpop.f32.mrb[0].mxu0
      %v1766 = vadd.f32 0.0, %v1765
      %v1767 = vpop.f32.mrb[0].mxu0
      %v1768 = vpop.f32.mrb[0].mxu0
      %v1769 = vadd.f32 0.0, %v1768
      %v1770 = vpop.f32.mrb[0].mxu0
      %1771 = vmatprep.mubr.bf16.mxu0 0
      %1772 = vmatmul.mubr.bf16.gmra.mrb[0].mxu0 %v873
      %v1773 = vpop.f32.mrb[0].mxu0
      %v1774 = vadd.f32 0.0, %v1773
      %v1775 = vpop.f32.mrb[0].mxu0
      %v1776 = vpop.f32.mrb[0].mxu0
      %v1777 = vadd.f32 0.0, %v1776
      %v1778 = vpop.f32.mrb[0].mxu0
      %1779 = vmatprep.mubr.bf16.mxu0 0
      %1780 = vmatmul.mubr.bf16.gmra.mrb[0].mxu0 %v874
      %v1781 = vpop.f32.mrb[0].mxu0
      %v1782 = vadd.f32 0.0, %v1781
      %v1783 = vpop.f32.mrb[0].mxu0
      %v1784 = vpop.f32.mrb[0].mxu0
      %v1785 = vadd.f32 0.0, %v1784
      %v1786 = vpop.f32.mrb[0].mxu0
      %1787 = vdwg.mxu0
      %v1788 = vld [vmem:[#allocation5] sm:$0xff]
      %v1789 = vld [vmem:[#allocation5 + $0x8] sm:$0xff]
      %v1790 = vld [vmem:[#allocation5 + $0x10] sm:$0xff]
      %v1791 = vld [vmem:[#allocation5 + $0x18] sm:$0xff]
      %v1792 = vld [vmem:[#allocation5 + $0x20] sm:$0xff]
      %v1793 = vld [vmem:[#allocation5 + $0x28] sm:$0xff]
      %v1794 = vld [vmem:[#allocation5 + $0x30] sm:$0xff]
      %v1795 = vld [vmem:[#allocation5 + $0x38] sm:$0xff]
      %v1796 = vld [vmem:[#allocation5 + $0x40] sm:$0xff]
      %v1797 = vld [vmem:[#allocation5 + $0x48] sm:$0xff]
      %v1798 = vld [vmem:[#allocation5 + $0x50] sm:$0xff]
      %v1799 = vld [vmem:[#allocation5 + $0x58] sm:$0xff]
      %v1800 = vld [vmem:[#allocation5 + $0x60] sm:$0xff]
      %v1801 = vld [vmem:[#allocation5 + $0x68] sm:$0xff]
      %v1802 = vld [vmem:[#allocation5 + $0x70] sm:$0xff]
      %v1803 = vld [vmem:[#allocation5 + $0x78] sm:$0xff]
      %v1804 = vadd.f32 %v1788, %v1726
      %v1805 = vadd.f32 %v1789, %v1729
      %v1806 = vadd.f32 %v1790, %v1734
      %v1807 = vadd.f32 %v1791, %v1737
      %v1808 = vadd.f32 %v1792, %v1742
      %v1809 = vadd.f32 %v1793, %v1745
      %v1810 = vadd.f32 %v1794, %v1750
      %v1811 = vadd.f32 %v1795, %v1753
      %v1812 = vadd.f32 %v1796, %v1758
      %v1813 = vadd.f32 %v1797, %v1761
      %v1814 = vadd.f32 %v1798, %v1766
      %v1815 = vadd.f32 %v1799, %v1769
      %v1816 = vadd.f32 %v1800, %v1774
      %v1817 = vadd.f32 %v1801, %v1777
      %v1818 = vadd.f32 %v1802, %v1782
      %v1819 = vadd.f32 %v1803, %v1785
      %1820 = vst [vmem:[#allocation5] sm:$0xff] %v1804
      %1821 = vst [vmem:[#allocation5 + $0x8] sm:$0xff] %v1805
      %1822 = vst [vmem:[#allocation5 + $0x10] sm:$0xff] %v1806
      %1823 = vst [vmem:[#allocation5 + $0x18] sm:$0xff] %v1807
      %1824 = vst [vmem:[#allocation5 + $0x20] sm:$0xff] %v1808
      %1825 = vst [vmem:[#allocation5 + $0x28] sm:$0xff] %v1809
      %1826 = vst [vmem:[#allocation5 + $0x30] sm:$0xff] %v1810
      %1827 = vst [vmem:[#allocation5 + $0x38] sm:$0xff] %v1811
      %1828 = vst [vmem:[#allocation5 + $0x40] sm:$0xff] %v1812
      %1829 = vst [vmem:[#allocation5 + $0x48] sm:$0xff] %v1813
      %1830 = vst [vmem:[#allocation5 + $0x50] sm:$0xff] %v1814
      %1831 = vst [vmem:[#allocation5 + $0x58] sm:$0xff] %v1815
      %1832 = vst [vmem:[#allocation5 + $0x60] sm:$0xff] %v1816
      %1833 = vst [vmem:[#allocation5 + $0x68] sm:$0xff] %v1817
      %1834 = vst [vmem:[#allocation5 + $0x70] sm:$0xff] %v1818
      %1835 = vst [vmem:[#allocation5 + $0x78] sm:$0xff] %v1819
      %s1836 = scalar_lea.vmem %s1, 128
      %v1837 = vld [vmem:[%s1836] sm:$0xf]
      %v1838 = vld [vmem:[%s1836 + $0x4] sm:$0xf]
      %v1839 = vld [vmem:[%s1836 + $0x8] sm:$0xf]
      %v1840 = vld [vmem:[%s1836 + $0xc] sm:$0xf]
      %v1841 = vld [vmem:[%s1836 + $0x10] sm:$0xf]
      %v1842 = vld [vmem:[%s1836 + $0x14] sm:$0xf]
      %v1843 = vld [vmem:[%s1836 + $0x18] sm:$0xf]
      %v1844 = vld [vmem:[%s1836 + $0x1c] sm:$0xf]
      %v1845 = vld [vmem:[%s1836 + $0x20] sm:$0xf]
      %v1846 = vld [vmem:[%s1836 + $0x24] sm:$0xf]
      %v1847 = vld [vmem:[%s1836 + $0x28] sm:$0xf]
      %v1848 = vld [vmem:[%s1836 + $0x2c] sm:$0xf]
      %v1849 = vld [vmem:[%s1836 + $0x30] sm:$0xf]
      %v1850 = vld [vmem:[%s1836 + $0x34] sm:$0xf]
      %v1851 = vld [vmem:[%s1836 + $0x38] sm:$0xf]
      %v1852 = vld [vmem:[%s1836 + $0x3c] sm:$0xf]
      %v1853 = vunpack.c.l.b16 %v1342
      %v1854 = vunpack.c.l.b16 %v1345
      %v1855 = vunpack.c.l.b16 %v1349
      %v1856 = vunpack.c.l.b16 %v1352
      %v1857 = vunpack.c.l.b16 %v1356
      %v1858 = vunpack.c.l.b16 %v1359
      %v1859 = vunpack.c.l.b16 %v1363
      %v1860 = vunpack.c.l.b16 %v1366
      %v1861 = vunpack.c.l.b16 %v1370
      %v1862 = vunpack.c.l.b16 %v1373
      %v1863 = vunpack.c.l.b16 %v1377
      %v1864 = vunpack.c.l.b16 %v1380
      %v1865 = vunpack.c.l.b16 %v1384
      %v1866 = vunpack.c.l.b16 %v1387
      %v1867 = vunpack.c.l.b16 %v1391
      %v1868 = vunpack.c.l.b16 %v1394
      %v1869 = vpack.c.b16 %v1854, %v1853
      %v1870 = vpack.c.b16 %v1856, %v1855
      %v1871 = vpack.c.b16 %v1858, %v1857
      %v1872 = vpack.c.b16 %v1860, %v1859
      %v1873 = vpack.c.b16 %v1862, %v1861
      %v1874 = vpack.c.b16 %v1864, %v1863
      %v1875 = vpack.c.b16 %v1866, %v1865
      %v1876 = vpack.c.b16 %v1868, %v1867
      %v1901 = vunpack.c.l.b16 %v1837
      %v1902 = vunpack.c.l.b16 %v1838
      %v1903 = vunpack.c.l.b16 %v1839
      %v1904 = vunpack.c.l.b16 %v1840
      %v1905 = vunpack.c.l.b16 %v1841
      %v1906 = vunpack.c.l.b16 %v1842
      %v1907 = vunpack.c.l.b16 %v1843
      %v1908 = vunpack.c.l.b16 %v1844
      %v1909 = vunpack.c.l.b16 %v1845
      %v1910 = vunpack.c.l.b16 %v1846
      %v1911 = vunpack.c.l.b16 %v1847
      %v1912 = vunpack.c.l.b16 %v1848
      %v1913 = vunpack.c.l.b16 %v1849
      %v1914 = vunpack.c.l.b16 %v1850
      %v1915 = vunpack.c.l.b16 %v1851
      %v1916 = vunpack.c.l.b16 %v1852
      %v1917 = vpack.c.b16 %v1902, %v1901
      %v1918 = vpack.c.b16 %v1904, %v1903
      %v1919 = vpack.c.b16 %v1906, %v1905
      %v1920 = vpack.c.b16 %v1908, %v1907
      %v1921 = vpack.c.b16 %v1910, %v1909
      %v1922 = vpack.c.b16 %v1912, %v1911
      %v1923 = vpack.c.b16 %v1914, %v1913
      %v1924 = vpack.c.b16 %v1916, %v1915
      %1933 = vmatprep.subr.bf16.mxu0 0
      %1934 = vmatpush1.bf16.msra.mxu0 %v1917
      %1935 = vmatprep.subr.bf16.mxu0 0
      %1936 = vmatpush1.bf16.msra.mxu0 %v1918
      %1937 = vmatprep.subr.bf16.mxu0 0
      %1938 = vmatpush1.bf16.msra.mxu0 %v1919
      %1939 = vmatprep.subr.bf16.mxu0 0
      %1940 = vmatpush1.bf16.msra.mxu0 %v1920
      %1941 = vmatprep.subr.bf16.mxu0 0
      %1942 = vmatpush1.bf16.msra.mxu0 %v1921
      %1943 = vmatprep.subr.bf16.mxu0 0
      %1944 = vmatpush1.bf16.msra.mxu0 %v1922
      %1945 = vmatprep.subr.bf16.mxu0 0
      %1946 = vmatpush1.bf16.msra.mxu0 %v1923
      %1947 = vmatprep.subr.bf16.mxu0 0
      %1948 = vmatpush1.bf16.msra.mxu0 %v1924
      %1949 = vmatprep.subr.bf16.mxu0 0
      %1950 = vmatpush1.bf16.msra.mxu0 0
      %1951 = vmatprep.subr.bf16.mxu0 0
      %1952 = vmatpush1.bf16.msra.mxu0 0
      %1953 = vmatprep.subr.bf16.mxu0 0
      %1954 = vmatpush1.bf16.msra.mxu0 0
      %1955 = vmatprep.subr.bf16.mxu0 0
      %1956 = vmatpush1.bf16.msra.mxu0 0
      %1957 = vmatprep.subr.bf16.mxu0 0
      %1958 = vmatpush1.bf16.msra.mxu0 0
      %1959 = vmatprep.subr.bf16.mxu0 0
      %1960 = vmatpush1.bf16.msra.mxu0 0
      %1961 = vmatprep.subr.bf16.mxu0 0
      %1962 = vmatpush1.bf16.msra.mxu0 0
      %1963 = vmatprep.subr.bf16.mxu0 0
      %1964 = vmatpush1.bf16.msra.mxu0 0
      %1965 = vmatprep.mubr.bf16.mxu0 0
      %1966 = vmatmul.mubr.bf16.gmra.mrb[0].mxu0 %v1869
      %v1967 = vpop.f32.mrb[0].mxu0
      %v1968 = vadd.f32 0.0, %v1967
      %v1969 = vpop.f32.mrb[0].mxu0
      %v1970 = vpop.f32.mrb[0].mxu0
      %v1971 = vadd.f32 0.0, %v1970
      %v1972 = vpop.f32.mrb[0].mxu0
      %1973 = vmatprep.mubr.bf16.mxu0 0
      %1974 = vmatmul.mubr.bf16.gmra.mrb[0].mxu0 %v1870
      %v1975 = vpop.f32.mrb[0].mxu0
      %v1976 = vadd.f32 0.0, %v1975
      %v1977 = vpop.f32.mrb[0].mxu0
      %v1978 = vpop.f32.mrb[0].mxu0
      %v1979 = vadd.f32 0.0, %v1978
      %v1980 = vpop.f32.mrb[0].mxu0
      %1981 = vmatprep.mubr.bf16.mxu0 0
      %1982 = vmatmul.mubr.bf16.gmra.mrb[0].mxu0 %v1871
      %v1983 = vpop.f32.mrb[0].mxu0
      %v1984 = vadd.f32 0.0, %v1983
      %v1985 = vpop.f32.mrb[0].mxu0
      %v1986 = vpop.f32.mrb[0].mxu0
      %v1987 = vadd.f32 0.0, %v1986
      %v1988 = vpop.f32.mrb[0].mxu0
      %1989 = vmatprep.mubr.bf16.mxu0 0
      %1990 = vmatmul.mubr.bf16.gmra.mrb[0].mxu0 %v1872
      %v1991 = vpop.f32.mrb[0].mxu0
      %v1992 = vadd.f32 0.0, %v1991
      %v1993 = vpop.f32.mrb[0].mxu0
      %v1994 = vpop.f32.mrb[0].mxu0
      %v1995 = vadd.f32 0.0, %v1994
      %v1996 = vpop.f32.mrb[0].mxu0
      %1997 = vmatprep.mubr.bf16.mxu0 0
      %1998 = vmatmul.mubr.bf16.gmra.mrb[0].mxu0 %v1873
      %v1999 = vpop.f32.mrb[0].mxu0
      %v2000 = vadd.f32 0.0, %v1999
      %v2001 = vpop.f32.mrb[0].mxu0
      %v2002 = vpop.f32.mrb[0].mxu0
      %v2003 = vadd.f32 0.0, %v2002
      %v2004 = vpop.f32.mrb[0].mxu0
      %2005 = vmatprep.mubr.bf16.mxu0 0
      %2006 = vmatmul.mubr.bf16.gmra.mrb[0].mxu0 %v1874
      %v2007 = vpop.f32.mrb[0].mxu0
      %v2008 = vadd.f32 0.0, %v2007
      %v2009 = vpop.f32.mrb[0].mxu0
      %v2010 = vpop.f32.mrb[0].mxu0
      %v2011 = vadd.f32 0.0, %v2010
      %v2012 = vpop.f32.mrb[0].mxu0
      %2013 = vmatprep.mubr.bf16.mxu0 0
      %2014 = vmatmul.mubr.bf16.gmra.mrb[0].mxu0 %v1875
      %v2015 = vpop.f32.mrb[0].mxu0
      %v2016 = vadd.f32 0.0, %v2015
      %v2017 = vpop.f32.mrb[0].mxu0
      %v2018 = vpop.f32.mrb[0].mxu0
      %v2019 = vadd.f32 0.0, %v2018
      %v2020 = vpop.f32.mrb[0].mxu0
      %2021 = vmatprep.mubr.bf16.mxu0 0
      %2022 = vmatmul.mubr.bf16.gmra.mrb[0].mxu0 %v1876
      %v2023 = vpop.f32.mrb[0].mxu0
      %v2024 = vadd.f32 0.0, %v2023
      %v2025 = vpop.f32.mrb[0].mxu0
      %v2026 = vpop.f32.mrb[0].mxu0
      %v2027 = vadd.f32 0.0, %v2026
      %v2028 = vpop.f32.mrb[0].mxu0
      %2029 = vdwg.mxu0
      %v2030 = vld [vmem:[#allocation5] sm:$0xff]
      %v2031 = vld [vmem:[#allocation5 + $0x8] sm:$0xff]
      %v2032 = vld [vmem:[#allocation5 + $0x10] sm:$0xff]
      %v2033 = vld [vmem:[#allocation5 + $0x18] sm:$0xff]
      %v2034 = vld [vmem:[#allocation5 + $0x20] sm:$0xff]
      %v2035 = vld [vmem:[#allocation5 + $0x28] sm:$0xff]
      %v2036 = vld [vmem:[#allocation5 + $0x30] sm:$0xff]
      %v2037 = vld [vmem:[#allocation5 + $0x38] sm:$0xff]
      %v2038 = vld [vmem:[#allocation5 + $0x40] sm:$0xff]
      %v2039 = vld [vmem:[#allocation5 + $0x48] sm:$0xff]
      %v2040 = vld [vmem:[#allocation5 + $0x50] sm:$0xff]
      %v2041 = vld [vmem:[#allocation5 + $0x58] sm:$0xff]
      %v2042 = vld [vmem:[#allocation5 + $0x60] sm:$0xff]
      %v2043 = vld [vmem:[#allocation5 + $0x68] sm:$0xff]
      %v2044 = vld [vmem:[#allocation5 + $0x70] sm:$0xff]
      %v2045 = vld [vmem:[#allocation5 + $0x78] sm:$0xff]
      %v2046 = vadd.f32 %v2030, %v1968
      %v2047 = vadd.f32 %v2031, %v1971
      %v2048 = vadd.f32 %v2032, %v1976
      %v2049 = vadd.f32 %v2033, %v1979
      %v2050 = vadd.f32 %v2034, %v1984
      %v2051 = vadd.f32 %v2035, %v1987
      %v2052 = vadd.f32 %v2036, %v1992
      %v2053 = vadd.f32 %v2037, %v1995
      %v2054 = vadd.f32 %v2038, %v2000
      %v2055 = vadd.f32 %v2039, %v2003
      %v2056 = vadd.f32 %v2040, %v2008
      %v2057 = vadd.f32 %v2041, %v2011
      %v2058 = vadd.f32 %v2042, %v2016
      %v2059 = vadd.f32 %v2043, %v2019
      %v2060 = vadd.f32 %v2044, %v2024
      %v2061 = vadd.f32 %v2045, %v2027
      %2062 = vst [vmem:[#allocation5] sm:$0xff] %v2046
      %2063 = vst [vmem:[#allocation5 + $0x8] sm:$0xff] %v2047
      %2064 = vst [vmem:[#allocation5 + $0x10] sm:$0xff] %v2048
      %2065 = vst [vmem:[#allocation5 + $0x18] sm:$0xff] %v2049
      %2066 = vst [vmem:[#allocation5 + $0x20] sm:$0xff] %v2050
      %2067 = vst [vmem:[#allocation5 + $0x28] sm:$0xff] %v2051
      %2068 = vst [vmem:[#allocation5 + $0x30] sm:$0xff] %v2052
      %2069 = vst [vmem:[#allocation5 + $0x38] sm:$0xff] %v2053
      %2070 = vst [vmem:[#allocation5 + $0x40] sm:$0xff] %v2054
      %2071 = vst [vmem:[#allocation5 + $0x48] sm:$0xff] %v2055
      %2072 = vst [vmem:[#allocation5 + $0x50] sm:$0xff] %v2056
      %2073 = vst [vmem:[#allocation5 + $0x58] sm:$0xff] %v2057
      %2074 = vst [vmem:[#allocation5 + $0x60] sm:$0xff] %v2058
      %2075 = vst [vmem:[#allocation5 + $0x68] sm:$0xff] %v2059
      %2076 = vst [vmem:[#allocation5 + $0x70] sm:$0xff] %v2060
      %2077 = vst [vmem:[#allocation5 + $0x78] sm:$0xff] %v2061
      %s2078 = scalar_lea.vmem %s1, 192
      %v2079 = vld [vmem:[%s2078] sm:$0xf]
      %v2080 = vld [vmem:[%s2078 + $0x4] sm:$0xf]
      %v2081 = vld [vmem:[%s2078 + $0x8] sm:$0xf]
      %v2082 = vld [vmem:[%s2078 + $0xc] sm:$0xf]
      %v2083 = vld [vmem:[%s2078 + $0x10] sm:$0xf]
      %v2084 = vld [vmem:[%s2078 + $0x14] sm:$0xf]
      %v2085 = vld [vmem:[%s2078 + $0x18] sm:$0xf]
      %v2086 = vld [vmem:[%s2078 + $0x1c] sm:$0xf]
      %v2087 = vld [vmem:[%s2078 + $0x20] sm:$0xf]
      %v2088 = vld [vmem:[%s2078 + $0x24] sm:$0xf]
      %v2089 = vld [vmem:[%s2078 + $0x28] sm:$0xf]
      %v2090 = vld [vmem:[%s2078 + $0x2c] sm:$0xf]
      %v2091 = vld [vmem:[%s2078 + $0x30] sm:$0xf]
      %v2092 = vld [vmem:[%s2078 + $0x34] sm:$0xf]
      %v2093 = vld [vmem:[%s2078 + $0x38] sm:$0xf]
      %v2094 = vld [vmem:[%s2078 + $0x3c] sm:$0xf]
      %v2096 = vunpack.c.l.b16 %v1282
      %v2097 = vunpack.c.l.b16 %v1283
      %v2098 = vpack.c.b16 %v2097, %v2096
      %v2116 = vunpack.c.l.b16 %v2079
      %v2117 = vunpack.c.l.b16 %v2080
      %v2118 = vunpack.c.l.b16 %v2081
      %v2119 = vunpack.c.l.b16 %v2082
      %v2120 = vunpack.c.l.b16 %v2083
      %v2121 = vunpack.c.l.b16 %v2084
      %v2122 = vunpack.c.l.b16 %v2085
      %v2123 = vunpack.c.l.b16 %v2086
      %v2124 = vunpack.c.l.b16 %v2087
      %v2125 = vunpack.c.l.b16 %v2088
      %v2126 = vunpack.c.l.b16 %v2089
      %v2127 = vunpack.c.l.b16 %v2090
      %v2128 = vunpack.c.l.b16 %v2091
      %v2129 = vunpack.c.l.b16 %v2092
      %v2130 = vunpack.c.l.b16 %v2093
      %v2131 = vunpack.c.l.b16 %v2094
      %v2132 = vpack.c.b16 %v2117, %v2116
      %v2133 = vpack.c.b16 %v2119, %v2118
      %v2134 = vpack.c.b16 %v2121, %v2120
      %v2135 = vpack.c.b16 %v2123, %v2122
      %v2136 = vpack.c.b16 %v2125, %v2124
      %v2137 = vpack.c.b16 %v2127, %v2126
      %v2138 = vpack.c.b16 %v2129, %v2128
      %v2139 = vpack.c.b16 %v2131, %v2130
      %2148 = vmatprep.subr.bf16.mxu0 0
      %2149 = vmatpush1.bf16.msra.mxu0 %v2132
      %2150 = vmatprep.subr.bf16.mxu0 0
      %2151 = vmatpush1.bf16.msra.mxu0 %v2133
      %2152 = vmatprep.subr.bf16.mxu0 0
      %2153 = vmatpush1.bf16.msra.mxu0 %v2134
      %2154 = vmatprep.subr.bf16.mxu0 0
      %2155 = vmatpush1.bf16.msra.mxu0 %v2135
      %2156 = vmatprep.subr.bf16.mxu0 0
      %2157 = vmatpush1.bf16.msra.mxu0 %v2136
      %2158 = vmatprep.subr.bf16.mxu0 0
      %2159 = vmatpush1.bf16.msra.mxu0 %v2137
      %2160 = vmatprep.subr.bf16.mxu0 0
      %2161 = vmatpush1.bf16.msra.mxu0 %v2138
      %2162 = vmatprep.subr.bf16.mxu0 0
      %2163 = vmatpush1.bf16.msra.mxu0 %v2139
      %2164 = vmatprep.subr.bf16.mxu0 0
      %2165 = vmatpush1.bf16.msra.mxu0 0
      %2166 = vmatprep.subr.bf16.mxu0 0
      %2167 = vmatpush1.bf16.msra.mxu0 0
      %2168 = vmatprep.subr.bf16.mxu0 0
      %2169 = vmatpush1.bf16.msra.mxu0 0
      %2170 = vmatprep.subr.bf16.mxu0 0
      %2171 = vmatpush1.bf16.msra.mxu0 0
      %2172 = vmatprep.subr.bf16.mxu0 0
      %2173 = vmatpush1.bf16.msra.mxu0 0
      %2174 = vmatprep.subr.bf16.mxu0 0
      %2175 = vmatpush1.bf16.msra.mxu0 0
      %2176 = vmatprep.subr.bf16.mxu0 0
      %2177 = vmatpush1.bf16.msra.mxu0 0
      %2178 = vmatprep.subr.bf16.mxu0 0
      %2179 = vmatpush1.bf16.msra.mxu0 0
      %2180 = vmatprep.mubr.bf16.mxu0 0
      %2181 = vmatmul.mubr.bf16.gmra.mrb[0].mxu0 %v1450
      %v2182 = vpop.f32.mrb[0].mxu0
      %v2183 = vadd.f32 0.0, %v2182
      %v2184 = vpop.f32.mrb[0].mxu0
      %v2185 = vpop.f32.mrb[0].mxu0
      %v2186 = vadd.f32 0.0, %v2185
      %v2187 = vpop.f32.mrb[0].mxu0
      %2188 = vmatprep.mubr.bf16.mxu0 0
      %2189 = vmatmul.mubr.bf16.gmra.mrb[0].mxu0 %v1451
      %v2190 = vpop.f32.mrb[0].mxu0
      %v2191 = vadd.f32 0.0, %v2190
      %v2192 = vpop.f32.mrb[0].mxu0
      %v2193 = vpop.f32.mrb[0].mxu0
      %v2194 = vadd.f32 0.0, %v2193
      %v2195 = vpop.f32.mrb[0].mxu0
      %2196 = vmatprep.mubr.bf16.mxu0 0
      %2197 = vmatmul.mubr.bf16.gmra.mrb[0].mxu0 %v1452
      %v2198 = vpop.f32.mrb[0].mxu0
      %v2199 = vadd.f32 0.0, %v2198
      %v2200 = vpop.f32.mrb[0].mxu0
      %v2201 = vpop.f32.mrb[0].mxu0
      %v2202 = vadd.f32 0.0, %v2201
      %v2203 = vpop.f32.mrb[0].mxu0
      %2204 = vmatprep.mubr.bf16.mxu0 0
      %2205 = vmatmul.mubr.bf16.gmra.mrb[0].mxu0 %v1453
      %v2206 = vpop.f32.mrb[0].mxu0
      %v2207 = vadd.f32 0.0, %v2206
      %v2208 = vpop.f32.mrb[0].mxu0
      %v2209 = vpop.f32.mrb[0].mxu0
      %v2210 = vadd.f32 0.0, %v2209
      %v2211 = vpop.f32.mrb[0].mxu0
      %2212 = vmatprep.mubr.bf16.mxu0 0
      %2213 = vmatmul.mubr.bf16.gmra.mrb[0].mxu0 %v1454
      %v2214 = vpop.f32.mrb[0].mxu0
      %v2215 = vadd.f32 0.0, %v2214
      %v2216 = vpop.f32.mrb[0].mxu0
      %v2217 = vpop.f32.mrb[0].mxu0
      %v2218 = vadd.f32 0.0, %v2217
      %v2219 = vpop.f32.mrb[0].mxu0
      %2220 = vmatprep.mubr.bf16.mxu0 0
      %2221 = vmatmul.mubr.bf16.gmra.mrb[0].mxu0 %v1455
      %v2222 = vpop.f32.mrb[0].mxu0
      %v2223 = vadd.f32 0.0, %v2222
      %v2224 = vpop.f32.mrb[0].mxu0
      %v2225 = vpop.f32.mrb[0].mxu0
      %v2226 = vadd.f32 0.0, %v2225
      %v2227 = vpop.f32.mrb[0].mxu0
      %2228 = vmatprep.mubr.bf16.mxu0 0
      %2229 = vmatmul.mubr.bf16.gmra.mrb[0].mxu0 %v1456
      %v2230 = vpop.f32.mrb[0].mxu0
      %v2231 = vadd.f32 0.0, %v2230
      %v2232 = vpop.f32.mrb[0].mxu0
      %v2233 = vpop.f32.mrb[0].mxu0
      %v2234 = vadd.f32 0.0, %v2233
      %v2235 = vpop.f32.mrb[0].mxu0
      %2236 = vmatprep.mubr.bf16.mxu0 0
      %2237 = vmatmul.mubr.bf16.gmra.mrb[0].mxu0 %v2098
      %v2238 = vpop.f32.mrb[0].mxu0
      %v2239 = vadd.f32 0.0, %v2238
      %v2240 = vpop.f32.mrb[0].mxu0
      %v2241 = vpop.f32.mrb[0].mxu0
      %v2242 = vadd.f32 0.0, %v2241
      %v2243 = vpop.f32.mrb[0].mxu0
      %2244 = vdwg.mxu0
      %v2245 = vld [vmem:[#allocation5] sm:$0xff]
      %v2246 = vld [vmem:[#allocation5 + $0x8] sm:$0xff]
      %v2247 = vld [vmem:[#allocation5 + $0x10] sm:$0xff]
      %v2248 = vld [vmem:[#allocation5 + $0x18] sm:$0xff]
      %v2249 = vld [vmem:[#allocation5 + $0x20] sm:$0xff]
      %v2250 = vld [vmem:[#allocation5 + $0x28] sm:$0xff]
      %v2251 = vld [vmem:[#allocation5 + $0x30] sm:$0xff]
      %v2252 = vld [vmem:[#allocation5 + $0x38] sm:$0xff]
      %v2253 = vld [vmem:[#allocation5 + $0x40] sm:$0xff]
      %v2254 = vld [vmem:[#allocation5 + $0x48] sm:$0xff]
      %v2255 = vld [vmem:[#allocation5 + $0x50] sm:$0xff]
      %v2256 = vld [vmem:[#allocation5 + $0x58] sm:$0xff]
      %v2257 = vld [vmem:[#allocation5 + $0x60] sm:$0xff]
      %v2258 = vld [vmem:[#allocation5 + $0x68] sm:$0xff]
      %v2259 = vld [vmem:[#allocation5 + $0x70] sm:$0xff]
      %v2260 = vld [vmem:[#allocation5 + $0x78] sm:$0xff]
      %v2261 = vadd.f32 %v2245, %v2183
      %v2262 = vadd.f32 %v2246, %v2186
      %v2263 = vadd.f32 %v2247, %v2191
      %v2264 = vadd.f32 %v2248, %v2194
      %v2265 = vadd.f32 %v2249, %v2199
      %v2266 = vadd.f32 %v2250, %v2202
      %v2267 = vadd.f32 %v2251, %v2207
      %v2268 = vadd.f32 %v2252, %v2210
      %v2269 = vadd.f32 %v2253, %v2215
      %v2270 = vadd.f32 %v2254, %v2218
      %v2271 = vadd.f32 %v2255, %v2223
      %v2272 = vadd.f32 %v2256, %v2226
      %v2273 = vadd.f32 %v2257, %v2231
      %v2274 = vadd.f32 %v2258, %v2234
      %v2275 = vadd.f32 %v2259, %v2239
      %v2276 = vadd.f32 %v2260, %v2242
      %2277 = vst [vmem:[#allocation5] sm:$0xff] %v2261
      %2278 = vst [vmem:[#allocation5 + $0x8] sm:$0xff] %v2262
      %2279 = vst [vmem:[#allocation5 + $0x10] sm:$0xff] %v2263
      %2280 = vst [vmem:[#allocation5 + $0x18] sm:$0xff] %v2264
      %2281 = vst [vmem:[#allocation5 + $0x20] sm:$0xff] %v2265
      %2282 = vst [vmem:[#allocation5 + $0x28] sm:$0xff] %v2266
      %2283 = vst [vmem:[#allocation5 + $0x30] sm:$0xff] %v2267
      %2284 = vst [vmem:[#allocation5 + $0x38] sm:$0xff] %v2268
      %2285 = vst [vmem:[#allocation5 + $0x40] sm:$0xff] %v2269
      %2286 = vst [vmem:[#allocation5 + $0x48] sm:$0xff] %v2270
      %2287 = vst [vmem:[#allocation5 + $0x50] sm:$0xff] %v2271
      %2288 = vst [vmem:[#allocation5 + $0x58] sm:$0xff] %v2272
      %2289 = vst [vmem:[#allocation5 + $0x60] sm:$0xff] %v2273
      %2290 = vst [vmem:[#allocation5 + $0x68] sm:$0xff] %v2274
      %2291 = vst [vmem:[#allocation5 + $0x70] sm:$0xff] %v2275
      %2292 = vst [vmem:[#allocation5 + $0x78] sm:$0xff] %v2276
      %s2293 = scalar_lea.vmem %s1, 256
      %v2294 = vld [vmem:[%s2293] sm:$0xf]
      %v2295 = vld [vmem:[%s2293 + $0x4] sm:$0xf]
      %v2296 = vld [vmem:[%s2293 + $0x8] sm:$0xf]
      %v2297 = vld [vmem:[%s2293 + $0xc] sm:$0xf]
      %v2298 = vld [vmem:[%s2293 + $0x10] sm:$0xf]
      %v2299 = vld [vmem:[%s2293 + $0x14] sm:$0xf]
      %v2300 = vld [vmem:[%s2293 + $0x18] sm:$0xf]
      %v2301 = vld [vmem:[%s2293 + $0x1c] sm:$0xf]
      %v2302 = vld [vmem:[%s2293 + $0x20] sm:$0xf]
      %v2303 = vld [vmem:[%s2293 + $0x24] sm:$0xf]
      %v2304 = vld [vmem:[%s2293 + $0x28] sm:$0xf]
      %v2305 = vld [vmem:[%s2293 + $0x2c] sm:$0xf]
      %v2306 = vld [vmem:[%s2293 + $0x30] sm:$0xf]
      %v2307 = vld [vmem:[%s2293 + $0x34] sm:$0xf]
      %v2308 = vld [vmem:[%s2293 + $0x38] sm:$0xf]
      %v2309 = vld [vmem:[%s2293 + $0x3c] sm:$0xf]
      %v2326 = vunpack.c.l.b16 %v2294
      %v2327 = vunpack.c.l.b16 %v2295
      %v2328 = vunpack.c.l.b16 %v2296
      %v2329 = vunpack.c.l.b16 %v2297
      %v2330 = vunpack.c.l.b16 %v2298
      %v2331 = vunpack.c.l.b16 %v2299
      %v2332 = vunpack.c.l.b16 %v2300
      %v2333 = vunpack.c.l.b16 %v2301
      %v2334 = vunpack.c.l.b16 %v2302
      %v2335 = vunpack.c.l.b16 %v2303
      %v2336 = vunpack.c.l.b16 %v2304
      %v2337 = vunpack.c.l.b16 %v2305
      %v2338 = vunpack.c.l.b16 %v2306
      %v2339 = vunpack.c.l.b16 %v2307
      %v2340 = vunpack.c.l.b16 %v2308
      %v2341 = vunpack.c.l.b16 %v2309
      %v2342 = vpack.c.b16 %v2327, %v2326
      %v2343 = vpack.c.b16 %v2329, %v2328
      %v2344 = vpack.c.b16 %v2331, %v2330
      %v2345 = vpack.c.b16 %v2333, %v2332
      %v2346 = vpack.c.b16 %v2335, %v2334
      %v2347 = vpack.c.b16 %v2337, %v2336
      %v2348 = vpack.c.b16 %v2339, %v2338
      %v2349 = vpack.c.b16 %v2341, %v2340
      %2358 = vmatprep.subr.bf16.mxu0 0
      %2359 = vmatpush1.bf16.msra.mxu0 %v2342
      %2360 = vmatprep.subr.bf16.mxu0 0
      %2361 = vmatpush1.bf16.msra.mxu0 %v2343
      %2362 = vmatprep.subr.bf16.mxu0 0
      %2363 = vmatpush1.bf16.msra.mxu0 %v2344
      %2364 = vmatprep.subr.bf16.mxu0 0
      %2365 = vmatpush1.bf16.msra.mxu0 %v2345
      %2366 = vmatprep.subr.bf16.mxu0 0
      %2367 = vmatpush1.bf16.msra.mxu0 %v2346
      %2368 = vmatprep.subr.bf16.mxu0 0
      %2369 = vmatpush1.bf16.msra.mxu0 %v2347
      %2370 = vmatprep.subr.bf16.mxu0 0
      %2371 = vmatpush1.bf16.msra.mxu0 %v2348
      %2372 = vmatprep.subr.bf16.mxu0 0
      %2373 = vmatpush1.bf16.msra.mxu0 %v2349
      %2374 = vmatprep.subr.bf16.mxu0 0
      %2375 = vmatpush1.bf16.msra.mxu0 0
      %2376 = vmatprep.subr.bf16.mxu0 0
      %2377 = vmatpush1.bf16.msra.mxu0 0
      %2378 = vmatprep.subr.bf16.mxu0 0
      %2379 = vmatpush1.bf16.msra.mxu0 0
      %2380 = vmatprep.subr.bf16.mxu0 0
      %2381 = vmatpush1.bf16.msra.mxu0 0
      %2382 = vmatprep.subr.bf16.mxu0 0
      %2383 = vmatpush1.bf16.msra.mxu0 0
      %2384 = vmatprep.subr.bf16.mxu0 0
      %2385 = vmatpush1.bf16.msra.mxu0 0
      %2386 = vmatprep.subr.bf16.mxu0 0
      %2387 = vmatpush1.bf16.msra.mxu0 0
      %2388 = vmatprep.subr.bf16.mxu0 0
      %2389 = vmatpush1.bf16.msra.mxu0 0
      %2390 = vmatprep.mubr.bf16.mxu0 0
      %2391 = vmatmul.mubr.bf16.gmra.mrb[0].mxu0 %v868
      %v2392 = vpop.f32.mrb[0].mxu0
      %v2393 = vadd.f32 0.0, %v2392
      %v2394 = vpop.f32.mrb[0].mxu0
      %v2395 = vpop.f32.mrb[0].mxu0
      %v2396 = vadd.f32 0.0, %v2395
      %v2397 = vpop.f32.mrb[0].mxu0
      %2398 = vmatprep.mubr.bf16.mxu0 0
      %2399 = vmatmul.mubr.bf16.gmra.mrb[0].mxu0 %v869
      %v2400 = vpop.f32.mrb[0].mxu0
      %v2401 = vadd.f32 0.0, %v2400
      %v2402 = vpop.f32.mrb[0].mxu0
      %v2403 = vpop.f32.mrb[0].mxu0
      %v2404 = vadd.f32 0.0, %v2403
      %v2405 = vpop.f32.mrb[0].mxu0
      %2406 = vmatprep.mubr.bf16.mxu0 0
      %2407 = vmatmul.mubr.bf16.gmra.mrb[0].mxu0 %v870
      %v2408 = vpop.f32.mrb[0].mxu0
      %v2409 = vadd.f32 0.0, %v2408
      %v2410 = vpop.f32.mrb[0].mxu0
      %v2411 = vpop.f32.mrb[0].mxu0
      %v2412 = vadd.f32 0.0, %v2411
      %v2413 = vpop.f32.mrb[0].mxu0
      %2414 = vmatprep.mubr.bf16.mxu0 0
      %2415 = vmatmul.mubr.bf16.gmra.mrb[0].mxu0 %v871
      %v2416 = vpop.f32.mrb[0].mxu0
      %v2417 = vadd.f32 0.0, %v2416
      %v2418 = vpop.f32.mrb[0].mxu0
      %v2419 = vpop.f32.mrb[0].mxu0
      %v2420 = vadd.f32 0.0, %v2419
      %v2421 = vpop.f32.mrb[0].mxu0
      %2422 = vmatprep.mubr.bf16.mxu0 0
      %2423 = vmatmul.mubr.bf16.gmra.mrb[0].mxu0 %v872
      %v2424 = vpop.f32.mrb[0].mxu0
      %v2425 = vadd.f32 0.0, %v2424
      %v2426 = vpop.f32.mrb[0].mxu0
      %v2427 = vpop.f32.mrb[0].mxu0
      %v2428 = vadd.f32 0.0, %v2427
      %v2429 = vpop.f32.mrb[0].mxu0
      %2430 = vmatprep.mubr.bf16.mxu0 0
      %2431 = vmatmul.mubr.bf16.gmra.mrb[0].mxu0 %v873
      %v2432 = vpop.f32.mrb[0].mxu0
      %v2433 = vadd.f32 0.0, %v2432
      %v2434 = vpop.f32.mrb[0].mxu0
      %v2435 = vpop.f32.mrb[0].mxu0
      %v2436 = vadd.f32 0.0, %v2435
      %v2437 = vpop.f32.mrb[0].mxu0
      %2438 = vmatprep.mubr.bf16.mxu0 0
      %2439 = vmatmul.mubr.bf16.gmra.mrb[0].mxu0 %v874
      %v2440 = vpop.f32.mrb[0].mxu0
      %v2441 = vadd.f32 0.0, %v2440
      %v2442 = vpop.f32.mrb[0].mxu0
      %v2443 = vpop.f32.mrb[0].mxu0
      %v2444 = vadd.f32 0.0, %v2443
      %v2445 = vpop.f32.mrb[0].mxu0
      %2446 = vmatprep.mubr.bf16.mxu0 0
      %2447 = vmatmul.mubr.bf16.gmra.mrb[0].mxu0 %v875
      %v2448 = vpop.f32.mrb[0].mxu0
      %v2449 = vadd.f32 0.0, %v2448
      %v2450 = vpop.f32.mrb[0].mxu0
      %v2451 = vpop.f32.mrb[0].mxu0
      %v2452 = vadd.f32 0.0, %v2451
      %v2453 = vpop.f32.mrb[0].mxu0
      %2454 = vdwg.mxu0
      %v2455 = vld [vmem:[#allocation5] sm:$0xff]
      %v2456 = vld [vmem:[#allocation5 + $0x8] sm:$0xff]
      %v2457 = vld [vmem:[#allocation5 + $0x10] sm:$0xff]
      %v2458 = vld [vmem:[#allocation5 + $0x18] sm:$0xff]
      %v2459 = vld [vmem:[#allocation5 + $0x20] sm:$0xff]
      %v2460 = vld [vmem:[#allocation5 + $0x28] sm:$0xff]
      %v2461 = vld [vmem:[#allocation5 + $0x30] sm:$0xff]
      %v2462 = vld [vmem:[#allocation5 + $0x38] sm:$0xff]
      %v2463 = vld [vmem:[#allocation5 + $0x40] sm:$0xff]
      %v2464 = vld [vmem:[#allocation5 + $0x48] sm:$0xff]
      %v2465 = vld [vmem:[#allocation5 + $0x50] sm:$0xff]
      %v2466 = vld [vmem:[#allocation5 + $0x58] sm:$0xff]
      %v2467 = vld [vmem:[#allocation5 + $0x60] sm:$0xff]
      %v2468 = vld [vmem:[#allocation5 + $0x68] sm:$0xff]
      %v2469 = vld [vmem:[#allocation5 + $0x70] sm:$0xff]
      %v2470 = vld [vmem:[#allocation5 + $0x78] sm:$0xff]
      %v2471 = vadd.f32 %v2455, %v2393
      %v2472 = vadd.f32 %v2456, %v2396
      %v2473 = vadd.f32 %v2457, %v2401
      %v2474 = vadd.f32 %v2458, %v2404
      %v2475 = vadd.f32 %v2459, %v2409
      %v2476 = vadd.f32 %v2460, %v2412
      %v2477 = vadd.f32 %v2461, %v2417
      %v2478 = vadd.f32 %v2462, %v2420
      %v2479 = vadd.f32 %v2463, %v2425
      %v2480 = vadd.f32 %v2464, %v2428
      %v2481 = vadd.f32 %v2465, %v2433
      %v2482 = vadd.f32 %v2466, %v2436
      %v2483 = vadd.f32 %v2467, %v2441
      %v2484 = vadd.f32 %v2468, %v2444
      %v2485 = vadd.f32 %v2469, %v2449
      %v2486 = vadd.f32 %v2470, %v2452
      %2487 = vst [vmem:[#allocation5] sm:$0xff] %v2471
      %2488 = vst [vmem:[#allocation5 + $0x8] sm:$0xff] %v2472
      %2489 = vst [vmem:[#allocation5 + $0x10] sm:$0xff] %v2473
      %2490 = vst [vmem:[#allocation5 + $0x18] sm:$0xff] %v2474
      %2491 = vst [vmem:[#allocation5 + $0x20] sm:$0xff] %v2475
      %2492 = vst [vmem:[#allocation5 + $0x28] sm:$0xff] %v2476
      %2493 = vst [vmem:[#allocation5 + $0x30] sm:$0xff] %v2477
      %2494 = vst [vmem:[#allocation5 + $0x38] sm:$0xff] %v2478
      %2495 = vst [vmem:[#allocation5 + $0x40] sm:$0xff] %v2479
      %2496 = vst [vmem:[#allocation5 + $0x48] sm:$0xff] %v2480
      %2497 = vst [vmem:[#allocation5 + $0x50] sm:$0xff] %v2481
      %2498 = vst [vmem:[#allocation5 + $0x58] sm:$0xff] %v2482
      %2499 = vst [vmem:[#allocation5 + $0x60] sm:$0xff] %v2483
      %2500 = vst [vmem:[#allocation5 + $0x68] sm:$0xff] %v2484
      %2501 = vst [vmem:[#allocation5 + $0x70] sm:$0xff] %v2485
      %2502 = vst [vmem:[#allocation5 + $0x78] sm:$0xff] %v2486
      %s2503 = scalar_lea.vmem %s1, 320
      %v2504 = vld [vmem:[%s2503] sm:$0xf]
      %v2505 = vld [vmem:[%s2503 + $0x4] sm:$0xf]
      %v2506 = vld [vmem:[%s2503 + $0x8] sm:$0xf]
      %v2507 = vld [vmem:[%s2503 + $0xc] sm:$0xf]
      %v2508 = vld [vmem:[%s2503 + $0x10] sm:$0xf]
      %v2509 = vld [vmem:[%s2503 + $0x14] sm:$0xf]
      %v2510 = vld [vmem:[%s2503 + $0x18] sm:$0xf]
      %v2511 = vld [vmem:[%s2503 + $0x1c] sm:$0xf]
      %v2512 = vld [vmem:[%s2503 + $0x20] sm:$0xf]
      %v2513 = vld [vmem:[%s2503 + $0x24] sm:$0xf]
      %v2514 = vld [vmem:[%s2503 + $0x28] sm:$0xf]
      %v2515 = vld [vmem:[%s2503 + $0x2c] sm:$0xf]
      %v2516 = vld [vmem:[%s2503 + $0x30] sm:$0xf]
      %v2517 = vld [vmem:[%s2503 + $0x34] sm:$0xf]
      %v2518 = vld [vmem:[%s2503 + $0x38] sm:$0xf]
      %v2519 = vld [vmem:[%s2503 + $0x3c] sm:$0xf]
      %v2520 = vunpack.c.l.b16 %v1398
      %v2521 = vunpack.c.l.b16 %v1401
      %v2522 = vpack.c.b16 %v2521, %v2520
      %v2540 = vunpack.c.l.b16 %v2504
      %v2541 = vunpack.c.l.b16 %v2505
      %v2542 = vunpack.c.l.b16 %v2506
      %v2543 = vunpack.c.l.b16 %v2507
      %v2544 = vunpack.c.l.b16 %v2508
      %v2545 = vunpack.c.l.b16 %v2509
      %v2546 = vunpack.c.l.b16 %v2510
      %v2547 = vunpack.c.l.b16 %v2511
      %v2548 = vunpack.c.l.b16 %v2512
      %v2549 = vunpack.c.l.b16 %v2513
      %v2550 = vunpack.c.l.b16 %v2514
      %v2551 = vunpack.c.l.b16 %v2515
      %v2552 = vunpack.c.l.b16 %v2516
      %v2553 = vunpack.c.l.b16 %v2517
      %v2554 = vunpack.c.l.b16 %v2518
      %v2555 = vunpack.c.l.b16 %v2519
      %v2556 = vpack.c.b16 %v2541, %v2540
      %v2557 = vpack.c.b16 %v2543, %v2542
      %v2558 = vpack.c.b16 %v2545, %v2544
      %v2559 = vpack.c.b16 %v2547, %v2546
      %v2560 = vpack.c.b16 %v2549, %v2548
      %v2561 = vpack.c.b16 %v2551, %v2550
      %v2562 = vpack.c.b16 %v2553, %v2552
      %v2563 = vpack.c.b16 %v2555, %v2554
      %2572 = vmatprep.subr.bf16.mxu0 0
      %2573 = vmatpush1.bf16.msra.mxu0 %v2556
      %2574 = vmatprep.subr.bf16.mxu0 0
      %2575 = vmatpush1.bf16.msra.mxu0 %v2557
      %2576 = vmatprep.subr.bf16.mxu0 0
      %2577 = vmatpush1.bf16.msra.mxu0 %v2558
      %2578 = vmatprep.subr.bf16.mxu0 0
      %2579 = vmatpush1.bf16.msra.mxu0 %v2559
      %2580 = vmatprep.subr.bf16.mxu0 0
      %2581 = vmatpush1.bf16.msra.mxu0 %v2560
      %2582 = vmatprep.subr.bf16.mxu0 0
      %2583 = vmatpush1.bf16.msra.mxu0 %v2561
      %2584 = vmatprep.subr.bf16.mxu0 0
      %2585 = vmatpush1.bf16.msra.mxu0 %v2562
      %2586 = vmatprep.subr.bf16.mxu0 0
      %2587 = vmatpush1.bf16.msra.mxu0 %v2563
      %2588 = vmatprep.subr.bf16.mxu0 0
      %2589 = vmatpush1.bf16.msra.mxu0 0
      %2590 = vmatprep.subr.bf16.mxu0 0
      %2591 = vmatpush1.bf16.msra.mxu0 0
      %2592 = vmatprep.subr.bf16.mxu0 0
      %2593 = vmatpush1.bf16.msra.mxu0 0
      %2594 = vmatprep.subr.bf16.mxu0 0
      %2595 = vmatpush1.bf16.msra.mxu0 0
      %2596 = vmatprep.subr.bf16.mxu0 0
      %2597 = vmatpush1.bf16.msra.mxu0 0
      %2598 = vmatprep.subr.bf16.mxu0 0
      %2599 = vmatpush1.bf16.msra.mxu0 0
      %2600 = vmatprep.subr.bf16.mxu0 0
      %2601 = vmatpush1.bf16.msra.mxu0 0
      %2602 = vmatprep.subr.bf16.mxu0 0
      %2603 = vmatpush1.bf16.msra.mxu0 0
      %2604 = vmatprep.mubr.bf16.mxu0 0
      %2605 = vmatmul.mubr.bf16.gmra.mrb[0].mxu0 %v1870
      %v2606 = vpop.f32.mrb[0].mxu0
      %v2607 = vadd.f32 0.0, %v2606
      %v2608 = vpop.f32.mrb[0].mxu0
      %v2609 = vpop.f32.mrb[0].mxu0
      %v2610 = vadd.f32 0.0, %v2609
      %v2611 = vpop.f32.mrb[0].mxu0
      %2612 = vmatprep.mubr.bf16.mxu0 0
      %2613 = vmatmul.mubr.bf16.gmra.mrb[0].mxu0 %v1871
      %v2614 = vpop.f32.mrb[0].mxu0
      %v2615 = vadd.f32 0.0, %v2614
      %v2616 = vpop.f32.mrb[0].mxu0
      %v2617 = vpop.f32.mrb[0].mxu0
      %v2618 = vadd.f32 0.0, %v2617
      %v2619 = vpop.f32.mrb[0].mxu0
      %2620 = vmatprep.mubr.bf16.mxu0 0
      %2621 = vmatmul.mubr.bf16.gmra.mrb[0].mxu0 %v1872
      %v2622 = vpop.f32.mrb[0].mxu0
      %v2623 = vadd.f32 0.0, %v2622
      %v2624 = vpop.f32.mrb[0].mxu0
      %v2625 = vpop.f32.mrb[0].mxu0
      %v2626 = vadd.f32 0.0, %v2625
      %v2627 = vpop.f32.mrb[0].mxu0
      %2628 = vmatprep.mubr.bf16.mxu0 0
      %2629 = vmatmul.mubr.bf16.gmra.mrb[0].mxu0 %v1873
      %v2630 = vpop.f32.mrb[0].mxu0
      %v2631 = vadd.f32 0.0, %v2630
      %v2632 = vpop.f32.mrb[0].mxu0
      %v2633 = vpop.f32.mrb[0].mxu0
      %v2634 = vadd.f32 0.0, %v2633
      %v2635 = vpop.f32.mrb[0].mxu0
      %2636 = vmatprep.mubr.bf16.mxu0 0
      %2637 = vmatmul.mubr.bf16.gmra.mrb[0].mxu0 %v1874
      %v2638 = vpop.f32.mrb[0].mxu0
      %v2639 = vadd.f32 0.0, %v2638
      %v2640 = vpop.f32.mrb[0].mxu0
      %v2641 = vpop.f32.mrb[0].mxu0
      %v2642 = vadd.f32 0.0, %v2641
      %v2643 = vpop.f32.mrb[0].mxu0
      %2644 = vmatprep.mubr.bf16.mxu0 0
      %2645 = vmatmul.mubr.bf16.gmra.mrb[0].mxu0 %v1875
      %v2646 = vpop.f32.mrb[0].mxu0
      %v2647 = vadd.f32 0.0, %v2646
      %v2648 = vpop.f32.mrb[0].mxu0
      %v2649 = vpop.f32.mrb[0].mxu0
      %v2650 = vadd.f32 0.0, %v2649
      %v2651 = vpop.f32.mrb[0].mxu0
      %2652 = vmatprep.mubr.bf16.mxu0 0
      %2653 = vmatmul.mubr.bf16.gmra.mrb[0].mxu0 %v1876
      %v2654 = vpop.f32.mrb[0].mxu0
      %v2655 = vadd.f32 0.0, %v2654
      %v2656 = vpop.f32.mrb[0].mxu0
      %v2657 = vpop.f32.mrb[0].mxu0
      %v2658 = vadd.f32 0.0, %v2657
      %v2659 = vpop.f32.mrb[0].mxu0
      %2660 = vmatprep.mubr.bf16.mxu0 0
      %2661 = vmatmul.mubr.bf16.gmra.mrb[0].mxu0 %v2522
      %v2662 = vpop.f32.mrb[0].mxu0
      %v2663 = vadd.f32 0.0, %v2662
      %v2664 = vpop.f32.mrb[0].mxu0
      %v2665 = vpop.f32.mrb[0].mxu0
      %v2666 = vadd.f32 0.0, %v2665
      %v2667 = vpop.f32.mrb[0].mxu0
      %2668 = vdwg.mxu0
      %v2669 = vld [vmem:[#allocation5] sm:$0xff]
      %v2670 = vld [vmem:[#allocation5 + $0x8] sm:$0xff]
      %v2671 = vld [vmem:[#allocation5 + $0x10] sm:$0xff]
      %v2672 = vld [vmem:[#allocation5 + $0x18] sm:$0xff]
      %v2673 = vld [vmem:[#allocation5 + $0x20] sm:$0xff]
      %v2674 = vld [vmem:[#allocation5 + $0x28] sm:$0xff]
      %v2675 = vld [vmem:[#allocation5 + $0x30] sm:$0xff]
      %v2676 = vld [vmem:[#allocation5 + $0x38] sm:$0xff]
      %v2677 = vld [vmem:[#allocation5 + $0x40] sm:$0xff]
      %v2678 = vld [vmem:[#allocation5 + $0x48] sm:$0xff]
      %v2679 = vld [vmem:[#allocation5 + $0x50] sm:$0xff]
      %v2680 = vld [vmem:[#allocation5 + $0x58] sm:$0xff]
      %v2681 = vld [vmem:[#allocation5 + $0x60] sm:$0xff]
      %v2682 = vld [vmem:[#allocation5 + $0x68] sm:$0xff]
      %v2683 = vld [vmem:[#allocation5 + $0x70] sm:$0xff]
      %v2684 = vld [vmem:[#allocation5 + $0x78] sm:$0xff]
      %v2685 = vadd.f32 %v2669, %v2607
      %v2686 = vadd.f32 %v2670, %v2610
      %v2687 = vadd.f32 %v2671, %v2615
      %v2688 = vadd.f32 %v2672, %v2618
      %v2689 = vadd.f32 %v2673, %v2623
      %v2690 = vadd.f32 %v2674, %v2626
      %v2691 = vadd.f32 %v2675, %v2631
      %v2692 = vadd.f32 %v2676, %v2634
      %v2693 = vadd.f32 %v2677, %v2639
      %v2694 = vadd.f32 %v2678, %v2642
      %v2695 = vadd.f32 %v2679, %v2647
      %v2696 = vadd.f32 %v2680, %v2650
      %v2697 = vadd.f32 %v2681, %v2655
      %v2698 = vadd.f32 %v2682, %v2658
      %v2699 = vadd.f32 %v2683, %v2663
      %v2700 = vadd.f32 %v2684, %v2666
      %2701 = vst [vmem:[#allocation5] sm:$0xff] %v2685
      %2702 = vst [vmem:[#allocation5 + $0x8] sm:$0xff] %v2686
      %2703 = vst [vmem:[#allocation5 + $0x10] sm:$0xff] %v2687
      %2704 = vst [vmem:[#allocation5 + $0x18] sm:$0xff] %v2688
      %2705 = vst [vmem:[#allocation5 + $0x20] sm:$0xff] %v2689
      %2706 = vst [vmem:[#allocation5 + $0x28] sm:$0xff] %v2690
      %2707 = vst [vmem:[#allocation5 + $0x30] sm:$0xff] %v2691
      %2708 = vst [vmem:[#allocation5 + $0x38] sm:$0xff] %v2692
      %2709 = vst [vmem:[#allocation5 + $0x40] sm:$0xff] %v2693
      %2710 = vst [vmem:[#allocation5 + $0x48] sm:$0xff] %v2694
      %2711 = vst [vmem:[#allocation5 + $0x50] sm:$0xff] %v2695
      %2712 = vst [vmem:[#allocation5 + $0x58] sm:$0xff] %v2696
      %2713 = vst [vmem:[#allocation5 + $0x60] sm:$0xff] %v2697
      %2714 = vst [vmem:[#allocation5 + $0x68] sm:$0xff] %v2698
      %2715 = vst [vmem:[#allocation5 + $0x70] sm:$0xff] %v2699
      %2716 = vst [vmem:[#allocation5 + $0x78] sm:$0xff] %v2700
      %s2717 = scalar_lea.vmem %s1, 384
      %v2718 = vld [vmem:[%s2717] sm:$0xf]
      %v2719 = vld [vmem:[%s2717 + $0x4] sm:$0xf]
      %v2720 = vld [vmem:[%s2717 + $0x8] sm:$0xf]
      %v2721 = vld [vmem:[%s2717 + $0xc] sm:$0xf]
      %v2722 = vld [vmem:[%s2717 + $0x10] sm:$0xf]
      %v2723 = vld [vmem:[%s2717 + $0x14] sm:$0xf]
      %v2724 = vld [vmem:[%s2717 + $0x18] sm:$0xf]
      %v2725 = vld [vmem:[%s2717 + $0x1c] sm:$0xf]
      %v2726 = vld [vmem:[%s2717 + $0x20] sm:$0xf]
      %v2727 = vld [vmem:[%s2717 + $0x24] sm:$0xf]
      %v2728 = vld [vmem:[%s2717 + $0x28] sm:$0xf]
      %v2729 = vld [vmem:[%s2717 + $0x2c] sm:$0xf]
      %v2730 = vld [vmem:[%s2717 + $0x30] sm:$0xf]
      %v2731 = vld [vmem:[%s2717 + $0x34] sm:$0xf]
      %v2732 = vld [vmem:[%s2717 + $0x38] sm:$0xf]
      %v2733 = vld [vmem:[%s2717 + $0x3c] sm:$0xf]
      %v2735 = vunpack.c.l.b16 %v1284
      %v2736 = vunpack.c.l.b16 %v1285
      %v2737 = vpack.c.b16 %v2736, %v2735
      %v2755 = vunpack.c.l.b16 %v2718
      %v2756 = vunpack.c.l.b16 %v2719
      %v2757 = vunpack.c.l.b16 %v2720
      %v2758 = vunpack.c.l.b16 %v2721
      %v2759 = vunpack.c.l.b16 %v2722
      %v2760 = vunpack.c.l.b16 %v2723
      %v2761 = vunpack.c.l.b16 %v2724
      %v2762 = vunpack.c.l.b16 %v2725
      %v2763 = vunpack.c.l.b16 %v2726
      %v2764 = vunpack.c.l.b16 %v2727
      %v2765 = vunpack.c.l.b16 %v2728
      %v2766 = vunpack.c.l.b16 %v2729
      %v2767 = vunpack.c.l.b16 %v2730
      %v2768 = vunpack.c.l.b16 %v2731
      %v2769 = vunpack.c.l.b16 %v2732
      %v2770 = vunpack.c.l.b16 %v2733
      %v2771 = vpack.c.b16 %v2756, %v2755
      %v2772 = vpack.c.b16 %v2758, %v2757
      %v2773 = vpack.c.b16 %v2760, %v2759
      %v2774 = vpack.c.b16 %v2762, %v2761
      %v2775 = vpack.c.b16 %v2764, %v2763
      %v2776 = vpack.c.b16 %v2766, %v2765
      %v2777 = vpack.c.b16 %v2768, %v2767
      %v2778 = vpack.c.b16 %v2770, %v2769
      %2787 = vmatprep.subr.bf16.mxu0 0
      %2788 = vmatpush1.bf16.msra.mxu0 %v2771
      %2789 = vmatprep.subr.bf16.mxu0 0
      %2790 = vmatpush1.bf16.msra.mxu0 %v2772
      %2791 = vmatprep.subr.bf16.mxu0 0
      %2792 = vmatpush1.bf16.msra.mxu0 %v2773
      %2793 = vmatprep.subr.bf16.mxu0 0
      %2794 = vmatpush1.bf16.msra.mxu0 %v2774
      %2795 = vmatprep.subr.bf16.mxu0 0
      %2796 = vmatpush1.bf16.msra.mxu0 %v2775
      %2797 = vmatprep.subr.bf16.mxu0 0
      %2798 = vmatpush1.bf16.msra.mxu0 %v2776
      %2799 = vmatprep.subr.bf16.mxu0 0
      %2800 = vmatpush1.bf16.msra.mxu0 %v2777
      %2801 = vmatprep.subr.bf16.mxu0 0
      %2802 = vmatpush1.bf16.msra.mxu0 %v2778
      %2803 = vmatprep.subr.bf16.mxu0 0
      %2804 = vmatpush1.bf16.msra.mxu0 0
      %2805 = vmatprep.subr.bf16.mxu0 0
      %2806 = vmatpush1.bf16.msra.mxu0 0
      %2807 = vmatprep.subr.bf16.mxu0 0
      %2808 = vmatpush1.bf16.msra.mxu0 0
      %2809 = vmatprep.subr.bf16.mxu0 0
      %2810 = vmatpush1.bf16.msra.mxu0 0
      %2811 = vmatprep.subr.bf16.mxu0 0
      %2812 = vmatpush1.bf16.msra.mxu0 0
      %2813 = vmatprep.subr.bf16.mxu0 0
      %2814 = vmatpush1.bf16.msra.mxu0 0
      %2815 = vmatprep.subr.bf16.mxu0 0
      %2816 = vmatpush1.bf16.msra.mxu0 0
      %2817 = vmatprep.subr.bf16.mxu0 0
      %2818 = vmatpush1.bf16.msra.mxu0 0
      %2819 = vmatprep.mubr.bf16.mxu0 0
      %2820 = vmatmul.mubr.bf16.gmra.mrb[0].mxu0 %v1451
      %v2821 = vpop.f32.mrb[0].mxu0
      %v2822 = vadd.f32 0.0, %v2821
      %v2823 = vpop.f32.mrb[0].mxu0
      %v2824 = vpop.f32.mrb[0].mxu0
      %v2825 = vadd.f32 0.0, %v2824
      %v2826 = vpop.f32.mrb[0].mxu0
      %2827 = vmatprep.mubr.bf16.mxu0 0
      %2828 = vmatmul.mubr.bf16.gmra.mrb[0].mxu0 %v1452
      %v2829 = vpop.f32.mrb[0].mxu0
      %v2830 = vadd.f32 0.0, %v2829
      %v2831 = vpop.f32.mrb[0].mxu0
      %v2832 = vpop.f32.mrb[0].mxu0
      %v2833 = vadd.f32 0.0, %v2832
      %v2834 = vpop.f32.mrb[0].mxu0
      %2835 = vmatprep.mubr.bf16.mxu0 0
      %2836 = vmatmul.mubr.bf16.gmra.mrb[0].mxu0 %v1453
      %v2837 = vpop.f32.mrb[0].mxu0
      %v2838 = vadd.f32 0.0, %v2837
      %v2839 = vpop.f32.mrb[0].mxu0
      %v2840 = vpop.f32.mrb[0].mxu0
      %v2841 = vadd.f32 0.0, %v2840
      %v2842 = vpop.f32.mrb[0].mxu0
      %2843 = vmatprep.mubr.bf16.mxu0 0
      %2844 = vmatmul.mubr.bf16.gmra.mrb[0].mxu0 %v1454
      %v2845 = vpop.f32.mrb[0].mxu0
      %v2846 = vadd.f32 0.0, %v2845
      %v2847 = vpop.f32.mrb[0].mxu0
      %v2848 = vpop.f32.mrb[0].mxu0
      %v2849 = vadd.f32 0.0, %v2848
      %v2850 = vpop.f32.mrb[0].mxu0
      %2851 = vmatprep.mubr.bf16.mxu0 0
      %2852 = vmatmul.mubr.bf16.gmra.mrb[0].mxu0 %v1455
      %v2853 = vpop.f32.mrb[0].mxu0
      %v2854 = vadd.f32 0.0, %v2853
      %v2855 = vpop.f32.mrb[0].mxu0
      %v2856 = vpop.f32.mrb[0].mxu0
      %v2857 = vadd.f32 0.0, %v2856
      %v2858 = vpop.f32.mrb[0].mxu0
      %2859 = vmatprep.mubr.bf16.mxu0 0
      %2860 = vmatmul.mubr.bf16.gmra.mrb[0].mxu0 %v1456
      %v2861 = vpop.f32.mrb[0].mxu0
      %v2862 = vadd.f32 0.0, %v2861
      %v2863 = vpop.f32.mrb[0].mxu0
      %v2864 = vpop.f32.mrb[0].mxu0
      %v2865 = vadd.f32 0.0, %v2864
      %v2866 = vpop.f32.mrb[0].mxu0
      %2867 = vmatprep.mubr.bf16.mxu0 0
      %2868 = vmatmul.mubr.bf16.gmra.mrb[0].mxu0 %v2098
      %v2869 = vpop.f32.mrb[0].mxu0
      %v2870 = vadd.f32 0.0, %v2869
      %v2871 = vpop.f32.mrb[0].mxu0
      %v2872 = vpop.f32.mrb[0].mxu0
      %v2873 = vadd.f32 0.0, %v2872
      %v2874 = vpop.f32.mrb[0].mxu0
      %2875 = vmatprep.mubr.bf16.mxu0 0
      %2876 = vmatmul.mubr.bf16.gmra.mrb[0].mxu0 %v2737
      %v2877 = vpop.f32.mrb[0].mxu0
      %v2878 = vadd.f32 0.0, %v2877
      %v2879 = vpop.f32.mrb[0].mxu0
      %v2880 = vpop.f32.mrb[0].mxu0
      %v2881 = vadd.f32 0.0, %v2880
      %v2882 = vpop.f32.mrb[0].mxu0
      %2883 = vdwg.mxu0
      %v2884 = vld [vmem:[#allocation5] sm:$0xff]
      %v2885 = vld [vmem:[#allocation5 + $0x8] sm:$0xff]
      %v2886 = vld [vmem:[#allocation5 + $0x10] sm:$0xff]
      %v2887 = vld [vmem:[#allocation5 + $0x18] sm:$0xff]
      %v2888 = vld [vmem:[#allocation5 + $0x20] sm:$0xff]
      %v2889 = vld [vmem:[#allocation5 + $0x28] sm:$0xff]
      %v2890 = vld [vmem:[#allocation5 + $0x30] sm:$0xff]
      %v2891 = vld [vmem:[#allocation5 + $0x38] sm:$0xff]
      %v2892 = vld [vmem:[#allocation5 + $0x40] sm:$0xff]
      %v2893 = vld [vmem:[#allocation5 + $0x48] sm:$0xff]
      %v2894 = vld [vmem:[#allocation5 + $0x50] sm:$0xff]
      %v2895 = vld [vmem:[#allocation5 + $0x58] sm:$0xff]
      %v2896 = vld [vmem:[#allocation5 + $0x60] sm:$0xff]
      %v2897 = vld [vmem:[#allocation5 + $0x68] sm:$0xff]
      %v2898 = vld [vmem:[#allocation5 + $0x70] sm:$0xff]
      %v2899 = vld [vmem:[#allocation5 + $0x78] sm:$0xff]
      %v2900 = vadd.f32 %v2884, %v2822
      %v2901 = vadd.f32 %v2885, %v2825
      %v2902 = vadd.f32 %v2886, %v2830
      %v2903 = vadd.f32 %v2887, %v2833
      %v2904 = vadd.f32 %v2888, %v2838
      %v2905 = vadd.f32 %v2889, %v2841
      %v2906 = vadd.f32 %v2890, %v2846
      %v2907 = vadd.f32 %v2891, %v2849
      %v2908 = vadd.f32 %v2892, %v2854
      %v2909 = vadd.f32 %v2893, %v2857
      %v2910 = vadd.f32 %v2894, %v2862
      %v2911 = vadd.f32 %v2895, %v2865
      %v2912 = vadd.f32 %v2896, %v2870
      %v2913 = vadd.f32 %v2897, %v2873
      %v2914 = vadd.f32 %v2898, %v2878
      %v2915 = vadd.f32 %v2899, %v2881
      %2916 = vst [vmem:[#allocation5] sm:$0xff] %v2900
      %2917 = vst [vmem:[#allocation5 + $0x8] sm:$0xff] %v2901
      %2918 = vst [vmem:[#allocation5 + $0x10] sm:$0xff] %v2902
      %2919 = vst [vmem:[#allocation5 + $0x18] sm:$0xff] %v2903
      %2920 = vst [vmem:[#allocation5 + $0x20] sm:$0xff] %v2904
      %2921 = vst [vmem:[#allocation5 + $0x28] sm:$0xff] %v2905
      %2922 = vst [vmem:[#allocation5 + $0x30] sm:$0xff] %v2906
      %2923 = vst [vmem:[#allocation5 + $0x38] sm:$0xff] %v2907
      %2924 = vst [vmem:[#allocation5 + $0x40] sm:$0xff] %v2908
      %2925 = vst [vmem:[#allocation5 + $0x48] sm:$0xff] %v2909
      %2926 = vst [vmem:[#allocation5 + $0x50] sm:$0xff] %v2910
      %2927 = vst [vmem:[#allocation5 + $0x58] sm:$0xff] %v2911
      %2928 = vst [vmem:[#allocation5 + $0x60] sm:$0xff] %v2912
      %2929 = vst [vmem:[#allocation5 + $0x68] sm:$0xff] %v2913
      %2930 = vst [vmem:[#allocation5 + $0x70] sm:$0xff] %v2914
      %2931 = vst [vmem:[#allocation5 + $0x78] sm:$0xff] %v2915
      %s2932 = scalar_lea.vmem %s1, 448
      %v2933 = vld [vmem:[%s2932] sm:$0xf]
      %v2934 = vld [vmem:[%s2932 + $0x4] sm:$0xf]
      %v2935 = vld [vmem:[%s2932 + $0x8] sm:$0xf]
      %v2936 = vld [vmem:[%s2932 + $0xc] sm:$0xf]
      %v2937 = vld [vmem:[%s2932 + $0x10] sm:$0xf]
      %v2938 = vld [vmem:[%s2932 + $0x14] sm:$0xf]
      %v2939 = vld [vmem:[%s2932 + $0x18] sm:$0xf]
      %v2940 = vld [vmem:[%s2932 + $0x1c] sm:$0xf]
      %v2941 = vld [vmem:[%s2932 + $0x20] sm:$0xf]
      %v2942 = vld [vmem:[%s2932 + $0x24] sm:$0xf]
      %v2943 = vld [vmem:[%s2932 + $0x28] sm:$0xf]
      %v2944 = vld [vmem:[%s2932 + $0x2c] sm:$0xf]
      %v2945 = vld [vmem:[%s2932 + $0x30] sm:$0xf]
      %v2946 = vld [vmem:[%s2932 + $0x34] sm:$0xf]
      %v2947 = vld [vmem:[%s2932 + $0x38] sm:$0xf]
      %v2948 = vld [vmem:[%s2932 + $0x3c] sm:$0xf]
      %v2965 = vunpack.c.l.b16 %v2933
      %v2966 = vunpack.c.l.b16 %v2934
      %v2967 = vunpack.c.l.b16 %v2935
      %v2968 = vunpack.c.l.b16 %v2936
      %v2969 = vunpack.c.l.b16 %v2937
      %v2970 = vunpack.c.l.b16 %v2938
      %v2971 = vunpack.c.l.b16 %v2939
      %v2972 = vunpack.c.l.b16 %v2940
      %v2973 = vunpack.c.l.b16 %v2941
      %v2974 = vunpack.c.l.b16 %v2942
      %v2975 = vunpack.c.l.b16 %v2943
      %v2976 = vunpack.c.l.b16 %v2944
      %v2977 = vunpack.c.l.b16 %v2945
      %v2978 = vunpack.c.l.b16 %v2946
      %v2979 = vunpack.c.l.b16 %v2947
      %v2980 = vunpack.c.l.b16 %v2948
      %v2981 = vpack.c.b16 %v2966, %v2965
      %v2982 = vpack.c.b16 %v2968, %v2967
      %v2983 = vpack.c.b16 %v2970, %v2969
      %v2984 = vpack.c.b16 %v2972, %v2971
      %v2985 = vpack.c.b16 %v2974, %v2973
      %v2986 = vpack.c.b16 %v2976, %v2975
      %v2987 = vpack.c.b16 %v2978, %v2977
      %v2988 = vpack.c.b16 %v2980, %v2979
      %2997 = vmatprep.subr.bf16.mxu0 0
      %2998 = vmatpush1.bf16.msra.mxu0 %v2981
      %2999 = vmatprep.subr.bf16.mxu0 0
      %3000 = vmatpush1.bf16.msra.mxu0 %v2982
      %3001 = vmatprep.subr.bf16.mxu0 0
      %3002 = vmatpush1.bf16.msra.mxu0 %v2983
      %3003 = vmatprep.subr.bf16.mxu0 0
      %3004 = vmatpush1.bf16.msra.mxu0 %v2984
      %3005 = vmatprep.subr.bf16.mxu0 0
      %3006 = vmatpush1.bf16.msra.mxu0 %v2985
      %3007 = vmatprep.subr.bf16.mxu0 0
      %3008 = vmatpush1.bf16.msra.mxu0 %v2986
      %3009 = vmatprep.subr.bf16.mxu0 0
      %3010 = vmatpush1.bf16.msra.mxu0 %v2987
      %3011 = vmatprep.subr.bf16.mxu0 0
      %3012 = vmatpush1.bf16.msra.mxu0 %v2988
      %3013 = vmatprep.subr.bf16.mxu0 0
      %3014 = vmatpush1.bf16.msra.mxu0 0
      %3015 = vmatprep.subr.bf16.mxu0 0
      %3016 = vmatpush1.bf16.msra.mxu0 0
      %3017 = vmatprep.subr.bf16.mxu0 0
      %3018 = vmatpush1.bf16.msra.mxu0 0
      %3019 = vmatprep.subr.bf16.mxu0 0
      %3020 = vmatpush1.bf16.msra.mxu0 0
      %3021 = vmatprep.subr.bf16.mxu0 0
      %3022 = vmatpush1.bf16.msra.mxu0 0
      %3023 = vmatprep.subr.bf16.mxu0 0
      %3024 = vmatpush1.bf16.msra.mxu0 0
      %3025 = vmatprep.subr.bf16.mxu0 0
      %3026 = vmatpush1.bf16.msra.mxu0 0
      %3027 = vmatprep.subr.bf16.mxu0 0
      %3028 = vmatpush1.bf16.msra.mxu0 0
      %3029 = vmatprep.mubr.bf16.mxu0 0
      %3030 = vmatmul.mubr.bf16.gmra.mrb[0].mxu0 %v869
      %v3031 = vpop.f32.mrb[0].mxu0
      %v3032 = vadd.f32 0.0, %v3031
      %v3033 = vpop.f32.mrb[0].mxu0
      %v3034 = vpop.f32.mrb[0].mxu0
      %v3035 = vadd.f32 0.0, %v3034
      %v3036 = vpop.f32.mrb[0].mxu0
      %3037 = vmatprep.mubr.bf16.mxu0 0
      %3038 = vmatmul.mubr.bf16.gmra.mrb[0].mxu0 %v870
      %v3039 = vpop.f32.mrb[0].mxu0
      %v3040 = vadd.f32 0.0, %v3039
      %v3041 = vpop.f32.mrb[0].mxu0
      %v3042 = vpop.f32.mrb[0].mxu0
      %v3043 = vadd.f32 0.0, %v3042
      %v3044 = vpop.f32.mrb[0].mxu0
      %3045 = vmatprep.mubr.bf16.mxu0 0
      %3046 = vmatmul.mubr.bf16.gmra.mrb[0].mxu0 %v871
      %v3047 = vpop.f32.mrb[0].mxu0
      %v3048 = vadd.f32 0.0, %v3047
      %v3049 = vpop.f32.mrb[0].mxu0
      %v3050 = vpop.f32.mrb[0].mxu0
      %v3051 = vadd.f32 0.0, %v3050
      %v3052 = vpop.f32.mrb[0].mxu0
      %3053 = vmatprep.mubr.bf16.mxu0 0
      %3054 = vmatmul.mubr.bf16.gmra.mrb[0].mxu0 %v872
      %v3055 = vpop.f32.mrb[0].mxu0
      %v3056 = vadd.f32 0.0, %v3055
      %v3057 = vpop.f32.mrb[0].mxu0
      %v3058 = vpop.f32.mrb[0].mxu0
      %v3059 = vadd.f32 0.0, %v3058
      %v3060 = vpop.f32.mrb[0].mxu0
      %3061 = vmatprep.mubr.bf16.mxu0 0
      %3062 = vmatmul.mubr.bf16.gmra.mrb[0].mxu0 %v873
      %v3063 = vpop.f32.mrb[0].mxu0
      %v3064 = vadd.f32 0.0, %v3063
      %v3065 = vpop.f32.mrb[0].mxu0
      %v3066 = vpop.f32.mrb[0].mxu0
      %v3067 = vadd.f32 0.0, %v3066
      %v3068 = vpop.f32.mrb[0].mxu0
      %3069 = vmatprep.mubr.bf16.mxu0 0
      %3070 = vmatmul.mubr.bf16.gmra.mrb[0].mxu0 %v874
      %v3071 = vpop.f32.mrb[0].mxu0
      %v3072 = vadd.f32 0.0, %v3071
      %v3073 = vpop.f32.mrb[0].mxu0
      %v3074 = vpop.f32.mrb[0].mxu0
      %v3075 = vadd.f32 0.0, %v3074
      %v3076 = vpop.f32.mrb[0].mxu0
      %3077 = vmatprep.mubr.bf16.mxu0 0
      %3078 = vmatmul.mubr.bf16.gmra.mrb[0].mxu0 %v875
      %v3079 = vpop.f32.mrb[0].mxu0
      %v3080 = vadd.f32 0.0, %v3079
      %v3081 = vpop.f32.mrb[0].mxu0
      %v3082 = vpop.f32.mrb[0].mxu0
      %v3083 = vadd.f32 0.0, %v3082
      %v3084 = vpop.f32.mrb[0].mxu0
      %3085 = vmatprep.mubr.bf16.mxu0 0
      %3086 = vmatmul.mubr.bf16.gmra.mrb[0].mxu0 %v876
      %v3087 = vpop.f32.mrb[0].mxu0
      %v3088 = vadd.f32 0.0, %v3087
      %v3089 = vpop.f32.mrb[0].mxu0
      %v3090 = vpop.f32.mrb[0].mxu0
      %v3091 = vadd.f32 0.0, %v3090
      %v3092 = vpop.f32.mrb[0].mxu0
      %3093 = vdwg.mxu0
      %v3094 = vld [vmem:[#allocation5] sm:$0xff]
      %v3095 = vld [vmem:[#allocation5 + $0x8] sm:$0xff]
      %v3096 = vld [vmem:[#allocation5 + $0x10] sm:$0xff]
      %v3097 = vld [vmem:[#allocation5 + $0x18] sm:$0xff]
      %v3098 = vld [vmem:[#allocation5 + $0x20] sm:$0xff]
      %v3099 = vld [vmem:[#allocation5 + $0x28] sm:$0xff]
      %v3100 = vld [vmem:[#allocation5 + $0x30] sm:$0xff]
      %v3101 = vld [vmem:[#allocation5 + $0x38] sm:$0xff]
      %v3102 = vld [vmem:[#allocation5 + $0x40] sm:$0xff]
      %v3103 = vld [vmem:[#allocation5 + $0x48] sm:$0xff]
      %v3104 = vld [vmem:[#allocation5 + $0x50] sm:$0xff]
      %v3105 = vld [vmem:[#allocation5 + $0x58] sm:$0xff]
      %v3106 = vld [vmem:[#allocation5 + $0x60] sm:$0xff]
      %v3107 = vld [vmem:[#allocation5 + $0x68] sm:$0xff]
      %v3108 = vld [vmem:[#allocation5 + $0x70] sm:$0xff]
      %v3109 = vld [vmem:[#allocation5 + $0x78] sm:$0xff]
      %v3110 = vadd.f32 %v3094, %v3032
      %v3111 = vadd.f32 %v3095, %v3035
      %v3112 = vadd.f32 %v3096, %v3040
      %v3113 = vadd.f32 %v3097, %v3043
      %v3114 = vadd.f32 %v3098, %v3048
      %v3115 = vadd.f32 %v3099, %v3051
      %v3116 = vadd.f32 %v3100, %v3056
      %v3117 = vadd.f32 %v3101, %v3059
      %v3118 = vadd.f32 %v3102, %v3064
      %v3119 = vadd.f32 %v3103, %v3067
      %v3120 = vadd.f32 %v3104, %v3072
      %v3121 = vadd.f32 %v3105, %v3075
      %v3122 = vadd.f32 %v3106, %v3080
      %v3123 = vadd.f32 %v3107, %v3083
      %v3124 = vadd.f32 %v3108, %v3088
      %v3125 = vadd.f32 %v3109, %v3091
      %3126 = vst [vmem:[#allocation5] sm:$0xff] %v3110
      %3127 = vst [vmem:[#allocation5 + $0x8] sm:$0xff] %v3111
      %3128 = vst [vmem:[#allocation5 + $0x10] sm:$0xff] %v3112
      %3129 = vst [vmem:[#allocation5 + $0x18] sm:$0xff] %v3113
      %3130 = vst [vmem:[#allocation5 + $0x20] sm:$0xff] %v3114
      %3131 = vst [vmem:[#allocation5 + $0x28] sm:$0xff] %v3115
      %3132 = vst [vmem:[#allocation5 + $0x30] sm:$0xff] %v3116
      %3133 = vst [vmem:[#allocation5 + $0x38] sm:$0xff] %v3117
      %3134 = vst [vmem:[#allocation5 + $0x40] sm:$0xff] %v3118
      %3135 = vst [vmem:[#allocation5 + $0x48] sm:$0xff] %v3119
      %3136 = vst [vmem:[#allocation5 + $0x50] sm:$0xff] %v3120
      %3137 = vst [vmem:[#allocation5 + $0x58] sm:$0xff] %v3121
      %3138 = vst [vmem:[#allocation5 + $0x60] sm:$0xff] %v3122
      %3139 = vst [vmem:[#allocation5 + $0x68] sm:$0xff] %v3123
      %3140 = vst [vmem:[#allocation5 + $0x70] sm:$0xff] %v3124
      %3141 = vst [vmem:[#allocation5 + $0x78] sm:$0xff] %v3125
      %s3142 = scalar_lea.vmem %s1, 512
      %v3143 = vld [vmem:[%s3142] sm:$0xf]
      %v3144 = vld [vmem:[%s3142 + $0x4] sm:$0xf]
      %v3145 = vld [vmem:[%s3142 + $0x8] sm:$0xf]
      %v3146 = vld [vmem:[%s3142 + $0xc] sm:$0xf]
      %v3147 = vld [vmem:[%s3142 + $0x10] sm:$0xf]
      %v3148 = vld [vmem:[%s3142 + $0x14] sm:$0xf]
      %v3149 = vld [vmem:[%s3142 + $0x18] sm:$0xf]
      %v3150 = vld [vmem:[%s3142 + $0x1c] sm:$0xf]
      %v3151 = vld [vmem:[%s3142 + $0x20] sm:$0xf]
      %v3152 = vld [vmem:[%s3142 + $0x24] sm:$0xf]
      %v3153 = vld [vmem:[%s3142 + $0x28] sm:$0xf]
      %v3154 = vld [vmem:[%s3142 + $0x2c] sm:$0xf]
      %v3155 = vld [vmem:[%s3142 + $0x30] sm:$0xf]
      %v3156 = vld [vmem:[%s3142 + $0x34] sm:$0xf]
      %v3157 = vld [vmem:[%s3142 + $0x38] sm:$0xf]
      %v3158 = vld [vmem:[%s3142 + $0x3c] sm:$0xf]
      %v3159 = vunpack.c.l.b16 %v1405
      %v3160 = vunpack.c.l.b16 %v1408
      %v3161 = vpack.c.b16 %v3160, %v3159
      %v3179 = vunpack.c.l.b16 %v3143
      %v3180 = vunpack.c.l.b16 %v3144
      %v3181 = vunpack.c.l.b16 %v3145
      %v3182 = vunpack.c.l.b16 %v3146
      %v3183 = vunpack.c.l.b16 %v3147
      %v3184 = vunpack.c.l.b16 %v3148
      %v3185 = vunpack.c.l.b16 %v3149
      %v3186 = vunpack.c.l.b16 %v3150
      %v3187 = vunpack.c.l.b16 %v3151
      %v3188 = vunpack.c.l.b16 %v3152
      %v3189 = vunpack.c.l.b16 %v3153
      %v3190 = vunpack.c.l.b16 %v3154
      %v3191 = vunpack.c.l.b16 %v3155
      %v3192 = vunpack.c.l.b16 %v3156
      %v3193 = vunpack.c.l.b16 %v3157
      %v3194 = vunpack.c.l.b16 %v3158
      %v3195 = vpack.c.b16 %v3180, %v3179
      %v3196 = vpack.c.b16 %v3182, %v3181
      %v3197 = vpack.c.b16 %v3184, %v3183
      %v3198 = vpack.c.b16 %v3186, %v3185
      %v3199 = vpack.c.b16 %v3188, %v3187
      %v3200 = vpack.c.b16 %v3190, %v3189
      %v3201 = vpack.c.b16 %v3192, %v3191
      %v3202 = vpack.c.b16 %v3194, %v3193
      %3211 = vmatprep.subr.bf16.mxu0 0
      %3212 = vmatpush1.bf16.msra.mxu0 %v3195
      %3213 = vmatprep.subr.bf16.mxu0 0
      %3214 = vmatpush1.bf16.msra.mxu0 %v3196
      %3215 = vmatprep.subr.bf16.mxu0 0
      %3216 = vmatpush1.bf16.msra.mxu0 %v3197
      %3217 = vmatprep.subr.bf16.mxu0 0
      %3218 = vmatpush1.bf16.msra.mxu0 %v3198
      %3219 = vmatprep.subr.bf16.mxu0 0
      %3220 = vmatpush1.bf16.msra.mxu0 %v3199
      %3221 = vmatprep.subr.bf16.mxu0 0
      %3222 = vmatpush1.bf16.msra.mxu0 %v3200
      %3223 = vmatprep.subr.bf16.mxu0 0
      %3224 = vmatpush1.bf16.msra.mxu0 %v3201
      %3225 = vmatprep.subr.bf16.mxu0 0
      %3226 = vmatpush1.bf16.msra.mxu0 %v3202
      %3227 = vmatprep.subr.bf16.mxu0 0
      %3228 = vmatpush1.bf16.msra.mxu0 0
      %3229 = vmatprep.subr.bf16.mxu0 0
      %3230 = vmatpush1.bf16.msra.mxu0 0
      %3231 = vmatprep.subr.bf16.mxu0 0
      %3232 = vmatpush1.bf16.msra.mxu0 0
      %3233 = vmatprep.subr.bf16.mxu0 0
      %3234 = vmatpush1.bf16.msra.mxu0 0
      %3235 = vmatprep.subr.bf16.mxu0 0
      %3236 = vmatpush1.bf16.msra.mxu0 0
      %3237 = vmatprep.subr.bf16.mxu0 0
      %3238 = vmatpush1.bf16.msra.mxu0 0
      %3239 = vmatprep.subr.bf16.mxu0 0
      %3240 = vmatpush1.bf16.msra.mxu0 0
      %3241 = vmatprep.subr.bf16.mxu0 0
      %3242 = vmatpush1.bf16.msra.mxu0 0
      %3243 = vmatprep.mubr.bf16.mxu0 0
      %3244 = vmatmul.mubr.bf16.gmra.mrb[0].mxu0 %v1871
      %v3245 = vpop.f32.mrb[0].mxu0
      %v3246 = vadd.f32 0.0, %v3245
      %v3247 = vpop.f32.mrb[0].mxu0
      %v3248 = vpop.f32.mrb[0].mxu0
      %v3249 = vadd.f32 0.0, %v3248
      %v3250 = vpop.f32.mrb[0].mxu0
      %3251 = vmatprep.mubr.bf16.mxu0 0
      %3252 = vmatmul.mubr.bf16.gmra.mrb[0].mxu0 %v1872
      %v3253 = vpop.f32.mrb[0].mxu0
      %v3254 = vadd.f32 0.0, %v3253
      %v3255 = vpop.f32.mrb[0].mxu0
      %v3256 = vpop.f32.mrb[0].mxu0
      %v3257 = vadd.f32 0.0, %v3256
      %v3258 = vpop.f32.mrb[0].mxu0
      %3259 = vmatprep.mubr.bf16.mxu0 0
      %3260 = vmatmul.mubr.bf16.gmra.mrb[0].mxu0 %v1873
      %v3261 = vpop.f32.mrb[0].mxu0
      %v3262 = vadd.f32 0.0, %v3261
      %v3263 = vpop.f32.mrb[0].mxu0
      %v3264 = vpop.f32.mrb[0].mxu0
      %v3265 = vadd.f32 0.0, %v3264
      %v3266 = vpop.f32.mrb[0].mxu0
      %3267 = vmatprep.mubr.bf16.mxu0 0
      %3268 = vmatmul.mubr.bf16.gmra.mrb[0].mxu0 %v1874
      %v3269 = vpop.f32.mrb[0].mxu0
      %v3270 = vadd.f32 0.0, %v3269
      %v3271 = vpop.f32.mrb[0].mxu0
      %v3272 = vpop.f32.mrb[0].mxu0
      %v3273 = vadd.f32 0.0, %v3272
      %v3274 = vpop.f32.mrb[0].mxu0
      %3275 = vmatprep.mubr.bf16.mxu0 0
      %3276 = vmatmul.mubr.bf16.gmra.mrb[0].mxu0 %v1875
      %v3277 = vpop.f32.mrb[0].mxu0
      %v3278 = vadd.f32 0.0, %v3277
      %v3279 = vpop.f32.mrb[0].mxu0
      %v3280 = vpop.f32.mrb[0].mxu0
      %v3281 = vadd.f32 0.0, %v3280
      %v3282 = vpop.f32.mrb[0].mxu0
      %3283 = vmatprep.mubr.bf16.mxu0 0
      %3284 = vmatmul.mubr.bf16.gmra.mrb[0].mxu0 %v1876
      %v3285 = vpop.f32.mrb[0].mxu0
      %v3286 = vadd.f32 0.0, %v3285
      %v3287 = vpop.f32.mrb[0].mxu0
      %v3288 = vpop.f32.mrb[0].mxu0
      %v3289 = vadd.f32 0.0, %v3288
      %v3290 = vpop.f32.mrb[0].mxu0
      %3291 = vmatprep.mubr.bf16.mxu0 0
      %3292 = vmatmul.mubr.bf16.gmra.mrb[0].mxu0 %v2522
      %v3293 = vpop.f32.mrb[0].mxu0
      %v3294 = vadd.f32 0.0, %v3293
      %v3295 = vpop.f32.mrb[0].mxu0
      %v3296 = vpop.f32.mrb[0].mxu0
      %v3297 = vadd.f32 0.0, %v3296
      %v3298 = vpop.f32.mrb[0].mxu0
      %3299 = vmatprep.mubr.bf16.mxu0 0
      %3300 = vmatmul.mubr.bf16.gmra.mrb[0].mxu0 %v3161
      %v3301 = vpop.f32.mrb[0].mxu0
      %v3302 = vadd.f32 0.0, %v3301
      %v3303 = vpop.f32.mrb[0].mxu0
      %v3304 = vpop.f32.mrb[0].mxu0
      %v3305 = vadd.f32 0.0, %v3304
      %v3306 = vpop.f32.mrb[0].mxu0
      %3307 = vdwg.mxu0
      %v3308 = vld [vmem:[#allocation5] sm:$0xff]
      %v3309 = vld [vmem:[#allocation5 + $0x8] sm:$0xff]
      %v3310 = vld [vmem:[#allocation5 + $0x10] sm:$0xff]
      %v3311 = vld [vmem:[#allocation5 + $0x18] sm:$0xff]
      %v3312 = vld [vmem:[#allocation5 + $0x20] sm:$0xff]
      %v3313 = vld [vmem:[#allocation5 + $0x28] sm:$0xff]
      %v3314 = vld [vmem:[#allocation5 + $0x30] sm:$0xff]
      %v3315 = vld [vmem:[#allocation5 + $0x38] sm:$0xff]
      %v3316 = vld [vmem:[#allocation5 + $0x40] sm:$0xff]
      %v3317 = vld [vmem:[#allocation5 + $0x48] sm:$0xff]
      %v3318 = vld [vmem:[#allocation5 + $0x50] sm:$0xff]
      %v3319 = vld [vmem:[#allocation5 + $0x58] sm:$0xff]
      %v3320 = vld [vmem:[#allocation5 + $0x60] sm:$0xff]
      %v3321 = vld [vmem:[#allocation5 + $0x68] sm:$0xff]
      %v3322 = vld [vmem:[#allocation5 + $0x70] sm:$0xff]
      %v3323 = vld [vmem:[#allocation5 + $0x78] sm:$0xff]
      %v3324 = vadd.f32 %v3308, %v3246
      %v3325 = vadd.f32 %v3309, %v3249
      %v3326 = vadd.f32 %v3310, %v3254
      %v3327 = vadd.f32 %v3311, %v3257
      %v3328 = vadd.f32 %v3312, %v3262
      %v3329 = vadd.f32 %v3313, %v3265
      %v3330 = vadd.f32 %v3314, %v3270
      %v3331 = vadd.f32 %v3315, %v3273
      %v3332 = vadd.f32 %v3316, %v3278
      %v3333 = vadd.f32 %v3317, %v3281
      %v3334 = vadd.f32 %v3318, %v3286
      %v3335 = vadd.f32 %v3319, %v3289
      %v3336 = vadd.f32 %v3320, %v3294
      %v3337 = vadd.f32 %v3321, %v3297
      %v3338 = vadd.f32 %v3322, %v3302
      %v3339 = vadd.f32 %v3323, %v3305
      %3340 = vst [vmem:[#allocation5] sm:$0xff] %v3324
      %3341 = vst [vmem:[#allocation5 + $0x8] sm:$0xff] %v3325
      %3342 = vst [vmem:[#allocation5 + $0x10] sm:$0xff] %v3326
      %3343 = vst [vmem:[#allocation5 + $0x18] sm:$0xff] %v3327
      %3344 = vst [vmem:[#allocation5 + $0x20] sm:$0xff] %v3328
      %3345 = vst [vmem:[#allocation5 + $0x28] sm:$0xff] %v3329
      %3346 = vst [vmem:[#allocation5 + $0x30] sm:$0xff] %v3330
      %3347 = vst [vmem:[#allocation5 + $0x38] sm:$0xff] %v3331
      %3348 = vst [vmem:[#allocation5 + $0x40] sm:$0xff] %v3332
      %3349 = vst [vmem:[#allocation5 + $0x48] sm:$0xff] %v3333
      %3350 = vst [vmem:[#allocation5 + $0x50] sm:$0xff] %v3334
      %3351 = vst [vmem:[#allocation5 + $0x58] sm:$0xff] %v3335
      %3352 = vst [vmem:[#allocation5 + $0x60] sm:$0xff] %v3336
      %3353 = vst [vmem:[#allocation5 + $0x68] sm:$0xff] %v3337
      %3354 = vst [vmem:[#allocation5 + $0x70] sm:$0xff] %v3338
      %3355 = vst [vmem:[#allocation5 + $0x78] sm:$0xff] %v3339
      %v3356 = vld [vmem:[#allocation5] sm:$0xff]
      %v3357 = vld [vmem:[#allocation5 + $0x8] sm:$0xff]
      %v3358 = vld [vmem:[#allocation5 + $0x10] sm:$0xff]
      %v3359 = vld [vmem:[#allocation5 + $0x18] sm:$0xff]
      %v3360 = vld [vmem:[#allocation5 + $0x20] sm:$0xff]
      %v3361 = vld [vmem:[#allocation5 + $0x28] sm:$0xff]
      %v3362 = vld [vmem:[#allocation5 + $0x30] sm:$0xff]
      %v3363 = vld [vmem:[#allocation5 + $0x38] sm:$0xff]
      %v3364 = vld [vmem:[#allocation5 + $0x40] sm:$0xff]
      %v3365 = vld [vmem:[#allocation5 + $0x48] sm:$0xff]
      %v3366 = vld [vmem:[#allocation5 + $0x50] sm:$0xff]
      %v3367 = vld [vmem:[#allocation5 + $0x58] sm:$0xff]
      %v3368 = vld [vmem:[#allocation5 + $0x60] sm:$0xff]
      %v3369 = vld [vmem:[#allocation5 + $0x68] sm:$0xff]
      %v3370 = vld [vmem:[#allocation5 + $0x70] sm:$0xff]
      %v3371 = vld [vmem:[#allocation5 + $0x78] sm:$0xff]
      %v3372 = vld [vmem:[%s2] sm:$0x1]
      %v3374 = vlaneseq
      %v3375 = vshrl.u32 %v3374, 7
      %v3376 = vsub.s32 0, %v3375
      %v3377 = vrot.slane %v3372, %v3376
      %v3379 = vadd.f32 %v3356, %v3377
      %v3380 = vadd.f32 %v3357, %v3377
      %v3381 = vadd.f32 %v3358, %v3377
      %v3382 = vadd.f32 %v3359, %v3377
      %v3383 = vadd.f32 %v3360, %v3377
      %v3384 = vadd.f32 %v3361, %v3377
      %v3385 = vadd.f32 %v3362, %v3377
      %v3386 = vadd.f32 %v3363, %v3377
      %v3387 = vadd.f32 %v3364, %v3377
      %v3388 = vadd.f32 %v3365, %v3377
      %v3389 = vadd.f32 %v3366, %v3377
      %v3390 = vadd.f32 %v3367, %v3377
      %v3391 = vadd.f32 %v3368, %v3377
      %v3392 = vadd.f32 %v3369, %v3377
      %v3393 = vadd.f32 %v3370, %v3377
      %v3394 = vadd.f32 %v3371, %v3377
      %v3395 = vpack.c.bf16 %v3380, %v3379
      %v3396 = vpack.c.bf16 %v3382, %v3381
      %v3397 = vpack.c.bf16 %v3384, %v3383
      %v3398 = vpack.c.bf16 %v3386, %v3385
      %v3399 = vpack.c.bf16 %v3388, %v3387
      %v3400 = vpack.c.bf16 %v3390, %v3389
      %v3401 = vpack.c.bf16 %v3392, %v3391
      %v3402 = vpack.c.bf16 %v3394, %v3393
      %v3411 = vunpack.c.l.b16 %v3395
      %v3412 = vunpack.c.h.b16 %v3395
      %v3413 = vunpack.c.l.b16 %v3396
      %v3414 = vunpack.c.h.b16 %v3396
      %v3415 = vunpack.c.l.b16 %v3397
      %v3416 = vunpack.c.h.b16 %v3397
      %v3417 = vunpack.c.l.b16 %v3398
      %v3418 = vunpack.c.h.b16 %v3398
      %v3419 = vunpack.c.l.b16 %v3399
      %v3420 = vunpack.c.h.b16 %v3399
      %v3421 = vunpack.c.l.b16 %v3400
      %v3422 = vunpack.c.h.b16 %v3400
      %v3423 = vunpack.c.l.b16 %v3401
      %v3424 = vunpack.c.h.b16 %v3401
      %v3425 = vunpack.c.l.b16 %v3402
      %v3426 = vunpack.c.h.b16 %v3402
      %v3427 = vpack.c.b16 %v3411, %v3411
      %v3428 = vpack.c.b16 %v3412, %v3412
      %v3429 = vpack.c.b16 %v3413, %v3413
      %v3430 = vpack.c.b16 %v3414, %v3414
      %v3431 = vpack.c.b16 %v3415, %v3415
      %v3432 = vpack.c.b16 %v3416, %v3416
      %v3433 = vpack.c.b16 %v3417, %v3417
      %v3434 = vpack.c.b16 %v3418, %v3418
      %v3435 = vpack.c.b16 %v3419, %v3419
      %v3436 = vpack.c.b16 %v3420, %v3420
      %v3437 = vpack.c.b16 %v3421, %v3421
      %v3438 = vpack.c.b16 %v3422, %v3422
      %v3439 = vpack.c.b16 %v3423, %v3423
      %v3440 = vpack.c.b16 %v3424, %v3424
      %v3441 = vpack.c.b16 %v3425, %v3425
      %v3442 = vpack.c.b16 %v3426, %v3426
      %3459 = vst [vmem:[%s242] sm:$0xf] %v3427
      %3460 = vst [vmem:[%s242 + $0x4] sm:$0xf] %v3428
      %3461 = vst [vmem:[%s242 + $0x8] sm:$0xf] %v3429
      %3462 = vst [vmem:[%s242 + $0xc] sm:$0xf] %v3430
      %3463 = vst [vmem:[%s242 + $0x10] sm:$0xf] %v3431
      %3464 = vst [vmem:[%s242 + $0x14] sm:$0xf] %v3432
      %3465 = vst [vmem:[%s242 + $0x18] sm:$0xf] %v3433
      %3466 = vst [vmem:[%s242 + $0x1c] sm:$0xf] %v3434
      %3467 = vst [vmem:[%s242 + $0x20] sm:$0xf] %v3435
      %3468 = vst [vmem:[%s242 + $0x24] sm:$0xf] %v3436
      %3469 = vst [vmem:[%s242 + $0x28] sm:$0xf] %v3437
      %3470 = vst [vmem:[%s242 + $0x2c] sm:$0xf] %v3438
      %3471 = vst [vmem:[%s242 + $0x30] sm:$0xf] %v3439
      %3472 = vst [vmem:[%s242 + $0x34] sm:$0xf] %v3440
      %3473 = vst [vmem:[%s242 + $0x38] sm:$0xf] %v3441
      %3474 = vst [vmem:[%s242 + $0x3c] sm:$0xf] %v3442
      %v3475 = vadd.f32 %v3379, %v3380
      %v3476 = vadd.f32 %v3475, %v3381
      %v3477 = vadd.f32 %v3476, %v3382
      %v3478 = vadd.f32 %v3477, %v3383
      %v3479 = vadd.f32 %v3478, %v3384
      %v3480 = vadd.f32 %v3479, %v3385
      %v3481 = vadd.f32 %v3480, %v3386
      %v3482 = vadd.f32 %v3481, %v3387
      %v3483 = vadd.f32 %v3482, %v3388
      %v3484 = vadd.f32 %v3483, %v3389
      %v3485 = vadd.f32 %v3484, %v3390
      %v3486 = vadd.f32 %v3485, %v3391
      %v3487 = vadd.f32 %v3486, %v3392
      %v3488 = vadd.f32 %v3487, %v3393
      %v3489 = vadd.f32 %v3488, %v3394
      %v3490 = vrot.slane %v3489, 4
      %v3491 = vadd.f32 %v3489, %v3490
      %v3492 = vrot.slane %v3491, 2
      %v3493 = vadd.f32 %v3491, %v3492
      %v3494 = vrot.slane %v3493, 1
      %v3495 = vadd.f32 %v3493, %v3494
      %v3496 = vmul.f32 %v3379, %v3379
      %v3497 = vmul.f32 %v3380, %v3380
      %v3498 = vmul.f32 %v3381, %v3381
      %v3499 = vmul.f32 %v3382, %v3382
      %v3500 = vmul.f32 %v3383, %v3383
      %v3501 = vmul.f32 %v3384, %v3384
      %v3502 = vmul.f32 %v3385, %v3385
      %v3503 = vmul.f32 %v3386, %v3386
      %v3504 = vmul.f32 %v3387, %v3387
      %v3505 = vmul.f32 %v3388, %v3388
      %v3506 = vmul.f32 %v3389, %v3389
      %v3507 = vmul.f32 %v3390, %v3390
      %v3508 = vmul.f32 %v3391, %v3391
      %v3509 = vmul.f32 %v3392, %v3392
      %v3510 = vmul.f32 %v3393, %v3393
      %v3511 = vmul.f32 %v3394, %v3394
      %v3512 = vadd.f32 %v3496, %v3497
      %v3513 = vadd.f32 %v3512, %v3498
      %v3514 = vadd.f32 %v3513, %v3499
      %v3515 = vadd.f32 %v3514, %v3500
      %v3516 = vadd.f32 %v3515, %v3501
      %v3517 = vadd.f32 %v3516, %v3502
      %v3518 = vadd.f32 %v3517, %v3503
      %v3519 = vadd.f32 %v3518, %v3504
      %v3520 = vadd.f32 %v3519, %v3505
      %v3521 = vadd.f32 %v3520, %v3506
      %v3522 = vadd.f32 %v3521, %v3507
      %v3523 = vadd.f32 %v3522, %v3508
      %v3524 = vadd.f32 %v3523, %v3509
      %v3525 = vadd.f32 %v3524, %v3510
      %v3526 = vadd.f32 %v3525, %v3511
      %v3527 = vrot.slane %v3526, 4
      %v3528 = vadd.f32 %v3526, %v3527
      %v3529 = vrot.slane %v3528, 2
      %v3530 = vadd.f32 %v3528, %v3529
      %v3531 = vrot.slane %v3530, 1
      %v3532 = vadd.f32 %v3530, %v3531
      %vm3533 = vcmask 1040384
      %v3534 = vsel %vm3533, %v3495, %v3532
      %3535 = vst [vmem:[%s251] sm:$0x3] %v3534
      %s3536 = smul.u32 8, %s23
      %p3537 = scmp.lt.s32.totalorder %s22, 1
      %s3538 = scalar_select %p3537, %s22, 1
      %p3539 = scmp.lt.s32.totalorder %s3536, 15
      %s3540 = scalar_select %p3539, %s3536, 15
      %s3541 = smul.addr %s3540, 2
      %s3542 = smul.addr %s3538, 32
      %s3543 = sadd.s32 %s3541, %s3542
      %s3544 = smul.addr %s3543, 4
      %s3545 = scalar_lea.vmem %s5, %s3544
      %p3546 = scmp.lt.s32.totalorder %s22, 1
      %s3547 = scalar_select %p3546, %s22, 1
      %p3548 = scmp.lt.s32.totalorder %s23, 1
      %s3549 = scalar_select %p3548, %s23, 1
      %s3550 = smul.addr %s3547, 2
      %s3551 = sadd.s32 %s3549, %s3550
      %s3552 = smul.addr %s3551, 2
      %s3553 = scalar_lea.vmem %s6, %s3552
      // Predicated region
      $region281: #{double_conv_forward.4} parent=35 // pred_check
        %p3554 = pneg %p134
      $region282: #{double_conv_forward.4} parent=35 // pred_check_branch
        %3556 = sbr.rel (%p3554) target = $region284
      $region283: #{double_conv_forward.4} parent=35 // pred_region
        %s3557 = smul.u32 8, %s23
      $region284: #{double_conv_forward.4} parent=35 // pred_fallthru
        _
      // Predicated region
      $region285: #{double_conv_forward.4} parent=35 // pred_check
        %p3558 = pneg %p162
      $region286: #{double_conv_forward.4} parent=35 // pred_check_branch
        %3560 = sbr.rel (%p3558) target = $region288
      $region287: #{double_conv_forward.4} parent=35 // pred_region
        _
      $region288: #{double_conv_forward.4} parent=35 // pred_fallthru
        _
    $region36: #{double_conv_forward.4} parent=5 // pred_fallthru
      _
    %p3561 = scmp.le.s32.totalorder 2, %s13
    // Predicated region
    $region289: #{double_conv_forward.4} parent=5 // pred_check
      %p3562 = pneg %p3561
    $region290: #{double_conv_forward.4} parent=5 // pred_check_branch
      %3564 = sbr.rel (%p3562) target = $region292
    $region291: #{double_conv_forward.4} parent=5 // pred_region
      %s3565 = ssub.s32 %s13, 2
      // Predicated region
      $region293: #{double_conv_forward.4} parent=291 // pred_check
        %p3566 = pneg %p140
      $region294: #{double_conv_forward.4} parent=291 // pred_check_branch
        %3568 = sbr.rel (%p3566) target = $region296
      $region295: #{double_conv_forward.4} parent=291 // pred_region
        %s3569 = smul.u32 8, %s25
        %p3570 = scmp.lt.s32.totalorder %s24, 1
        %s3571 = scalar_select %p3570, %s24, 1
        %p3572 = scmp.lt.s32.totalorder %s3569, 15
        %s3573 = scalar_select %p3572, %s3569, 15
        %s3574 = smul.addr %s3573, 2
        %s3575 = smul.addr %s3571, 32
        %s3576 = sadd.s32 %s3574, %s3575
        %s3577 = smul.addr %s3576, 4
        %s3578 = scalar_lea.vmem %s5, %s3577
      $region296: #{double_conv_forward.4} parent=291 // pred_fallthru
        _
      // Predicated region
      $region297: #{double_conv_forward.4} parent=291 // pred_check
        %p3579 = pneg %p168
      $region298: #{double_conv_forward.4} parent=291 // pred_check_branch
        %3581 = sbr.rel (%p3579) target = $region300
      $region299: #{double_conv_forward.4} parent=291 // pred_region
        %p3582 = scmp.lt.s32.totalorder %s24, 1
        %s3583 = scalar_select %p3582, %s24, 1
        %p3584 = scmp.lt.s32.totalorder %s25, 1
        %s3585 = scalar_select %p3584, %s25, 1
        %s3586 = smul.addr %s3583, 2
        %s3587 = sadd.s32 %s3585, %s3586
        %s3588 = smul.addr %s3587, 2
        %s3589 = scalar_lea.vmem %s6, %s3588
      $region300: #{double_conv_forward.4} parent=291 // pred_fallthru
        _
    $region292: #{double_conv_forward.4} parent=5 // pred_fallthru
      _
  $region6: #{double_conv_forward.4} parent=0 // loop_footer
    %s17 = sadd.s32 1, %s13
  $region7: #{double_conv_forward.4} parent=0 // loop_footer_branch
    %12 = sbr.rel target = $region3
  $region8: #{double_conv_forward.4} parent=0 // loop_exit
    _
  %3590 = vsyncmov [#allocation4]
  %s3591 = vpop.sfrf %3590
  %p3592 = scmp.eq.s32.totalorder %s3591, 0
  %p3593 = pneg %p3592
  %3595 = shalt.err (%p3593)
  %s3596 = scalar_lea.sflag [#allocation4], 1
  %3597 = vsyncmov %s3596
  %s3598 = vpop.sfrf %3597
  %p3599 = scmp.eq.s32.totalorder %s3598, 0
  %p3600 = pneg %p3599
  %3602 = shalt.err (%p3600)
  %s3603 = scalar_lea.sflag [#allocation4], 2
  %3604 = vsyncmov %s3603
  %s3605 = vpop.sfrf %3604
  %p3606 = scmp.eq.s32.totalorder %s3605, 0
  %p3607 = pneg %p3606
  %3609 = shalt.err (%p3607)
  %s3610 = scalar_lea.sflag [#allocation4], 3
  %3611 = vsyncmov %s3610
  %s3612 = vpop.sfrf %3611
  %p3613 = scmp.eq.s32.totalorder %s3612, 0
  %p3614 = pneg %p3613
  %3616 = shalt.err (%p3614)
  %s3617 = scalar_lea.sflag [#allocation4], 4
  %3618 = vsyncmov %s3617
  %s3619 = vpop.sfrf %3618
  %p3620 = scmp.eq.s32.totalorder %s3619, 0
  %p3621 = pneg %p3620
  %3623 = shalt.err (%p3621)
  %s3624 = scalar_lea.sflag [#allocation4], 5
  %3625 = vsyncmov %s3624
  %s3626 = vpop.sfrf %3625
  %p3627 = scmp.eq.s32.totalorder %s3626, 0
  %p3628 = pneg %p3627
  %3630 = shalt.err (%p3628)

</llo_original>
